<compile_context>
chip_gen: v5e
topology: v5e:2x2
jax: 0.10.0
libtpu: 0.0.40
codegen_flags: <defaults>
</compile_context>

<pallas_src>
import jax
import jax.numpy as jnp
from jax import lax
from jax.experimental import pallas as pl
from jax.experimental.pallas import tpu as pltpu

D_MODEL = 256          # context_dim
NHEAD = 2
HEAD_DIM = D_MODEL // NHEAD
FF_DIM = 256           # dim_feedforward
LN_EPS = 1e-5
NUM_CSQ = 4            # ConcatSquashLinear layers: concat1, concat3, concat4, linear


def _layernorm(x, w, b):
    mu = jnp.mean(x, axis=-1, keepdims=True)
    xc = x - mu
    var = jnp.mean(xc * xc, axis=-1, keepdims=True)
    return xc * lax.rsqrt(var + LN_EPS) * w + b


def _bf16(x):
    return x.astype(jnp.bfloat16)


# ----------------------------------------------------------------------------
# Fused kernel: social_transformer context encoder + reverse-diffusion loop
# ----------------------------------------------------------------------------
def fused_forward_kernel(sched_ref, h_ref, mask_ref, z_ref,
                         wenc_ref, wqkv_ref, bqkv_ref, wo_ref, bo_ref,
                         ln1w_ref, ln1b_ref, w1_ref, b1_ref, w2_ref, b2_ref,
                         ln2w_ref, ln2b_ref,
                         *rest):
    # rest = 4 x [Wl, bl, Wgc, Wbc]  +  4 x t_gate tables  +  4 x t_bias tables
    #        + [ctx_out_ref, y_out_ref]
    csq_refs = rest[:4 * NUM_CSQ]
    tg_refs = rest[4 * NUM_CSQ: 5 * NUM_CSQ]
    tb_refs = rest[5 * NUM_CSQ: 6 * NUM_CSQ]
    ctx_out_ref, y_out_ref = rest[-2], rest[-1]

    # ------------------- social_transformer (encode_context) -----------------
    h = h_ref[...]                      # (B, D_in) flattened past trajectory, f32
    mask = mask_ref[...]                # (B, B) additive attention mask (0 / -1e9)

    # encode_past: Linear(D_in -> 256, bias=False); bf16 matmul, f32 accumulate
    x0 = jnp.dot(_bf16(h), wenc_ref[...], preferred_element_type=jnp.float32)   # (B, 256)
    x = x0
    scale = 1.0 / (HEAD_DIM ** 0.5)

    for l in range(2):                  # 2 TransformerEncoder layers (post-norm, ReLU)
        qkv = (jnp.dot(_bf16(x), wqkv_ref[l], preferred_element_type=jnp.float32)
               + bqkv_ref[l:l + 1, :])
        q = qkv[:, 0 * D_MODEL:1 * D_MODEL]
        k = qkv[:, 1 * D_MODEL:2 * D_MODEL]
        v = qkv[:, 2 * D_MODEL:3 * D_MODEL]

        wo_l = wo_ref[l]                                # (256, 256) bf16
        attn = bo_ref[l:l + 1, :]                       # start from output-proj bias
        for hh in range(NHEAD):
            sl = slice(hh * HEAD_DIM, (hh + 1) * HEAD_DIM)
            qh, kh, vh = q[:, sl], k[:, sl], v[:, sl]
            # contract on the feature axis directly: no kh.T XLU transpose
            s = lax.dot_general(_bf16(qh), _bf16(kh),
                                dimension_numbers=(((1,), (1,)), ((), ())),
                                preferred_element_type=jnp.float32)
            s = s * scale + mask
            s = s - jnp.max(s, axis=-1, keepdims=True)
            p = jnp.exp(s)
            p = p * pl.reciprocal(jnp.sum(p, axis=-1, keepdims=True), approx=True)
            head = jnp.dot(_bf16(p), _bf16(vh), preferred_element_type=jnp.float32)
            # per-head output projection (no lane concat): sum_h head_h @ wo[h*HD:(h+1)*HD, :]
            attn = attn + jnp.dot(_bf16(head), wo_l[hh * HEAD_DIM:(hh + 1) * HEAD_DIM, :],
                                  preferred_element_type=jnp.float32)

        x = _layernorm(x + attn, ln1w_ref[l:l + 1, :], ln1b_ref[l:l + 1, :])

        ff = (jnp.dot(_bf16(x), w1_ref[l], preferred_element_type=jnp.float32)
              + b1_ref[l:l + 1, :])
        ff = jnp.maximum(ff, 0.0)
        ff = (jnp.dot(_bf16(ff), w2_ref[l], preferred_element_type=jnp.float32)
              + b2_ref[l:l + 1, :])

        x = _layernorm(x + ff, ln2w_ref[l:l + 1, :], ln2b_ref[l:l + 1, :])

    # social_transformer: h_feat = h_feat + transformer(h_feat)
    ctx = x0 + x
    ctx_out_ref[...] = ctx

    # ------------- step-invariant hyper-network terms (hoisted) --------------
    # gate_arg = ctx @ Wgc  (+ time/bias terms from the per-step tables)
    # bias_arg = ctx @ Wbc  (+ time terms from the per-step tables)
    ctx_b = _bf16(ctx)
    gate_base, bias_base = [], []
    for li in range(NUM_CSQ):
        _, _, wgc_ref, wbc_ref = csq_refs[4 * li: 4 * li + 4]
        gate_base.append(jnp.dot(ctx_b, wgc_ref[...], preferred_element_type=jnp.float32))
        bias_base.append(jnp.dot(ctx_b, wbc_ref[...], preferred_element_type=jnp.float32))

    # ----------------------- reverse-diffusion loop ---------------------------
    z = z_ref[...]                      # (B, S*K)  initial noise == per-step z (torch quirk)
    steps = sched_ref.shape[1]          # static

    def step_body(i, y):
        hcur = y
        for li in range(NUM_CSQ):       # concat1 -> concat3 -> concat4 -> linear
            wl_ref, bl_ref, _, _ = csq_refs[4 * li: 4 * li + 4]
            lin = (jnp.dot(_bf16(hcur), wl_ref[...], preferred_element_type=jnp.float32)
                   + bl_ref[...])
            tg = tg_refs[li][pl.ds(i, 1), :]    # (1, dout): beta/sin/cos rows + gate bias
            tb = tb_refs[li][pl.ds(i, 1), :]    # (1, dout): beta/sin/cos rows of hyper_bias
            gate = jax.nn.sigmoid(gate_base[li] + tg)
            hcur = lin * gate + (bias_base[li] + tb)
        eps_theta = hcur

        eps_factor = sched_ref[0, i]    # (1 - alpha_t) / one_minus_alphas_bar_sqrt_t
        rs_alpha = sched_ref[1, i]      # 1 / sqrt(alpha_t)
        sigma = sched_ref[2, i]         # sqrt(beta_t) * 1e-5
        return (y - eps_factor * eps_theta) * rs_alpha + sigma * z

    y_out_ref[...] = lax.fori_loop(0, steps, step_body, z)


# ----------------------------------------------------------------------------
# Wrapper: prepare operands (bf16 weights, per-step time tables) and call once
# ----------------------------------------------------------------------------
def diffusion_model_forward(past_traj_BK1, traj_mask_BB, loc_BNK1, enc, csq,
                            betas, alphas, one_minus_alphas_bar_sqrt):
    # DiffusionModel.forward with cfg.baseline_use_map == False (returned map tensor is None).
    # TODO(synk): extract_patches_batched / PatchEncoder / map_mlp depend on external map &
    # homography dictionaries and a .ckpt load; no Pallas equivalent, omitted.
    B = past_traj_BK1.shape[0]
    S_, K_ = loc_BNK1.shape[1], loc_BNK1.shape[2]
    SK = S_ * K_

    # encode_context: mask 0 -> -1e9 (finite; avoids NaN for fully-masked rows), 1 -> 0
    addmask = jnp.where(traj_mask_BB == 0, -1e9, 0.0).astype(jnp.float32)
    h_BD = past_traj_BK1.reshape(B, -1).astype(jnp.float32)

    # torch reseeds Generator(0) for the initial y and for every per-step z, so all draws
    # are identical; reproduce with a single deterministic normal.
    z = jax.random.normal(jax.random.PRNGKey(0), (B, SK), jnp.float32)

    betas_rev = betas[::-1].astype(jnp.float32)
    alphas_rev = alphas[::-1].astype(jnp.float32)
    omabs_rev = one_minus_alphas_bar_sqrt[::-1].astype(jnp.float32)

    # per-step DDPM scalars -> SMEM table (3, steps)
    sched = jnp.stack([
        (1.0 - alphas_rev) / omabs_rev,
        1.0 / jnp.sqrt(alphas_rev),
        jnp.sqrt(betas_rev) * 1e-5,
    ], axis=0).astype(jnp.float32)

    # per-step time-embedding tables (trace-time): (steps, 3) @ (3, dout) [+ gate bias]
    time_feats = jnp.stack([betas_rev, jnp.sin(betas_rev), jnp.cos(betas_rev)], axis=1)

    enc_ops = [
        _bf16(enc["wenc"]), _bf16(enc["wqkv"]), enc["bqkv"],
        _bf16(enc["wo"]), enc["bo"],
        enc["ln1w"], enc["ln1b"],
        _bf16(enc["w1"]), enc["b1"], _bf16(enc["w2"]), enc["b2"],
        enc["ln2w"], enc["ln2b"],
    ]

    csq_ops, tg_tabs, tb_tabs = [], [], []
    for li in range(NUM_CSQ):
        Wl, bl, Wgt, Wgc, bg, Wbt, Wbc = csq[7 * li: 7 * li + 7]
        csq_ops += [_bf16(Wl), bl, _bf16(Wgc), _bf16(Wbc)]
        tg_tabs.append((time_feats @ Wgt + bg).astype(jnp.float32))   # (steps, dout)
        tb_tabs.append((time_feats @ Wbt).astype(jnp.float32))        # (steps, dout)

    operands = [sched, h_BD, addmask, z] + enc_ops + csq_ops + tg_tabs + tb_tabs

    smem = pl.BlockSpec(memory_space=pltpu.MemorySpace.SMEM)
    vmem = pl.BlockSpec(memory_space=pltpu.MemorySpace.VMEM)
    in_specs = [smem] + [vmem] * (len(operands) - 1)

    context_BK, y = pl.pallas_call(
        fused_forward_kernel,
        out_shape=(jax.ShapeDtypeStruct((B, D_MODEL), jnp.float32),
                   jax.ShapeDtypeStruct((B, SK), jnp.float32)),
        in_specs=in_specs,
        out_specs=(vmem, vmem),
    )(*operands)

    pred_traj_BNK1 = y.reshape(B, S_, K_, 1)
    map_B1HW = None
    return pred_traj_BNK1, context_BK, map_B1HW


# ----------------------------------------------------------------------------
# Parameter init (deterministic, synthetic)
# ----------------------------------------------------------------------------
def init_params(key, d_in, sk):
    ks = iter(jax.random.split(key, 80))

    def w(shape, scale=0.05):
        return (scale * jax.random.normal(next(ks), shape)).astype(jnp.float32)

    enc = dict(
        wenc=w((d_in, D_MODEL)),
        wqkv=w((2, D_MODEL, 3 * D_MODEL)),
        bqkv=w((2, 3 * D_MODEL)),
        wo=w((2, D_MODEL, D_MODEL)),
        bo=w((2, D_MODEL)),
        ln1w=jnp.ones((2, D_MODEL), jnp.float32),
        ln1b=jnp.zeros((2, D_MODEL), jnp.float32),
        w1=w((2, D_MODEL, FF_DIM)),
        b1=w((2, FF_DIM)),
        w2=w((2, FF_DIM, D_MODEL)),
        b2=w((2, D_MODEL)),
        ln2w=jnp.ones((2, D_MODEL), jnp.float32),
        ln2b=jnp.zeros((2, D_MODEL), jnp.float32),
    )

    # ConcatSquashLinear layers: concat1, concat3, concat4, linear (stored (in,out): y = x@W+b)
    dims = [(sk, 2 * D_MODEL), (2 * D_MODEL, D_MODEL),
            (D_MODEL, D_MODEL // 2), (D_MODEL // 2, sk)]
    csq = []
    for din, dout in dims:
        csq += [
            w((din, dout)),        # _layer weight
            w((1, dout)),          # _layer bias
            w((3, dout)),          # _hyper_gate weight, time-emb rows [beta, sin, cos]
            w((D_MODEL, dout)),    # _hyper_gate weight, context rows
            w((1, dout)),          # _hyper_gate bias
            w((3, dout)),          # _hyper_bias weight, time-emb rows (no bias)
            w((D_MODEL, dout)),    # _hyper_bias weight, context rows
        ]
    return enc, csq


if __name__ == "__main__":
    B, K, S, STEPS = 8, 4, 6, 10            # agents, cfg.k, cfg.s, cfg.steps
    D_IN = K * S + K + 2                     # social_transformer input dim (30)
    SK = S * K                               # temporal_dim * spatial_dim (24)

    root = jax.random.PRNGKey(0)
    k_in, k_par = jax.random.split(root)

    past_traj_BK1 = jax.random.normal(k_in, (B, D_IN, 1), jnp.float32)
    traj_mask_BB = jnp.ones((B, B), jnp.float32)
    loc_BNK1 = jnp.zeros((B, S, K, 1), jnp.float32)   # only its shape is used (noise init)

    enc, csq = init_params(k_par, D_IN, SK)

    # make_beta_schedule('linear')
    betas = jnp.linspace(1e-4, 5e-2, STEPS).astype(jnp.float32)
    alphas = 1.0 - betas
    alphas_prod = jnp.cumprod(alphas)
    one_minus_alphas_bar_sqrt = jnp.sqrt(1.0 - alphas_prod)

    pred_BNK1, context_BK, map_B1HW = diffusion_model_forward(
        past_traj_BK1, traj_mask_BB, loc_BNK1, enc, csq,
        betas, alphas, one_minus_alphas_bar_sqrt)

    jax.block_until_ready((pred_BNK1, context_BK))
    assert pred_BNK1.shape == (B, S, K, 1)
    assert context_BK.shape == (B, D_MODEL)     # == social_transformer(h, mask).squeeze(1)
    assert bool(jnp.all(jnp.isfinite(pred_BNK1)))
    assert bool(jnp.all(jnp.isfinite(context_BK)))
    print("KERNEL_OK")
</pallas_src>

<mosaic_0001>
module attributes {stable_mosaic.version = 11 : i64} {
  func.func @fused_forward_kernel(%arg0: memref<3x10xf32, #tpu.memory_space<smem>>, %arg1: memref<8x30xf32, #tpu.memory_space<vmem>>, %arg2: memref<8x8xf32, #tpu.memory_space<vmem>>, %arg3: memref<8x24xf32, #tpu.memory_space<vmem>>, %arg4: memref<30x256xbf16, #tpu.memory_space<vmem>>, %arg5: memref<2x256x768xbf16, #tpu.memory_space<vmem>>, %arg6: memref<2x768xf32, #tpu.memory_space<vmem>>, %arg7: memref<2x256x256xbf16, #tpu.memory_space<vmem>>, %arg8: memref<2x256xf32, #tpu.memory_space<vmem>>, %arg9: memref<2x256xf32, #tpu.memory_space<vmem>>, %arg10: memref<2x256xf32, #tpu.memory_space<vmem>>, %arg11: memref<2x256x256xbf16, #tpu.memory_space<vmem>>, %arg12: memref<2x256xf32, #tpu.memory_space<vmem>>, %arg13: memref<2x256x256xbf16, #tpu.memory_space<vmem>>, %arg14: memref<2x256xf32, #tpu.memory_space<vmem>>, %arg15: memref<2x256xf32, #tpu.memory_space<vmem>>, %arg16: memref<2x256xf32, #tpu.memory_space<vmem>>, %arg17: memref<24x512xbf16, #tpu.memory_space<vmem>>, %arg18: memref<1x512xf32, #tpu.memory_space<vmem>>, %arg19: memref<256x512xbf16, #tpu.memory_space<vmem>>, %arg20: memref<256x512xbf16, #tpu.memory_space<vmem>>, %arg21: memref<512x256xbf16, #tpu.memory_space<vmem>>, %arg22: memref<1x256xf32, #tpu.memory_space<vmem>>, %arg23: memref<256x256xbf16, #tpu.memory_space<vmem>>, %arg24: memref<256x256xbf16, #tpu.memory_space<vmem>>, %arg25: memref<256x128xbf16, #tpu.memory_space<vmem>>, %arg26: memref<1x128xf32, #tpu.memory_space<vmem>>, %arg27: memref<256x128xbf16, #tpu.memory_space<vmem>>, %arg28: memref<256x128xbf16, #tpu.memory_space<vmem>>, %arg29: memref<128x24xbf16, #tpu.memory_space<vmem>>, %arg30: memref<1x24xf32, #tpu.memory_space<vmem>>, %arg31: memref<256x24xbf16, #tpu.memory_space<vmem>>, %arg32: memref<256x24xbf16, #tpu.memory_space<vmem>>, %arg33: memref<10x512xf32, #tpu.memory_space<vmem>>, %arg34: memref<10x256xf32, #tpu.memory_space<vmem>>, %arg35: memref<10x128xf32, #tpu.memory_space<vmem>>, %arg36: memref<10x24xf32, #tpu.memory_space<vmem>>, %arg37: memref<10x512xf32, #tpu.memory_space<vmem>>, %arg38: memref<10x256xf32, #tpu.memory_space<vmem>>, %arg39: memref<10x128xf32, #tpu.memory_space<vmem>>, %arg40: memref<10x24xf32, #tpu.memory_space<vmem>>, %arg41: memref<8x256xf32, #tpu.memory_space<vmem>>, %arg42: memref<8x24xf32, #tpu.memory_space<vmem>>) attributes {dimension_semantics = [], scalar_prefetch = 0 : i64, scratch_operands = 0 : i64, tpu.core_type = #tpu.core_type<tc>} {
    %c0 = arith.constant 0 : index
    %c0_0 = arith.constant 0 : index
    %0 = vector.load %arg1[%c0, %c0_0] : memref<8x30xf32, #tpu.memory_space<vmem>>, vector<8x30xf32>
    %c0_1 = arith.constant 0 : index
    %c0_2 = arith.constant 0 : index
    %1 = vector.load %arg2[%c0_1, %c0_2] : memref<8x8xf32, #tpu.memory_space<vmem>>, vector<8x8xf32>
    %2 = arith.truncf %0 : vector<8x30xf32> to vector<8x30xbf16>
    %c0_3 = arith.constant 0 : index
    %c0_4 = arith.constant 0 : index
    %3 = vector.load %arg4[%c0_3, %c0_4] : memref<30x256xbf16, #tpu.memory_space<vmem>>, vector<30x256xbf16>
    %cst = arith.constant dense<0.000000e+00> : vector<8x256xf32>
    %4 = tpu.matmul %2, %3, %cst {dimension_numbers = #tpu.dot_dimension_numbers<[1], [0], [0], [1], [0, 0, 1, 1], [], []>} : vector<8x30xbf16>, vector<30x256xbf16>, vector<8x256xf32> -> vector<8x256xf32>
    %5 = arith.truncf %4 : vector<8x256xf32> to vector<8x256xbf16>
    %c0_5 = arith.constant 0 : index
    %c0_6 = arith.constant 0 : index
    %c0_7 = arith.constant 0 : index
    %6 = vector.load %arg5[%c0_5, %c0_6, %c0_7] : memref<2x256x768xbf16, #tpu.memory_space<vmem>>, vector<1x256x768xbf16>
    %7 = vector.shape_cast %6 : vector<1x256x768xbf16> to vector<256x768xbf16>
    %cst_8 = arith.constant dense<0.000000e+00> : vector<8x768xf32>
    %8 = tpu.matmul %5, %7, %cst_8 {dimension_numbers = #tpu.dot_dimension_numbers<[1], [0], [0], [1], [0, 0, 1, 1], [], []>} : vector<8x256xbf16>, vector<256x768xbf16>, vector<8x768xf32> -> vector<8x768xf32>
    %c0_9 = arith.constant 0 : index
    %c0_10 = arith.constant 0 : index
    %9 = vector.load %arg6[%c0_9, %c0_10] : memref<2x768xf32, #tpu.memory_space<vmem>>, vector<1x768xf32>
    %10 = vector.broadcast %9 : vector<1x768xf32> to vector<8x768xf32>
    %11 = arith.addf %8, %10 : vector<8x768xf32>
    %12 = vector.extract_strided_slice %11 {offsets = [0, 0], sizes = [8, 256], strides = [1, 1]} : vector<8x768xf32> to vector<8x256xf32>
    %13 = vector.extract_strided_slice %11 {offsets = [0, 256], sizes = [8, 256], strides = [1, 1]} : vector<8x768xf32> to vector<8x256xf32>
    %14 = vector.extract_strided_slice %11 {offsets = [0, 512], sizes = [8, 256], strides = [1, 1]} : vector<8x768xf32> to vector<8x256xf32>
    %c0_11 = arith.constant 0 : index
    %c0_12 = arith.constant 0 : index
    %c0_13 = arith.constant 0 : index
    %15 = vector.load %arg7[%c0_11, %c0_12, %c0_13] : memref<2x256x256xbf16, #tpu.memory_space<vmem>>, vector<1x256x256xbf16>
    %16 = vector.shape_cast %15 : vector<1x256x256xbf16> to vector<256x256xbf16>
    %c0_14 = arith.constant 0 : index
    %c0_15 = arith.constant 0 : index
    %17 = vector.load %arg8[%c0_14, %c0_15] : memref<2x256xf32, #tpu.memory_space<vmem>>, vector<1x256xf32>
    %18 = vector.extract_strided_slice %12 {offsets = [0, 0], sizes = [8, 128], strides = [1, 1]} : vector<8x256xf32> to vector<8x128xf32>
    %19 = vector.extract_strided_slice %13 {offsets = [0, 0], sizes = [8, 128], strides = [1, 1]} : vector<8x256xf32> to vector<8x128xf32>
    %20 = vector.extract_strided_slice %14 {offsets = [0, 0], sizes = [8, 128], strides = [1, 1]} : vector<8x256xf32> to vector<8x128xf32>
    %21 = arith.truncf %18 : vector<8x128xf32> to vector<8x128xbf16>
    %22 = arith.truncf %19 : vector<8x128xf32> to vector<8x128xbf16>
    %cst_16 = arith.constant dense<0.000000e+00> : vector<8x8xf32>
    %23 = tpu.matmul %21, %22, %cst_16 {dimension_numbers = #tpu.dot_dimension_numbers<[1], [1], [0], [0], [0, 0, 1, 0], [], []>} : vector<8x128xbf16>, vector<8x128xbf16>, vector<8x8xf32> -> vector<8x8xf32>
    %cst_17 = arith.constant 0.0883883461 : f32
    %24 = vector.broadcast %cst_17 : f32 to vector<8x8xf32>
    %25 = arith.mulf %23, %24 : vector<8x8xf32>
    %26 = arith.addf %25, %1 : vector<8x8xf32>
    %cst_18 = arith.constant dense<0xFF800000> : vector<8xf32>
    %27 = vector.multi_reduction <maximumf>, %26, %cst_18 [1] : vector<8x8xf32> to vector<8xf32>
    %28 = vector.shape_cast %27 : vector<8xf32> to vector<8x1xf32>
    %29 = vector.broadcast %28 : vector<8x1xf32> to vector<8x8xf32>
    %30 = arith.subf %26, %29 : vector<8x8xf32>
    %31 = math.exp %30 : vector<8x8xf32>
    %cst_19 = arith.constant dense<0.000000e+00> : vector<8xf32>
    %32 = vector.multi_reduction <add>, %31, %cst_19 [1] : vector<8x8xf32> to vector<8xf32>
    %33 = vector.shape_cast %32 : vector<8xf32> to vector<8x1xf32>
    %34 = tpu.reciprocal %33 {approx = true} : vector<8x1xf32> -> vector<8x1xf32>
    %35 = vector.broadcast %34 : vector<8x1xf32> to vector<8x8xf32>
    %36 = arith.mulf %31, %35 : vector<8x8xf32>
    %37 = arith.truncf %36 : vector<8x8xf32> to vector<8x8xbf16>
    %38 = arith.truncf %20 : vector<8x128xf32> to vector<8x128xbf16>
    %cst_20 = arith.constant dense<0.000000e+00> : vector<8x128xf32>
    %39 = tpu.matmul %37, %38, %cst_20 {dimension_numbers = #tpu.dot_dimension_numbers<[1], [0], [0], [1], [0, 0, 1, 1], [], []>} : vector<8x8xbf16>, vector<8x128xbf16>, vector<8x128xf32> -> vector<8x128xf32>
    %40 = arith.truncf %39 : vector<8x128xf32> to vector<8x128xbf16>
    %41 = vector.extract_strided_slice %16 {offsets = [0, 0], sizes = [128, 256], strides = [1, 1]} : vector<256x256xbf16> to vector<128x256xbf16>
    %cst_21 = arith.constant dense<0.000000e+00> : vector<8x256xf32>
    %42 = tpu.matmul %40, %41, %cst_21 {dimension_numbers = #tpu.dot_dimension_numbers<[1], [0], [0], [1], [0, 0, 1, 1], [], []>} : vector<8x128xbf16>, vector<128x256xbf16>, vector<8x256xf32> -> vector<8x256xf32>
    %43 = vector.broadcast %17 : vector<1x256xf32> to vector<8x256xf32>
    %44 = arith.addf %43, %42 : vector<8x256xf32>
    %45 = vector.extract_strided_slice %12 {offsets = [0, 128], sizes = [8, 128], strides = [1, 1]} : vector<8x256xf32> to vector<8x128xf32>
    %46 = vector.extract_strided_slice %13 {offsets = [0, 128], sizes = [8, 128], strides = [1, 1]} : vector<8x256xf32> to vector<8x128xf32>
    %47 = vector.extract_strided_slice %14 {offsets = [0, 128], sizes = [8, 128], strides = [1, 1]} : vector<8x256xf32> to vector<8x128xf32>
    %48 = arith.truncf %45 : vector<8x128xf32> to vector<8x128xbf16>
    %49 = arith.truncf %46 : vector<8x128xf32> to vector<8x128xbf16>
    %cst_22 = arith.constant dense<0.000000e+00> : vector<8x8xf32>
    %50 = tpu.matmul %48, %49, %cst_22 {dimension_numbers = #tpu.dot_dimension_numbers<[1], [1], [0], [0], [0, 0, 1, 0], [], []>} : vector<8x128xbf16>, vector<8x128xbf16>, vector<8x8xf32> -> vector<8x8xf32>
    %cst_23 = arith.constant 0.0883883461 : f32
    %51 = vector.broadcast %cst_23 : f32 to vector<8x8xf32>
    %52 = arith.mulf %50, %51 : vector<8x8xf32>
    %53 = arith.addf %52, %1 : vector<8x8xf32>
    %cst_24 = arith.constant dense<0xFF800000> : vector<8xf32>
    %54 = vector.multi_reduction <maximumf>, %53, %cst_24 [1] : vector<8x8xf32> to vector<8xf32>
    %55 = vector.shape_cast %54 : vector<8xf32> to vector<8x1xf32>
    %56 = vector.broadcast %55 : vector<8x1xf32> to vector<8x8xf32>
    %57 = arith.subf %53, %56 : vector<8x8xf32>
    %58 = math.exp %57 : vector<8x8xf32>
    %cst_25 = arith.constant dense<0.000000e+00> : vector<8xf32>
    %59 = vector.multi_reduction <add>, %58, %cst_25 [1] : vector<8x8xf32> to vector<8xf32>
    %60 = vector.shape_cast %59 : vector<8xf32> to vector<8x1xf32>
    %61 = tpu.reciprocal %60 {approx = true} : vector<8x1xf32> -> vector<8x1xf32>
    %62 = vector.broadcast %61 : vector<8x1xf32> to vector<8x8xf32>
    %63 = arith.mulf %58, %62 : vector<8x8xf32>
    %64 = arith.truncf %63 : vector<8x8xf32> to vector<8x8xbf16>
    %65 = arith.truncf %47 : vector<8x128xf32> to vector<8x128xbf16>
    %cst_26 = arith.constant dense<0.000000e+00> : vector<8x128xf32>
    %66 = tpu.matmul %64, %65, %cst_26 {dimension_numbers = #tpu.dot_dimension_numbers<[1], [0], [0], [1], [0, 0, 1, 1], [], []>} : vector<8x8xbf16>, vector<8x128xbf16>, vector<8x128xf32> -> vector<8x128xf32>
    %67 = arith.truncf %66 : vector<8x128xf32> to vector<8x128xbf16>
    %68 = vector.extract_strided_slice %16 {offsets = [128, 0], sizes = [128, 256], strides = [1, 1]} : vector<256x256xbf16> to vector<128x256xbf16>
    %cst_27 = arith.constant dense<0.000000e+00> : vector<8x256xf32>
    %69 = tpu.matmul %67, %68, %cst_27 {dimension_numbers = #tpu.dot_dimension_numbers<[1], [0], [0], [1], [0, 0, 1, 1], [], []>} : vector<8x128xbf16>, vector<128x256xbf16>, vector<8x256xf32> -> vector<8x256xf32>
    %70 = arith.addf %44, %69 : vector<8x256xf32>
    %71 = arith.addf %4, %70 : vector<8x256xf32>
    %c0_28 = arith.constant 0 : index
    %c0_29 = arith.constant 0 : index
    %72 = vector.load %arg9[%c0_28, %c0_29] : memref<2x256xf32, #tpu.memory_space<vmem>>, vector<1x256xf32>
    %c0_30 = arith.constant 0 : index
    %c0_31 = arith.constant 0 : index
    %73 = vector.load %arg10[%c0_30, %c0_31] : memref<2x256xf32, #tpu.memory_space<vmem>>, vector<1x256xf32>
    %cst_32 = arith.constant dense<0.000000e+00> : vector<8xf32>
    %74 = vector.multi_reduction <add>, %71, %cst_32 [1] : vector<8x256xf32> to vector<8xf32>
    %75 = vector.shape_cast %74 : vector<8xf32> to vector<8x1xf32>
    %cst_33 = arith.constant 2.560000e+02 : f32
    %76 = vector.broadcast %cst_33 : f32 to vector<8x1xf32>
    %77 = arith.divf %75, %76 : vector<8x1xf32>
    %78 = vector.broadcast %77 : vector<8x1xf32> to vector<8x256xf32>
    %79 = arith.subf %71, %78 : vector<8x256xf32>
    %80 = arith.mulf %79, %79 : vector<8x256xf32>
    %cst_34 = arith.constant dense<0.000000e+00> : vector<8xf32>
    %81 = vector.multi_reduction <add>, %80, %cst_34 [1] : vector<8x256xf32> to vector<8xf32>
    %82 = vector.shape_cast %81 : vector<8xf32> to vector<8x1xf32>
    %cst_35 = arith.constant 2.560000e+02 : f32
    %83 = vector.broadcast %cst_35 : f32 to vector<8x1xf32>
    %84 = arith.divf %82, %83 : vector<8x1xf32>
    %cst_36 = arith.constant 9.99999974E-6 : f32
    %85 = vector.broadcast %cst_36 : f32 to vector<8x1xf32>
    %86 = arith.addf %84, %85 : vector<8x1xf32>
    %87 = math.rsqrt %86 : vector<8x1xf32>
    %88 = vector.broadcast %87 : vector<8x1xf32> to vector<8x256xf32>
    %89 = arith.mulf %79, %88 : vector<8x256xf32>
    %90 = vector.broadcast %72 : vector<1x256xf32> to vector<8x256xf32>
    %91 = arith.mulf %89, %90 : vector<8x256xf32>
    %92 = vector.broadcast %73 : vector<1x256xf32> to vector<8x256xf32>
    %93 = arith.addf %91, %92 : vector<8x256xf32>
    %94 = arith.truncf %93 : vector<8x256xf32> to vector<8x256xbf16>
    %c0_37 = arith.constant 0 : index
    %c0_38 = arith.constant 0 : index
    %c0_39 = arith.constant 0 : index
    %95 = vector.load %arg11[%c0_37, %c0_38, %c0_39] : memref<2x256x256xbf16, #tpu.memory_space<vmem>>, vector<1x256x256xbf16>
    %96 = vector.shape_cast %95 : vector<1x256x256xbf16> to vector<256x256xbf16>
    %cst_40 = arith.constant dense<0.000000e+00> : vector<8x256xf32>
    %97 = tpu.matmul %94, %96, %cst_40 {dimension_numbers = #tpu.dot_dimension_numbers<[1], [0], [0], [1], [0, 0, 1, 1], [], []>} : vector<8x256xbf16>, vector<256x256xbf16>, vector<8x256xf32> -> vector<8x256xf32>
    %c0_41 = arith.constant 0 : index
    %c0_42 = arith.constant 0 : index
    %98 = vector.load %arg12[%c0_41, %c0_42] : memref<2x256xf32, #tpu.memory_space<vmem>>, vector<1x256xf32>
    %99 = vector.broadcast %98 : vector<1x256xf32> to vector<8x256xf32>
    %100 = arith.addf %97, %99 : vector<8x256xf32>
    %cst_43 = arith.constant 0.000000e+00 : f32
    %101 = vector.broadcast %cst_43 : f32 to vector<8x256xf32>
    %102 = arith.maximumf %100, %101 : vector<8x256xf32>
    %103 = arith.truncf %102 : vector<8x256xf32> to vector<8x256xbf16>
    %c0_44 = arith.constant 0 : index
    %c0_45 = arith.constant 0 : index
    %c0_46 = arith.constant 0 : index
    %104 = vector.load %arg13[%c0_44, %c0_45, %c0_46] : memref<2x256x256xbf16, #tpu.memory_space<vmem>>, vector<1x256x256xbf16>
    %105 = vector.shape_cast %104 : vector<1x256x256xbf16> to vector<256x256xbf16>
    %cst_47 = arith.constant dense<0.000000e+00> : vector<8x256xf32>
    %106 = tpu.matmul %103, %105, %cst_47 {dimension_numbers = #tpu.dot_dimension_numbers<[1], [0], [0], [1], [0, 0, 1, 1], [], []>} : vector<8x256xbf16>, vector<256x256xbf16>, vector<8x256xf32> -> vector<8x256xf32>
    %c0_48 = arith.constant 0 : index
    %c0_49 = arith.constant 0 : index
    %107 = vector.load %arg14[%c0_48, %c0_49] : memref<2x256xf32, #tpu.memory_space<vmem>>, vector<1x256xf32>
    %108 = vector.broadcast %107 : vector<1x256xf32> to vector<8x256xf32>
    %109 = arith.addf %106, %108 : vector<8x256xf32>
    %110 = arith.addf %93, %109 : vector<8x256xf32>
    %c0_50 = arith.constant 0 : index
    %c0_51 = arith.constant 0 : index
    %111 = vector.load %arg15[%c0_50, %c0_51] : memref<2x256xf32, #tpu.memory_space<vmem>>, vector<1x256xf32>
    %c0_52 = arith.constant 0 : index
    %c0_53 = arith.constant 0 : index
    %112 = vector.load %arg16[%c0_52, %c0_53] : memref<2x256xf32, #tpu.memory_space<vmem>>, vector<1x256xf32>
    %cst_54 = arith.constant dense<0.000000e+00> : vector<8xf32>
    %113 = vector.multi_reduction <add>, %110, %cst_54 [1] : vector<8x256xf32> to vector<8xf32>
    %114 = vector.shape_cast %113 : vector<8xf32> to vector<8x1xf32>
    %cst_55 = arith.constant 2.560000e+02 : f32
    %115 = vector.broadcast %cst_55 : f32 to vector<8x1xf32>
    %116 = arith.divf %114, %115 : vector<8x1xf32>
    %117 = vector.broadcast %116 : vector<8x1xf32> to vector<8x256xf32>
    %118 = arith.subf %110, %117 : vector<8x256xf32>
    %119 = arith.mulf %118, %118 : vector<8x256xf32>
    %cst_56 = arith.constant dense<0.000000e+00> : vector<8xf32>
    %120 = vector.multi_reduction <add>, %119, %cst_56 [1] : vector<8x256xf32> to vector<8xf32>
    %121 = vector.shape_cast %120 : vector<8xf32> to vector<8x1xf32>
    %cst_57 = arith.constant 2.560000e+02 : f32
    %122 = vector.broadcast %cst_57 : f32 to vector<8x1xf32>
    %123 = arith.divf %121, %122 : vector<8x1xf32>
    %cst_58 = arith.constant 9.99999974E-6 : f32
    %124 = vector.broadcast %cst_58 : f32 to vector<8x1xf32>
    %125 = arith.addf %123, %124 : vector<8x1xf32>
    %126 = math.rsqrt %125 : vector<8x1xf32>
    %127 = vector.broadcast %126 : vector<8x1xf32> to vector<8x256xf32>
    %128 = arith.mulf %118, %127 : vector<8x256xf32>
    %129 = vector.broadcast %111 : vector<1x256xf32> to vector<8x256xf32>
    %130 = arith.mulf %128, %129 : vector<8x256xf32>
    %131 = vector.broadcast %112 : vector<1x256xf32> to vector<8x256xf32>
    %132 = arith.addf %130, %131 : vector<8x256xf32>
    %133 = arith.truncf %132 : vector<8x256xf32> to vector<8x256xbf16>
    %c1 = arith.constant 1 : index
    %c0_59 = arith.constant 0 : index
    %c0_60 = arith.constant 0 : index
    %134 = vector.load %arg5[%c1, %c0_59, %c0_60] : memref<2x256x768xbf16, #tpu.memory_space<vmem>>, vector<1x256x768xbf16>
    %135 = vector.shape_cast %134 : vector<1x256x768xbf16> to vector<256x768xbf16>
    %cst_61 = arith.constant dense<0.000000e+00> : vector<8x768xf32>
    %136 = tpu.matmul %133, %135, %cst_61 {dimension_numbers = #tpu.dot_dimension_numbers<[1], [0], [0], [1], [0, 0, 1, 1], [], []>} : vector<8x256xbf16>, vector<256x768xbf16>, vector<8x768xf32> -> vector<8x768xf32>
    %c1_62 = arith.constant 1 : index
    %c0_63 = arith.constant 0 : index
    %137 = vector.load %arg6[%c1_62, %c0_63] : memref<2x768xf32, #tpu.memory_space<vmem>>, vector<1x768xf32>
    %138 = vector.broadcast %137 : vector<1x768xf32> to vector<8x768xf32>
    %139 = arith.addf %136, %138 : vector<8x768xf32>
    %140 = vector.extract_strided_slice %139 {offsets = [0, 0], sizes = [8, 256], strides = [1, 1]} : vector<8x768xf32> to vector<8x256xf32>
    %141 = vector.extract_strided_slice %139 {offsets = [0, 256], sizes = [8, 256], strides = [1, 1]} : vector<8x768xf32> to vector<8x256xf32>
    %142 = vector.extract_strided_slice %139 {offsets = [0, 512], sizes = [8, 256], strides = [1, 1]} : vector<8x768xf32> to vector<8x256xf32>
    %c1_64 = arith.constant 1 : index
    %c0_65 = arith.constant 0 : index
    %c0_66 = arith.constant 0 : index
    %143 = vector.load %arg7[%c1_64, %c0_65, %c0_66] : memref<2x256x256xbf16, #tpu.memory_space<vmem>>, vector<1x256x256xbf16>
    %144 = vector.shape_cast %143 : vector<1x256x256xbf16> to vector<256x256xbf16>
    %c1_67 = arith.constant 1 : index
    %c0_68 = arith.constant 0 : index
    %145 = vector.load %arg8[%c1_67, %c0_68] : memref<2x256xf32, #tpu.memory_space<vmem>>, vector<1x256xf32>
    %146 = vector.extract_strided_slice %140 {offsets = [0, 0], sizes = [8, 128], strides = [1, 1]} : vector<8x256xf32> to vector<8x128xf32>
    %147 = vector.extract_strided_slice %141 {offsets = [0, 0], sizes = [8, 128], strides = [1, 1]} : vector<8x256xf32> to vector<8x128xf32>
    %148 = vector.extract_strided_slice %142 {offsets = [0, 0], sizes = [8, 128], strides = [1, 1]} : vector<8x256xf32> to vector<8x128xf32>
    %149 = arith.truncf %146 : vector<8x128xf32> to vector<8x128xbf16>
    %150 = arith.truncf %147 : vector<8x128xf32> to vector<8x128xbf16>
    %cst_69 = arith.constant dense<0.000000e+00> : vector<8x8xf32>
    %151 = tpu.matmul %149, %150, %cst_69 {dimension_numbers = #tpu.dot_dimension_numbers<[1], [1], [0], [0], [0, 0, 1, 0], [], []>} : vector<8x128xbf16>, vector<8x128xbf16>, vector<8x8xf32> -> vector<8x8xf32>
    %cst_70 = arith.constant 0.0883883461 : f32
    %152 = vector.broadcast %cst_70 : f32 to vector<8x8xf32>
    %153 = arith.mulf %151, %152 : vector<8x8xf32>
    %154 = arith.addf %153, %1 : vector<8x8xf32>
    %cst_71 = arith.constant dense<0xFF800000> : vector<8xf32>
    %155 = vector.multi_reduction <maximumf>, %154, %cst_71 [1] : vector<8x8xf32> to vector<8xf32>
    %156 = vector.shape_cast %155 : vector<8xf32> to vector<8x1xf32>
    %157 = vector.broadcast %156 : vector<8x1xf32> to vector<8x8xf32>
    %158 = arith.subf %154, %157 : vector<8x8xf32>
    %159 = math.exp %158 : vector<8x8xf32>
    %cst_72 = arith.constant dense<0.000000e+00> : vector<8xf32>
    %160 = vector.multi_reduction <add>, %159, %cst_72 [1] : vector<8x8xf32> to vector<8xf32>
    %161 = vector.shape_cast %160 : vector<8xf32> to vector<8x1xf32>
    %162 = tpu.reciprocal %161 {approx = true} : vector<8x1xf32> -> vector<8x1xf32>
    %163 = vector.broadcast %162 : vector<8x1xf32> to vector<8x8xf32>
    %164 = arith.mulf %159, %163 : vector<8x8xf32>
    %165 = arith.truncf %164 : vector<8x8xf32> to vector<8x8xbf16>
    %166 = arith.truncf %148 : vector<8x128xf32> to vector<8x128xbf16>
    %cst_73 = arith.constant dense<0.000000e+00> : vector<8x128xf32>
    %167 = tpu.matmul %165, %166, %cst_73 {dimension_numbers = #tpu.dot_dimension_numbers<[1], [0], [0], [1], [0, 0, 1, 1], [], []>} : vector<8x8xbf16>, vector<8x128xbf16>, vector<8x128xf32> -> vector<8x128xf32>
    %168 = arith.truncf %167 : vector<8x128xf32> to vector<8x128xbf16>
    %169 = vector.extract_strided_slice %144 {offsets = [0, 0], sizes = [128, 256], strides = [1, 1]} : vector<256x256xbf16> to vector<128x256xbf16>
    %cst_74 = arith.constant dense<0.000000e+00> : vector<8x256xf32>
    %170 = tpu.matmul %168, %169, %cst_74 {dimension_numbers = #tpu.dot_dimension_numbers<[1], [0], [0], [1], [0, 0, 1, 1], [], []>} : vector<8x128xbf16>, vector<128x256xbf16>, vector<8x256xf32> -> vector<8x256xf32>
    %171 = vector.broadcast %145 : vector<1x256xf32> to vector<8x256xf32>
    %172 = arith.addf %171, %170 : vector<8x256xf32>
    %173 = vector.extract_strided_slice %140 {offsets = [0, 128], sizes = [8, 128], strides = [1, 1]} : vector<8x256xf32> to vector<8x128xf32>
    %174 = vector.extract_strided_slice %141 {offsets = [0, 128], sizes = [8, 128], strides = [1, 1]} : vector<8x256xf32> to vector<8x128xf32>
    %175 = vector.extract_strided_slice %142 {offsets = [0, 128], sizes = [8, 128], strides = [1, 1]} : vector<8x256xf32> to vector<8x128xf32>
    %176 = arith.truncf %173 : vector<8x128xf32> to vector<8x128xbf16>
    %177 = arith.truncf %174 : vector<8x128xf32> to vector<8x128xbf16>
    %cst_75 = arith.constant dense<0.000000e+00> : vector<8x8xf32>
    %178 = tpu.matmul %176, %177, %cst_75 {dimension_numbers = #tpu.dot_dimension_numbers<[1], [1], [0], [0], [0, 0, 1, 0], [], []>} : vector<8x128xbf16>, vector<8x128xbf16>, vector<8x8xf32> -> vector<8x8xf32>
    %cst_76 = arith.constant 0.0883883461 : f32
    %179 = vector.broadcast %cst_76 : f32 to vector<8x8xf32>
    %180 = arith.mulf %178, %179 : vector<8x8xf32>
    %181 = arith.addf %180, %1 : vector<8x8xf32>
    %cst_77 = arith.constant dense<0xFF800000> : vector<8xf32>
    %182 = vector.multi_reduction <maximumf>, %181, %cst_77 [1] : vector<8x8xf32> to vector<8xf32>
    %183 = vector.shape_cast %182 : vector<8xf32> to vector<8x1xf32>
    %184 = vector.broadcast %183 : vector<8x1xf32> to vector<8x8xf32>
    %185 = arith.subf %181, %184 : vector<8x8xf32>
    %186 = math.exp %185 : vector<8x8xf32>
    %cst_78 = arith.constant dense<0.000000e+00> : vector<8xf32>
    %187 = vector.multi_reduction <add>, %186, %cst_78 [1] : vector<8x8xf32> to vector<8xf32>
    %188 = vector.shape_cast %187 : vector<8xf32> to vector<8x1xf32>
    %189 = tpu.reciprocal %188 {approx = true} : vector<8x1xf32> -> vector<8x1xf32>
    %190 = vector.broadcast %189 : vector<8x1xf32> to vector<8x8xf32>
    %191 = arith.mulf %186, %190 : vector<8x8xf32>
    %192 = arith.truncf %191 : vector<8x8xf32> to vector<8x8xbf16>
    %193 = arith.truncf %175 : vector<8x128xf32> to vector<8x128xbf16>
    %cst_79 = arith.constant dense<0.000000e+00> : vector<8x128xf32>
    %194 = tpu.matmul %192, %193, %cst_79 {dimension_numbers = #tpu.dot_dimension_numbers<[1], [0], [0], [1], [0, 0, 1, 1], [], []>} : vector<8x8xbf16>, vector<8x128xbf16>, vector<8x128xf32> -> vector<8x128xf32>
    %195 = arith.truncf %194 : vector<8x128xf32> to vector<8x128xbf16>
    %196 = vector.extract_strided_slice %144 {offsets = [128, 0], sizes = [128, 256], strides = [1, 1]} : vector<256x256xbf16> to vector<128x256xbf16>
    %cst_80 = arith.constant dense<0.000000e+00> : vector<8x256xf32>
    %197 = tpu.matmul %195, %196, %cst_80 {dimension_numbers = #tpu.dot_dimension_numbers<[1], [0], [0], [1], [0, 0, 1, 1], [], []>} : vector<8x128xbf16>, vector<128x256xbf16>, vector<8x256xf32> -> vector<8x256xf32>
    %198 = arith.addf %172, %197 : vector<8x256xf32>
    %199 = arith.addf %132, %198 : vector<8x256xf32>
    %c1_81 = arith.constant 1 : index
    %c0_82 = arith.constant 0 : index
    %200 = vector.load %arg9[%c1_81, %c0_82] : memref<2x256xf32, #tpu.memory_space<vmem>>, vector<1x256xf32>
    %c1_83 = arith.constant 1 : index
    %c0_84 = arith.constant 0 : index
    %201 = vector.load %arg10[%c1_83, %c0_84] : memref<2x256xf32, #tpu.memory_space<vmem>>, vector<1x256xf32>
    %cst_85 = arith.constant dense<0.000000e+00> : vector<8xf32>
    %202 = vector.multi_reduction <add>, %199, %cst_85 [1] : vector<8x256xf32> to vector<8xf32>
    %203 = vector.shape_cast %202 : vector<8xf32> to vector<8x1xf32>
    %cst_86 = arith.constant 2.560000e+02 : f32
    %204 = vector.broadcast %cst_86 : f32 to vector<8x1xf32>
    %205 = arith.divf %203, %204 : vector<8x1xf32>
    %206 = vector.broadcast %205 : vector<8x1xf32> to vector<8x256xf32>
    %207 = arith.subf %199, %206 : vector<8x256xf32>
    %208 = arith.mulf %207, %207 : vector<8x256xf32>
    %cst_87 = arith.constant dense<0.000000e+00> : vector<8xf32>
    %209 = vector.multi_reduction <add>, %208, %cst_87 [1] : vector<8x256xf32> to vector<8xf32>
    %210 = vector.shape_cast %209 : vector<8xf32> to vector<8x1xf32>
    %cst_88 = arith.constant 2.560000e+02 : f32
    %211 = vector.broadcast %cst_88 : f32 to vector<8x1xf32>
    %212 = arith.divf %210, %211 : vector<8x1xf32>
    %cst_89 = arith.constant 9.99999974E-6 : f32
    %213 = vector.broadcast %cst_89 : f32 to vector<8x1xf32>
    %214 = arith.addf %212, %213 : vector<8x1xf32>
    %215 = math.rsqrt %214 : vector<8x1xf32>
    %216 = vector.broadcast %215 : vector<8x1xf32> to vector<8x256xf32>
    %217 = arith.mulf %207, %216 : vector<8x256xf32>
    %218 = vector.broadcast %200 : vector<1x256xf32> to vector<8x256xf32>
    %219 = arith.mulf %217, %218 : vector<8x256xf32>
    %220 = vector.broadcast %201 : vector<1x256xf32> to vector<8x256xf32>
    %221 = arith.addf %219, %220 : vector<8x256xf32>
    %222 = arith.truncf %221 : vector<8x256xf32> to vector<8x256xbf16>
    %c1_90 = arith.constant 1 : index
    %c0_91 = arith.constant 0 : index
    %c0_92 = arith.constant 0 : index
    %223 = vector.load %arg11[%c1_90, %c0_91, %c0_92] : memref<2x256x256xbf16, #tpu.memory_space<vmem>>, vector<1x256x256xbf16>
    %224 = vector.shape_cast %223 : vector<1x256x256xbf16> to vector<256x256xbf16>
    %cst_93 = arith.constant dense<0.000000e+00> : vector<8x256xf32>
    %225 = tpu.matmul %222, %224, %cst_93 {dimension_numbers = #tpu.dot_dimension_numbers<[1], [0], [0], [1], [0, 0, 1, 1], [], []>} : vector<8x256xbf16>, vector<256x256xbf16>, vector<8x256xf32> -> vector<8x256xf32>
    %c1_94 = arith.constant 1 : index
    %c0_95 = arith.constant 0 : index
    %226 = vector.load %arg12[%c1_94, %c0_95] : memref<2x256xf32, #tpu.memory_space<vmem>>, vector<1x256xf32>
    %227 = vector.broadcast %226 : vector<1x256xf32> to vector<8x256xf32>
    %228 = arith.addf %225, %227 : vector<8x256xf32>
    %cst_96 = arith.constant 0.000000e+00 : f32
    %229 = vector.broadcast %cst_96 : f32 to vector<8x256xf32>
    %230 = arith.maximumf %228, %229 : vector<8x256xf32>
    %231 = arith.truncf %230 : vector<8x256xf32> to vector<8x256xbf16>
    %c1_97 = arith.constant 1 : index
    %c0_98 = arith.constant 0 : index
    %c0_99 = arith.constant 0 : index
    %232 = vector.load %arg13[%c1_97, %c0_98, %c0_99] : memref<2x256x256xbf16, #tpu.memory_space<vmem>>, vector<1x256x256xbf16>
    %233 = vector.shape_cast %232 : vector<1x256x256xbf16> to vector<256x256xbf16>
    %cst_100 = arith.constant dense<0.000000e+00> : vector<8x256xf32>
    %234 = tpu.matmul %231, %233, %cst_100 {dimension_numbers = #tpu.dot_dimension_numbers<[1], [0], [0], [1], [0, 0, 1, 1], [], []>} : vector<8x256xbf16>, vector<256x256xbf16>, vector<8x256xf32> -> vector<8x256xf32>
    %c1_101 = arith.constant 1 : index
    %c0_102 = arith.constant 0 : index
    %235 = vector.load %arg14[%c1_101, %c0_102] : memref<2x256xf32, #tpu.memory_space<vmem>>, vector<1x256xf32>
    %236 = vector.broadcast %235 : vector<1x256xf32> to vector<8x256xf32>
    %237 = arith.addf %234, %236 : vector<8x256xf32>
    %238 = arith.addf %221, %237 : vector<8x256xf32>
    %c1_103 = arith.constant 1 : index
    %c0_104 = arith.constant 0 : index
    %239 = vector.load %arg15[%c1_103, %c0_104] : memref<2x256xf32, #tpu.memory_space<vmem>>, vector<1x256xf32>
    %c1_105 = arith.constant 1 : index
    %c0_106 = arith.constant 0 : index
    %240 = vector.load %arg16[%c1_105, %c0_106] : memref<2x256xf32, #tpu.memory_space<vmem>>, vector<1x256xf32>
    %cst_107 = arith.constant dense<0.000000e+00> : vector<8xf32>
    %241 = vector.multi_reduction <add>, %238, %cst_107 [1] : vector<8x256xf32> to vector<8xf32>
    %242 = vector.shape_cast %241 : vector<8xf32> to vector<8x1xf32>
    %cst_108 = arith.constant 2.560000e+02 : f32
    %243 = vector.broadcast %cst_108 : f32 to vector<8x1xf32>
    %244 = arith.divf %242, %243 : vector<8x1xf32>
    %245 = vector.broadcast %244 : vector<8x1xf32> to vector<8x256xf32>
    %246 = arith.subf %238, %245 : vector<8x256xf32>
    %247 = arith.mulf %246, %246 : vector<8x256xf32>
    %cst_109 = arith.constant dense<0.000000e+00> : vector<8xf32>
    %248 = vector.multi_reduction <add>, %247, %cst_109 [1] : vector<8x256xf32> to vector<8xf32>
    %249 = vector.shape_cast %248 : vector<8xf32> to vector<8x1xf32>
    %cst_110 = arith.constant 2.560000e+02 : f32
    %250 = vector.broadcast %cst_110 : f32 to vector<8x1xf32>
    %251 = arith.divf %249, %250 : vector<8x1xf32>
    %cst_111 = arith.constant 9.99999974E-6 : f32
    %252 = vector.broadcast %cst_111 : f32 to vector<8x1xf32>
    %253 = arith.addf %251, %252 : vector<8x1xf32>
    %254 = math.rsqrt %253 : vector<8x1xf32>
    %255 = vector.broadcast %254 : vector<8x1xf32> to vector<8x256xf32>
    %256 = arith.mulf %246, %255 : vector<8x256xf32>
    %257 = vector.broadcast %239 : vector<1x256xf32> to vector<8x256xf32>
    %258 = arith.mulf %256, %257 : vector<8x256xf32>
    %259 = vector.broadcast %240 : vector<1x256xf32> to vector<8x256xf32>
    %260 = arith.addf %258, %259 : vector<8x256xf32>
    %261 = arith.addf %4, %260 : vector<8x256xf32>
    %c0_112 = arith.constant 0 : index
    %c0_113 = arith.constant 0 : index
    %262 = vector.load %arg41[%c0_112, %c0_113] : memref<8x256xf32, #tpu.memory_space<vmem>>, vector<8x256xf32>
    tpu.vector_store %arg41[%c0_112, %c0_113], %261 {strides = array<i32>} : memref<8x256xf32, #tpu.memory_space<vmem>>, vector<8x256xf32>,
    %263 = arith.truncf %261 : vector<8x256xf32> to vector<8x256xbf16>
    %c0_114 = arith.constant 0 : index
    %c0_115 = arith.constant 0 : index
    %264 = vector.load %arg19[%c0_114, %c0_115] : memref<256x512xbf16, #tpu.memory_space<vmem>>, vector<256x512xbf16>
    %cst_116 = arith.constant dense<0.000000e+00> : vector<8x512xf32>
    %265 = tpu.matmul %263, %264, %cst_116 {dimension_numbers = #tpu.dot_dimension_numbers<[1], [0], [0], [1], [0, 0, 1, 1], [], []>} : vector<8x256xbf16>, vector<256x512xbf16>, vector<8x512xf32> -> vector<8x512xf32>
    %c0_117 = arith.constant 0 : index
    %c0_118 = arith.constant 0 : index
    %266 = vector.load %arg20[%c0_117, %c0_118] : memref<256x512xbf16, #tpu.memory_space<vmem>>, vector<256x512xbf16>
    %cst_119 = arith.constant dense<0.000000e+00> : vector<8x512xf32>
    %267 = tpu.matmul %263, %266, %cst_119 {dimension_numbers = #tpu.dot_dimension_numbers<[1], [0], [0], [1], [0, 0, 1, 1], [], []>} : vector<8x256xbf16>, vector<256x512xbf16>, vector<8x512xf32> -> vector<8x512xf32>
    %c0_120 = arith.constant 0 : index
    %c0_121 = arith.constant 0 : index
    %268 = vector.load %arg23[%c0_120, %c0_121] : memref<256x256xbf16, #tpu.memory_space<vmem>>, vector<256x256xbf16>
    %cst_122 = arith.constant dense<0.000000e+00> : vector<8x256xf32>
    %269 = tpu.matmul %263, %268, %cst_122 {dimension_numbers = #tpu.dot_dimension_numbers<[1], [0], [0], [1], [0, 0, 1, 1], [], []>} : vector<8x256xbf16>, vector<256x256xbf16>, vector<8x256xf32> -> vector<8x256xf32>
    %c0_123 = arith.constant 0 : index
    %c0_124 = arith.constant 0 : index
    %270 = vector.load %arg24[%c0_123, %c0_124] : memref<256x256xbf16, #tpu.memory_space<vmem>>, vector<256x256xbf16>
    %cst_125 = arith.constant dense<0.000000e+00> : vector<8x256xf32>
    %271 = tpu.matmul %263, %270, %cst_125 {dimension_numbers = #tpu.dot_dimension_numbers<[1], [0], [0], [1], [0, 0, 1, 1], [], []>} : vector<8x256xbf16>, vector<256x256xbf16>, vector<8x256xf32> -> vector<8x256xf32>
    %c0_126 = arith.constant 0 : index
    %c0_127 = arith.constant 0 : index
    %272 = vector.load %arg27[%c0_126, %c0_127] : memref<256x128xbf16, #tpu.memory_space<vmem>>, vector<256x128xbf16>
    %cst_128 = arith.constant dense<0.000000e+00> : vector<8x128xf32>
    %273 = tpu.matmul %263, %272, %cst_128 {dimension_numbers = #tpu.dot_dimension_numbers<[1], [0], [0], [1], [0, 0, 1, 1], [], []>} : vector<8x256xbf16>, vector<256x128xbf16>, vector<8x128xf32> -> vector<8x128xf32>
    %c0_129 = arith.constant 0 : index
    %c0_130 = arith.constant 0 : index
    %274 = vector.load %arg28[%c0_129, %c0_130] : memref<256x128xbf16, #tpu.memory_space<vmem>>, vector<256x128xbf16>
    %cst_131 = arith.constant dense<0.000000e+00> : vector<8x128xf32>
    %275 = tpu.matmul %263, %274, %cst_131 {dimension_numbers = #tpu.dot_dimension_numbers<[1], [0], [0], [1], [0, 0, 1, 1], [], []>} : vector<8x256xbf16>, vector<256x128xbf16>, vector<8x128xf32> -> vector<8x128xf32>
    %c0_132 = arith.constant 0 : index
    %c0_133 = arith.constant 0 : index
    %276 = vector.load %arg31[%c0_132, %c0_133] : memref<256x24xbf16, #tpu.memory_space<vmem>>, vector<256x24xbf16>
    %cst_134 = arith.constant dense<0.000000e+00> : vector<8x24xf32>
    %277 = tpu.matmul %263, %276, %cst_134 {dimension_numbers = #tpu.dot_dimension_numbers<[1], [0], [0], [1], [0, 0, 1, 1], [], []>} : vector<8x256xbf16>, vector<256x24xbf16>, vector<8x24xf32> -> vector<8x24xf32>
    %c0_135 = arith.constant 0 : index
    %c0_136 = arith.constant 0 : index
    %278 = vector.load %arg32[%c0_135, %c0_136] : memref<256x24xbf16, #tpu.memory_space<vmem>>, vector<256x24xbf16>
    %cst_137 = arith.constant dense<0.000000e+00> : vector<8x24xf32>
    %279 = tpu.matmul %263, %278, %cst_137 {dimension_numbers = #tpu.dot_dimension_numbers<[1], [0], [0], [1], [0, 0, 1, 1], [], []>} : vector<8x256xbf16>, vector<256x24xbf16>, vector<8x24xf32> -> vector<8x24xf32>
    %c0_138 = arith.constant 0 : index
    %c0_139 = arith.constant 0 : index
    %280 = vector.load %arg3[%c0_138, %c0_139] : memref<8x24xf32, #tpu.memory_space<vmem>>, vector<8x24xf32>
    %c0_i32 = arith.constant 0 : i32
    %c10_i32 = arith.constant 10 : i32
    %281 = arith.addi %c0_i32, %c10_i32 : i32
    %c1_i32 = arith.constant 1 : i32
    %282 = scf.for %arg43 = %c0_i32 to %281 step %c1_i32 iter_args(%arg44 = %280) -> (vector<8x24xf32>)  : i32 {
      %284 = arith.truncf %arg44 : vector<8x24xf32> to vector<8x24xbf16>
      %c0_143 = arith.constant 0 : index
      %c0_144 = arith.constant 0 : index
      %285 = vector.load %arg17[%c0_143, %c0_144] : memref<24x512xbf16, #tpu.memory_space<vmem>>, vector<24x512xbf16>
      %cst_145 = arith.constant dense<0.000000e+00> : vector<8x512xf32>
      %286 = tpu.matmul %284, %285, %cst_145 {dimension_numbers = #tpu.dot_dimension_numbers<[1], [0], [0], [1], [0, 0, 1, 1], [], []>} : vector<8x24xbf16>, vector<24x512xbf16>, vector<8x512xf32> -> vector<8x512xf32>
      %c0_146 = arith.constant 0 : index
      %c0_147 = arith.constant 0 : index
      %287 = vector.load %arg18[%c0_146, %c0_147] : memref<1x512xf32, #tpu.memory_space<vmem>>, vector<1x512xf32>
      %288 = vector.broadcast %287 : vector<1x512xf32> to vector<8x512xf32>
      %289 = arith.addf %286, %288 : vector<8x512xf32>
      %290 = arith.index_cast %arg43 : i32 to index
      %c0_148 = arith.constant 0 : index
      %291 = vector.load %arg33[%290, %c0_148] : memref<10x512xf32, #tpu.memory_space<vmem>>, vector<1x512xf32>
      %292 = arith.index_cast %arg43 : i32 to index
      %c0_149 = arith.constant 0 : index
      %293 = vector.load %arg37[%292, %c0_149] : memref<10x512xf32, #tpu.memory_space<vmem>>, vector<1x512xf32>
      %294 = vector.broadcast %291 : vector<1x512xf32> to vector<8x512xf32>
      %295 = arith.addf %265, %294 : vector<8x512xf32>
      %296 = arith.negf %295 : vector<8x512xf32>
      %297 = math.exp %296 : vector<8x512xf32>
      %cst_150 = arith.constant 1.000000e+00 : f32
      %298 = vector.broadcast %cst_150 : f32 to vector<8x512xf32>
      %299 = arith.addf %298, %297 : vector<8x512xf32>
      %300 = arith.divf %298, %299 : vector<8x512xf32>
      %301 = arith.mulf %289, %300 : vector<8x512xf32>
      %302 = vector.broadcast %293 : vector<1x512xf32> to vector<8x512xf32>
      %303 = arith.addf %267, %302 : vector<8x512xf32>
      %304 = arith.addf %301, %303 : vector<8x512xf32>
      %305 = arith.truncf %304 : vector<8x512xf32> to vector<8x512xbf16>
      %c0_151 = arith.constant 0 : index
      %c0_152 = arith.constant 0 : index
      %306 = vector.load %arg21[%c0_151, %c0_152] : memref<512x256xbf16, #tpu.memory_space<vmem>>, vector<512x256xbf16>
      %cst_153 = arith.constant dense<0.000000e+00> : vector<8x256xf32>
      %307 = tpu.matmul %305, %306, %cst_153 {dimension_numbers = #tpu.dot_dimension_numbers<[1], [0], [0], [1], [0, 0, 1, 1], [], []>} : vector<8x512xbf16>, vector<512x256xbf16>, vector<8x256xf32> -> vector<8x256xf32>
      %c0_154 = arith.constant 0 : index
      %c0_155 = arith.constant 0 : index
      %308 = vector.load %arg22[%c0_154, %c0_155] : memref<1x256xf32, #tpu.memory_space<vmem>>, vector<1x256xf32>
      %309 = vector.broadcast %308 : vector<1x256xf32> to vector<8x256xf32>
      %310 = arith.addf %307, %309 : vector<8x256xf32>
      %311 = arith.index_cast %arg43 : i32 to index
      %c0_156 = arith.constant 0 : index
      %312 = vector.load %arg34[%311, %c0_156] : memref<10x256xf32, #tpu.memory_space<vmem>>, vector<1x256xf32>
      %313 = arith.index_cast %arg43 : i32 to index
      %c0_157 = arith.constant 0 : index
      %314 = vector.load %arg38[%313, %c0_157] : memref<10x256xf32, #tpu.memory_space<vmem>>, vector<1x256xf32>
      %315 = vector.broadcast %312 : vector<1x256xf32> to vector<8x256xf32>
      %316 = arith.addf %269, %315 : vector<8x256xf32>
      %317 = arith.negf %316 : vector<8x256xf32>
      %318 = math.exp %317 : vector<8x256xf32>
      %cst_158 = arith.constant 1.000000e+00 : f32
      %319 = vector.broadcast %cst_158 : f32 to vector<8x256xf32>
      %320 = arith.addf %319, %318 : vector<8x256xf32>
      %321 = arith.divf %319, %320 : vector<8x256xf32>
      %322 = arith.mulf %310, %321 : vector<8x256xf32>
      %323 = vector.broadcast %314 : vector<1x256xf32> to vector<8x256xf32>
      %324 = arith.addf %271, %323 : vector<8x256xf32>
      %325 = arith.addf %322, %324 : vector<8x256xf32>
      %326 = arith.truncf %325 : vector<8x256xf32> to vector<8x256xbf16>
      %c0_159 = arith.constant 0 : index
      %c0_160 = arith.constant 0 : index
      %327 = vector.load %arg25[%c0_159, %c0_160] : memref<256x128xbf16, #tpu.memory_space<vmem>>, vector<256x128xbf16>
      %cst_161 = arith.constant dense<0.000000e+00> : vector<8x128xf32>
      %328 = tpu.matmul %326, %327, %cst_161 {dimension_numbers = #tpu.dot_dimension_numbers<[1], [0], [0], [1], [0, 0, 1, 1], [], []>} : vector<8x256xbf16>, vector<256x128xbf16>, vector<8x128xf32> -> vector<8x128xf32>
      %c0_162 = arith.constant 0 : index
      %c0_163 = arith.constant 0 : index
      %329 = vector.load %arg26[%c0_162, %c0_163] : memref<1x128xf32, #tpu.memory_space<vmem>>, vector<1x128xf32>
      %330 = vector.broadcast %329 : vector<1x128xf32> to vector<8x128xf32>
      %331 = arith.addf %328, %330 : vector<8x128xf32>
      %332 = arith.index_cast %arg43 : i32 to index
      %c0_164 = arith.constant 0 : index
      %333 = vector.load %arg35[%332, %c0_164] : memref<10x128xf32, #tpu.memory_space<vmem>>, vector<1x128xf32>
      %334 = arith.index_cast %arg43 : i32 to index
      %c0_165 = arith.constant 0 : index
      %335 = vector.load %arg39[%334, %c0_165] : memref<10x128xf32, #tpu.memory_space<vmem>>, vector<1x128xf32>
      %336 = vector.broadcast %333 : vector<1x128xf32> to vector<8x128xf32>
      %337 = arith.addf %273, %336 : vector<8x128xf32>
      %338 = arith.negf %337 : vector<8x128xf32>
      %339 = math.exp %338 : vector<8x128xf32>
      %cst_166 = arith.constant 1.000000e+00 : f32
      %340 = vector.broadcast %cst_166 : f32 to vector<8x128xf32>
      %341 = arith.addf %340, %339 : vector<8x128xf32>
      %342 = arith.divf %340, %341 : vector<8x128xf32>
      %343 = arith.mulf %331, %342 : vector<8x128xf32>
      %344 = vector.broadcast %335 : vector<1x128xf32> to vector<8x128xf32>
      %345 = arith.addf %275, %344 : vector<8x128xf32>
      %346 = arith.addf %343, %345 : vector<8x128xf32>
      %347 = arith.truncf %346 : vector<8x128xf32> to vector<8x128xbf16>
      %c0_167 = arith.constant 0 : index
      %c0_168 = arith.constant 0 : index
      %348 = vector.load %arg29[%c0_167, %c0_168] : memref<128x24xbf16, #tpu.memory_space<vmem>>, vector<128x24xbf16>
      %cst_169 = arith.constant dense<0.000000e+00> : vector<8x24xf32>
      %349 = tpu.matmul %347, %348, %cst_169 {dimension_numbers = #tpu.dot_dimension_numbers<[1], [0], [0], [1], [0, 0, 1, 1], [], []>} : vector<8x128xbf16>, vector<128x24xbf16>, vector<8x24xf32> -> vector<8x24xf32>
      %c0_170 = arith.constant 0 : index
      %c0_171 = arith.constant 0 : index
      %350 = vector.load %arg30[%c0_170, %c0_171] : memref<1x24xf32, #tpu.memory_space<vmem>>, vector<1x24xf32>
      %351 = vector.broadcast %350 : vector<1x24xf32> to vector<8x24xf32>
      %352 = arith.addf %349, %351 : vector<8x24xf32>
      %353 = arith.index_cast %arg43 : i32 to index
      %c0_172 = arith.constant 0 : index
      %354 = vector.load %arg36[%353, %c0_172] : memref<10x24xf32, #tpu.memory_space<vmem>>, vector<1x24xf32>
      %355 = arith.index_cast %arg43 : i32 to index
      %c0_173 = arith.constant 0 : index
      %356 = vector.load %arg40[%355, %c0_173] : memref<10x24xf32, #tpu.memory_space<vmem>>, vector<1x24xf32>
      %357 = vector.broadcast %354 : vector<1x24xf32> to vector<8x24xf32>
      %358 = arith.addf %277, %357 : vector<8x24xf32>
      %359 = arith.negf %358 : vector<8x24xf32>
      %360 = math.exp %359 : vector<8x24xf32>
      %cst_174 = arith.constant 1.000000e+00 : f32
      %361 = vector.broadcast %cst_174 : f32 to vector<8x24xf32>
      %362 = arith.addf %361, %360 : vector<8x24xf32>
      %363 = arith.divf %361, %362 : vector<8x24xf32>
      %364 = arith.mulf %352, %363 : vector<8x24xf32>
      %365 = vector.broadcast %356 : vector<1x24xf32> to vector<8x24xf32>
      %366 = arith.addf %279, %365 : vector<8x24xf32>
      %367 = arith.addf %364, %366 : vector<8x24xf32>
      %c0_175 = arith.constant 0 : index
      %368 = arith.index_cast %arg43 : i32 to index
      %369 = memref.load %arg0[%c0_175, %368] : memref<3x10xf32, #tpu.memory_space<smem>>
      %c1_176 = arith.constant 1 : index
      %370 = arith.index_cast %arg43 : i32 to index
      %371 = memref.load %arg0[%c1_176, %370] : memref<3x10xf32, #tpu.memory_space<smem>>
      %c2 = arith.constant 2 : index
      %372 = arith.index_cast %arg43 : i32 to index
      %373 = memref.load %arg0[%c2, %372] : memref<3x10xf32, #tpu.memory_space<smem>>
      %374 = vector.broadcast %369 : f32 to vector<8x24xf32>
      %375 = arith.mulf %374, %367 : vector<8x24xf32>
      %376 = arith.subf %arg44, %375 : vector<8x24xf32>
      %377 = vector.broadcast %371 : f32 to vector<8x24xf32>
      %378 = arith.mulf %376, %377 : vector<8x24xf32>
      %379 = vector.broadcast %373 : f32 to vector<8x24xf32>
      %380 = arith.mulf %379, %280 : vector<8x24xf32>
      %381 = arith.addf %378, %380 : vector<8x24xf32>
      scf.yield %381 : vector<8x24xf32>
    }
    %c10_i32_140 = arith.constant 10 : i32
    %c0_141 = arith.constant 0 : index
    %c0_142 = arith.constant 0 : index
    %283 = vector.load %arg42[%c0_141, %c0_142] : memref<8x24xf32, #tpu.memory_space<vmem>>, vector<8x24xf32>
    tpu.vector_store %arg42[%c0_141, %c0_142], %282 {strides = array<i32>} : memref<8x24xf32, #tpu.memory_space<vmem>>, vector<8x24xf32>,
    return
  }
}

</mosaic_0001>

<llo_original>
// kernel: tpu_custom_call.1
$region0: #{tpu_custom_call.1}
  #allocation0 [shape = 'u32[]', space=smem, size = 0x4, offset = 0x4, fixed_abs, tag = 'smem constant byte address 0x4 - core index']
  #allocation1 [shape = 'u32[72,128]{1,0:T(1,128)}', space=vmem, size = 0x9000, scoped, tag = 'internal scratch']
  %s0 = inlined_call_operand.smem [shape: u32[43], index: -1, kind: input, shape index: {}]
  %s1 = sld [smem:[%s0]]
  %s2 = scalar_lea.smem %s0, 1
  %s3 = sld [smem:[%s2]]
  %s4 = scalar_lea.smem %s0, 2
  %s5 = sld [smem:[%s4]]
  %s6 = scalar_lea.smem %s0, 3
  %s7 = sld [smem:[%s6]]
  %s8 = scalar_lea.smem %s0, 4
  %s9 = sld [smem:[%s8]]
  %s10 = scalar_lea.smem %s0, 5
  %s11 = sld [smem:[%s10]]
  %s12 = scalar_lea.smem %s0, 6
  %s13 = sld [smem:[%s12]]
  %s14 = scalar_lea.smem %s0, 7
  %s15 = sld [smem:[%s14]]
  %s16 = scalar_lea.smem %s0, 8
  %s17 = sld [smem:[%s16]]
  %s18 = scalar_lea.smem %s0, 9
  %s19 = sld [smem:[%s18]]
  %s20 = scalar_lea.smem %s0, 10
  %s21 = sld [smem:[%s20]]
  %s22 = scalar_lea.smem %s0, 11
  %s23 = sld [smem:[%s22]]
  %s24 = scalar_lea.smem %s0, 12
  %s25 = sld [smem:[%s24]]
  %s26 = scalar_lea.smem %s0, 13
  %s27 = sld [smem:[%s26]]
  %s28 = scalar_lea.smem %s0, 14
  %s29 = sld [smem:[%s28]]
  %s30 = scalar_lea.smem %s0, 15
  %s31 = sld [smem:[%s30]]
  %s32 = scalar_lea.smem %s0, 16
  %s33 = sld [smem:[%s32]]
  %s34 = scalar_lea.smem %s0, 17
  %s35 = sld [smem:[%s34]]
  %s36 = scalar_lea.smem %s0, 18
  %s37 = sld [smem:[%s36]]
  %s38 = scalar_lea.smem %s0, 19
  %s39 = sld [smem:[%s38]]
  %s40 = scalar_lea.smem %s0, 20
  %s41 = sld [smem:[%s40]]
  %s42 = scalar_lea.smem %s0, 21
  %s43 = sld [smem:[%s42]]
  %s44 = scalar_lea.smem %s0, 22
  %s45 = sld [smem:[%s44]]
  %s46 = scalar_lea.smem %s0, 23
  %s47 = sld [smem:[%s46]]
  %s48 = scalar_lea.smem %s0, 24
  %s49 = sld [smem:[%s48]]
  %s50 = scalar_lea.smem %s0, 25
  %s51 = sld [smem:[%s50]]
  %s52 = scalar_lea.smem %s0, 26
  %s53 = sld [smem:[%s52]]
  %s54 = scalar_lea.smem %s0, 27
  %s55 = sld [smem:[%s54]]
  %s56 = scalar_lea.smem %s0, 28
  %s57 = sld [smem:[%s56]]
  %s58 = scalar_lea.smem %s0, 29
  %s59 = sld [smem:[%s58]]
  %s60 = scalar_lea.smem %s0, 30
  %s61 = sld [smem:[%s60]]
  %s62 = scalar_lea.smem %s0, 31
  %s63 = sld [smem:[%s62]]
  %s64 = scalar_lea.smem %s0, 32
  %s65 = sld [smem:[%s64]]
  %s66 = scalar_lea.smem %s0, 33
  %s67 = sld [smem:[%s66]]
  %s68 = scalar_lea.smem %s0, 34
  %s69 = sld [smem:[%s68]]
  %s70 = scalar_lea.smem %s0, 35
  %s71 = sld [smem:[%s70]]
  %s72 = scalar_lea.smem %s0, 36
  %s73 = sld [smem:[%s72]]
  %s74 = scalar_lea.smem %s0, 37
  %s75 = sld [smem:[%s74]]
  %s76 = scalar_lea.smem %s0, 38
  %s77 = sld [smem:[%s76]]
  %s78 = scalar_lea.smem %s0, 39
  %s79 = sld [smem:[%s78]]
  %s80 = scalar_lea.smem %s0, 40
  %s81 = sld [smem:[%s80]]
  %s82 = scalar_lea.smem %s0, 41
  %s83 = sld [smem:[%s82]]
  %s84 = scalar_lea.smem %s0, 42
  %s85 = sld [smem:[%s84]]
  %86 = xla_tuple %s83, %s85
  %s87 = sld [smem:[#allocation0]]
  $region321: #{tpu_custom_call.1} parent=0
    _
  %s89 = ssub.s32 1, %s87
  %s90 = scalar_select 0, %s89, %s87
  $region1: #{tpu_custom_call.1} parent=0
    #allocation2 [shape = 'u8[2048]{0}', space=smem, size = 0x800, scoped, tag = 'input window, operand 0, single buffered']
    #allocation3 [shape = 's32[1]{0}', space=sflag, size = 0x4, scoped, tag = 'scoped memory for tpu_custom_call.1']
    #allocation4 [shape = 's32[1]{0}', space=sflag, size = 0x4, scoped, tag = 'scoped memory for tpu_custom_call.1']
    #allocation5 [shape = 's32[1]{0}', space=sflag, size = 0x4, scoped, tag = 'scoped memory for tpu_custom_call.1']
    #allocation6 [shape = 'u8[4096]{0}', space=vmem, size = 0x1000, scoped, tag = 'input window, operand 1, single buffered']
    #allocation7 [shape = 'u8[4096]{0}', space=vmem, size = 0x1000, scoped, tag = 'input window, operand 2, single buffered']
    #allocation8 [shape = 's32[1]{0}', space=sflag, size = 0x4, scoped, tag = 'scoped memory for tpu_custom_call.1']
    #allocation9 [shape = 'u8[4096]{0}', space=vmem, size = 0x1000, scoped, tag = 'input window, operand 3, single buffered']
    #allocation10 [shape = 'u8[16384]{0}', space=vmem, size = 0x4000, scoped, tag = 'input window, operand 4, single buffered']
    #allocation11 [shape = 's32[1]{0}', space=sflag, size = 0x4, scoped, tag = 'scoped memory for tpu_custom_call.1']
    #allocation12 [shape = 'u8[786432]{0}', space=vmem, size = 0xc0000, scoped, tag = 'input window, operand 5, single buffered']
    #allocation13 [shape = 'u8[6144]{0}', space=vmem, size = 0x1800, scoped, tag = 'input window, operand 6, single buffered']
    #allocation14 [shape = 's32[1]{0}', space=sflag, size = 0x4, scoped, tag = 'scoped memory for tpu_custom_call.1']
    #allocation15 [shape = 'u8[262144]{0}', space=vmem, size = 0x40000, scoped, tag = 'input window, operand 7, single buffered']
    #allocation16 [shape = 'u8[2048]{0}', space=vmem, size = 0x800, scoped, tag = 'input window, operand 8, single buffered']
    #allocation17 [shape = 's32[1]{0}', space=sflag, size = 0x4, scoped, tag = 'scoped memory for tpu_custom_call.1']
    #allocation18 [shape = 'u8[2048]{0}', space=vmem, size = 0x800, scoped, tag = 'input window, operand 9, single buffered']
    #allocation19 [shape = 'u8[2048]{0}', space=vmem, size = 0x800, scoped, tag = 'input window, operand 10, single buffered']
    #allocation20 [shape = 's32[1]{0}', space=sflag, size = 0x4, scoped, tag = 'scoped memory for tpu_custom_call.1']
    #allocation21 [shape = 'u8[262144]{0}', space=vmem, size = 0x40000, scoped, tag = 'input window, operand 11, single buffered']
    #allocation22 [shape = 'u8[2048]{0}', space=vmem, size = 0x800, scoped, tag = 'input window, operand 12, single buffered']
    #allocation23 [shape = 's32[1]{0}', space=sflag, size = 0x4, scoped, tag = 'scoped memory for tpu_custom_call.1']
    #allocation24 [shape = 'u8[262144]{0}', space=vmem, size = 0x40000, scoped, tag = 'input window, operand 13, single buffered']
    #allocation25 [shape = 'u8[2048]{0}', space=vmem, size = 0x800, scoped, tag = 'input window, operand 14, single buffered']
    #allocation26 [shape = 's32[1]{0}', space=sflag, size = 0x4, scoped, tag = 'scoped memory for tpu_custom_call.1']
    #allocation27 [shape = 'u8[2048]{0}', space=vmem, size = 0x800, scoped, tag = 'input window, operand 15, single buffered']
    #allocation28 [shape = 'u8[2048]{0}', space=vmem, size = 0x800, scoped, tag = 'input window, operand 16, single buffered']
    #allocation29 [shape = 's32[1]{0}', space=sflag, size = 0x4, scoped, tag = 'scoped memory for tpu_custom_call.1']
    #allocation30 [shape = 'u8[24576]{0}', space=vmem, size = 0x6000, scoped, tag = 'input window, operand 17, single buffered']
    #allocation31 [shape = 'u8[2048]{0}', space=vmem, size = 0x800, scoped, tag = 'input window, operand 18, single buffered']
    #allocation32 [shape = 's32[1]{0}', space=sflag, size = 0x4, scoped, tag = 'scoped memory for tpu_custom_call.1']
    #allocation33 [shape = 'u8[262144]{0}', space=vmem, size = 0x40000, scoped, tag = 'input window, operand 19, single buffered']
    #allocation34 [shape = 'u8[262144]{0}', space=vmem, size = 0x40000, scoped, tag = 'input window, operand 20, single buffered']
    #allocation35 [shape = 's32[1]{0}', space=sflag, size = 0x4, scoped, tag = 'scoped memory for tpu_custom_call.1']
    #allocation36 [shape = 'u8[262144]{0}', space=vmem, size = 0x40000, scoped, tag = 'input window, operand 21, single buffered']
    #allocation37 [shape = 'u8[1024]{0}', space=vmem, size = 0x400, scoped, tag = 'input window, operand 22, single buffered']
    #allocation38 [shape = 's32[1]{0}', space=sflag, size = 0x4, scoped, tag = 'scoped memory for tpu_custom_call.1']
    #allocation39 [shape = 'u8[131072]{0}', space=vmem, size = 0x20000, scoped, tag = 'input window, operand 24, single buffered']
    #allocation40 [shape = 'u8[65536]{0}', space=vmem, size = 0x10000, scoped, tag = 'input window, operand 25, single buffered']
    #allocation41 [shape = 's32[1]{0}', space=sflag, size = 0x4, scoped, tag = 'scoped memory for tpu_custom_call.1']
    #allocation42 [shape = 'u8[65536]{0}', space=vmem, size = 0x10000, scoped, tag = 'input window, operand 27, single buffered']
    #allocation43 [shape = 'u8[65536]{0}', space=vmem, size = 0x10000, scoped, tag = 'input window, operand 28, single buffered']
    #allocation44 [shape = 's32[1]{0}', space=sflag, size = 0x4, scoped, tag = 'scoped memory for tpu_custom_call.1']
    #allocation45 [shape = 'u8[512]{0}', space=vmem, size = 0x400, scoped, tag = 'input window, operand 30, single buffered']
    #allocation46 [shape = 'u8[16384]{0}', space=vmem, size = 0x4000, scoped, tag = 'input window, operand 34, single buffered']
    #allocation47 [shape = 's32[1]{0}', space=sflag, size = 0x4, scoped, tag = 'scoped memory for tpu_custom_call.1']
    #allocation48 [shape = 'u8[32768]{0}', space=vmem, size = 0x8000, scoped, tag = 'input window, operand 37, single buffered']
    #allocation49 [shape = 'u8[16384]{0}', space=vmem, size = 0x4000, scoped, tag = 'input window, operand 38, single buffered']
    #allocation50 [shape = 's32[1]{0}', space=sflag, size = 0x4, scoped, tag = 'scoped memory for tpu_custom_call.1']
    #allocation51 [shape = 'u8[8192]{0}', space=vmem, size = 0x2000, scoped, tag = 'input window, operand 39, single buffered']
    #allocation52 [shape = 'u8[8192]{0}', space=vmem, size = 0x2000, scoped, tag = 'input window, operand 40, single buffered']
    #allocation53 [shape = 's32[1]{0}', space=sflag, size = 0x4, scoped, tag = 'scoped memory for tpu_custom_call.1']
    #allocation54 [shape = 'u8[8192]{0}', space=vmem, size = 0x2000, scoped, tag = 'output window, operand 0, single buffered']
    #allocation55 [shape = 'u8[4096]{0}', space=vmem, size = 0x1000, scoped, tag = 'output window, operand 1, single buffered']
    #allocation56 [shape = 's32[1]{0}', space=sflag, size = 0x4, scoped, tag = 'scoped memory for tpu_custom_call.1']
    %91 = vsyncpa [#allocation5], 0
    %92 = vsyncpa [#allocation3], 0
    %93 = vsyncpa [#allocation8], 0
    %94 = vsyncpa [#allocation11], 0
    %95 = vsyncpa [#allocation14], 0
    %96 = vsyncpa [#allocation17], 0
    %97 = vsyncpa [#allocation20], 0
    %98 = vsyncpa [#allocation23], 0
    %99 = vsyncpa [#allocation26], 0
    %100 = vsyncpa [#allocation29], 0
    %101 = vsyncpa [#allocation32], 0
    %102 = vsyncpa [#allocation35], 0
    %103 = vsyncpa [#allocation38], 0
    %104 = vsyncpa [#allocation41], 0
    %105 = vsyncpa [#allocation44], 0
    %106 = vsyncpa [#allocation47], 0
    %107 = vsyncpa [#allocation50], 0
    %108 = vsyncpa [#allocation53], 0
    %109 = vsyncpa [#allocation4], 0
    %110 = vsyncpa [#allocation56], 0
    // Predicated region
    $region2: #{tpu_custom_call.1} parent=1 // pred_check
      _
    $region3: #{tpu_custom_call.1} parent=1 // pred_check_branch
      %112 = sbr.rel (0) target = $region5
    $region4: #{tpu_custom_call.1} parent=1 // pred_region
      %114 = vsyncadd [#allocation5], 0
      %s116 = sshll.u32 %s1, 4
      %s117 = int_to_ptr.hbm [resolvable:$true] %s116
      %119 = dma.hbm_to_smem %s117, 64, [#allocation2], [#allocation5]
    $region5: #{tpu_custom_call.1} parent=1 // pred_fallthru
      _
    // Predicated region
    $region6: #{tpu_custom_call.1} parent=1 // pred_check
      _
    $region7: #{tpu_custom_call.1} parent=1 // pred_check_branch
      %121 = sbr.rel (0) target = $region9
    $region8: #{tpu_custom_call.1} parent=1 // pred_region
      %123 = vsyncadd [#allocation3], 0
      %s125 = sshll.u32 %s3, 4
      %s126 = int_to_ptr.hbm [resolvable:$true] %s125
      %s127 = sshll.u32 [#allocation6], 4
      %s128 = int_to_ptr.vmem [resolvable:$true] %s127
      %130 = dma.hbm_to_vmem [thread:$0]  %s126, 128, %s128, [#allocation3]
    $region9: #{tpu_custom_call.1} parent=1 // pred_fallthru
      _
    // Predicated region
    $region10: #{tpu_custom_call.1} parent=1 // pred_check
      _
    $region11: #{tpu_custom_call.1} parent=1 // pred_check_branch
      %132 = sbr.rel (0) target = $region13
    $region12: #{tpu_custom_call.1} parent=1 // pred_region
      %134 = vsyncadd [#allocation8], 0
      %s136 = sshll.u32 %s5, 4
      %s137 = int_to_ptr.hbm [resolvable:$true] %s136
      %s138 = sshll.u32 [#allocation7], 4
      %s139 = int_to_ptr.vmem [resolvable:$true] %s138
      %141 = dma.hbm_to_vmem [thread:$0]  %s137, 128, %s139, [#allocation8]
    $region13: #{tpu_custom_call.1} parent=1 // pred_fallthru
      _
    // Predicated region
    $region14: #{tpu_custom_call.1} parent=1 // pred_check
      _
    $region15: #{tpu_custom_call.1} parent=1 // pred_check_branch
      %143 = sbr.rel (0) target = $region17
    $region16: #{tpu_custom_call.1} parent=1 // pred_region
      %145 = vsyncadd [#allocation8], 0
      %s147 = sshll.u32 %s7, 4
      %s148 = int_to_ptr.hbm [resolvable:$true] %s147
      %s149 = sshll.u32 [#allocation9], 4
      %s150 = int_to_ptr.vmem [resolvable:$true] %s149
      %152 = dma.hbm_to_vmem [thread:$0]  %s148, 128, %s150, [#allocation8]
    $region17: #{tpu_custom_call.1} parent=1 // pred_fallthru
      _
    // Predicated region
    $region18: #{tpu_custom_call.1} parent=1 // pred_check
      _
    $region19: #{tpu_custom_call.1} parent=1 // pred_check_branch
      %154 = sbr.rel (0) target = $region21
    $region20: #{tpu_custom_call.1} parent=1 // pred_region
      %156 = vsyncadd [#allocation11], 0
      %s157 = sshll.u32 %s9, 4
      %s158 = int_to_ptr.hbm [resolvable:$true] %s157
      %s159 = sshll.u32 [#allocation10], 4
      %s160 = int_to_ptr.vmem [resolvable:$true] %s159
      %165 = dma.hbm_to_vmem [thread:$0]  %s158, 512, %s160, [#allocation11], 128, 128, 8
    $region21: #{tpu_custom_call.1} parent=1 // pred_fallthru
      _
    // Predicated region
    $region22: #{tpu_custom_call.1} parent=1 // pred_check
      _
    $region23: #{tpu_custom_call.1} parent=1 // pred_check_branch
      %167 = sbr.rel (0) target = $region25
    $region24: #{tpu_custom_call.1} parent=1 // pred_region
      %169 = vsyncadd [#allocation11], 0
      %s170 = sshll.u32 %s11, 4
      %s171 = int_to_ptr.hbm [resolvable:$true] %s170
      %s172 = sshll.u32 [#allocation12], 4
      %s173 = int_to_ptr.vmem [resolvable:$true] %s172
      %178 = dma.hbm_to_vmem [thread:$0]  %s171, 24576, %s173, [#allocation11], 384, 384, 24
    $region25: #{tpu_custom_call.1} parent=1 // pred_fallthru
      _
    // Predicated region
    $region26: #{tpu_custom_call.1} parent=1 // pred_check
      _
    $region27: #{tpu_custom_call.1} parent=1 // pred_check_branch
      %180 = sbr.rel (0) target = $region29
    $region28: #{tpu_custom_call.1} parent=1 // pred_region
      %182 = vsyncadd [#allocation14], 0
      %s184 = sshll.u32 %s13, 4
      %s185 = int_to_ptr.hbm [resolvable:$true] %s184
      %s186 = sshll.u32 [#allocation13], 4
      %s187 = int_to_ptr.vmem [resolvable:$true] %s186
      %189 = dma.hbm_to_vmem [thread:$0]  %s185, 192, %s187, [#allocation14]
    $region29: #{tpu_custom_call.1} parent=1 // pred_fallthru
      _
    // Predicated region
    $region30: #{tpu_custom_call.1} parent=1 // pred_check
      _
    $region31: #{tpu_custom_call.1} parent=1 // pred_check_branch
      %191 = sbr.rel (0) target = $region33
    $region32: #{tpu_custom_call.1} parent=1 // pred_region
      %193 = vsyncadd [#allocation14], 0
      %s194 = sshll.u32 %s15, 4
      %s195 = int_to_ptr.hbm [resolvable:$true] %s194
      %s196 = sshll.u32 [#allocation15], 4
      %s197 = int_to_ptr.vmem [resolvable:$true] %s196
      %202 = dma.hbm_to_vmem [thread:$0]  %s195, 8192, %s197, [#allocation14], 128, 128, 8
    $region33: #{tpu_custom_call.1} parent=1 // pred_fallthru
      _
    // Predicated region
    $region34: #{tpu_custom_call.1} parent=1 // pred_check
      _
    $region35: #{tpu_custom_call.1} parent=1 // pred_check_branch
      %204 = sbr.rel (0) target = $region37
    $region36: #{tpu_custom_call.1} parent=1 // pred_region
      %206 = vsyncadd [#allocation17], 0
      %s208 = sshll.u32 %s17, 4
      %s209 = int_to_ptr.hbm [resolvable:$true] %s208
      %s210 = sshll.u32 [#allocation16], 4
      %s211 = int_to_ptr.vmem [resolvable:$true] %s210
      %213 = dma.hbm_to_vmem [thread:$0]  %s209, 64, %s211, [#allocation17]
    $region37: #{tpu_custom_call.1} parent=1 // pred_fallthru
      _
    // Predicated region
    $region38: #{tpu_custom_call.1} parent=1 // pred_check
      _
    $region39: #{tpu_custom_call.1} parent=1 // pred_check_branch
      %215 = sbr.rel (0) target = $region41
    $region40: #{tpu_custom_call.1} parent=1 // pred_region
      %217 = vsyncadd [#allocation17], 0
      %s219 = sshll.u32 %s19, 4
      %s220 = int_to_ptr.hbm [resolvable:$true] %s219
      %s221 = sshll.u32 [#allocation18], 4
      %s222 = int_to_ptr.vmem [resolvable:$true] %s221
      %224 = dma.hbm_to_vmem [thread:$0]  %s220, 64, %s222, [#allocation17]
    $region41: #{tpu_custom_call.1} parent=1 // pred_fallthru
      _
    // Predicated region
    $region42: #{tpu_custom_call.1} parent=1 // pred_check
      _
    $region43: #{tpu_custom_call.1} parent=1 // pred_check_branch
      %226 = sbr.rel (0) target = $region45
    $region44: #{tpu_custom_call.1} parent=1 // pred_region
      %228 = vsyncadd [#allocation20], 0
      %s230 = sshll.u32 %s21, 4
      %s231 = int_to_ptr.hbm [resolvable:$true] %s230
      %s232 = sshll.u32 [#allocation19], 4
      %s233 = int_to_ptr.vmem [resolvable:$true] %s232
      %235 = dma.hbm_to_vmem [thread:$0]  %s231, 64, %s233, [#allocation20]
    $region45: #{tpu_custom_call.1} parent=1 // pred_fallthru
      _
    // Predicated region
    $region46: #{tpu_custom_call.1} parent=1 // pred_check
      _
    $region47: #{tpu_custom_call.1} parent=1 // pred_check_branch
      %237 = sbr.rel (0) target = $region49
    $region48: #{tpu_custom_call.1} parent=1 // pred_region
      %239 = vsyncadd [#allocation20], 0
      %s240 = sshll.u32 %s23, 4
      %s241 = int_to_ptr.hbm [resolvable:$true] %s240
      %s242 = sshll.u32 [#allocation21], 4
      %s243 = int_to_ptr.vmem [resolvable:$true] %s242
      %248 = dma.hbm_to_vmem [thread:$0]  %s241, 8192, %s243, [#allocation20], 128, 128, 8
    $region49: #{tpu_custom_call.1} parent=1 // pred_fallthru
      _
    // Predicated region
    $region50: #{tpu_custom_call.1} parent=1 // pred_check
      _
    $region51: #{tpu_custom_call.1} parent=1 // pred_check_branch
      %250 = sbr.rel (0) target = $region53
    $region52: #{tpu_custom_call.1} parent=1 // pred_region
      %252 = vsyncadd [#allocation23], 0
      %s254 = sshll.u32 %s25, 4
      %s255 = int_to_ptr.hbm [resolvable:$true] %s254
      %s256 = sshll.u32 [#allocation22], 4
      %s257 = int_to_ptr.vmem [resolvable:$true] %s256
      %259 = dma.hbm_to_vmem [thread:$0]  %s255, 64, %s257, [#allocation23]
    $region53: #{tpu_custom_call.1} parent=1 // pred_fallthru
      _
    // Predicated region
    $region54: #{tpu_custom_call.1} parent=1 // pred_check
      _
    $region55: #{tpu_custom_call.1} parent=1 // pred_check_branch
      %261 = sbr.rel (0) target = $region57
    $region56: #{tpu_custom_call.1} parent=1 // pred_region
      %263 = vsyncadd [#allocation23], 0
      %s264 = sshll.u32 %s27, 4
      %s265 = int_to_ptr.hbm [resolvable:$true] %s264
      %s266 = sshll.u32 [#allocation24], 4
      %s267 = int_to_ptr.vmem [resolvable:$true] %s266
      %272 = dma.hbm_to_vmem [thread:$0]  %s265, 8192, %s267, [#allocation23], 128, 128, 8
    $region57: #{tpu_custom_call.1} parent=1 // pred_fallthru
      _
    // Predicated region
    $region58: #{tpu_custom_call.1} parent=1 // pred_check
      _
    $region59: #{tpu_custom_call.1} parent=1 // pred_check_branch
      %274 = sbr.rel (0) target = $region61
    $region60: #{tpu_custom_call.1} parent=1 // pred_region
      %276 = vsyncadd [#allocation26], 0
      %s278 = sshll.u32 %s29, 4
      %s279 = int_to_ptr.hbm [resolvable:$true] %s278
      %s280 = sshll.u32 [#allocation25], 4
      %s281 = int_to_ptr.vmem [resolvable:$true] %s280
      %283 = dma.hbm_to_vmem [thread:$0]  %s279, 64, %s281, [#allocation26]
    $region61: #{tpu_custom_call.1} parent=1 // pred_fallthru
      _
    // Predicated region
    $region62: #{tpu_custom_call.1} parent=1 // pred_check
      _
    $region63: #{tpu_custom_call.1} parent=1 // pred_check_branch
      %285 = sbr.rel (0) target = $region65
    $region64: #{tpu_custom_call.1} parent=1 // pred_region
      %287 = vsyncadd [#allocation26], 0
      %s289 = sshll.u32 %s31, 4
      %s290 = int_to_ptr.hbm [resolvable:$true] %s289
      %s291 = sshll.u32 [#allocation27], 4
      %s292 = int_to_ptr.vmem [resolvable:$true] %s291
      %294 = dma.hbm_to_vmem [thread:$0]  %s290, 64, %s292, [#allocation26]
    $region65: #{tpu_custom_call.1} parent=1 // pred_fallthru
      _
    // Predicated region
    $region66: #{tpu_custom_call.1} parent=1 // pred_check
      _
    $region67: #{tpu_custom_call.1} parent=1 // pred_check_branch
      %296 = sbr.rel (0) target = $region69
    $region68: #{tpu_custom_call.1} parent=1 // pred_region
      %298 = vsyncadd [#allocation29], 0
      %s300 = sshll.u32 %s33, 4
      %s301 = int_to_ptr.hbm [resolvable:$true] %s300
      %s302 = sshll.u32 [#allocation28], 4
      %s303 = int_to_ptr.vmem [resolvable:$true] %s302
      %305 = dma.hbm_to_vmem [thread:$0]  %s301, 64, %s303, [#allocation29]
    $region69: #{tpu_custom_call.1} parent=1 // pred_fallthru
      _
    // Predicated region
    $region70: #{tpu_custom_call.1} parent=1 // pred_check
      _
    $region71: #{tpu_custom_call.1} parent=1 // pred_check_branch
      %307 = sbr.rel (0) target = $region73
    $region72: #{tpu_custom_call.1} parent=1 // pred_region
      %309 = vsyncadd [#allocation29], 0
      %s310 = sshll.u32 %s35, 4
      %s311 = int_to_ptr.hbm [resolvable:$true] %s310
      %s312 = sshll.u32 [#allocation30], 4
      %s313 = int_to_ptr.vmem [resolvable:$true] %s312
      %318 = dma.hbm_to_vmem [thread:$0]  %s311, 768, %s313, [#allocation29], 256, 256, 16
    $region73: #{tpu_custom_call.1} parent=1 // pred_fallthru
      _
    // Predicated region
    $region74: #{tpu_custom_call.1} parent=1 // pred_check
      _
    $region75: #{tpu_custom_call.1} parent=1 // pred_check_branch
      %320 = sbr.rel (0) target = $region77
    $region76: #{tpu_custom_call.1} parent=1 // pred_region
      %322 = vsyncadd [#allocation32], 0
      %s324 = sshll.u32 %s37, 4
      %s325 = int_to_ptr.hbm [resolvable:$true] %s324
      %s326 = sshll.u32 [#allocation31], 4
      %s327 = int_to_ptr.vmem [resolvable:$true] %s326
      %329 = dma.hbm_to_vmem [thread:$0]  %s325, 64, %s327, [#allocation32]
    $region77: #{tpu_custom_call.1} parent=1 // pred_fallthru
      _
    // Predicated region
    $region78: #{tpu_custom_call.1} parent=1 // pred_check
      _
    $region79: #{tpu_custom_call.1} parent=1 // pred_check_branch
      %331 = sbr.rel (0) target = $region81
    $region80: #{tpu_custom_call.1} parent=1 // pred_region
      %333 = vsyncadd [#allocation32], 0
      %s334 = sshll.u32 %s39, 4
      %s335 = int_to_ptr.hbm [resolvable:$true] %s334
      %s336 = sshll.u32 [#allocation33], 4
      %s337 = int_to_ptr.vmem [resolvable:$true] %s336
      %342 = dma.hbm_to_vmem [thread:$0]  %s335, 8192, %s337, [#allocation32], 256, 256, 16
    $region81: #{tpu_custom_call.1} parent=1 // pred_fallthru
      _
    // Predicated region
    $region82: #{tpu_custom_call.1} parent=1 // pred_check
      _
    $region83: #{tpu_custom_call.1} parent=1 // pred_check_branch
      %344 = sbr.rel (0) target = $region85
    $region84: #{tpu_custom_call.1} parent=1 // pred_region
      %346 = vsyncadd [#allocation35], 0
      %s347 = sshll.u32 %s41, 4
      %s348 = int_to_ptr.hbm [resolvable:$true] %s347
      %s349 = sshll.u32 [#allocation34], 4
      %s350 = int_to_ptr.vmem [resolvable:$true] %s349
      %355 = dma.hbm_to_vmem [thread:$0]  %s348, 8192, %s350, [#allocation35], 256, 256, 16
    $region85: #{tpu_custom_call.1} parent=1 // pred_fallthru
      _
    // Predicated region
    $region86: #{tpu_custom_call.1} parent=1 // pred_check
      _
    $region87: #{tpu_custom_call.1} parent=1 // pred_check_branch
      %357 = sbr.rel (0) target = $region89
    $region88: #{tpu_custom_call.1} parent=1 // pred_region
      %359 = vsyncadd [#allocation35], 0
      %s360 = sshll.u32 %s43, 4
      %s361 = int_to_ptr.hbm [resolvable:$true] %s360
      %s362 = sshll.u32 [#allocation36], 4
      %s363 = int_to_ptr.vmem [resolvable:$true] %s362
      %368 = dma.hbm_to_vmem [thread:$0]  %s361, 8192, %s363, [#allocation35], 128, 128, 8
    $region89: #{tpu_custom_call.1} parent=1 // pred_fallthru
      _
    // Predicated region
    $region90: #{tpu_custom_call.1} parent=1 // pred_check
      _
    $region91: #{tpu_custom_call.1} parent=1 // pred_check_branch
      %370 = sbr.rel (0) target = $region93
    $region92: #{tpu_custom_call.1} parent=1 // pred_region
      %372 = vsyncadd [#allocation38], 0
      %s374 = sshll.u32 %s45, 4
      %s375 = int_to_ptr.hbm [resolvable:$true] %s374
      %s376 = sshll.u32 [#allocation37], 4
      %s377 = int_to_ptr.vmem [resolvable:$true] %s376
      %379 = dma.hbm_to_vmem [thread:$0]  %s375, 32, %s377, [#allocation38]
    $region93: #{tpu_custom_call.1} parent=1 // pred_fallthru
      _
    // Predicated region
    $region94: #{tpu_custom_call.1} parent=1 // pred_check
      _
    $region95: #{tpu_custom_call.1} parent=1 // pred_check_branch
      %381 = sbr.rel (0) target = $region97
    $region96: #{tpu_custom_call.1} parent=1 // pred_region
      _
    $region97: #{tpu_custom_call.1} parent=1 // pred_fallthru
      _
    // Predicated region
    $region98: #{tpu_custom_call.1} parent=1 // pred_check
      _
    $region99: #{tpu_custom_call.1} parent=1 // pred_check_branch
      %383 = sbr.rel (0) target = $region101
    $region100: #{tpu_custom_call.1} parent=1 // pred_region
      %385 = vsyncadd [#allocation38], 0
      %s386 = sshll.u32 %s49, 4
      %s387 = int_to_ptr.hbm [resolvable:$true] %s386
      %s388 = sshll.u32 [#allocation39], 4
      %s389 = int_to_ptr.vmem [resolvable:$true] %s388
      %394 = dma.hbm_to_vmem [thread:$0]  %s387, 4096, %s389, [#allocation38], 128, 128, 8
    $region101: #{tpu_custom_call.1} parent=1 // pred_fallthru
      _
    // Predicated region
    $region102: #{tpu_custom_call.1} parent=1 // pred_check
      _
    $region103: #{tpu_custom_call.1} parent=1 // pred_check_branch
      %396 = sbr.rel (0) target = $region105
    $region104: #{tpu_custom_call.1} parent=1 // pred_region
      %398 = vsyncadd [#allocation41], 0
      %s399 = sshll.u32 %s51, 4
      %s400 = int_to_ptr.hbm [resolvable:$true] %s399
      %s401 = sshll.u32 [#allocation40], 4
      %s402 = int_to_ptr.vmem [resolvable:$true] %s401
      %407 = dma.hbm_to_vmem [thread:$0]  %s400, 2048, %s402, [#allocation41], 64, 64, 4
    $region105: #{tpu_custom_call.1} parent=1 // pred_fallthru
      _
    // Predicated region
    $region106: #{tpu_custom_call.1} parent=1 // pred_check
      _
    $region107: #{tpu_custom_call.1} parent=1 // pred_check_branch
      %409 = sbr.rel (0) target = $region109
    $region108: #{tpu_custom_call.1} parent=1 // pred_region
      _
    $region109: #{tpu_custom_call.1} parent=1 // pred_fallthru
      _
    // Predicated region
    $region110: #{tpu_custom_call.1} parent=1 // pred_check
      _
    $region111: #{tpu_custom_call.1} parent=1 // pred_check_branch
      %411 = sbr.rel (0) target = $region113
    $region112: #{tpu_custom_call.1} parent=1 // pred_region
      %413 = vsyncadd [#allocation41], 0
      %s414 = sshll.u32 %s55, 4
      %s415 = int_to_ptr.hbm [resolvable:$true] %s414
      %s416 = sshll.u32 [#allocation42], 4
      %s417 = int_to_ptr.vmem [resolvable:$true] %s416
      %422 = dma.hbm_to_vmem [thread:$0]  %s415, 2048, %s417, [#allocation41], 64, 64, 4
    $region113: #{tpu_custom_call.1} parent=1 // pred_fallthru
      _
    // Predicated region
    $region114: #{tpu_custom_call.1} parent=1 // pred_check
      _
    $region115: #{tpu_custom_call.1} parent=1 // pred_check_branch
      %424 = sbr.rel (0) target = $region117
    $region116: #{tpu_custom_call.1} parent=1 // pred_region
      %426 = vsyncadd [#allocation44], 0
      %s427 = sshll.u32 %s57, 4
      %s428 = int_to_ptr.hbm [resolvable:$true] %s427
      %s429 = sshll.u32 [#allocation43], 4
      %s430 = int_to_ptr.vmem [resolvable:$true] %s429
      %435 = dma.hbm_to_vmem [thread:$0]  %s428, 2048, %s430, [#allocation44], 64, 64, 4
    $region117: #{tpu_custom_call.1} parent=1 // pred_fallthru
      _
    // Predicated region
    $region118: #{tpu_custom_call.1} parent=1 // pred_check
      _
    $region119: #{tpu_custom_call.1} parent=1 // pred_check_branch
      %437 = sbr.rel (0) target = $region121
    $region120: #{tpu_custom_call.1} parent=1 // pred_region
      _
    $region121: #{tpu_custom_call.1} parent=1 // pred_fallthru
      _
    // Predicated region
    $region122: #{tpu_custom_call.1} parent=1 // pred_check
      _
    $region123: #{tpu_custom_call.1} parent=1 // pred_check_branch
      %439 = sbr.rel (0) target = $region125
    $region124: #{tpu_custom_call.1} parent=1 // pred_region
      %441 = vsyncadd [#allocation44], 0
      %s443 = sshll.u32 %s61, 4
      %s444 = int_to_ptr.hbm [resolvable:$true] %s443
      %s445 = sshll.u32 [#allocation45], 4
      %s446 = int_to_ptr.vmem [resolvable:$true] %s445
      %448 = dma.hbm_to_vmem [thread:$0]  %s444, 16, %s446, [#allocation44]
    $region125: #{tpu_custom_call.1} parent=1 // pred_fallthru
      _
    // Predicated region
    $region126: #{tpu_custom_call.1} parent=1 // pred_check
      _
    $region127: #{tpu_custom_call.1} parent=1 // pred_check_branch
      %450 = sbr.rel (0) target = $region129
    $region128: #{tpu_custom_call.1} parent=1 // pred_region
      _
    $region129: #{tpu_custom_call.1} parent=1 // pred_fallthru
      _
    // Predicated region
    $region130: #{tpu_custom_call.1} parent=1 // pred_check
      _
    $region131: #{tpu_custom_call.1} parent=1 // pred_check_branch
      %452 = sbr.rel (0) target = $region133
    $region132: #{tpu_custom_call.1} parent=1 // pred_region
      _
    $region133: #{tpu_custom_call.1} parent=1 // pred_fallthru
      _
    // Predicated region
    $region134: #{tpu_custom_call.1} parent=1 // pred_check
      _
    $region135: #{tpu_custom_call.1} parent=1 // pred_check_branch
      %454 = sbr.rel (0) target = $region137
    $region136: #{tpu_custom_call.1} parent=1 // pred_region
      _
    $region137: #{tpu_custom_call.1} parent=1 // pred_fallthru
      _
    // Predicated region
    $region138: #{tpu_custom_call.1} parent=1 // pred_check
      _
    $region139: #{tpu_custom_call.1} parent=1 // pred_check_branch
      %456 = sbr.rel (0) target = $region141
    $region140: #{tpu_custom_call.1} parent=1 // pred_region
      %458 = vsyncadd [#allocation47], 0
      %s459 = sshll.u32 %s69, 4
      %s460 = int_to_ptr.hbm [resolvable:$true] %s459
      %s461 = sshll.u32 [#allocation46], 4
      %s462 = int_to_ptr.vmem [resolvable:$true] %s461
      %467 = dma.hbm_to_vmem [thread:$0]  %s460, 512, %s462, [#allocation47], 256, 256, 16
    $region141: #{tpu_custom_call.1} parent=1 // pred_fallthru
      _
    // Predicated region
    $region142: #{tpu_custom_call.1} parent=1 // pred_check
      _
    $region143: #{tpu_custom_call.1} parent=1 // pred_check_branch
      %469 = sbr.rel (0) target = $region145
    $region144: #{tpu_custom_call.1} parent=1 // pred_region
      _
    $region145: #{tpu_custom_call.1} parent=1 // pred_fallthru
      _
    // Predicated region
    $region146: #{tpu_custom_call.1} parent=1 // pred_check
      _
    $region147: #{tpu_custom_call.1} parent=1 // pred_check_branch
      %471 = sbr.rel (0) target = $region149
    $region148: #{tpu_custom_call.1} parent=1 // pred_region
      _
    $region149: #{tpu_custom_call.1} parent=1 // pred_fallthru
      _
    // Predicated region
    $region150: #{tpu_custom_call.1} parent=1 // pred_check
      _
    $region151: #{tpu_custom_call.1} parent=1 // pred_check_branch
      %473 = sbr.rel (0) target = $region153
    $region152: #{tpu_custom_call.1} parent=1 // pred_region
      %475 = vsyncadd [#allocation47], 0
      %s476 = sshll.u32 %s75, 4
      %s477 = int_to_ptr.hbm [resolvable:$true] %s476
      %s478 = sshll.u32 [#allocation48], 4
      %s479 = int_to_ptr.vmem [resolvable:$true] %s478
      %484 = dma.hbm_to_vmem [thread:$0]  %s477, 1024, %s479, [#allocation47], 512, 512, 32
    $region153: #{tpu_custom_call.1} parent=1 // pred_fallthru
      _
    // Predicated region
    $region154: #{tpu_custom_call.1} parent=1 // pred_check
      _
    $region155: #{tpu_custom_call.1} parent=1 // pred_check_branch
      %486 = sbr.rel (0) target = $region157
    $region156: #{tpu_custom_call.1} parent=1 // pred_region
      %488 = vsyncadd [#allocation50], 0
      %s489 = sshll.u32 %s77, 4
      %s490 = int_to_ptr.hbm [resolvable:$true] %s489
      %s491 = sshll.u32 [#allocation49], 4
      %s492 = int_to_ptr.vmem [resolvable:$true] %s491
      %497 = dma.hbm_to_vmem [thread:$0]  %s490, 512, %s492, [#allocation50], 256, 256, 16
    $region157: #{tpu_custom_call.1} parent=1 // pred_fallthru
      _
    // Predicated region
    $region158: #{tpu_custom_call.1} parent=1 // pred_check
      _
    $region159: #{tpu_custom_call.1} parent=1 // pred_check_branch
      %499 = sbr.rel (0) target = $region161
    $region160: #{tpu_custom_call.1} parent=1 // pred_region
      %501 = vsyncadd [#allocation50], 0
      %s502 = sshll.u32 %s79, 4
      %s503 = int_to_ptr.hbm [resolvable:$true] %s502
      %s504 = sshll.u32 [#allocation51], 4
      %s505 = int_to_ptr.vmem [resolvable:$true] %s504
      %510 = dma.hbm_to_vmem [thread:$0]  %s503, 256, %s505, [#allocation50], 128, 128, 8
    $region161: #{tpu_custom_call.1} parent=1 // pred_fallthru
      _
    // Predicated region
    $region162: #{tpu_custom_call.1} parent=1 // pred_check
      _
    $region163: #{tpu_custom_call.1} parent=1 // pred_check_branch
      %512 = sbr.rel (0) target = $region165
    $region164: #{tpu_custom_call.1} parent=1 // pred_region
      %514 = vsyncadd [#allocation53], 0
      %s515 = sshll.u32 %s81, 4
      %s516 = int_to_ptr.hbm [resolvable:$true] %s515
      %s517 = sshll.u32 [#allocation52], 4
      %s518 = int_to_ptr.vmem [resolvable:$true] %s517
      %523 = dma.hbm_to_vmem [thread:$0]  %s516, 256, %s518, [#allocation53], 128, 128, 8
    $region165: #{tpu_custom_call.1} parent=1 // pred_fallthru
      _
    // Predicated region
    $region166: #{tpu_custom_call.1} parent=1 // pred_check
      _
    $region167: #{tpu_custom_call.1} parent=1 // pred_check_branch
      %525 = sbr.rel (0) target = $region169
    $region168: #{tpu_custom_call.1} parent=1 // pred_region
      %527 = dma.done [#allocation5], 64
    $region169: #{tpu_custom_call.1} parent=1 // pred_fallthru
      _
    // Predicated region
    $region170: #{tpu_custom_call.1} parent=1 // pred_check
      _
    $region171: #{tpu_custom_call.1} parent=1 // pred_check_branch
      %529 = sbr.rel (0) target = $region173
    $region172: #{tpu_custom_call.1} parent=1 // pred_region
      %531 = dma.done [#allocation3], 128
    $region173: #{tpu_custom_call.1} parent=1 // pred_fallthru
      _
    // Predicated region
    $region174: #{tpu_custom_call.1} parent=1 // pred_check
      _
    $region175: #{tpu_custom_call.1} parent=1 // pred_check_branch
      %533 = sbr.rel (0) target = $region177
    $region176: #{tpu_custom_call.1} parent=1 // pred_region
      %535 = dma.done [#allocation8], 128
    $region177: #{tpu_custom_call.1} parent=1 // pred_fallthru
      _
    // Predicated region
    $region178: #{tpu_custom_call.1} parent=1 // pred_check
      _
    $region179: #{tpu_custom_call.1} parent=1 // pred_check_branch
      %537 = sbr.rel (0) target = $region181
    $region180: #{tpu_custom_call.1} parent=1 // pred_region
      %539 = dma.done [#allocation8], 128
    $region181: #{tpu_custom_call.1} parent=1 // pred_fallthru
      _
    // Predicated region
    $region182: #{tpu_custom_call.1} parent=1 // pred_check
      _
    $region183: #{tpu_custom_call.1} parent=1 // pred_check_branch
      %541 = sbr.rel (0) target = $region185
    $region184: #{tpu_custom_call.1} parent=1 // pred_region
      %543 = dma.done [#allocation11], 512
    $region185: #{tpu_custom_call.1} parent=1 // pred_fallthru
      _
    // Predicated region
    $region186: #{tpu_custom_call.1} parent=1 // pred_check
      _
    $region187: #{tpu_custom_call.1} parent=1 // pred_check_branch
      %545 = sbr.rel (0) target = $region189
    $region188: #{tpu_custom_call.1} parent=1 // pred_region
      %547 = dma.done [#allocation11], 24576
    $region189: #{tpu_custom_call.1} parent=1 // pred_fallthru
      _
    // Predicated region
    $region190: #{tpu_custom_call.1} parent=1 // pred_check
      _
    $region191: #{tpu_custom_call.1} parent=1 // pred_check_branch
      %549 = sbr.rel (0) target = $region193
    $region192: #{tpu_custom_call.1} parent=1 // pred_region
      %551 = dma.done [#allocation14], 192
    $region193: #{tpu_custom_call.1} parent=1 // pred_fallthru
      _
    // Predicated region
    $region194: #{tpu_custom_call.1} parent=1 // pred_check
      _
    $region195: #{tpu_custom_call.1} parent=1 // pred_check_branch
      %553 = sbr.rel (0) target = $region197
    $region196: #{tpu_custom_call.1} parent=1 // pred_region
      %555 = dma.done [#allocation14], 8192
    $region197: #{tpu_custom_call.1} parent=1 // pred_fallthru
      _
    // Predicated region
    $region198: #{tpu_custom_call.1} parent=1 // pred_check
      _
    $region199: #{tpu_custom_call.1} parent=1 // pred_check_branch
      %557 = sbr.rel (0) target = $region201
    $region200: #{tpu_custom_call.1} parent=1 // pred_region
      %559 = dma.done [#allocation17], 64
    $region201: #{tpu_custom_call.1} parent=1 // pred_fallthru
      _
    // Predicated region
    $region202: #{tpu_custom_call.1} parent=1 // pred_check
      _
    $region203: #{tpu_custom_call.1} parent=1 // pred_check_branch
      %561 = sbr.rel (0) target = $region205
    $region204: #{tpu_custom_call.1} parent=1 // pred_region
      %563 = dma.done [#allocation17], 64
    $region205: #{tpu_custom_call.1} parent=1 // pred_fallthru
      _
    // Predicated region
    $region206: #{tpu_custom_call.1} parent=1 // pred_check
      _
    $region207: #{tpu_custom_call.1} parent=1 // pred_check_branch
      %565 = sbr.rel (0) target = $region209
    $region208: #{tpu_custom_call.1} parent=1 // pred_region
      %567 = dma.done [#allocation20], 64
    $region209: #{tpu_custom_call.1} parent=1 // pred_fallthru
      _
    // Predicated region
    $region210: #{tpu_custom_call.1} parent=1 // pred_check
      _
    $region211: #{tpu_custom_call.1} parent=1 // pred_check_branch
      %569 = sbr.rel (0) target = $region213
    $region212: #{tpu_custom_call.1} parent=1 // pred_region
      %571 = dma.done [#allocation20], 8192
    $region213: #{tpu_custom_call.1} parent=1 // pred_fallthru
      _
    // Predicated region
    $region214: #{tpu_custom_call.1} parent=1 // pred_check
      _
    $region215: #{tpu_custom_call.1} parent=1 // pred_check_branch
      %573 = sbr.rel (0) target = $region217
    $region216: #{tpu_custom_call.1} parent=1 // pred_region
      %575 = dma.done [#allocation23], 64
    $region217: #{tpu_custom_call.1} parent=1 // pred_fallthru
      _
    // Predicated region
    $region218: #{tpu_custom_call.1} parent=1 // pred_check
      _
    $region219: #{tpu_custom_call.1} parent=1 // pred_check_branch
      %577 = sbr.rel (0) target = $region221
    $region220: #{tpu_custom_call.1} parent=1 // pred_region
      %579 = dma.done [#allocation23], 8192
    $region221: #{tpu_custom_call.1} parent=1 // pred_fallthru
      _
    // Predicated region
    $region222: #{tpu_custom_call.1} parent=1 // pred_check
      _
    $region223: #{tpu_custom_call.1} parent=1 // pred_check_branch
      %581 = sbr.rel (0) target = $region225
    $region224: #{tpu_custom_call.1} parent=1 // pred_region
      %583 = dma.done [#allocation26], 64
    $region225: #{tpu_custom_call.1} parent=1 // pred_fallthru
      _
    // Predicated region
    $region226: #{tpu_custom_call.1} parent=1 // pred_check
      _
    $region227: #{tpu_custom_call.1} parent=1 // pred_check_branch
      %585 = sbr.rel (0) target = $region229
    $region228: #{tpu_custom_call.1} parent=1 // pred_region
      %587 = dma.done [#allocation26], 64
    $region229: #{tpu_custom_call.1} parent=1 // pred_fallthru
      _
    // Predicated region
    $region230: #{tpu_custom_call.1} parent=1 // pred_check
      _
    $region231: #{tpu_custom_call.1} parent=1 // pred_check_branch
      %589 = sbr.rel (0) target = $region233
    $region232: #{tpu_custom_call.1} parent=1 // pred_region
      %591 = dma.done [#allocation29], 64
    $region233: #{tpu_custom_call.1} parent=1 // pred_fallthru
      _
    // Predicated region
    $region234: #{tpu_custom_call.1} parent=1 // pred_check
      _
    $region235: #{tpu_custom_call.1} parent=1 // pred_check_branch
      %593 = sbr.rel (0) target = $region237
    $region236: #{tpu_custom_call.1} parent=1 // pred_region
      %595 = dma.done [#allocation29], 768
    $region237: #{tpu_custom_call.1} parent=1 // pred_fallthru
      _
    // Predicated region
    $region238: #{tpu_custom_call.1} parent=1 // pred_check
      _
    $region239: #{tpu_custom_call.1} parent=1 // pred_check_branch
      %597 = sbr.rel (0) target = $region241
    $region240: #{tpu_custom_call.1} parent=1 // pred_region
      %599 = dma.done [#allocation32], 64
    $region241: #{tpu_custom_call.1} parent=1 // pred_fallthru
      _
    // Predicated region
    $region242: #{tpu_custom_call.1} parent=1 // pred_check
      _
    $region243: #{tpu_custom_call.1} parent=1 // pred_check_branch
      %601 = sbr.rel (0) target = $region245
    $region244: #{tpu_custom_call.1} parent=1 // pred_region
      %603 = dma.done [#allocation32], 8192
    $region245: #{tpu_custom_call.1} parent=1 // pred_fallthru
      _
    // Predicated region
    $region246: #{tpu_custom_call.1} parent=1 // pred_check
      _
    $region247: #{tpu_custom_call.1} parent=1 // pred_check_branch
      %605 = sbr.rel (0) target = $region249
    $region248: #{tpu_custom_call.1} parent=1 // pred_region
      %607 = dma.done [#allocation35], 8192
    $region249: #{tpu_custom_call.1} parent=1 // pred_fallthru
      _
    // Predicated region
    $region250: #{tpu_custom_call.1} parent=1 // pred_check
      _
    $region251: #{tpu_custom_call.1} parent=1 // pred_check_branch
      %609 = sbr.rel (0) target = $region253
    $region252: #{tpu_custom_call.1} parent=1 // pred_region
      %611 = dma.done [#allocation35], 8192
    $region253: #{tpu_custom_call.1} parent=1 // pred_fallthru
      _
    // Predicated region
    $region254: #{tpu_custom_call.1} parent=1 // pred_check
      _
    $region255: #{tpu_custom_call.1} parent=1 // pred_check_branch
      %613 = sbr.rel (0) target = $region257
    $region256: #{tpu_custom_call.1} parent=1 // pred_region
      %615 = dma.done [#allocation38], 32
    $region257: #{tpu_custom_call.1} parent=1 // pred_fallthru
      _
    // Predicated region
    $region258: #{tpu_custom_call.1} parent=1 // pred_check
      _
    $region259: #{tpu_custom_call.1} parent=1 // pred_check_branch
      %617 = sbr.rel (0) target = $region261
    $region260: #{tpu_custom_call.1} parent=1 // pred_region
      %619 = dma.done [#allocation38], 4096
    $region261: #{tpu_custom_call.1} parent=1 // pred_fallthru
      _
    // Predicated region
    $region262: #{tpu_custom_call.1} parent=1 // pred_check
      _
    $region263: #{tpu_custom_call.1} parent=1 // pred_check_branch
      %621 = sbr.rel (0) target = $region265
    $region264: #{tpu_custom_call.1} parent=1 // pred_region
      %623 = dma.done [#allocation41], 2048
    $region265: #{tpu_custom_call.1} parent=1 // pred_fallthru
      _
    // Predicated region
    $region266: #{tpu_custom_call.1} parent=1 // pred_check
      _
    $region267: #{tpu_custom_call.1} parent=1 // pred_check_branch
      %625 = sbr.rel (0) target = $region269
    $region268: #{tpu_custom_call.1} parent=1 // pred_region
      %627 = dma.done [#allocation41], 2048
    $region269: #{tpu_custom_call.1} parent=1 // pred_fallthru
      _
    // Predicated region
    $region270: #{tpu_custom_call.1} parent=1 // pred_check
      _
    $region271: #{tpu_custom_call.1} parent=1 // pred_check_branch
      %629 = sbr.rel (0) target = $region273
    $region272: #{tpu_custom_call.1} parent=1 // pred_region
      %631 = dma.done [#allocation44], 2048
    $region273: #{tpu_custom_call.1} parent=1 // pred_fallthru
      _
    // Predicated region
    $region274: #{tpu_custom_call.1} parent=1 // pred_check
      _
    $region275: #{tpu_custom_call.1} parent=1 // pred_check_branch
      %633 = sbr.rel (0) target = $region277
    $region276: #{tpu_custom_call.1} parent=1 // pred_region
      %635 = dma.done [#allocation44], 16
    $region277: #{tpu_custom_call.1} parent=1 // pred_fallthru
      _
    // Predicated region
    $region278: #{tpu_custom_call.1} parent=1 // pred_check
      _
    $region279: #{tpu_custom_call.1} parent=1 // pred_check_branch
      %637 = sbr.rel (0) target = $region281
    $region280: #{tpu_custom_call.1} parent=1 // pred_region
      %639 = dma.done [#allocation47], 512
    $region281: #{tpu_custom_call.1} parent=1 // pred_fallthru
      _
    // Predicated region
    $region282: #{tpu_custom_call.1} parent=1 // pred_check
      _
    $region283: #{tpu_custom_call.1} parent=1 // pred_check_branch
      %641 = sbr.rel (0) target = $region285
    $region284: #{tpu_custom_call.1} parent=1 // pred_region
      %643 = dma.done [#allocation47], 1024
    $region285: #{tpu_custom_call.1} parent=1 // pred_fallthru
      _
    // Predicated region
    $region286: #{tpu_custom_call.1} parent=1 // pred_check
      _
    $region287: #{tpu_custom_call.1} parent=1 // pred_check_branch
      %645 = sbr.rel (0) target = $region289
    $region288: #{tpu_custom_call.1} parent=1 // pred_region
      %647 = dma.done [#allocation50], 512
    $region289: #{tpu_custom_call.1} parent=1 // pred_fallthru
      _
    // Predicated region
    $region290: #{tpu_custom_call.1} parent=1 // pred_check
      _
    $region291: #{tpu_custom_call.1} parent=1 // pred_check_branch
      %649 = sbr.rel (0) target = $region293
    $region292: #{tpu_custom_call.1} parent=1 // pred_region
      %651 = dma.done [#allocation50], 256
    $region293: #{tpu_custom_call.1} parent=1 // pred_fallthru
      _
    // Predicated region
    $region294: #{tpu_custom_call.1} parent=1 // pred_check
      _
    $region295: #{tpu_custom_call.1} parent=1 // pred_check_branch
      %653 = sbr.rel (0) target = $region297
    $region296: #{tpu_custom_call.1} parent=1 // pred_region
      %655 = dma.done [#allocation53], 256
    $region297: #{tpu_custom_call.1} parent=1 // pred_fallthru
      _
    %656 = sfence
    %v658 = vld [vmem:[#allocation6] sm:$0xff]
    %v659 = vld [vmem:[#allocation7] sm:$0xff]
    %v660 = vpack.c.bf16 %v658, %v658
    %v661 = vld [vmem:[#allocation10] sm:$0xff]
    %v662 = vld [vmem:[#allocation10 + $0x8] sm:$0xff]
    %v663 = vld [vmem:[#allocation10 + $0x10] sm:$0xff]
    %v664 = vld [vmem:[#allocation10 + $0x18] sm:$0x77]
    %v669 = vunpack.c.l.b16 %v661
    %v670 = vunpack.c.h.b16 %v661
    %v671 = vunpack.c.l.b16 %v662
    %v672 = vunpack.c.h.b16 %v662
    %v673 = vunpack.c.l.b16 %v663
    %v674 = vunpack.c.h.b16 %v663
    %v675 = vunpack.c.l.b16 %v664
    %v676 = vunpack.c.h.b16 %v664
    %v677 = vpack.c.b16 %v671, %v669
    %v678 = vpack.c.b16 %v672, %v670
    %v679 = vpack.c.b16 %v675, %v673
    %v680 = vpack.c.b16 %v676, %v674
    %vm683 = vcmask 244736
    %v685 = vsel %vm683, %v660, 0
    %vm687 = vcmask 1046528
    %v689 = vsel %vm687, %v679, 0
    %v692 = vsel %vm687, %v680, 0
    %694 = vmatpush.bf16.msra.mxu0 0
    %695 = vmatpush.bf16.msra.mxu0 0
    %696 = vmatpush.bf16.msra.mxu0 0
    %697 = vmatpush.bf16.msra.mxu0 0
    %698 = vmatpush.bf16.msra.mxu0 0
    %699 = vmatpush.bf16.msra.mxu0 0
    %700 = vmatpush.bf16.msra.mxu0 %v689
    %701 = vmatpush.bf16.msra.mxu0 %v677
    %702 = vmatmul.bf16.gmra.mxu0 %v685
    %v703 = vpop.f32.mrf.mxu0
    %v704 = vadd.f32 0.0, %v703
    %v705 = vpop.f32.mrf.mxu0
    %706 = vdwg.mxu0
    %707 = vmatpush.bf16.msra.mxu0 0
    %708 = vmatpush.bf16.msra.mxu0 0
    %709 = vmatpush.bf16.msra.mxu0 0
    %710 = vmatpush.bf16.msra.mxu0 0
    %711 = vmatpush.bf16.msra.mxu0 0
    %712 = vmatpush.bf16.msra.mxu0 0
    %713 = vmatpush.bf16.msra.mxu0 %v692
    %714 = vmatpush.bf16.msra.mxu0 %v678
    %715 = vmatmul.bf16.gmra.mxu0 %v685
    %v716 = vpop.f32.mrf.mxu0
    %v717 = vadd.f32 0.0, %v716
    %v718 = vpop.f32.mrf.mxu0
    %719 = vdwg.mxu0
    %v720 = vpack.c.bf16 %v704, %v704
    %v721 = vpack.c.bf16 %v717, %v717
    %v722 = vld [vmem:[#allocation12] sm:$0xff]
    %v723 = vld [vmem:[#allocation12 + $0x8] sm:$0xff]
    %v724 = vld [vmem:[#allocation12 + $0x10] sm:$0xff]
    %v725 = vld [vmem:[#allocation12 + $0x18] sm:$0xff]
    %v726 = vld [vmem:[#allocation12 + $0x20] sm:$0xff]
    %v727 = vld [vmem:[#allocation12 + $0x28] sm:$0xff]
    %v728 = vld [vmem:[#allocation12 + $0x30] sm:$0xff]
    %v729 = vld [vmem:[#allocation12 + $0x38] sm:$0xff]
    %v730 = vld [vmem:[#allocation12 + $0x40] sm:$0xff]
    %v731 = vld [vmem:[#allocation12 + $0x48] sm:$0xff]
    %v732 = vld [vmem:[#allocation12 + $0x50] sm:$0xff]
    %v733 = vld [vmem:[#allocation12 + $0x58] sm:$0xff]
    %v734 = vld [vmem:[#allocation12 + $0x60] sm:$0xff]
    %v735 = vld [vmem:[#allocation12 + $0x68] sm:$0xff]
    %v736 = vld [vmem:[#allocation12 + $0x70] sm:$0xff]
    %v737 = vld [vmem:[#allocation12 + $0x78] sm:$0xff]
    %v738 = vld [vmem:[#allocation12 + $0x80] sm:$0xff]
    %v739 = vld [vmem:[#allocation12 + $0x88] sm:$0xff]
    %v740 = vld [vmem:[#allocation12 + $0x90] sm:$0xff]
    %v741 = vld [vmem:[#allocation12 + $0x98] sm:$0xff]
    %v742 = vld [vmem:[#allocation12 + $0xa0] sm:$0xff]
    %v743 = vld [vmem:[#allocation12 + $0xa8] sm:$0xff]
    %v744 = vld [vmem:[#allocation12 + $0xb0] sm:$0xff]
    %v745 = vld [vmem:[#allocation12 + $0xb8] sm:$0xff]
    %v746 = vld [vmem:[#allocation12 + $0xc0] sm:$0xff]
    %v747 = vld [vmem:[#allocation12 + $0xc8] sm:$0xff]
    %v748 = vld [vmem:[#allocation12 + $0xd0] sm:$0xff]
    %v749 = vld [vmem:[#allocation12 + $0xd8] sm:$0xff]
    %v750 = vld [vmem:[#allocation12 + $0xe0] sm:$0xff]
    %v751 = vld [vmem:[#allocation12 + $0xe8] sm:$0xff]
    %v752 = vld [vmem:[#allocation12 + $0xf0] sm:$0xff]
    %v753 = vld [vmem:[#allocation12 + $0xf8] sm:$0xff]
    %v754 = vld [vmem:[#allocation12 + $0x100] sm:$0xff]
    %v755 = vld [vmem:[#allocation12 + $0x108] sm:$0xff]
    %v756 = vld [vmem:[#allocation12 + $0x110] sm:$0xff]
    %v757 = vld [vmem:[#allocation12 + $0x118] sm:$0xff]
    %v758 = vld [vmem:[#allocation12 + $0x120] sm:$0xff]
    %v759 = vld [vmem:[#allocation12 + $0x128] sm:$0xff]
    %v760 = vld [vmem:[#allocation12 + $0x130] sm:$0xff]
    %v761 = vld [vmem:[#allocation12 + $0x138] sm:$0xff]
    %v762 = vld [vmem:[#allocation12 + $0x140] sm:$0xff]
    %v763 = vld [vmem:[#allocation12 + $0x148] sm:$0xff]
    %v764 = vld [vmem:[#allocation12 + $0x150] sm:$0xff]
    %v765 = vld [vmem:[#allocation12 + $0x158] sm:$0xff]
    %v766 = vld [vmem:[#allocation12 + $0x160] sm:$0xff]
    %v767 = vld [vmem:[#allocation12 + $0x168] sm:$0xff]
    %v768 = vld [vmem:[#allocation12 + $0x170] sm:$0xff]
    %v769 = vld [vmem:[#allocation12 + $0x178] sm:$0xff]
    %v770 = vld [vmem:[#allocation12 + $0x180] sm:$0xff]
    %v771 = vld [vmem:[#allocation12 + $0x188] sm:$0xff]
    %v772 = vld [vmem:[#allocation12 + $0x190] sm:$0xff]
    %v773 = vld [vmem:[#allocation12 + $0x198] sm:$0xff]
    %v774 = vld [vmem:[#allocation12 + $0x1a0] sm:$0xff]
    %v775 = vld [vmem:[#allocation12 + $0x1a8] sm:$0xff]
    %v776 = vld [vmem:[#allocation12 + $0x1b0] sm:$0xff]
    %v777 = vld [vmem:[#allocation12 + $0x1b8] sm:$0xff]
    %v778 = vld [vmem:[#allocation12 + $0x1c0] sm:$0xff]
    %v779 = vld [vmem:[#allocation12 + $0x1c8] sm:$0xff]
    %v780 = vld [vmem:[#allocation12 + $0x1d0] sm:$0xff]
    %v781 = vld [vmem:[#allocation12 + $0x1d8] sm:$0xff]
    %v782 = vld [vmem:[#allocation12 + $0x1e0] sm:$0xff]
    %v783 = vld [vmem:[#allocation12 + $0x1e8] sm:$0xff]
    %v784 = vld [vmem:[#allocation12 + $0x1f0] sm:$0xff]
    %v785 = vld [vmem:[#allocation12 + $0x1f8] sm:$0xff]
    %v786 = vld [vmem:[#allocation12 + $0x200] sm:$0xff]
    %v787 = vld [vmem:[#allocation12 + $0x208] sm:$0xff]
    %v788 = vld [vmem:[#allocation12 + $0x210] sm:$0xff]
    %v789 = vld [vmem:[#allocation12 + $0x218] sm:$0xff]
    %v790 = vld [vmem:[#allocation12 + $0x220] sm:$0xff]
    %v791 = vld [vmem:[#allocation12 + $0x228] sm:$0xff]
    %v792 = vld [vmem:[#allocation12 + $0x230] sm:$0xff]
    %v793 = vld [vmem:[#allocation12 + $0x238] sm:$0xff]
    %v794 = vld [vmem:[#allocation12 + $0x240] sm:$0xff]
    %v795 = vld [vmem:[#allocation12 + $0x248] sm:$0xff]
    %v796 = vld [vmem:[#allocation12 + $0x250] sm:$0xff]
    %v797 = vld [vmem:[#allocation12 + $0x258] sm:$0xff]
    %v798 = vld [vmem:[#allocation12 + $0x260] sm:$0xff]
    %v799 = vld [vmem:[#allocation12 + $0x268] sm:$0xff]
    %v800 = vld [vmem:[#allocation12 + $0x270] sm:$0xff]
    %v801 = vld [vmem:[#allocation12 + $0x278] sm:$0xff]
    %v802 = vld [vmem:[#allocation12 + $0x280] sm:$0xff]
    %v803 = vld [vmem:[#allocation12 + $0x288] sm:$0xff]
    %v804 = vld [vmem:[#allocation12 + $0x290] sm:$0xff]
    %v805 = vld [vmem:[#allocation12 + $0x298] sm:$0xff]
    %v806 = vld [vmem:[#allocation12 + $0x2a0] sm:$0xff]
    %v807 = vld [vmem:[#allocation12 + $0x2a8] sm:$0xff]
    %v808 = vld [vmem:[#allocation12 + $0x2b0] sm:$0xff]
    %v809 = vld [vmem:[#allocation12 + $0x2b8] sm:$0xff]
    %v810 = vld [vmem:[#allocation12 + $0x2c0] sm:$0xff]
    %v811 = vld [vmem:[#allocation12 + $0x2c8] sm:$0xff]
    %v812 = vld [vmem:[#allocation12 + $0x2d0] sm:$0xff]
    %v813 = vld [vmem:[#allocation12 + $0x2d8] sm:$0xff]
    %v814 = vld [vmem:[#allocation12 + $0x2e0] sm:$0xff]
    %v815 = vld [vmem:[#allocation12 + $0x2e8] sm:$0xff]
    %v816 = vld [vmem:[#allocation12 + $0x2f0] sm:$0xff]
    %v817 = vld [vmem:[#allocation12 + $0x2f8] sm:$0xff]
    %v818 = vld [vmem:[#allocation13] ss:$2 sm:$0x3f]
    %v820 = vperm.slane %v818, 0
    %v821 = vperm.slane %v818, 1
    %v822 = vperm.slane %v818, 2
    %v823 = vperm.slane %v818, 3
    %v824 = vperm.slane %v818, 4
    %v825 = vperm.slane %v818, 5
    %v928 = vunpack.c.l.b16 %v722
    %v929 = vunpack.c.h.b16 %v722
    %v930 = vunpack.c.l.b16 %v723
    %v931 = vunpack.c.h.b16 %v723
    %v932 = vunpack.c.l.b16 %v724
    %v933 = vunpack.c.h.b16 %v724
    %v934 = vunpack.c.l.b16 %v725
    %v935 = vunpack.c.h.b16 %v725
    %v936 = vunpack.c.l.b16 %v726
    %v937 = vunpack.c.h.b16 %v726
    %v938 = vunpack.c.l.b16 %v727
    %v939 = vunpack.c.h.b16 %v727
    %v940 = vunpack.c.l.b16 %v728
    %v941 = vunpack.c.h.b16 %v728
    %v942 = vunpack.c.l.b16 %v729
    %v943 = vunpack.c.h.b16 %v729
    %v944 = vunpack.c.l.b16 %v730
    %v945 = vunpack.c.h.b16 %v730
    %v946 = vunpack.c.l.b16 %v731
    %v947 = vunpack.c.h.b16 %v731
    %v948 = vunpack.c.l.b16 %v732
    %v949 = vunpack.c.h.b16 %v732
    %v950 = vunpack.c.l.b16 %v733
    %v951 = vunpack.c.h.b16 %v733
    %v952 = vunpack.c.l.b16 %v734
    %v953 = vunpack.c.h.b16 %v734
    %v954 = vunpack.c.l.b16 %v735
    %v955 = vunpack.c.h.b16 %v735
    %v956 = vunpack.c.l.b16 %v736
    %v957 = vunpack.c.h.b16 %v736
    %v958 = vunpack.c.l.b16 %v737
    %v959 = vunpack.c.h.b16 %v737
    %v960 = vunpack.c.l.b16 %v738
    %v961 = vunpack.c.h.b16 %v738
    %v962 = vunpack.c.l.b16 %v739
    %v963 = vunpack.c.h.b16 %v739
    %v964 = vunpack.c.l.b16 %v740
    %v965 = vunpack.c.h.b16 %v740
    %v966 = vunpack.c.l.b16 %v741
    %v967 = vunpack.c.h.b16 %v741
    %v968 = vunpack.c.l.b16 %v742
    %v969 = vunpack.c.h.b16 %v742
    %v970 = vunpack.c.l.b16 %v743
    %v971 = vunpack.c.h.b16 %v743
    %v972 = vunpack.c.l.b16 %v744
    %v973 = vunpack.c.h.b16 %v744
    %v974 = vunpack.c.l.b16 %v745
    %v975 = vunpack.c.h.b16 %v745
    %v976 = vunpack.c.l.b16 %v746
    %v977 = vunpack.c.h.b16 %v746
    %v978 = vunpack.c.l.b16 %v747
    %v979 = vunpack.c.h.b16 %v747
    %v980 = vunpack.c.l.b16 %v748
    %v981 = vunpack.c.h.b16 %v748
    %v982 = vunpack.c.l.b16 %v749
    %v983 = vunpack.c.h.b16 %v749
    %v984 = vunpack.c.l.b16 %v750
    %v985 = vunpack.c.h.b16 %v750
    %v986 = vunpack.c.l.b16 %v751
    %v987 = vunpack.c.h.b16 %v751
    %v988 = vunpack.c.l.b16 %v752
    %v989 = vunpack.c.h.b16 %v752
    %v990 = vunpack.c.l.b16 %v753
    %v991 = vunpack.c.h.b16 %v753
    %v992 = vunpack.c.l.b16 %v754
    %v993 = vunpack.c.h.b16 %v754
    %v994 = vunpack.c.l.b16 %v755
    %v995 = vunpack.c.h.b16 %v755
    %v996 = vunpack.c.l.b16 %v756
    %v997 = vunpack.c.h.b16 %v756
    %v998 = vunpack.c.l.b16 %v757
    %v999 = vunpack.c.h.b16 %v757
    %v1000 = vunpack.c.l.b16 %v758
    %v1001 = vunpack.c.h.b16 %v758
    %v1002 = vunpack.c.l.b16 %v759
    %v1003 = vunpack.c.h.b16 %v759
    %v1004 = vunpack.c.l.b16 %v760
    %v1005 = vunpack.c.h.b16 %v760
    %v1006 = vunpack.c.l.b16 %v761
    %v1007 = vunpack.c.h.b16 %v761
    %v1008 = vunpack.c.l.b16 %v762
    %v1009 = vunpack.c.h.b16 %v762
    %v1010 = vunpack.c.l.b16 %v763
    %v1011 = vunpack.c.h.b16 %v763
    %v1012 = vunpack.c.l.b16 %v764
    %v1013 = vunpack.c.h.b16 %v764
    %v1014 = vunpack.c.l.b16 %v765
    %v1015 = vunpack.c.h.b16 %v765
    %v1016 = vunpack.c.l.b16 %v766
    %v1017 = vunpack.c.h.b16 %v766
    %v1018 = vunpack.c.l.b16 %v767
    %v1019 = vunpack.c.h.b16 %v767
    %v1020 = vunpack.c.l.b16 %v768
    %v1021 = vunpack.c.h.b16 %v768
    %v1022 = vunpack.c.l.b16 %v769
    %v1023 = vunpack.c.h.b16 %v769
    %v1024 = vunpack.c.l.b16 %v770
    %v1025 = vunpack.c.h.b16 %v770
    %v1026 = vunpack.c.l.b16 %v771
    %v1027 = vunpack.c.h.b16 %v771
    %v1028 = vunpack.c.l.b16 %v772
    %v1029 = vunpack.c.h.b16 %v772
    %v1030 = vunpack.c.l.b16 %v773
    %v1031 = vunpack.c.h.b16 %v773
    %v1032 = vunpack.c.l.b16 %v774
    %v1033 = vunpack.c.h.b16 %v774
    %v1034 = vunpack.c.l.b16 %v775
    %v1035 = vunpack.c.h.b16 %v775
    %v1036 = vunpack.c.l.b16 %v776
    %v1037 = vunpack.c.h.b16 %v776
    %v1038 = vunpack.c.l.b16 %v777
    %v1039 = vunpack.c.h.b16 %v777
    %v1040 = vunpack.c.l.b16 %v778
    %v1041 = vunpack.c.h.b16 %v778
    %v1042 = vunpack.c.l.b16 %v779
    %v1043 = vunpack.c.h.b16 %v779
    %v1044 = vunpack.c.l.b16 %v780
    %v1045 = vunpack.c.h.b16 %v780
    %v1046 = vunpack.c.l.b16 %v781
    %v1047 = vunpack.c.h.b16 %v781
    %v1048 = vunpack.c.l.b16 %v782
    %v1049 = vunpack.c.h.b16 %v782
    %v1050 = vunpack.c.l.b16 %v783
    %v1051 = vunpack.c.h.b16 %v783
    %v1052 = vunpack.c.l.b16 %v784
    %v1053 = vunpack.c.h.b16 %v784
    %v1054 = vunpack.c.l.b16 %v785
    %v1055 = vunpack.c.h.b16 %v785
    %v1056 = vunpack.c.l.b16 %v786
    %v1057 = vunpack.c.h.b16 %v786
    %v1058 = vunpack.c.l.b16 %v787
    %v1059 = vunpack.c.h.b16 %v787
    %v1060 = vunpack.c.l.b16 %v788
    %v1061 = vunpack.c.h.b16 %v788
    %v1062 = vunpack.c.l.b16 %v789
    %v1063 = vunpack.c.h.b16 %v789
    %v1064 = vunpack.c.l.b16 %v790
    %v1065 = vunpack.c.h.b16 %v790
    %v1066 = vunpack.c.l.b16 %v791
    %v1067 = vunpack.c.h.b16 %v791
    %v1068 = vunpack.c.l.b16 %v792
    %v1069 = vunpack.c.h.b16 %v792
    %v1070 = vunpack.c.l.b16 %v793
    %v1071 = vunpack.c.h.b16 %v793
    %v1072 = vunpack.c.l.b16 %v794
    %v1073 = vunpack.c.h.b16 %v794
    %v1074 = vunpack.c.l.b16 %v795
    %v1075 = vunpack.c.h.b16 %v795
    %v1076 = vunpack.c.l.b16 %v796
    %v1077 = vunpack.c.h.b16 %v796
    %v1078 = vunpack.c.l.b16 %v797
    %v1079 = vunpack.c.h.b16 %v797
    %v1080 = vunpack.c.l.b16 %v798
    %v1081 = vunpack.c.h.b16 %v798
    %v1082 = vunpack.c.l.b16 %v799
    %v1083 = vunpack.c.h.b16 %v799
    %v1084 = vunpack.c.l.b16 %v800
    %v1085 = vunpack.c.h.b16 %v800
    %v1086 = vunpack.c.l.b16 %v801
    %v1087 = vunpack.c.h.b16 %v801
    %v1088 = vunpack.c.l.b16 %v802
    %v1089 = vunpack.c.h.b16 %v802
    %v1090 = vunpack.c.l.b16 %v803
    %v1091 = vunpack.c.h.b16 %v803
    %v1092 = vunpack.c.l.b16 %v804
    %v1093 = vunpack.c.h.b16 %v804
    %v1094 = vunpack.c.l.b16 %v805
    %v1095 = vunpack.c.h.b16 %v805
    %v1096 = vunpack.c.l.b16 %v806
    %v1097 = vunpack.c.h.b16 %v806
    %v1098 = vunpack.c.l.b16 %v807
    %v1099 = vunpack.c.h.b16 %v807
    %v1100 = vunpack.c.l.b16 %v808
    %v1101 = vunpack.c.h.b16 %v808
    %v1102 = vunpack.c.l.b16 %v809
    %v1103 = vunpack.c.h.b16 %v809
    %v1104 = vunpack.c.l.b16 %v810
    %v1105 = vunpack.c.h.b16 %v810
    %v1106 = vunpack.c.l.b16 %v811
    %v1107 = vunpack.c.h.b16 %v811
    %v1108 = vunpack.c.l.b16 %v812
    %v1109 = vunpack.c.h.b16 %v812
    %v1110 = vunpack.c.l.b16 %v813
    %v1111 = vunpack.c.h.b16 %v813
    %v1112 = vunpack.c.l.b16 %v814
    %v1113 = vunpack.c.h.b16 %v814
    %v1114 = vunpack.c.l.b16 %v815
    %v1115 = vunpack.c.h.b16 %v815
    %v1116 = vunpack.c.l.b16 %v816
    %v1117 = vunpack.c.h.b16 %v816
    %v1118 = vunpack.c.l.b16 %v817
    %v1119 = vunpack.c.h.b16 %v817
    %v1120 = vpack.c.b16 %v934, %v928
    %v1121 = vpack.c.b16 %v935, %v929
    %v1122 = vpack.c.b16 %v936, %v930
    %v1123 = vpack.c.b16 %v937, %v931
    %v1124 = vpack.c.b16 %v938, %v932
    %v1125 = vpack.c.b16 %v939, %v933
    %v1126 = vpack.c.b16 %v946, %v940
    %v1127 = vpack.c.b16 %v947, %v941
    %v1128 = vpack.c.b16 %v948, %v942
    %v1129 = vpack.c.b16 %v949, %v943
    %v1130 = vpack.c.b16 %v950, %v944
    %v1131 = vpack.c.b16 %v951, %v945
    %v1132 = vpack.c.b16 %v958, %v952
    %v1133 = vpack.c.b16 %v959, %v953
    %v1134 = vpack.c.b16 %v960, %v954
    %v1135 = vpack.c.b16 %v961, %v955
    %v1136 = vpack.c.b16 %v962, %v956
    %v1137 = vpack.c.b16 %v963, %v957
    %v1138 = vpack.c.b16 %v970, %v964
    %v1139 = vpack.c.b16 %v971, %v965
    %v1140 = vpack.c.b16 %v972, %v966
    %v1141 = vpack.c.b16 %v973, %v967
    %v1142 = vpack.c.b16 %v974, %v968
    %v1143 = vpack.c.b16 %v975, %v969
    %v1144 = vpack.c.b16 %v982, %v976
    %v1145 = vpack.c.b16 %v983, %v977
    %v1146 = vpack.c.b16 %v984, %v978
    %v1147 = vpack.c.b16 %v985, %v979
    %v1148 = vpack.c.b16 %v986, %v980
    %v1149 = vpack.c.b16 %v987, %v981
    %v1150 = vpack.c.b16 %v994, %v988
    %v1151 = vpack.c.b16 %v995, %v989
    %v1152 = vpack.c.b16 %v996, %v990
    %v1153 = vpack.c.b16 %v997, %v991
    %v1154 = vpack.c.b16 %v998, %v992
    %v1155 = vpack.c.b16 %v999, %v993
    %v1156 = vpack.c.b16 %v1006, %v1000
    %v1157 = vpack.c.b16 %v1007, %v1001
    %v1158 = vpack.c.b16 %v1008, %v1002
    %v1159 = vpack.c.b16 %v1009, %v1003
    %v1160 = vpack.c.b16 %v1010, %v1004
    %v1161 = vpack.c.b16 %v1011, %v1005
    %v1162 = vpack.c.b16 %v1018, %v1012
    %v1163 = vpack.c.b16 %v1019, %v1013
    %v1164 = vpack.c.b16 %v1020, %v1014
    %v1165 = vpack.c.b16 %v1021, %v1015
    %v1166 = vpack.c.b16 %v1022, %v1016
    %v1167 = vpack.c.b16 %v1023, %v1017
    %v1168 = vpack.c.b16 %v1030, %v1024
    %v1169 = vpack.c.b16 %v1031, %v1025
    %v1170 = vpack.c.b16 %v1032, %v1026
    %v1171 = vpack.c.b16 %v1033, %v1027
    %v1172 = vpack.c.b16 %v1034, %v1028
    %v1173 = vpack.c.b16 %v1035, %v1029
    %v1174 = vpack.c.b16 %v1042, %v1036
    %v1175 = vpack.c.b16 %v1043, %v1037
    %v1176 = vpack.c.b16 %v1044, %v1038
    %v1177 = vpack.c.b16 %v1045, %v1039
    %v1178 = vpack.c.b16 %v1046, %v1040
    %v1179 = vpack.c.b16 %v1047, %v1041
    %v1180 = vpack.c.b16 %v1054, %v1048
    %v1181 = vpack.c.b16 %v1055, %v1049
    %v1182 = vpack.c.b16 %v1056, %v1050
    %v1183 = vpack.c.b16 %v1057, %v1051
    %v1184 = vpack.c.b16 %v1058, %v1052
    %v1185 = vpack.c.b16 %v1059, %v1053
    %v1186 = vpack.c.b16 %v1066, %v1060
    %v1187 = vpack.c.b16 %v1067, %v1061
    %v1188 = vpack.c.b16 %v1068, %v1062
    %v1189 = vpack.c.b16 %v1069, %v1063
    %v1190 = vpack.c.b16 %v1070, %v1064
    %v1191 = vpack.c.b16 %v1071, %v1065
    %v1192 = vpack.c.b16 %v1078, %v1072
    %v1193 = vpack.c.b16 %v1079, %v1073
    %v1194 = vpack.c.b16 %v1080, %v1074
    %v1195 = vpack.c.b16 %v1081, %v1075
    %v1196 = vpack.c.b16 %v1082, %v1076
    %v1197 = vpack.c.b16 %v1083, %v1077
    %v1198 = vpack.c.b16 %v1090, %v1084
    %v1199 = vpack.c.b16 %v1091, %v1085
    %v1200 = vpack.c.b16 %v1092, %v1086
    %v1201 = vpack.c.b16 %v1093, %v1087
    %v1202 = vpack.c.b16 %v1094, %v1088
    %v1203 = vpack.c.b16 %v1095, %v1089
    %v1204 = vpack.c.b16 %v1102, %v1096
    %v1205 = vpack.c.b16 %v1103, %v1097
    %v1206 = vpack.c.b16 %v1104, %v1098
    %v1207 = vpack.c.b16 %v1105, %v1099
    %v1208 = vpack.c.b16 %v1106, %v1100
    %v1209 = vpack.c.b16 %v1107, %v1101
    %v1210 = vpack.c.b16 %v1114, %v1108
    %v1211 = vpack.c.b16 %v1115, %v1109
    %v1212 = vpack.c.b16 %v1116, %v1110
    %v1213 = vpack.c.b16 %v1117, %v1111
    %v1214 = vpack.c.b16 %v1118, %v1112
    %v1215 = vpack.c.b16 %v1119, %v1113
    %1312 = vmatpush.bf16.msra.mxu0 %v1162
    %1313 = vmatpush.bf16.msra.mxu0 %v1156
    %1314 = vmatpush.bf16.msra.mxu0 %v1150
    %1315 = vmatpush.bf16.msra.mxu0 %v1144
    %1316 = vmatpush.bf16.msra.mxu0 %v1138
    %1317 = vmatpush.bf16.msra.mxu0 %v1132
    %1318 = vmatpush.bf16.msra.mxu0 %v1126
    %1319 = vmatpush.bf16.msra.mxu0 %v1120
    %1320 = vmatmul.bf16.gmra.mxu0 %v720
    %v1321 = vpop.f32.mrf.mxu0
    %v1322 = vadd.f32 %v820, %v1321
    %v1323 = vpop.f32.mrf.mxu0
    %1324 = vdwg.mxu0
    %1325 = vmatpush.bf16.msra.mxu0 %v1210
    %1326 = vmatpush.bf16.msra.mxu0 %v1204
    %1327 = vmatpush.bf16.msra.mxu0 %v1198
    %1328 = vmatpush.bf16.msra.mxu0 %v1192
    %1329 = vmatpush.bf16.msra.mxu0 %v1186
    %1330 = vmatpush.bf16.msra.mxu0 %v1180
    %1331 = vmatpush.bf16.msra.mxu0 %v1174
    %1332 = vmatpush.bf16.msra.mxu0 %v1168
    %1333 = vmatmul.bf16.gmra.mxu0 %v721
    %v1334 = vpop.f32.mrf.mxu0
    %v1335 = vadd.f32 %v1322, %v1334
    %v1336 = vpop.f32.mrf.mxu0
    %1337 = vdwg.mxu0
    %1338 = vmatpush.bf16.msra.mxu0 %v1163
    %1339 = vmatpush.bf16.msra.mxu0 %v1157
    %1340 = vmatpush.bf16.msra.mxu0 %v1151
    %1341 = vmatpush.bf16.msra.mxu0 %v1145
    %1342 = vmatpush.bf16.msra.mxu0 %v1139
    %1343 = vmatpush.bf16.msra.mxu0 %v1133
    %1344 = vmatpush.bf16.msra.mxu0 %v1127
    %1345 = vmatpush.bf16.msra.mxu0 %v1121
    %1346 = vmatmul.bf16.gmra.mxu0 %v720
    %v1347 = vpop.f32.mrf.mxu0
    %v1348 = vadd.f32 %v821, %v1347
    %v1349 = vpop.f32.mrf.mxu0
    %1350 = vdwg.mxu0
    %1351 = vmatpush.bf16.msra.mxu0 %v1211
    %1352 = vmatpush.bf16.msra.mxu0 %v1205
    %1353 = vmatpush.bf16.msra.mxu0 %v1199
    %1354 = vmatpush.bf16.msra.mxu0 %v1193
    %1355 = vmatpush.bf16.msra.mxu0 %v1187
    %1356 = vmatpush.bf16.msra.mxu0 %v1181
    %1357 = vmatpush.bf16.msra.mxu0 %v1175
    %1358 = vmatpush.bf16.msra.mxu0 %v1169
    %1359 = vmatmul.bf16.gmra.mxu0 %v721
    %v1360 = vpop.f32.mrf.mxu0
    %v1361 = vadd.f32 %v1348, %v1360
    %v1362 = vpop.f32.mrf.mxu0
    %1363 = vdwg.mxu0
    %1364 = vmatpush.bf16.msra.mxu0 %v1164
    %1365 = vmatpush.bf16.msra.mxu0 %v1158
    %1366 = vmatpush.bf16.msra.mxu0 %v1152
    %1367 = vmatpush.bf16.msra.mxu0 %v1146
    %1368 = vmatpush.bf16.msra.mxu0 %v1140
    %1369 = vmatpush.bf16.msra.mxu0 %v1134
    %1370 = vmatpush.bf16.msra.mxu0 %v1128
    %1371 = vmatpush.bf16.msra.mxu0 %v1122
    %1372 = vmatmul.bf16.gmra.mxu0 %v720
    %v1373 = vpop.f32.mrf.mxu0
    %v1374 = vadd.f32 %v822, %v1373
    %v1375 = vpop.f32.mrf.mxu0
    %1376 = vdwg.mxu0
    %1377 = vmatpush.bf16.msra.mxu0 %v1212
    %1378 = vmatpush.bf16.msra.mxu0 %v1206
    %1379 = vmatpush.bf16.msra.mxu0 %v1200
    %1380 = vmatpush.bf16.msra.mxu0 %v1194
    %1381 = vmatpush.bf16.msra.mxu0 %v1188
    %1382 = vmatpush.bf16.msra.mxu0 %v1182
    %1383 = vmatpush.bf16.msra.mxu0 %v1176
    %1384 = vmatpush.bf16.msra.mxu0 %v1170
    %1385 = vmatmul.bf16.gmra.mxu0 %v721
    %v1386 = vpop.f32.mrf.mxu0
    %v1387 = vadd.f32 %v1374, %v1386
    %v1388 = vpop.f32.mrf.mxu0
    %1389 = vdwg.mxu0
    %1390 = vmatpush.bf16.msra.mxu0 %v1165
    %1391 = vmatpush.bf16.msra.mxu0 %v1159
    %1392 = vmatpush.bf16.msra.mxu0 %v1153
    %1393 = vmatpush.bf16.msra.mxu0 %v1147
    %1394 = vmatpush.bf16.msra.mxu0 %v1141
    %1395 = vmatpush.bf16.msra.mxu0 %v1135
    %1396 = vmatpush.bf16.msra.mxu0 %v1129
    %1397 = vmatpush.bf16.msra.mxu0 %v1123
    %1398 = vmatmul.bf16.gmra.mxu0 %v720
    %v1399 = vpop.f32.mrf.mxu0
    %v1400 = vadd.f32 %v823, %v1399
    %v1401 = vpop.f32.mrf.mxu0
    %1402 = vdwg.mxu0
    %1403 = vmatpush.bf16.msra.mxu0 %v1213
    %1404 = vmatpush.bf16.msra.mxu0 %v1207
    %1405 = vmatpush.bf16.msra.mxu0 %v1201
    %1406 = vmatpush.bf16.msra.mxu0 %v1195
    %1407 = vmatpush.bf16.msra.mxu0 %v1189
    %1408 = vmatpush.bf16.msra.mxu0 %v1183
    %1409 = vmatpush.bf16.msra.mxu0 %v1177
    %1410 = vmatpush.bf16.msra.mxu0 %v1171
    %1411 = vmatmul.bf16.gmra.mxu0 %v721
    %v1412 = vpop.f32.mrf.mxu0
    %v1413 = vadd.f32 %v1400, %v1412
    %v1414 = vpop.f32.mrf.mxu0
    %1415 = vdwg.mxu0
    %1416 = vmatpush.bf16.msra.mxu0 %v1166
    %1417 = vmatpush.bf16.msra.mxu0 %v1160
    %1418 = vmatpush.bf16.msra.mxu0 %v1154
    %1419 = vmatpush.bf16.msra.mxu0 %v1148
    %1420 = vmatpush.bf16.msra.mxu0 %v1142
    %1421 = vmatpush.bf16.msra.mxu0 %v1136
    %1422 = vmatpush.bf16.msra.mxu0 %v1130
    %1423 = vmatpush.bf16.msra.mxu0 %v1124
    %1424 = vmatmul.bf16.gmra.mxu0 %v720
    %v1425 = vpop.f32.mrf.mxu0
    %v1426 = vadd.f32 %v824, %v1425
    %v1427 = vpop.f32.mrf.mxu0
    %1428 = vdwg.mxu0
    %1429 = vmatpush.bf16.msra.mxu0 %v1214
    %1430 = vmatpush.bf16.msra.mxu0 %v1208
    %1431 = vmatpush.bf16.msra.mxu0 %v1202
    %1432 = vmatpush.bf16.msra.mxu0 %v1196
    %1433 = vmatpush.bf16.msra.mxu0 %v1190
    %1434 = vmatpush.bf16.msra.mxu0 %v1184
    %1435 = vmatpush.bf16.msra.mxu0 %v1178
    %1436 = vmatpush.bf16.msra.mxu0 %v1172
    %1437 = vmatmul.bf16.gmra.mxu0 %v721
    %v1438 = vpop.f32.mrf.mxu0
    %v1439 = vadd.f32 %v1426, %v1438
    %v1440 = vpop.f32.mrf.mxu0
    %1441 = vdwg.mxu0
    %1442 = vmatpush.bf16.msra.mxu0 %v1167
    %1443 = vmatpush.bf16.msra.mxu0 %v1161
    %1444 = vmatpush.bf16.msra.mxu0 %v1155
    %1445 = vmatpush.bf16.msra.mxu0 %v1149
    %1446 = vmatpush.bf16.msra.mxu0 %v1143
    %1447 = vmatpush.bf16.msra.mxu0 %v1137
    %1448 = vmatpush.bf16.msra.mxu0 %v1131
    %1449 = vmatpush.bf16.msra.mxu0 %v1125
    %1450 = vmatmul.bf16.gmra.mxu0 %v720
    %v1451 = vpop.f32.mrf.mxu0
    %v1452 = vadd.f32 %v825, %v1451
    %v1453 = vpop.f32.mrf.mxu0
    %1454 = vdwg.mxu0
    %1455 = vmatpush.bf16.msra.mxu0 %v1215
    %1456 = vmatpush.bf16.msra.mxu0 %v1209
    %1457 = vmatpush.bf16.msra.mxu0 %v1203
    %1458 = vmatpush.bf16.msra.mxu0 %v1197
    %1459 = vmatpush.bf16.msra.mxu0 %v1191
    %1460 = vmatpush.bf16.msra.mxu0 %v1185
    %1461 = vmatpush.bf16.msra.mxu0 %v1179
    %1462 = vmatpush.bf16.msra.mxu0 %v1173
    %1463 = vmatmul.bf16.gmra.mxu0 %v721
    %v1464 = vpop.f32.mrf.mxu0
    %v1465 = vadd.f32 %v1452, %v1464
    %v1466 = vpop.f32.mrf.mxu0
    %1467 = vdwg.mxu0
    %v1468 = vld [vmem:[#allocation15] sm:$0xff]
    %v1469 = vld [vmem:[#allocation15 + $0x8] sm:$0xff]
    %v1470 = vld [vmem:[#allocation15 + $0x10] sm:$0xff]
    %v1471 = vld [vmem:[#allocation15 + $0x18] sm:$0xff]
    %v1472 = vld [vmem:[#allocation15 + $0x20] sm:$0xff]
    %v1473 = vld [vmem:[#allocation15 + $0x28] sm:$0xff]
    %v1474 = vld [vmem:[#allocation15 + $0x30] sm:$0xff]
    %v1475 = vld [vmem:[#allocation15 + $0x38] sm:$0xff]
    %v1476 = vld [vmem:[#allocation15 + $0x40] sm:$0xff]
    %v1477 = vld [vmem:[#allocation15 + $0x48] sm:$0xff]
    %v1478 = vld [vmem:[#allocation15 + $0x50] sm:$0xff]
    %v1479 = vld [vmem:[#allocation15 + $0x58] sm:$0xff]
    %v1480 = vld [vmem:[#allocation15 + $0x60] sm:$0xff]
    %v1481 = vld [vmem:[#allocation15 + $0x68] sm:$0xff]
    %v1482 = vld [vmem:[#allocation15 + $0x70] sm:$0xff]
    %v1483 = vld [vmem:[#allocation15 + $0x78] sm:$0xff]
    %v1484 = vld [vmem:[#allocation15 + $0x80] sm:$0xff]
    %v1485 = vld [vmem:[#allocation15 + $0x88] sm:$0xff]
    %v1486 = vld [vmem:[#allocation15 + $0x90] sm:$0xff]
    %v1487 = vld [vmem:[#allocation15 + $0x98] sm:$0xff]
    %v1488 = vld [vmem:[#allocation15 + $0xa0] sm:$0xff]
    %v1489 = vld [vmem:[#allocation15 + $0xa8] sm:$0xff]
    %v1490 = vld [vmem:[#allocation15 + $0xb0] sm:$0xff]
    %v1491 = vld [vmem:[#allocation15 + $0xb8] sm:$0xff]
    %v1492 = vld [vmem:[#allocation15 + $0xc0] sm:$0xff]
    %v1493 = vld [vmem:[#allocation15 + $0xc8] sm:$0xff]
    %v1494 = vld [vmem:[#allocation15 + $0xd0] sm:$0xff]
    %v1495 = vld [vmem:[#allocation15 + $0xd8] sm:$0xff]
    %v1496 = vld [vmem:[#allocation15 + $0xe0] sm:$0xff]
    %v1497 = vld [vmem:[#allocation15 + $0xe8] sm:$0xff]
    %v1498 = vld [vmem:[#allocation15 + $0xf0] sm:$0xff]
    %v1499 = vld [vmem:[#allocation15 + $0xf8] sm:$0xff]
    %v1500 = vld [vmem:[#allocation16] ss:$2 sm:$0x3]
    %v1501 = vpack.c.bf16 %v1335, %v1335
    %v1502 = vpack.c.bf16 %v1387, %v1387
    %1503 = vmatpush.bf16.xpose.msra.mxu0 0
    %1504 = vmatpush.bf16.xpose.msra.mxu0 0
    %1505 = vmatpush.bf16.xpose.msra.mxu0 0
    %1506 = vmatpush.bf16.xpose.msra.mxu0 0
    %1507 = vmatpush.bf16.xpose.msra.mxu0 0
    %1508 = vmatpush.bf16.xpose.msra.mxu0 0
    %1509 = vmatpush.bf16.xpose.msra.mxu0 0
    %1510 = vmatpush.bf16.xpose.msra.mxu0 %v1502
    %1511 = vmatmul.bf16.gmra.mxu0 %v1501
    %v1512 = vpop.f32.mrf.mxu0
    %v1513 = vadd.f32 0.0, %v1512
    %v1514 = vpop.f32.mrf.mxu0
    %1515 = vdwg.mxu0
    %v1516 = vmul.f32 %v1513, 0.088388346
    %v1517 = vadd.f32 %v1516, %v659
    %vm1518 = vcmask 64512
    %v1519 = vsel %vm1518, %v1517, -inf
    %1520 = vmax.xlane.f32.xlu0 %v1519
    %v1521 = vpop.xlane.xlu0 %1520
    %v1522 = vsub.f32 %v1517, %v1521
    %v1523 = vmul.f32 %v1522, 1.442695
    %v1524 = vpow.pop %v1523
    %v1525 = vsel %vm1518, %v1524, 0.0
    %1526 = vadd.xlane.f32.xlu0 %v1525
    %v1527 = vpop.xlane.xlu0 %1526
    %v1528 = vrcp.pop %v1527
    %v1529 = vmul.f32 %v1524, %v1528
    %v1530 = vpack.c.bf16 %v1529, %v1529
    %v1531 = vpack.c.bf16 %v1439, %v1439
    %v1533 = vsel %vm1518, %v1530, 0
    %vm1535 = vcmask 1043456
    %v1537 = vsel %vm1535, %v1531, 0
    %1539 = vmatpush.bf16.msra.mxu0 0
    %1540 = vmatpush.bf16.msra.mxu0 0
    %1541 = vmatpush.bf16.msra.mxu0 0
    %1542 = vmatpush.bf16.msra.mxu0 0
    %1543 = vmatpush.bf16.msra.mxu0 0
    %1544 = vmatpush.bf16.msra.mxu0 0
    %1545 = vmatpush.bf16.msra.mxu0 0
    %1546 = vmatpush.bf16.msra.mxu0 %v1537
    %1547 = vmatmul.bf16.gmra.mxu0 %v1533
    %v1548 = vpop.f32.mrf.mxu0
    %v1549 = vadd.f32 0.0, %v1548
    %v1550 = vpop.f32.mrf.mxu0
    %1551 = vdwg.mxu0
    %v1552 = vpack.c.bf16 %v1549, %v1549
    %v1569 = vunpack.c.l.b16 %v1468
    %v1570 = vunpack.c.h.b16 %v1468
    %v1571 = vunpack.c.l.b16 %v1469
    %v1572 = vunpack.c.h.b16 %v1469
    %v1573 = vunpack.c.l.b16 %v1470
    %v1574 = vunpack.c.h.b16 %v1470
    %v1575 = vunpack.c.l.b16 %v1471
    %v1576 = vunpack.c.h.b16 %v1471
    %v1577 = vunpack.c.l.b16 %v1472
    %v1578 = vunpack.c.h.b16 %v1472
    %v1579 = vunpack.c.l.b16 %v1473
    %v1580 = vunpack.c.h.b16 %v1473
    %v1581 = vunpack.c.l.b16 %v1474
    %v1582 = vunpack.c.h.b16 %v1474
    %v1583 = vunpack.c.l.b16 %v1475
    %v1584 = vunpack.c.h.b16 %v1475
    %v1585 = vunpack.c.l.b16 %v1476
    %v1586 = vunpack.c.h.b16 %v1476
    %v1587 = vunpack.c.l.b16 %v1477
    %v1588 = vunpack.c.h.b16 %v1477
    %v1589 = vunpack.c.l.b16 %v1478
    %v1590 = vunpack.c.h.b16 %v1478
    %v1591 = vunpack.c.l.b16 %v1479
    %v1592 = vunpack.c.h.b16 %v1479
    %v1593 = vunpack.c.l.b16 %v1480
    %v1594 = vunpack.c.h.b16 %v1480
    %v1595 = vunpack.c.l.b16 %v1481
    %v1596 = vunpack.c.h.b16 %v1481
    %v1597 = vunpack.c.l.b16 %v1482
    %v1598 = vunpack.c.h.b16 %v1482
    %v1599 = vunpack.c.l.b16 %v1483
    %v1600 = vunpack.c.h.b16 %v1483
    %v1601 = vpack.c.b16 %v1571, %v1569
    %v1602 = vpack.c.b16 %v1572, %v1570
    %v1603 = vpack.c.b16 %v1575, %v1573
    %v1604 = vpack.c.b16 %v1576, %v1574
    %v1605 = vpack.c.b16 %v1579, %v1577
    %v1606 = vpack.c.b16 %v1580, %v1578
    %v1607 = vpack.c.b16 %v1583, %v1581
    %v1608 = vpack.c.b16 %v1584, %v1582
    %v1609 = vpack.c.b16 %v1587, %v1585
    %v1610 = vpack.c.b16 %v1588, %v1586
    %v1611 = vpack.c.b16 %v1591, %v1589
    %v1612 = vpack.c.b16 %v1592, %v1590
    %v1613 = vpack.c.b16 %v1595, %v1593
    %v1614 = vpack.c.b16 %v1596, %v1594
    %v1615 = vpack.c.b16 %v1599, %v1597
    %v1616 = vpack.c.b16 %v1600, %v1598
    %1633 = vmatpush.bf16.msra.mxu0 %v1615
    %1634 = vmatpush.bf16.msra.mxu0 %v1613
    %1635 = vmatpush.bf16.msra.mxu0 %v1611
    %1636 = vmatpush.bf16.msra.mxu0 %v1609
    %1637 = vmatpush.bf16.msra.mxu0 %v1607
    %1638 = vmatpush.bf16.msra.mxu0 %v1605
    %1639 = vmatpush.bf16.msra.mxu0 %v1603
    %1640 = vmatpush.bf16.msra.mxu0 %v1601
    %1641 = vmatmul.bf16.gmra.mxu0 %v1552
    %v1642 = vpop.f32.mrf.mxu0
    %v1643 = vadd.f32 0.0, %v1642
    %v1644 = vpop.f32.mrf.mxu0
    %1645 = vdwg.mxu0
    %1646 = vmatpush.bf16.msra.mxu0 %v1616
    %1647 = vmatpush.bf16.msra.mxu0 %v1614
    %1648 = vmatpush.bf16.msra.mxu0 %v1612
    %1649 = vmatpush.bf16.msra.mxu0 %v1610
    %1650 = vmatpush.bf16.msra.mxu0 %v1608
    %1651 = vmatpush.bf16.msra.mxu0 %v1606
    %1652 = vmatpush.bf16.msra.mxu0 %v1604
    %1653 = vmatpush.bf16.msra.mxu0 %v1602
    %1654 = vmatmul.bf16.gmra.mxu0 %v1552
    %v1655 = vpop.f32.mrf.mxu0
    %v1656 = vadd.f32 0.0, %v1655
    %v1657 = vpop.f32.mrf.mxu0
    %1658 = vdwg.mxu0
    %v1660 = vperm.slane %v1500, 0
    %v1661 = vperm.slane %v1500, 1
    %v1664 = vadd.f32 %v1660, %v1643
    %v1665 = vadd.f32 %v1661, %v1656
    %v1666 = vpack.c.bf16 %v1361, %v1361
    %v1667 = vpack.c.bf16 %v1413, %v1413
    %1668 = vmatpush.bf16.xpose.msra.mxu0 0
    %1669 = vmatpush.bf16.xpose.msra.mxu0 0
    %1670 = vmatpush.bf16.xpose.msra.mxu0 0
    %1671 = vmatpush.bf16.xpose.msra.mxu0 0
    %1672 = vmatpush.bf16.xpose.msra.mxu0 0
    %1673 = vmatpush.bf16.xpose.msra.mxu0 0
    %1674 = vmatpush.bf16.xpose.msra.mxu0 0
    %1675 = vmatpush.bf16.xpose.msra.mxu0 %v1667
    %1676 = vmatmul.bf16.gmra.mxu0 %v1666
    %v1677 = vpop.f32.mrf.mxu0
    %v1678 = vadd.f32 0.0, %v1677
    %v1679 = vpop.f32.mrf.mxu0
    %1680 = vdwg.mxu0
    %v1681 = vmul.f32 %v1678, 0.088388346
    %v1682 = vadd.f32 %v1681, %v659
    %v1683 = vsel %vm1518, %v1682, -inf
    %1684 = vmax.xlane.f32.xlu0 %v1683
    %v1685 = vpop.xlane.xlu0 %1684
    %v1686 = vsub.f32 %v1682, %v1685
    %v1687 = vmul.f32 %v1686, 1.442695
    %v1688 = vpow.pop %v1687
    %v1689 = vsel %vm1518, %v1688, 0.0
    %1690 = vadd.xlane.f32.xlu0 %v1689
    %v1691 = vpop.xlane.xlu0 %1690
    %v1692 = vrcp.pop %v1691
    %v1693 = vmul.f32 %v1688, %v1692
    %v1694 = vpack.c.bf16 %v1693, %v1693
    %v1695 = vpack.c.bf16 %v1465, %v1465
    %v1697 = vsel %vm1518, %v1694, 0
    %v1700 = vsel %vm1535, %v1695, 0
    %1702 = vmatpush.bf16.msra.mxu0 0
    %1703 = vmatpush.bf16.msra.mxu0 0
    %1704 = vmatpush.bf16.msra.mxu0 0
    %1705 = vmatpush.bf16.msra.mxu0 0
    %1706 = vmatpush.bf16.msra.mxu0 0
    %1707 = vmatpush.bf16.msra.mxu0 0
    %1708 = vmatpush.bf16.msra.mxu0 0
    %1709 = vmatpush.bf16.msra.mxu0 %v1700
    %1710 = vmatmul.bf16.gmra.mxu0 %v1697
    %v1711 = vpop.f32.mrf.mxu0
    %v1712 = vadd.f32 0.0, %v1711
    %v1713 = vpop.f32.mrf.mxu0
    %1714 = vdwg.mxu0
    %v1715 = vpack.c.bf16 %v1712, %v1712
    %v1732 = vunpack.c.l.b16 %v1484
    %v1733 = vunpack.c.h.b16 %v1484
    %v1734 = vunpack.c.l.b16 %v1485
    %v1735 = vunpack.c.h.b16 %v1485
    %v1736 = vunpack.c.l.b16 %v1486
    %v1737 = vunpack.c.h.b16 %v1486
    %v1738 = vunpack.c.l.b16 %v1487
    %v1739 = vunpack.c.h.b16 %v1487
    %v1740 = vunpack.c.l.b16 %v1488
    %v1741 = vunpack.c.h.b16 %v1488
    %v1742 = vunpack.c.l.b16 %v1489
    %v1743 = vunpack.c.h.b16 %v1489
    %v1744 = vunpack.c.l.b16 %v1490
    %v1745 = vunpack.c.h.b16 %v1490
    %v1746 = vunpack.c.l.b16 %v1491
    %v1747 = vunpack.c.h.b16 %v1491
    %v1748 = vunpack.c.l.b16 %v1492
    %v1749 = vunpack.c.h.b16 %v1492
    %v1750 = vunpack.c.l.b16 %v1493
    %v1751 = vunpack.c.h.b16 %v1493
    %v1752 = vunpack.c.l.b16 %v1494
    %v1753 = vunpack.c.h.b16 %v1494
    %v1754 = vunpack.c.l.b16 %v1495
    %v1755 = vunpack.c.h.b16 %v1495
    %v1756 = vunpack.c.l.b16 %v1496
    %v1757 = vunpack.c.h.b16 %v1496
    %v1758 = vunpack.c.l.b16 %v1497
    %v1759 = vunpack.c.h.b16 %v1497
    %v1760 = vunpack.c.l.b16 %v1498
    %v1761 = vunpack.c.h.b16 %v1498
    %v1762 = vunpack.c.l.b16 %v1499
    %v1763 = vunpack.c.h.b16 %v1499
    %v1764 = vpack.c.b16 %v1734, %v1732
    %v1765 = vpack.c.b16 %v1735, %v1733
    %v1766 = vpack.c.b16 %v1738, %v1736
    %v1767 = vpack.c.b16 %v1739, %v1737
    %v1768 = vpack.c.b16 %v1742, %v1740
    %v1769 = vpack.c.b16 %v1743, %v1741
    %v1770 = vpack.c.b16 %v1746, %v1744
    %v1771 = vpack.c.b16 %v1747, %v1745
    %v1772 = vpack.c.b16 %v1750, %v1748
    %v1773 = vpack.c.b16 %v1751, %v1749
    %v1774 = vpack.c.b16 %v1754, %v1752
    %v1775 = vpack.c.b16 %v1755, %v1753
    %v1776 = vpack.c.b16 %v1758, %v1756
    %v1777 = vpack.c.b16 %v1759, %v1757
    %v1778 = vpack.c.b16 %v1762, %v1760
    %v1779 = vpack.c.b16 %v1763, %v1761
    %1796 = vmatpush.bf16.msra.mxu0 %v1778
    %1797 = vmatpush.bf16.msra.mxu0 %v1776
    %1798 = vmatpush.bf16.msra.mxu0 %v1774
    %1799 = vmatpush.bf16.msra.mxu0 %v1772
    %1800 = vmatpush.bf16.msra.mxu0 %v1770
    %1801 = vmatpush.bf16.msra.mxu0 %v1768
    %1802 = vmatpush.bf16.msra.mxu0 %v1766
    %1803 = vmatpush.bf16.msra.mxu0 %v1764
    %1804 = vmatmul.bf16.gmra.mxu0 %v1715
    %v1805 = vpop.f32.mrf.mxu0
    %v1806 = vadd.f32 0.0, %v1805
    %v1807 = vpop.f32.mrf.mxu0
    %1808 = vdwg.mxu0
    %1809 = vmatpush.bf16.msra.mxu0 %v1779
    %1810 = vmatpush.bf16.msra.mxu0 %v1777
    %1811 = vmatpush.bf16.msra.mxu0 %v1775
    %1812 = vmatpush.bf16.msra.mxu0 %v1773
    %1813 = vmatpush.bf16.msra.mxu0 %v1771
    %1814 = vmatpush.bf16.msra.mxu0 %v1769
    %1815 = vmatpush.bf16.msra.mxu0 %v1767
    %1816 = vmatpush.bf16.msra.mxu0 %v1765
    %1817 = vmatmul.bf16.gmra.mxu0 %v1715
    %v1818 = vpop.f32.mrf.mxu0
    %v1819 = vadd.f32 0.0, %v1818
    %v1820 = vpop.f32.mrf.mxu0
    %1821 = vdwg.mxu0
    %v1822 = vadd.f32 %v1664, %v1806
    %v1823 = vadd.f32 %v1665, %v1819
    %v1824 = vadd.f32 %v704, %v1822
    %v1825 = vadd.f32 %v717, %v1823
    %v1826 = vld [vmem:[#allocation18] ss:$2 sm:$0x3]
    %v1827 = vld [vmem:[#allocation19] ss:$2 sm:$0x3]
    %v1828 = vadd.f32 %v1824, %v1825
    %1829 = vadd.xlane.f32.xlu0 %v1828
    %v1830 = vpop.xlane.xlu0 %1829
    %v1831 = vrcp.pop 256.0
    %v1832 = vmul.f32 256.0, %v1831
    %v1833 = vsub.f32 1.0, %v1832
    %v1834 = vmul.f32 %v1831, %v1833
    %v1835 = vadd.f32 %v1831, %v1834
    %vm1836 = vweird.f32 %v1831
    %v1837 = vsel %vm1836, %v1831, %v1835
    %v1838 = vmul.f32 %v1830, %v1837
    %v1839 = vsub.f32 %v1824, %v1838
    %v1840 = vsub.f32 %v1825, %v1838
    %v1841 = vmul.f32 %v1839, %v1839
    %v1842 = vmul.f32 %v1840, %v1840
    %v1843 = vadd.f32 %v1841, %v1842
    %1844 = vadd.xlane.f32.xlu0 %v1843
    %v1845 = vpop.xlane.xlu0 %1844
    %v1846 = vmul.f32 %v1845, %v1837
    %v1847 = vadd.f32 %v1846, 1e-05
    %v1848 = vrsqrt.pop %v1847
    %v1849 = vmul.f32 %v1848, %v1847
    %v1850 = vmul.f32 %v1849, %v1848
    %v1851 = vmul.f32 0.5, %v1850
    %v1852 = vsub.f32 1.5, %v1851
    %v1853 = vmul.f32 %v1848, %v1852
    %vm1854 = vweird.f32 %v1847
    %vm1855 = vweird.f32 %v1848
    %vm1856 = vmor %vm1854, %vm1855
    %v1857 = vsel %vm1856, %v1848, %v1853
    %v1858 = vmul.f32 %v1839, %v1857
    %v1859 = vmul.f32 %v1840, %v1857
    %v1861 = vperm.slane %v1826, 0
    %v1862 = vperm.slane %v1826, 1
    %v1865 = vmul.f32 %v1858, %v1861
    %v1866 = vmul.f32 %v1859, %v1862
    %v1868 = vperm.slane %v1827, 0
    %v1869 = vperm.slane %v1827, 1
    %v1872 = vadd.f32 %v1865, %v1868
    %v1873 = vadd.f32 %v1866, %v1869
    %v1874 = vpack.c.bf16 %v1872, %v1872
    %v1875 = vpack.c.bf16 %v1873, %v1873
    %v1876 = vld [vmem:[#allocation21] sm:$0xff]
    %v1877 = vld [vmem:[#allocation21 + $0x8] sm:$0xff]
    %v1878 = vld [vmem:[#allocation21 + $0x10] sm:$0xff]
    %v1879 = vld [vmem:[#allocation21 + $0x18] sm:$0xff]
    %v1880 = vld [vmem:[#allocation21 + $0x20] sm:$0xff]
    %v1881 = vld [vmem:[#allocation21 + $0x28] sm:$0xff]
    %v1882 = vld [vmem:[#allocation21 + $0x30] sm:$0xff]
    %v1883 = vld [vmem:[#allocation21 + $0x38] sm:$0xff]
    %v1884 = vld [vmem:[#allocation21 + $0x40] sm:$0xff]
    %v1885 = vld [vmem:[#allocation21 + $0x48] sm:$0xff]
    %v1886 = vld [vmem:[#allocation21 + $0x50] sm:$0xff]
    %v1887 = vld [vmem:[#allocation21 + $0x58] sm:$0xff]
    %v1888 = vld [vmem:[#allocation21 + $0x60] sm:$0xff]
    %v1889 = vld [vmem:[#allocation21 + $0x68] sm:$0xff]
    %v1890 = vld [vmem:[#allocation21 + $0x70] sm:$0xff]
    %v1891 = vld [vmem:[#allocation21 + $0x78] sm:$0xff]
    %v1892 = vld [vmem:[#allocation21 + $0x80] sm:$0xff]
    %v1893 = vld [vmem:[#allocation21 + $0x88] sm:$0xff]
    %v1894 = vld [vmem:[#allocation21 + $0x90] sm:$0xff]
    %v1895 = vld [vmem:[#allocation21 + $0x98] sm:$0xff]
    %v1896 = vld [vmem:[#allocation21 + $0xa0] sm:$0xff]
    %v1897 = vld [vmem:[#allocation21 + $0xa8] sm:$0xff]
    %v1898 = vld [vmem:[#allocation21 + $0xb0] sm:$0xff]
    %v1899 = vld [vmem:[#allocation21 + $0xb8] sm:$0xff]
    %v1900 = vld [vmem:[#allocation21 + $0xc0] sm:$0xff]
    %v1901 = vld [vmem:[#allocation21 + $0xc8] sm:$0xff]
    %v1902 = vld [vmem:[#allocation21 + $0xd0] sm:$0xff]
    %v1903 = vld [vmem:[#allocation21 + $0xd8] sm:$0xff]
    %v1904 = vld [vmem:[#allocation21 + $0xe0] sm:$0xff]
    %v1905 = vld [vmem:[#allocation21 + $0xe8] sm:$0xff]
    %v1906 = vld [vmem:[#allocation21 + $0xf0] sm:$0xff]
    %v1907 = vld [vmem:[#allocation21 + $0xf8] sm:$0xff]
    %v1908 = vld [vmem:[#allocation22] ss:$2 sm:$0x3]
    %v1910 = vperm.slane %v1908, 0
    %v1911 = vperm.slane %v1908, 1
    %v1946 = vunpack.c.l.b16 %v1876
    %v1947 = vunpack.c.h.b16 %v1876
    %v1948 = vunpack.c.l.b16 %v1877
    %v1949 = vunpack.c.h.b16 %v1877
    %v1950 = vunpack.c.l.b16 %v1878
    %v1951 = vunpack.c.h.b16 %v1878
    %v1952 = vunpack.c.l.b16 %v1879
    %v1953 = vunpack.c.h.b16 %v1879
    %v1954 = vunpack.c.l.b16 %v1880
    %v1955 = vunpack.c.h.b16 %v1880
    %v1956 = vunpack.c.l.b16 %v1881
    %v1957 = vunpack.c.h.b16 %v1881
    %v1958 = vunpack.c.l.b16 %v1882
    %v1959 = vunpack.c.h.b16 %v1882
    %v1960 = vunpack.c.l.b16 %v1883
    %v1961 = vunpack.c.h.b16 %v1883
    %v1962 = vunpack.c.l.b16 %v1884
    %v1963 = vunpack.c.h.b16 %v1884
    %v1964 = vunpack.c.l.b16 %v1885
    %v1965 = vunpack.c.h.b16 %v1885
    %v1966 = vunpack.c.l.b16 %v1886
    %v1967 = vunpack.c.h.b16 %v1886
    %v1968 = vunpack.c.l.b16 %v1887
    %v1969 = vunpack.c.h.b16 %v1887
    %v1970 = vunpack.c.l.b16 %v1888
    %v1971 = vunpack.c.h.b16 %v1888
    %v1972 = vunpack.c.l.b16 %v1889
    %v1973 = vunpack.c.h.b16 %v1889
    %v1974 = vunpack.c.l.b16 %v1890
    %v1975 = vunpack.c.h.b16 %v1890
    %v1976 = vunpack.c.l.b16 %v1891
    %v1977 = vunpack.c.h.b16 %v1891
    %v1978 = vunpack.c.l.b16 %v1892
    %v1979 = vunpack.c.h.b16 %v1892
    %v1980 = vunpack.c.l.b16 %v1893
    %v1981 = vunpack.c.h.b16 %v1893
    %v1982 = vunpack.c.l.b16 %v1894
    %v1983 = vunpack.c.h.b16 %v1894
    %v1984 = vunpack.c.l.b16 %v1895
    %v1985 = vunpack.c.h.b16 %v1895
    %v1986 = vunpack.c.l.b16 %v1896
    %v1987 = vunpack.c.h.b16 %v1896
    %v1988 = vunpack.c.l.b16 %v1897
    %v1989 = vunpack.c.h.b16 %v1897
    %v1990 = vunpack.c.l.b16 %v1898
    %v1991 = vunpack.c.h.b16 %v1898
    %v1992 = vunpack.c.l.b16 %v1899
    %v1993 = vunpack.c.h.b16 %v1899
    %v1994 = vunpack.c.l.b16 %v1900
    %v1995 = vunpack.c.h.b16 %v1900
    %v1996 = vunpack.c.l.b16 %v1901
    %v1997 = vunpack.c.h.b16 %v1901
    %v1998 = vunpack.c.l.b16 %v1902
    %v1999 = vunpack.c.h.b16 %v1902
    %v2000 = vunpack.c.l.b16 %v1903
    %v2001 = vunpack.c.h.b16 %v1903
    %v2002 = vunpack.c.l.b16 %v1904
    %v2003 = vunpack.c.h.b16 %v1904
    %v2004 = vunpack.c.l.b16 %v1905
    %v2005 = vunpack.c.h.b16 %v1905
    %v2006 = vunpack.c.l.b16 %v1906
    %v2007 = vunpack.c.h.b16 %v1906
    %v2008 = vunpack.c.l.b16 %v1907
    %v2009 = vunpack.c.h.b16 %v1907
    %v2010 = vpack.c.b16 %v1948, %v1946
    %v2011 = vpack.c.b16 %v1949, %v1947
    %v2012 = vpack.c.b16 %v1952, %v1950
    %v2013 = vpack.c.b16 %v1953, %v1951
    %v2014 = vpack.c.b16 %v1956, %v1954
    %v2015 = vpack.c.b16 %v1957, %v1955
    %v2016 = vpack.c.b16 %v1960, %v1958
    %v2017 = vpack.c.b16 %v1961, %v1959
    %v2018 = vpack.c.b16 %v1964, %v1962
    %v2019 = vpack.c.b16 %v1965, %v1963
    %v2020 = vpack.c.b16 %v1968, %v1966
    %v2021 = vpack.c.b16 %v1969, %v1967
    %v2022 = vpack.c.b16 %v1972, %v1970
    %v2023 = vpack.c.b16 %v1973, %v1971
    %v2024 = vpack.c.b16 %v1976, %v1974
    %v2025 = vpack.c.b16 %v1977, %v1975
    %v2026 = vpack.c.b16 %v1980, %v1978
    %v2027 = vpack.c.b16 %v1981, %v1979
    %v2028 = vpack.c.b16 %v1984, %v1982
    %v2029 = vpack.c.b16 %v1985, %v1983
    %v2030 = vpack.c.b16 %v1988, %v1986
    %v2031 = vpack.c.b16 %v1989, %v1987
    %v2032 = vpack.c.b16 %v1992, %v1990
    %v2033 = vpack.c.b16 %v1993, %v1991
    %v2034 = vpack.c.b16 %v1996, %v1994
    %v2035 = vpack.c.b16 %v1997, %v1995
    %v2036 = vpack.c.b16 %v2000, %v1998
    %v2037 = vpack.c.b16 %v2001, %v1999
    %v2038 = vpack.c.b16 %v2004, %v2002
    %v2039 = vpack.c.b16 %v2005, %v2003
    %v2040 = vpack.c.b16 %v2008, %v2006
    %v2041 = vpack.c.b16 %v2009, %v2007
    %2074 = vmatpush.bf16.msra.mxu0 %v2024
    %2075 = vmatpush.bf16.msra.mxu0 %v2022
    %2076 = vmatpush.bf16.msra.mxu0 %v2020
    %2077 = vmatpush.bf16.msra.mxu0 %v2018
    %2078 = vmatpush.bf16.msra.mxu0 %v2016
    %2079 = vmatpush.bf16.msra.mxu0 %v2014
    %2080 = vmatpush.bf16.msra.mxu0 %v2012
    %2081 = vmatpush.bf16.msra.mxu0 %v2010
    %2082 = vmatmul.bf16.gmra.mxu0 %v1874
    %v2083 = vpop.f32.mrf.mxu0
    %v2084 = vadd.f32 %v1910, %v2083
    %v2085 = vpop.f32.mrf.mxu0
    %2086 = vdwg.mxu0
    %2087 = vmatpush.bf16.msra.mxu0 %v2040
    %2088 = vmatpush.bf16.msra.mxu0 %v2038
    %2089 = vmatpush.bf16.msra.mxu0 %v2036
    %2090 = vmatpush.bf16.msra.mxu0 %v2034
    %2091 = vmatpush.bf16.msra.mxu0 %v2032
    %2092 = vmatpush.bf16.msra.mxu0 %v2030
    %2093 = vmatpush.bf16.msra.mxu0 %v2028
    %2094 = vmatpush.bf16.msra.mxu0 %v2026
    %2095 = vmatmul.bf16.gmra.mxu0 %v1875
    %v2096 = vpop.f32.mrf.mxu0
    %v2097 = vadd.f32 %v2084, %v2096
    %v2098 = vpop.f32.mrf.mxu0
    %2099 = vdwg.mxu0
    %2100 = vmatpush.bf16.msra.mxu0 %v2025
    %2101 = vmatpush.bf16.msra.mxu0 %v2023
    %2102 = vmatpush.bf16.msra.mxu0 %v2021
    %2103 = vmatpush.bf16.msra.mxu0 %v2019
    %2104 = vmatpush.bf16.msra.mxu0 %v2017
    %2105 = vmatpush.bf16.msra.mxu0 %v2015
    %2106 = vmatpush.bf16.msra.mxu0 %v2013
    %2107 = vmatpush.bf16.msra.mxu0 %v2011
    %2108 = vmatmul.bf16.gmra.mxu0 %v1874
    %v2109 = vpop.f32.mrf.mxu0
    %v2110 = vadd.f32 %v1911, %v2109
    %v2111 = vpop.f32.mrf.mxu0
    %2112 = vdwg.mxu0
    %2113 = vmatpush.bf16.msra.mxu0 %v2041
    %2114 = vmatpush.bf16.msra.mxu0 %v2039
    %2115 = vmatpush.bf16.msra.mxu0 %v2037
    %2116 = vmatpush.bf16.msra.mxu0 %v2035
    %2117 = vmatpush.bf16.msra.mxu0 %v2033
    %2118 = vmatpush.bf16.msra.mxu0 %v2031
    %2119 = vmatpush.bf16.msra.mxu0 %v2029
    %2120 = vmatpush.bf16.msra.mxu0 %v2027
    %2121 = vmatmul.bf16.gmra.mxu0 %v1875
    %v2122 = vpop.f32.mrf.mxu0
    %v2123 = vadd.f32 %v2110, %v2122
    %v2124 = vpop.f32.mrf.mxu0
    %2125 = vdwg.mxu0
    %v2126 = vmax.f32 %v2097, 0.0
    %v2127 = vmax.f32 %v2123, 0.0
    %v2128 = vpack.c.bf16 %v2126, %v2126
    %v2129 = vpack.c.bf16 %v2127, %v2127
    %v2130 = vld [vmem:[#allocation24] sm:$0xff]
    %v2131 = vld [vmem:[#allocation24 + $0x8] sm:$0xff]
    %v2132 = vld [vmem:[#allocation24 + $0x10] sm:$0xff]
    %v2133 = vld [vmem:[#allocation24 + $0x18] sm:$0xff]
    %v2134 = vld [vmem:[#allocation24 + $0x20] sm:$0xff]
    %v2135 = vld [vmem:[#allocation24 + $0x28] sm:$0xff]
    %v2136 = vld [vmem:[#allocation24 + $0x30] sm:$0xff]
    %v2137 = vld [vmem:[#allocation24 + $0x38] sm:$0xff]
    %v2138 = vld [vmem:[#allocation24 + $0x40] sm:$0xff]
    %v2139 = vld [vmem:[#allocation24 + $0x48] sm:$0xff]
    %v2140 = vld [vmem:[#allocation24 + $0x50] sm:$0xff]
    %v2141 = vld [vmem:[#allocation24 + $0x58] sm:$0xff]
    %v2142 = vld [vmem:[#allocation24 + $0x60] sm:$0xff]
    %v2143 = vld [vmem:[#allocation24 + $0x68] sm:$0xff]
    %v2144 = vld [vmem:[#allocation24 + $0x70] sm:$0xff]
    %v2145 = vld [vmem:[#allocation24 + $0x78] sm:$0xff]
    %v2146 = vld [vmem:[#allocation24 + $0x80] sm:$0xff]
    %v2147 = vld [vmem:[#allocation24 + $0x88] sm:$0xff]
    %v2148 = vld [vmem:[#allocation24 + $0x90] sm:$0xff]
    %v2149 = vld [vmem:[#allocation24 + $0x98] sm:$0xff]
    %v2150 = vld [vmem:[#allocation24 + $0xa0] sm:$0xff]
    %v2151 = vld [vmem:[#allocation24 + $0xa8] sm:$0xff]
    %v2152 = vld [vmem:[#allocation24 + $0xb0] sm:$0xff]
    %v2153 = vld [vmem:[#allocation24 + $0xb8] sm:$0xff]
    %v2154 = vld [vmem:[#allocation24 + $0xc0] sm:$0xff]
    %v2155 = vld [vmem:[#allocation24 + $0xc8] sm:$0xff]
    %v2156 = vld [vmem:[#allocation24 + $0xd0] sm:$0xff]
    %v2157 = vld [vmem:[#allocation24 + $0xd8] sm:$0xff]
    %v2158 = vld [vmem:[#allocation24 + $0xe0] sm:$0xff]
    %v2159 = vld [vmem:[#allocation24 + $0xe8] sm:$0xff]
    %v2160 = vld [vmem:[#allocation24 + $0xf0] sm:$0xff]
    %v2161 = vld [vmem:[#allocation24 + $0xf8] sm:$0xff]
    %v2162 = vld [vmem:[#allocation25] ss:$2 sm:$0x3]
    %v2164 = vperm.slane %v2162, 0
    %v2165 = vperm.slane %v2162, 1
    %v2200 = vunpack.c.l.b16 %v2130
    %v2201 = vunpack.c.h.b16 %v2130
    %v2202 = vunpack.c.l.b16 %v2131
    %v2203 = vunpack.c.h.b16 %v2131
    %v2204 = vunpack.c.l.b16 %v2132
    %v2205 = vunpack.c.h.b16 %v2132
    %v2206 = vunpack.c.l.b16 %v2133
    %v2207 = vunpack.c.h.b16 %v2133
    %v2208 = vunpack.c.l.b16 %v2134
    %v2209 = vunpack.c.h.b16 %v2134
    %v2210 = vunpack.c.l.b16 %v2135
    %v2211 = vunpack.c.h.b16 %v2135
    %v2212 = vunpack.c.l.b16 %v2136
    %v2213 = vunpack.c.h.b16 %v2136
    %v2214 = vunpack.c.l.b16 %v2137
    %v2215 = vunpack.c.h.b16 %v2137
    %v2216 = vunpack.c.l.b16 %v2138
    %v2217 = vunpack.c.h.b16 %v2138
    %v2218 = vunpack.c.l.b16 %v2139
    %v2219 = vunpack.c.h.b16 %v2139
    %v2220 = vunpack.c.l.b16 %v2140
    %v2221 = vunpack.c.h.b16 %v2140
    %v2222 = vunpack.c.l.b16 %v2141
    %v2223 = vunpack.c.h.b16 %v2141
    %v2224 = vunpack.c.l.b16 %v2142
    %v2225 = vunpack.c.h.b16 %v2142
    %v2226 = vunpack.c.l.b16 %v2143
    %v2227 = vunpack.c.h.b16 %v2143
    %v2228 = vunpack.c.l.b16 %v2144
    %v2229 = vunpack.c.h.b16 %v2144
    %v2230 = vunpack.c.l.b16 %v2145
    %v2231 = vunpack.c.h.b16 %v2145
    %v2232 = vunpack.c.l.b16 %v2146
    %v2233 = vunpack.c.h.b16 %v2146
    %v2234 = vunpack.c.l.b16 %v2147
    %v2235 = vunpack.c.h.b16 %v2147
    %v2236 = vunpack.c.l.b16 %v2148
    %v2237 = vunpack.c.h.b16 %v2148
    %v2238 = vunpack.c.l.b16 %v2149
    %v2239 = vunpack.c.h.b16 %v2149
    %v2240 = vunpack.c.l.b16 %v2150
    %v2241 = vunpack.c.h.b16 %v2150
    %v2242 = vunpack.c.l.b16 %v2151
    %v2243 = vunpack.c.h.b16 %v2151
    %v2244 = vunpack.c.l.b16 %v2152
    %v2245 = vunpack.c.h.b16 %v2152
    %v2246 = vunpack.c.l.b16 %v2153
    %v2247 = vunpack.c.h.b16 %v2153
    %v2248 = vunpack.c.l.b16 %v2154
    %v2249 = vunpack.c.h.b16 %v2154
    %v2250 = vunpack.c.l.b16 %v2155
    %v2251 = vunpack.c.h.b16 %v2155
    %v2252 = vunpack.c.l.b16 %v2156
    %v2253 = vunpack.c.h.b16 %v2156
    %v2254 = vunpack.c.l.b16 %v2157
    %v2255 = vunpack.c.h.b16 %v2157
    %v2256 = vunpack.c.l.b16 %v2158
    %v2257 = vunpack.c.h.b16 %v2158
    %v2258 = vunpack.c.l.b16 %v2159
    %v2259 = vunpack.c.h.b16 %v2159
    %v2260 = vunpack.c.l.b16 %v2160
    %v2261 = vunpack.c.h.b16 %v2160
    %v2262 = vunpack.c.l.b16 %v2161
    %v2263 = vunpack.c.h.b16 %v2161
    %v2264 = vpack.c.b16 %v2202, %v2200
    %v2265 = vpack.c.b16 %v2203, %v2201
    %v2266 = vpack.c.b16 %v2206, %v2204
    %v2267 = vpack.c.b16 %v2207, %v2205
    %v2268 = vpack.c.b16 %v2210, %v2208
    %v2269 = vpack.c.b16 %v2211, %v2209
    %v2270 = vpack.c.b16 %v2214, %v2212
    %v2271 = vpack.c.b16 %v2215, %v2213
    %v2272 = vpack.c.b16 %v2218, %v2216
    %v2273 = vpack.c.b16 %v2219, %v2217
    %v2274 = vpack.c.b16 %v2222, %v2220
    %v2275 = vpack.c.b16 %v2223, %v2221
    %v2276 = vpack.c.b16 %v2226, %v2224
    %v2277 = vpack.c.b16 %v2227, %v2225
    %v2278 = vpack.c.b16 %v2230, %v2228
    %v2279 = vpack.c.b16 %v2231, %v2229
    %v2280 = vpack.c.b16 %v2234, %v2232
    %v2281 = vpack.c.b16 %v2235, %v2233
    %v2282 = vpack.c.b16 %v2238, %v2236
    %v2283 = vpack.c.b16 %v2239, %v2237
    %v2284 = vpack.c.b16 %v2242, %v2240
    %v2285 = vpack.c.b16 %v2243, %v2241
    %v2286 = vpack.c.b16 %v2246, %v2244
    %v2287 = vpack.c.b16 %v2247, %v2245
    %v2288 = vpack.c.b16 %v2250, %v2248
    %v2289 = vpack.c.b16 %v2251, %v2249
    %v2290 = vpack.c.b16 %v2254, %v2252
    %v2291 = vpack.c.b16 %v2255, %v2253
    %v2292 = vpack.c.b16 %v2258, %v2256
    %v2293 = vpack.c.b16 %v2259, %v2257
    %v2294 = vpack.c.b16 %v2262, %v2260
    %v2295 = vpack.c.b16 %v2263, %v2261
    %2328 = vmatpush.bf16.msra.mxu0 %v2278
    %2329 = vmatpush.bf16.msra.mxu0 %v2276
    %2330 = vmatpush.bf16.msra.mxu0 %v2274
    %2331 = vmatpush.bf16.msra.mxu0 %v2272
    %2332 = vmatpush.bf16.msra.mxu0 %v2270
    %2333 = vmatpush.bf16.msra.mxu0 %v2268
    %2334 = vmatpush.bf16.msra.mxu0 %v2266
    %2335 = vmatpush.bf16.msra.mxu0 %v2264
    %2336 = vmatmul.bf16.gmra.mxu0 %v2128
    %v2337 = vpop.f32.mrf.mxu0
    %v2338 = vadd.f32 %v2164, %v2337
    %v2339 = vpop.f32.mrf.mxu0
    %2340 = vdwg.mxu0
    %2341 = vmatpush.bf16.msra.mxu0 %v2294
    %2342 = vmatpush.bf16.msra.mxu0 %v2292
    %2343 = vmatpush.bf16.msra.mxu0 %v2290
    %2344 = vmatpush.bf16.msra.mxu0 %v2288
    %2345 = vmatpush.bf16.msra.mxu0 %v2286
    %2346 = vmatpush.bf16.msra.mxu0 %v2284
    %2347 = vmatpush.bf16.msra.mxu0 %v2282
    %2348 = vmatpush.bf16.msra.mxu0 %v2280
    %2349 = vmatmul.bf16.gmra.mxu0 %v2129
    %v2350 = vpop.f32.mrf.mxu0
    %v2351 = vadd.f32 %v2338, %v2350
    %v2352 = vpop.f32.mrf.mxu0
    %2353 = vdwg.mxu0
    %2354 = vmatpush.bf16.msra.mxu0 %v2279
    %2355 = vmatpush.bf16.msra.mxu0 %v2277
    %2356 = vmatpush.bf16.msra.mxu0 %v2275
    %2357 = vmatpush.bf16.msra.mxu0 %v2273
    %2358 = vmatpush.bf16.msra.mxu0 %v2271
    %2359 = vmatpush.bf16.msra.mxu0 %v2269
    %2360 = vmatpush.bf16.msra.mxu0 %v2267
    %2361 = vmatpush.bf16.msra.mxu0 %v2265
    %2362 = vmatmul.bf16.gmra.mxu0 %v2128
    %v2363 = vpop.f32.mrf.mxu0
    %v2364 = vadd.f32 %v2165, %v2363
    %v2365 = vpop.f32.mrf.mxu0
    %2366 = vdwg.mxu0
    %2367 = vmatpush.bf16.msra.mxu0 %v2295
    %2368 = vmatpush.bf16.msra.mxu0 %v2293
    %2369 = vmatpush.bf16.msra.mxu0 %v2291
    %2370 = vmatpush.bf16.msra.mxu0 %v2289
    %2371 = vmatpush.bf16.msra.mxu0 %v2287
    %2372 = vmatpush.bf16.msra.mxu0 %v2285
    %2373 = vmatpush.bf16.msra.mxu0 %v2283
    %2374 = vmatpush.bf16.msra.mxu0 %v2281
    %2375 = vmatmul.bf16.gmra.mxu0 %v2129
    %v2376 = vpop.f32.mrf.mxu0
    %v2377 = vadd.f32 %v2364, %v2376
    %v2378 = vpop.f32.mrf.mxu0
    %2379 = vdwg.mxu0
    %v2380 = vadd.f32 %v1872, %v2351
    %v2381 = vadd.f32 %v1873, %v2377
    %v2382 = vld [vmem:[#allocation27] ss:$2 sm:$0x3]
    %v2383 = vld [vmem:[#allocation28] ss:$2 sm:$0x3]
    %v2384 = vadd.f32 %v2380, %v2381
    %2385 = vadd.xlane.f32.xlu0 %v2384
    %v2386 = vpop.xlane.xlu0 %2385
    %v2387 = vmul.f32 %v2386, %v1837
    %v2388 = vsub.f32 %v2380, %v2387
    %v2389 = vsub.f32 %v2381, %v2387
    %v2390 = vmul.f32 %v2388, %v2388
    %v2391 = vmul.f32 %v2389, %v2389
    %v2392 = vadd.f32 %v2390, %v2391
    %2393 = vadd.xlane.f32.xlu0 %v2392
    %v2394 = vpop.xlane.xlu0 %2393
    %v2395 = vmul.f32 %v2394, %v1837
    %v2396 = vadd.f32 %v2395, 1e-05
    %v2397 = vrsqrt.pop %v2396
    %v2398 = vmul.f32 %v2397, %v2396
    %v2399 = vmul.f32 %v2398, %v2397
    %v2400 = vmul.f32 0.5, %v2399
    %v2401 = vsub.f32 1.5, %v2400
    %v2402 = vmul.f32 %v2397, %v2401
    %vm2403 = vweird.f32 %v2396
    %vm2404 = vweird.f32 %v2397
    %vm2405 = vmor %vm2403, %vm2404
    %v2406 = vsel %vm2405, %v2397, %v2402
    %v2407 = vmul.f32 %v2388, %v2406
    %v2408 = vmul.f32 %v2389, %v2406
    %v2410 = vperm.slane %v2382, 0
    %v2411 = vperm.slane %v2382, 1
    %v2414 = vmul.f32 %v2407, %v2410
    %v2415 = vmul.f32 %v2408, %v2411
    %v2417 = vperm.slane %v2383, 0
    %v2418 = vperm.slane %v2383, 1
    %v2421 = vadd.f32 %v2414, %v2417
    %v2422 = vadd.f32 %v2415, %v2418
    %v2423 = vpack.c.bf16 %v2421, %v2421
    %v2424 = vpack.c.bf16 %v2422, %v2422
    %s2425 = scalar_lea.vmem [#allocation12], 768
    %v2426 = vld [vmem:[%s2425] sm:$0xff]
    %v2427 = vld [vmem:[%s2425 + $0x8] sm:$0xff]
    %v2428 = vld [vmem:[%s2425 + $0x10] sm:$0xff]
    %v2429 = vld [vmem:[%s2425 + $0x18] sm:$0xff]
    %v2430 = vld [vmem:[%s2425 + $0x20] sm:$0xff]
    %v2431 = vld [vmem:[%s2425 + $0x28] sm:$0xff]
    %v2432 = vld [vmem:[%s2425 + $0x30] sm:$0xff]
    %v2433 = vld [vmem:[%s2425 + $0x38] sm:$0xff]
    %v2434 = vld [vmem:[%s2425 + $0x40] sm:$0xff]
    %v2435 = vld [vmem:[%s2425 + $0x48] sm:$0xff]
    %v2436 = vld [vmem:[%s2425 + $0x50] sm:$0xff]
    %v2437 = vld [vmem:[%s2425 + $0x58] sm:$0xff]
    %v2438 = vld [vmem:[%s2425 + $0x60] sm:$0xff]
    %v2439 = vld [vmem:[%s2425 + $0x68] sm:$0xff]
    %v2440 = vld [vmem:[%s2425 + $0x70] sm:$0xff]
    %v2441 = vld [vmem:[%s2425 + $0x78] sm:$0xff]
    %v2442 = vld [vmem:[%s2425 + $0x80] sm:$0xff]
    %v2443 = vld [vmem:[%s2425 + $0x88] sm:$0xff]
    %v2444 = vld [vmem:[%s2425 + $0x90] sm:$0xff]
    %v2445 = vld [vmem:[%s2425 + $0x98] sm:$0xff]
    %v2446 = vld [vmem:[%s2425 + $0xa0] sm:$0xff]
    %v2447 = vld [vmem:[%s2425 + $0xa8] sm:$0xff]
    %v2448 = vld [vmem:[%s2425 + $0xb0] sm:$0xff]
    %v2449 = vld [vmem:[%s2425 + $0xb8] sm:$0xff]
    %v2450 = vld [vmem:[%s2425 + $0xc0] sm:$0xff]
    %v2451 = vld [vmem:[%s2425 + $0xc8] sm:$0xff]
    %v2452 = vld [vmem:[%s2425 + $0xd0] sm:$0xff]
    %v2453 = vld [vmem:[%s2425 + $0xd8] sm:$0xff]
    %v2454 = vld [vmem:[%s2425 + $0xe0] sm:$0xff]
    %v2455 = vld [vmem:[%s2425 + $0xe8] sm:$0xff]
    %v2456 = vld [vmem:[%s2425 + $0xf0] sm:$0xff]
    %v2457 = vld [vmem:[%s2425 + $0xf8] sm:$0xff]
    %v2458 = vld [vmem:[%s2425 + $0x100] sm:$0xff]
    %v2459 = vld [vmem:[%s2425 + $0x108] sm:$0xff]
    %v2460 = vld [vmem:[%s2425 + $0x110] sm:$0xff]
    %v2461 = vld [vmem:[%s2425 + $0x118] sm:$0xff]
    %v2462 = vld [vmem:[%s2425 + $0x120] sm:$0xff]
    %v2463 = vld [vmem:[%s2425 + $0x128] sm:$0xff]
    %v2464 = vld [vmem:[%s2425 + $0x130] sm:$0xff]
    %v2465 = vld [vmem:[%s2425 + $0x138] sm:$0xff]
    %v2466 = vld [vmem:[%s2425 + $0x140] sm:$0xff]
    %v2467 = vld [vmem:[%s2425 + $0x148] sm:$0xff]
    %v2468 = vld [vmem:[%s2425 + $0x150] sm:$0xff]
    %v2469 = vld [vmem:[%s2425 + $0x158] sm:$0xff]
    %v2470 = vld [vmem:[%s2425 + $0x160] sm:$0xff]
    %v2471 = vld [vmem:[%s2425 + $0x168] sm:$0xff]
    %v2472 = vld [vmem:[%s2425 + $0x170] sm:$0xff]
    %v2473 = vld [vmem:[%s2425 + $0x178] sm:$0xff]
    %v2474 = vld [vmem:[%s2425 + $0x180] sm:$0xff]
    %v2475 = vld [vmem:[%s2425 + $0x188] sm:$0xff]
    %v2476 = vld [vmem:[%s2425 + $0x190] sm:$0xff]
    %v2477 = vld [vmem:[%s2425 + $0x198] sm:$0xff]
    %v2478 = vld [vmem:[%s2425 + $0x1a0] sm:$0xff]
    %v2479 = vld [vmem:[%s2425 + $0x1a8] sm:$0xff]
    %v2480 = vld [vmem:[%s2425 + $0x1b0] sm:$0xff]
    %v2481 = vld [vmem:[%s2425 + $0x1b8] sm:$0xff]
    %v2482 = vld [vmem:[%s2425 + $0x1c0] sm:$0xff]
    %v2483 = vld [vmem:[%s2425 + $0x1c8] sm:$0xff]
    %v2484 = vld [vmem:[%s2425 + $0x1d0] sm:$0xff]
    %v2485 = vld [vmem:[%s2425 + $0x1d8] sm:$0xff]
    %v2486 = vld [vmem:[%s2425 + $0x1e0] sm:$0xff]
    %v2487 = vld [vmem:[%s2425 + $0x1e8] sm:$0xff]
    %v2488 = vld [vmem:[%s2425 + $0x1f0] sm:$0xff]
    %v2489 = vld [vmem:[%s2425 + $0x1f8] sm:$0xff]
    %v2490 = vld [vmem:[%s2425 + $0x200] sm:$0xff]
    %v2491 = vld [vmem:[%s2425 + $0x208] sm:$0xff]
    %v2492 = vld [vmem:[%s2425 + $0x210] sm:$0xff]
    %v2493 = vld [vmem:[%s2425 + $0x218] sm:$0xff]
    %v2494 = vld [vmem:[%s2425 + $0x220] sm:$0xff]
    %v2495 = vld [vmem:[%s2425 + $0x228] sm:$0xff]
    %v2496 = vld [vmem:[%s2425 + $0x230] sm:$0xff]
    %v2497 = vld [vmem:[%s2425 + $0x238] sm:$0xff]
    %v2498 = vld [vmem:[%s2425 + $0x240] sm:$0xff]
    %v2499 = vld [vmem:[%s2425 + $0x248] sm:$0xff]
    %v2500 = vld [vmem:[%s2425 + $0x250] sm:$0xff]
    %v2501 = vld [vmem:[%s2425 + $0x258] sm:$0xff]
    %v2502 = vld [vmem:[%s2425 + $0x260] sm:$0xff]
    %v2503 = vld [vmem:[%s2425 + $0x268] sm:$0xff]
    %v2504 = vld [vmem:[%s2425 + $0x270] sm:$0xff]
    %v2505 = vld [vmem:[%s2425 + $0x278] sm:$0xff]
    %v2506 = vld [vmem:[%s2425 + $0x280] sm:$0xff]
    %v2507 = vld [vmem:[%s2425 + $0x288] sm:$0xff]
    %v2508 = vld [vmem:[%s2425 + $0x290] sm:$0xff]
    %v2509 = vld [vmem:[%s2425 + $0x298] sm:$0xff]
    %v2510 = vld [vmem:[%s2425 + $0x2a0] sm:$0xff]
    %v2511 = vld [vmem:[%s2425 + $0x2a8] sm:$0xff]
    %v2512 = vld [vmem:[%s2425 + $0x2b0] sm:$0xff]
    %v2513 = vld [vmem:[%s2425 + $0x2b8] sm:$0xff]
    %v2514 = vld [vmem:[%s2425 + $0x2c0] sm:$0xff]
    %v2515 = vld [vmem:[%s2425 + $0x2c8] sm:$0xff]
    %v2516 = vld [vmem:[%s2425 + $0x2d0] sm:$0xff]
    %v2517 = vld [vmem:[%s2425 + $0x2d8] sm:$0xff]
    %v2518 = vld [vmem:[%s2425 + $0x2e0] sm:$0xff]
    %v2519 = vld [vmem:[%s2425 + $0x2e8] sm:$0xff]
    %v2520 = vld [vmem:[%s2425 + $0x2f0] sm:$0xff]
    %v2521 = vld [vmem:[%s2425 + $0x2f8] sm:$0xff]
    %s2522 = scalar_lea.vmem [#allocation13], 1
    %v2523 = vld [vmem:[%s2522] ss:$2 sm:$0x3f]
    %v2525 = vperm.slane %v2523, 0
    %v2526 = vperm.slane %v2523, 1
    %v2527 = vperm.slane %v2523, 2
    %v2528 = vperm.slane %v2523, 3
    %v2529 = vperm.slane %v2523, 4
    %v2530 = vperm.slane %v2523, 5
    %v2633 = vunpack.c.l.b16 %v2426
    %v2634 = vunpack.c.h.b16 %v2426
    %v2635 = vunpack.c.l.b16 %v2427
    %v2636 = vunpack.c.h.b16 %v2427
    %v2637 = vunpack.c.l.b16 %v2428
    %v2638 = vunpack.c.h.b16 %v2428
    %v2639 = vunpack.c.l.b16 %v2429
    %v2640 = vunpack.c.h.b16 %v2429
    %v2641 = vunpack.c.l.b16 %v2430
    %v2642 = vunpack.c.h.b16 %v2430
    %v2643 = vunpack.c.l.b16 %v2431
    %v2644 = vunpack.c.h.b16 %v2431
    %v2645 = vunpack.c.l.b16 %v2432
    %v2646 = vunpack.c.h.b16 %v2432
    %v2647 = vunpack.c.l.b16 %v2433
    %v2648 = vunpack.c.h.b16 %v2433
    %v2649 = vunpack.c.l.b16 %v2434
    %v2650 = vunpack.c.h.b16 %v2434
    %v2651 = vunpack.c.l.b16 %v2435
    %v2652 = vunpack.c.h.b16 %v2435
    %v2653 = vunpack.c.l.b16 %v2436
    %v2654 = vunpack.c.h.b16 %v2436
    %v2655 = vunpack.c.l.b16 %v2437
    %v2656 = vunpack.c.h.b16 %v2437
    %v2657 = vunpack.c.l.b16 %v2438
    %v2658 = vunpack.c.h.b16 %v2438
    %v2659 = vunpack.c.l.b16 %v2439
    %v2660 = vunpack.c.h.b16 %v2439
    %v2661 = vunpack.c.l.b16 %v2440
    %v2662 = vunpack.c.h.b16 %v2440
    %v2663 = vunpack.c.l.b16 %v2441
    %v2664 = vunpack.c.h.b16 %v2441
    %v2665 = vunpack.c.l.b16 %v2442
    %v2666 = vunpack.c.h.b16 %v2442
    %v2667 = vunpack.c.l.b16 %v2443
    %v2668 = vunpack.c.h.b16 %v2443
    %v2669 = vunpack.c.l.b16 %v2444
    %v2670 = vunpack.c.h.b16 %v2444
    %v2671 = vunpack.c.l.b16 %v2445
    %v2672 = vunpack.c.h.b16 %v2445
    %v2673 = vunpack.c.l.b16 %v2446
    %v2674 = vunpack.c.h.b16 %v2446
    %v2675 = vunpack.c.l.b16 %v2447
    %v2676 = vunpack.c.h.b16 %v2447
    %v2677 = vunpack.c.l.b16 %v2448
    %v2678 = vunpack.c.h.b16 %v2448
    %v2679 = vunpack.c.l.b16 %v2449
    %v2680 = vunpack.c.h.b16 %v2449
    %v2681 = vunpack.c.l.b16 %v2450
    %v2682 = vunpack.c.h.b16 %v2450
    %v2683 = vunpack.c.l.b16 %v2451
    %v2684 = vunpack.c.h.b16 %v2451
    %v2685 = vunpack.c.l.b16 %v2452
    %v2686 = vunpack.c.h.b16 %v2452
    %v2687 = vunpack.c.l.b16 %v2453
    %v2688 = vunpack.c.h.b16 %v2453
    %v2689 = vunpack.c.l.b16 %v2454
    %v2690 = vunpack.c.h.b16 %v2454
    %v2691 = vunpack.c.l.b16 %v2455
    %v2692 = vunpack.c.h.b16 %v2455
    %v2693 = vunpack.c.l.b16 %v2456
    %v2694 = vunpack.c.h.b16 %v2456
    %v2695 = vunpack.c.l.b16 %v2457
    %v2696 = vunpack.c.h.b16 %v2457
    %v2697 = vunpack.c.l.b16 %v2458
    %v2698 = vunpack.c.h.b16 %v2458
    %v2699 = vunpack.c.l.b16 %v2459
    %v2700 = vunpack.c.h.b16 %v2459
    %v2701 = vunpack.c.l.b16 %v2460
    %v2702 = vunpack.c.h.b16 %v2460
    %v2703 = vunpack.c.l.b16 %v2461
    %v2704 = vunpack.c.h.b16 %v2461
    %v2705 = vunpack.c.l.b16 %v2462
    %v2706 = vunpack.c.h.b16 %v2462
    %v2707 = vunpack.c.l.b16 %v2463
    %v2708 = vunpack.c.h.b16 %v2463
    %v2709 = vunpack.c.l.b16 %v2464
    %v2710 = vunpack.c.h.b16 %v2464
    %v2711 = vunpack.c.l.b16 %v2465
    %v2712 = vunpack.c.h.b16 %v2465
    %v2713 = vunpack.c.l.b16 %v2466
    %v2714 = vunpack.c.h.b16 %v2466
    %v2715 = vunpack.c.l.b16 %v2467
    %v2716 = vunpack.c.h.b16 %v2467
    %v2717 = vunpack.c.l.b16 %v2468
    %v2718 = vunpack.c.h.b16 %v2468
    %v2719 = vunpack.c.l.b16 %v2469
    %v2720 = vunpack.c.h.b16 %v2469
    %v2721 = vunpack.c.l.b16 %v2470
    %v2722 = vunpack.c.h.b16 %v2470
    %v2723 = vunpack.c.l.b16 %v2471
    %v2724 = vunpack.c.h.b16 %v2471
    %v2725 = vunpack.c.l.b16 %v2472
    %v2726 = vunpack.c.h.b16 %v2472
    %v2727 = vunpack.c.l.b16 %v2473
    %v2728 = vunpack.c.h.b16 %v2473
    %v2729 = vunpack.c.l.b16 %v2474
    %v2730 = vunpack.c.h.b16 %v2474
    %v2731 = vunpack.c.l.b16 %v2475
    %v2732 = vunpack.c.h.b16 %v2475
    %v2733 = vunpack.c.l.b16 %v2476
    %v2734 = vunpack.c.h.b16 %v2476
    %v2735 = vunpack.c.l.b16 %v2477
    %v2736 = vunpack.c.h.b16 %v2477
    %v2737 = vunpack.c.l.b16 %v2478
    %v2738 = vunpack.c.h.b16 %v2478
    %v2739 = vunpack.c.l.b16 %v2479
    %v2740 = vunpack.c.h.b16 %v2479
    %v2741 = vunpack.c.l.b16 %v2480
    %v2742 = vunpack.c.h.b16 %v2480
    %v2743 = vunpack.c.l.b16 %v2481
    %v2744 = vunpack.c.h.b16 %v2481
    %v2745 = vunpack.c.l.b16 %v2482
    %v2746 = vunpack.c.h.b16 %v2482
    %v2747 = vunpack.c.l.b16 %v2483
    %v2748 = vunpack.c.h.b16 %v2483
    %v2749 = vunpack.c.l.b16 %v2484
    %v2750 = vunpack.c.h.b16 %v2484
    %v2751 = vunpack.c.l.b16 %v2485
    %v2752 = vunpack.c.h.b16 %v2485
    %v2753 = vunpack.c.l.b16 %v2486
    %v2754 = vunpack.c.h.b16 %v2486
    %v2755 = vunpack.c.l.b16 %v2487
    %v2756 = vunpack.c.h.b16 %v2487
    %v2757 = vunpack.c.l.b16 %v2488
    %v2758 = vunpack.c.h.b16 %v2488
    %v2759 = vunpack.c.l.b16 %v2489
    %v2760 = vunpack.c.h.b16 %v2489
    %v2761 = vunpack.c.l.b16 %v2490
    %v2762 = vunpack.c.h.b16 %v2490
    %v2763 = vunpack.c.l.b16 %v2491
    %v2764 = vunpack.c.h.b16 %v2491
    %v2765 = vunpack.c.l.b16 %v2492
    %v2766 = vunpack.c.h.b16 %v2492
    %v2767 = vunpack.c.l.b16 %v2493
    %v2768 = vunpack.c.h.b16 %v2493
    %v2769 = vunpack.c.l.b16 %v2494
    %v2770 = vunpack.c.h.b16 %v2494
    %v2771 = vunpack.c.l.b16 %v2495
    %v2772 = vunpack.c.h.b16 %v2495
    %v2773 = vunpack.c.l.b16 %v2496
    %v2774 = vunpack.c.h.b16 %v2496
    %v2775 = vunpack.c.l.b16 %v2497
    %v2776 = vunpack.c.h.b16 %v2497
    %v2777 = vunpack.c.l.b16 %v2498
    %v2778 = vunpack.c.h.b16 %v2498
    %v2779 = vunpack.c.l.b16 %v2499
    %v2780 = vunpack.c.h.b16 %v2499
    %v2781 = vunpack.c.l.b16 %v2500
    %v2782 = vunpack.c.h.b16 %v2500
    %v2783 = vunpack.c.l.b16 %v2501
    %v2784 = vunpack.c.h.b16 %v2501
    %v2785 = vunpack.c.l.b16 %v2502
    %v2786 = vunpack.c.h.b16 %v2502
    %v2787 = vunpack.c.l.b16 %v2503
    %v2788 = vunpack.c.h.b16 %v2503
    %v2789 = vunpack.c.l.b16 %v2504
    %v2790 = vunpack.c.h.b16 %v2504
    %v2791 = vunpack.c.l.b16 %v2505
    %v2792 = vunpack.c.h.b16 %v2505
    %v2793 = vunpack.c.l.b16 %v2506
    %v2794 = vunpack.c.h.b16 %v2506
    %v2795 = vunpack.c.l.b16 %v2507
    %v2796 = vunpack.c.h.b16 %v2507
    %v2797 = vunpack.c.l.b16 %v2508
    %v2798 = vunpack.c.h.b16 %v2508
    %v2799 = vunpack.c.l.b16 %v2509
    %v2800 = vunpack.c.h.b16 %v2509
    %v2801 = vunpack.c.l.b16 %v2510
    %v2802 = vunpack.c.h.b16 %v2510
    %v2803 = vunpack.c.l.b16 %v2511
    %v2804 = vunpack.c.h.b16 %v2511
    %v2805 = vunpack.c.l.b16 %v2512
    %v2806 = vunpack.c.h.b16 %v2512
    %v2807 = vunpack.c.l.b16 %v2513
    %v2808 = vunpack.c.h.b16 %v2513
    %v2809 = vunpack.c.l.b16 %v2514
    %v2810 = vunpack.c.h.b16 %v2514
    %v2811 = vunpack.c.l.b16 %v2515
    %v2812 = vunpack.c.h.b16 %v2515
    %v2813 = vunpack.c.l.b16 %v2516
    %v2814 = vunpack.c.h.b16 %v2516
    %v2815 = vunpack.c.l.b16 %v2517
    %v2816 = vunpack.c.h.b16 %v2517
    %v2817 = vunpack.c.l.b16 %v2518
    %v2818 = vunpack.c.h.b16 %v2518
    %v2819 = vunpack.c.l.b16 %v2519
    %v2820 = vunpack.c.h.b16 %v2519
    %v2821 = vunpack.c.l.b16 %v2520
    %v2822 = vunpack.c.h.b16 %v2520
    %v2823 = vunpack.c.l.b16 %v2521
    %v2824 = vunpack.c.h.b16 %v2521
    %v2825 = vpack.c.b16 %v2639, %v2633
    %v2826 = vpack.c.b16 %v2640, %v2634
    %v2827 = vpack.c.b16 %v2641, %v2635
    %v2828 = vpack.c.b16 %v2642, %v2636
    %v2829 = vpack.c.b16 %v2643, %v2637
    %v2830 = vpack.c.b16 %v2644, %v2638
    %v2831 = vpack.c.b16 %v2651, %v2645
    %v2832 = vpack.c.b16 %v2652, %v2646
    %v2833 = vpack.c.b16 %v2653, %v2647
    %v2834 = vpack.c.b16 %v2654, %v2648
    %v2835 = vpack.c.b16 %v2655, %v2649
    %v2836 = vpack.c.b16 %v2656, %v2650
    %v2837 = vpack.c.b16 %v2663, %v2657
    %v2838 = vpack.c.b16 %v2664, %v2658
    %v2839 = vpack.c.b16 %v2665, %v2659
    %v2840 = vpack.c.b16 %v2666, %v2660
    %v2841 = vpack.c.b16 %v2667, %v2661
    %v2842 = vpack.c.b16 %v2668, %v2662
    %v2843 = vpack.c.b16 %v2675, %v2669
    %v2844 = vpack.c.b16 %v2676, %v2670
    %v2845 = vpack.c.b16 %v2677, %v2671
    %v2846 = vpack.c.b16 %v2678, %v2672
    %v2847 = vpack.c.b16 %v2679, %v2673
    %v2848 = vpack.c.b16 %v2680, %v2674
    %v2849 = vpack.c.b16 %v2687, %v2681
    %v2850 = vpack.c.b16 %v2688, %v2682
    %v2851 = vpack.c.b16 %v2689, %v2683
    %v2852 = vpack.c.b16 %v2690, %v2684
    %v2853 = vpack.c.b16 %v2691, %v2685
    %v2854 = vpack.c.b16 %v2692, %v2686
    %v2855 = vpack.c.b16 %v2699, %v2693
    %v2856 = vpack.c.b16 %v2700, %v2694
    %v2857 = vpack.c.b16 %v2701, %v2695
    %v2858 = vpack.c.b16 %v2702, %v2696
    %v2859 = vpack.c.b16 %v2703, %v2697
    %v2860 = vpack.c.b16 %v2704, %v2698
    %v2861 = vpack.c.b16 %v2711, %v2705
    %v2862 = vpack.c.b16 %v2712, %v2706
    %v2863 = vpack.c.b16 %v2713, %v2707
    %v2864 = vpack.c.b16 %v2714, %v2708
    %v2865 = vpack.c.b16 %v2715, %v2709
    %v2866 = vpack.c.b16 %v2716, %v2710
    %v2867 = vpack.c.b16 %v2723, %v2717
    %v2868 = vpack.c.b16 %v2724, %v2718
    %v2869 = vpack.c.b16 %v2725, %v2719
    %v2870 = vpack.c.b16 %v2726, %v2720
    %v2871 = vpack.c.b16 %v2727, %v2721
    %v2872 = vpack.c.b16 %v2728, %v2722
    %v2873 = vpack.c.b16 %v2735, %v2729
    %v2874 = vpack.c.b16 %v2736, %v2730
    %v2875 = vpack.c.b16 %v2737, %v2731
    %v2876 = vpack.c.b16 %v2738, %v2732
    %v2877 = vpack.c.b16 %v2739, %v2733
    %v2878 = vpack.c.b16 %v2740, %v2734
    %v2879 = vpack.c.b16 %v2747, %v2741
    %v2880 = vpack.c.b16 %v2748, %v2742
    %v2881 = vpack.c.b16 %v2749, %v2743
    %v2882 = vpack.c.b16 %v2750, %v2744
    %v2883 = vpack.c.b16 %v2751, %v2745
    %v2884 = vpack.c.b16 %v2752, %v2746
    %v2885 = vpack.c.b16 %v2759, %v2753
    %v2886 = vpack.c.b16 %v2760, %v2754
    %v2887 = vpack.c.b16 %v2761, %v2755
    %v2888 = vpack.c.b16 %v2762, %v2756
    %v2889 = vpack.c.b16 %v2763, %v2757
    %v2890 = vpack.c.b16 %v2764, %v2758
    %v2891 = vpack.c.b16 %v2771, %v2765
    %v2892 = vpack.c.b16 %v2772, %v2766
    %v2893 = vpack.c.b16 %v2773, %v2767
    %v2894 = vpack.c.b16 %v2774, %v2768
    %v2895 = vpack.c.b16 %v2775, %v2769
    %v2896 = vpack.c.b16 %v2776, %v2770
    %v2897 = vpack.c.b16 %v2783, %v2777
    %v2898 = vpack.c.b16 %v2784, %v2778
    %v2899 = vpack.c.b16 %v2785, %v2779
    %v2900 = vpack.c.b16 %v2786, %v2780
    %v2901 = vpack.c.b16 %v2787, %v2781
    %v2902 = vpack.c.b16 %v2788, %v2782
    %v2903 = vpack.c.b16 %v2795, %v2789
    %v2904 = vpack.c.b16 %v2796, %v2790
    %v2905 = vpack.c.b16 %v2797, %v2791
    %v2906 = vpack.c.b16 %v2798, %v2792
    %v2907 = vpack.c.b16 %v2799, %v2793
    %v2908 = vpack.c.b16 %v2800, %v2794
    %v2909 = vpack.c.b16 %v2807, %v2801
    %v2910 = vpack.c.b16 %v2808, %v2802
    %v2911 = vpack.c.b16 %v2809, %v2803
    %v2912 = vpack.c.b16 %v2810, %v2804
    %v2913 = vpack.c.b16 %v2811, %v2805
    %v2914 = vpack.c.b16 %v2812, %v2806
    %v2915 = vpack.c.b16 %v2819, %v2813
    %v2916 = vpack.c.b16 %v2820, %v2814
    %v2917 = vpack.c.b16 %v2821, %v2815
    %v2918 = vpack.c.b16 %v2822, %v2816
    %v2919 = vpack.c.b16 %v2823, %v2817
    %v2920 = vpack.c.b16 %v2824, %v2818
    %3017 = vmatpush.bf16.msra.mxu0 %v2867
    %3018 = vmatpush.bf16.msra.mxu0 %v2861
    %3019 = vmatpush.bf16.msra.mxu0 %v2855
    %3020 = vmatpush.bf16.msra.mxu0 %v2849
    %3021 = vmatpush.bf16.msra.mxu0 %v2843
    %3022 = vmatpush.bf16.msra.mxu0 %v2837
    %3023 = vmatpush.bf16.msra.mxu0 %v2831
    %3024 = vmatpush.bf16.msra.mxu0 %v2825
    %3025 = vmatmul.bf16.gmra.mxu0 %v2423
    %v3026 = vpop.f32.mrf.mxu0
    %v3027 = vadd.f32 %v2525, %v3026
    %v3028 = vpop.f32.mrf.mxu0
    %3029 = vdwg.mxu0
    %3030 = vmatpush.bf16.msra.mxu0 %v2915
    %3031 = vmatpush.bf16.msra.mxu0 %v2909
    %3032 = vmatpush.bf16.msra.mxu0 %v2903
    %3033 = vmatpush.bf16.msra.mxu0 %v2897
    %3034 = vmatpush.bf16.msra.mxu0 %v2891
    %3035 = vmatpush.bf16.msra.mxu0 %v2885
    %3036 = vmatpush.bf16.msra.mxu0 %v2879
    %3037 = vmatpush.bf16.msra.mxu0 %v2873
    %3038 = vmatmul.bf16.gmra.mxu0 %v2424
    %v3039 = vpop.f32.mrf.mxu0
    %v3040 = vadd.f32 %v3027, %v3039
    %v3041 = vpop.f32.mrf.mxu0
    %3042 = vdwg.mxu0
    %3043 = vmatpush.bf16.msra.mxu0 %v2868
    %3044 = vmatpush.bf16.msra.mxu0 %v2862
    %3045 = vmatpush.bf16.msra.mxu0 %v2856
    %3046 = vmatpush.bf16.msra.mxu0 %v2850
    %3047 = vmatpush.bf16.msra.mxu0 %v2844
    %3048 = vmatpush.bf16.msra.mxu0 %v2838
    %3049 = vmatpush.bf16.msra.mxu0 %v2832
    %3050 = vmatpush.bf16.msra.mxu0 %v2826
    %3051 = vmatmul.bf16.gmra.mxu0 %v2423
    %v3052 = vpop.f32.mrf.mxu0
    %v3053 = vadd.f32 %v2526, %v3052
    %v3054 = vpop.f32.mrf.mxu0
    %3055 = vdwg.mxu0
    %3056 = vmatpush.bf16.msra.mxu0 %v2916
    %3057 = vmatpush.bf16.msra.mxu0 %v2910
    %3058 = vmatpush.bf16.msra.mxu0 %v2904
    %3059 = vmatpush.bf16.msra.mxu0 %v2898
    %3060 = vmatpush.bf16.msra.mxu0 %v2892
    %3061 = vmatpush.bf16.msra.mxu0 %v2886
    %3062 = vmatpush.bf16.msra.mxu0 %v2880
    %3063 = vmatpush.bf16.msra.mxu0 %v2874
    %3064 = vmatmul.bf16.gmra.mxu0 %v2424
    %v3065 = vpop.f32.mrf.mxu0
    %v3066 = vadd.f32 %v3053, %v3065
    %v3067 = vpop.f32.mrf.mxu0
    %3068 = vdwg.mxu0
    %3069 = vmatpush.bf16.msra.mxu0 %v2869
    %3070 = vmatpush.bf16.msra.mxu0 %v2863
    %3071 = vmatpush.bf16.msra.mxu0 %v2857
    %3072 = vmatpush.bf16.msra.mxu0 %v2851
    %3073 = vmatpush.bf16.msra.mxu0 %v2845
    %3074 = vmatpush.bf16.msra.mxu0 %v2839
    %3075 = vmatpush.bf16.msra.mxu0 %v2833
    %3076 = vmatpush.bf16.msra.mxu0 %v2827
    %3077 = vmatmul.bf16.gmra.mxu0 %v2423
    %v3078 = vpop.f32.mrf.mxu0
    %v3079 = vadd.f32 %v2527, %v3078
    %v3080 = vpop.f32.mrf.mxu0
    %3081 = vdwg.mxu0
    %3082 = vmatpush.bf16.msra.mxu0 %v2917
    %3083 = vmatpush.bf16.msra.mxu0 %v2911
    %3084 = vmatpush.bf16.msra.mxu0 %v2905
    %3085 = vmatpush.bf16.msra.mxu0 %v2899
    %3086 = vmatpush.bf16.msra.mxu0 %v2893
    %3087 = vmatpush.bf16.msra.mxu0 %v2887
    %3088 = vmatpush.bf16.msra.mxu0 %v2881
    %3089 = vmatpush.bf16.msra.mxu0 %v2875
    %3090 = vmatmul.bf16.gmra.mxu0 %v2424
    %v3091 = vpop.f32.mrf.mxu0
    %v3092 = vadd.f32 %v3079, %v3091
    %v3093 = vpop.f32.mrf.mxu0
    %3094 = vdwg.mxu0
    %3095 = vmatpush.bf16.msra.mxu0 %v2870
    %3096 = vmatpush.bf16.msra.mxu0 %v2864
    %3097 = vmatpush.bf16.msra.mxu0 %v2858
    %3098 = vmatpush.bf16.msra.mxu0 %v2852
    %3099 = vmatpush.bf16.msra.mxu0 %v2846
    %3100 = vmatpush.bf16.msra.mxu0 %v2840
    %3101 = vmatpush.bf16.msra.mxu0 %v2834
    %3102 = vmatpush.bf16.msra.mxu0 %v2828
    %3103 = vmatmul.bf16.gmra.mxu0 %v2423
    %v3104 = vpop.f32.mrf.mxu0
    %v3105 = vadd.f32 %v2528, %v3104
    %v3106 = vpop.f32.mrf.mxu0
    %3107 = vdwg.mxu0
    %3108 = vmatpush.bf16.msra.mxu0 %v2918
    %3109 = vmatpush.bf16.msra.mxu0 %v2912
    %3110 = vmatpush.bf16.msra.mxu0 %v2906
    %3111 = vmatpush.bf16.msra.mxu0 %v2900
    %3112 = vmatpush.bf16.msra.mxu0 %v2894
    %3113 = vmatpush.bf16.msra.mxu0 %v2888
    %3114 = vmatpush.bf16.msra.mxu0 %v2882
    %3115 = vmatpush.bf16.msra.mxu0 %v2876
    %3116 = vmatmul.bf16.gmra.mxu0 %v2424
    %v3117 = vpop.f32.mrf.mxu0
    %v3118 = vadd.f32 %v3105, %v3117
    %v3119 = vpop.f32.mrf.mxu0
    %3120 = vdwg.mxu0
    %3121 = vmatpush.bf16.msra.mxu0 %v2871
    %3122 = vmatpush.bf16.msra.mxu0 %v2865
    %3123 = vmatpush.bf16.msra.mxu0 %v2859
    %3124 = vmatpush.bf16.msra.mxu0 %v2853
    %3125 = vmatpush.bf16.msra.mxu0 %v2847
    %3126 = vmatpush.bf16.msra.mxu0 %v2841
    %3127 = vmatpush.bf16.msra.mxu0 %v2835
    %3128 = vmatpush.bf16.msra.mxu0 %v2829
    %3129 = vmatmul.bf16.gmra.mxu0 %v2423
    %v3130 = vpop.f32.mrf.mxu0
    %v3131 = vadd.f32 %v2529, %v3130
    %v3132 = vpop.f32.mrf.mxu0
    %3133 = vdwg.mxu0
    %3134 = vmatpush.bf16.msra.mxu0 %v2919
    %3135 = vmatpush.bf16.msra.mxu0 %v2913
    %3136 = vmatpush.bf16.msra.mxu0 %v2907
    %3137 = vmatpush.bf16.msra.mxu0 %v2901
    %3138 = vmatpush.bf16.msra.mxu0 %v2895
    %3139 = vmatpush.bf16.msra.mxu0 %v2889
    %3140 = vmatpush.bf16.msra.mxu0 %v2883
    %3141 = vmatpush.bf16.msra.mxu0 %v2877
    %3142 = vmatmul.bf16.gmra.mxu0 %v2424
    %v3143 = vpop.f32.mrf.mxu0
    %v3144 = vadd.f32 %v3131, %v3143
    %v3145 = vpop.f32.mrf.mxu0
    %3146 = vdwg.mxu0
    %3147 = vmatpush.bf16.msra.mxu0 %v2872
    %3148 = vmatpush.bf16.msra.mxu0 %v2866
    %3149 = vmatpush.bf16.msra.mxu0 %v2860
    %3150 = vmatpush.bf16.msra.mxu0 %v2854
    %3151 = vmatpush.bf16.msra.mxu0 %v2848
    %3152 = vmatpush.bf16.msra.mxu0 %v2842
    %3153 = vmatpush.bf16.msra.mxu0 %v2836
    %3154 = vmatpush.bf16.msra.mxu0 %v2830
    %3155 = vmatmul.bf16.gmra.mxu0 %v2423
    %v3156 = vpop.f32.mrf.mxu0
    %v3157 = vadd.f32 %v2530, %v3156
    %v3158 = vpop.f32.mrf.mxu0
    %3159 = vdwg.mxu0
    %3160 = vmatpush.bf16.msra.mxu0 %v2920
    %3161 = vmatpush.bf16.msra.mxu0 %v2914
    %3162 = vmatpush.bf16.msra.mxu0 %v2908
    %3163 = vmatpush.bf16.msra.mxu0 %v2902
    %3164 = vmatpush.bf16.msra.mxu0 %v2896
    %3165 = vmatpush.bf16.msra.mxu0 %v2890
    %3166 = vmatpush.bf16.msra.mxu0 %v2884
    %3167 = vmatpush.bf16.msra.mxu0 %v2878
    %3168 = vmatmul.bf16.gmra.mxu0 %v2424
    %v3169 = vpop.f32.mrf.mxu0
    %v3170 = vadd.f32 %v3157, %v3169
    %v3171 = vpop.f32.mrf.mxu0
    %3172 = vdwg.mxu0
    %s3173 = scalar_lea.vmem [#allocation15], 256
    %v3174 = vld [vmem:[%s3173] sm:$0xff]
    %v3175 = vld [vmem:[%s3173 + $0x8] sm:$0xff]
    %v3176 = vld [vmem:[%s3173 + $0x10] sm:$0xff]
    %v3177 = vld [vmem:[%s3173 + $0x18] sm:$0xff]
    %v3178 = vld [vmem:[%s3173 + $0x20] sm:$0xff]
    %v3179 = vld [vmem:[%s3173 + $0x28] sm:$0xff]
    %v3180 = vld [vmem:[%s3173 + $0x30] sm:$0xff]
    %v3181 = vld [vmem:[%s3173 + $0x38] sm:$0xff]
    %v3182 = vld [vmem:[%s3173 + $0x40] sm:$0xff]
    %v3183 = vld [vmem:[%s3173 + $0x48] sm:$0xff]
    %v3184 = vld [vmem:[%s3173 + $0x50] sm:$0xff]
    %v3185 = vld [vmem:[%s3173 + $0x58] sm:$0xff]
    %v3186 = vld [vmem:[%s3173 + $0x60] sm:$0xff]
    %v3187 = vld [vmem:[%s3173 + $0x68] sm:$0xff]
    %v3188 = vld [vmem:[%s3173 + $0x70] sm:$0xff]
    %v3189 = vld [vmem:[%s3173 + $0x78] sm:$0xff]
    %v3190 = vld [vmem:[%s3173 + $0x80] sm:$0xff]
    %v3191 = vld [vmem:[%s3173 + $0x88] sm:$0xff]
    %v3192 = vld [vmem:[%s3173 + $0x90] sm:$0xff]
    %v3193 = vld [vmem:[%s3173 + $0x98] sm:$0xff]
    %v3194 = vld [vmem:[%s3173 + $0xa0] sm:$0xff]
    %v3195 = vld [vmem:[%s3173 + $0xa8] sm:$0xff]
    %v3196 = vld [vmem:[%s3173 + $0xb0] sm:$0xff]
    %v3197 = vld [vmem:[%s3173 + $0xb8] sm:$0xff]
    %v3198 = vld [vmem:[%s3173 + $0xc0] sm:$0xff]
    %v3199 = vld [vmem:[%s3173 + $0xc8] sm:$0xff]
    %v3200 = vld [vmem:[%s3173 + $0xd0] sm:$0xff]
    %v3201 = vld [vmem:[%s3173 + $0xd8] sm:$0xff]
    %v3202 = vld [vmem:[%s3173 + $0xe0] sm:$0xff]
    %v3203 = vld [vmem:[%s3173 + $0xe8] sm:$0xff]
    %v3204 = vld [vmem:[%s3173 + $0xf0] sm:$0xff]
    %v3205 = vld [vmem:[%s3173 + $0xf8] sm:$0xff]
    %s3206 = scalar_lea.vmem [#allocation16], 1
    %v3207 = vld [vmem:[%s3206] ss:$2 sm:$0x3]
    %v3208 = vpack.c.bf16 %v3040, %v3040
    %v3209 = vpack.c.bf16 %v3092, %v3092
    %3210 = vmatpush.bf16.xpose.msra.mxu0 0
    %3211 = vmatpush.bf16.xpose.msra.mxu0 0
    %3212 = vmatpush.bf16.xpose.msra.mxu0 0
    %3213 = vmatpush.bf16.xpose.msra.mxu0 0
    %3214 = vmatpush.bf16.xpose.msra.mxu0 0
    %3215 = vmatpush.bf16.xpose.msra.mxu0 0
    %3216 = vmatpush.bf16.xpose.msra.mxu0 0
    %3217 = vmatpush.bf16.xpose.msra.mxu0 %v3209
    %3218 = vmatmul.bf16.gmra.mxu0 %v3208
    %v3219 = vpop.f32.mrf.mxu0
    %v3220 = vadd.f32 0.0, %v3219
    %v3221 = vpop.f32.mrf.mxu0
    %3222 = vdwg.mxu0
    %v3223 = vmul.f32 %v3220, 0.088388346
    %v3224 = vadd.f32 %v3223, %v659
    %v3225 = vsel %vm1518, %v3224, -inf
    %3226 = vmax.xlane.f32.xlu0 %v3225
    %v3227 = vpop.xlane.xlu0 %3226
    %v3228 = vsub.f32 %v3224, %v3227
    %v3229 = vmul.f32 %v3228, 1.442695
    %v3230 = vpow.pop %v3229
    %v3231 = vsel %vm1518, %v3230, 0.0
    %3232 = vadd.xlane.f32.xlu0 %v3231
    %v3233 = vpop.xlane.xlu0 %3232
    %v3234 = vrcp.pop %v3233
    %v3235 = vmul.f32 %v3230, %v3234
    %v3236 = vpack.c.bf16 %v3235, %v3235
    %v3237 = vpack.c.bf16 %v3144, %v3144
    %v3239 = vsel %vm1518, %v3236, 0
    %v3242 = vsel %vm1535, %v3237, 0
    %3244 = vmatpush.bf16.msra.mxu0 0
    %3245 = vmatpush.bf16.msra.mxu0 0
    %3246 = vmatpush.bf16.msra.mxu0 0
    %3247 = vmatpush.bf16.msra.mxu0 0
    %3248 = vmatpush.bf16.msra.mxu0 0
    %3249 = vmatpush.bf16.msra.mxu0 0
    %3250 = vmatpush.bf16.msra.mxu0 0
    %3251 = vmatpush.bf16.msra.mxu0 %v3242
    %3252 = vmatmul.bf16.gmra.mxu0 %v3239
    %v3253 = vpop.f32.mrf.mxu0
    %v3254 = vadd.f32 0.0, %v3253
    %v3255 = vpop.f32.mrf.mxu0
    %3256 = vdwg.mxu0
    %v3257 = vpack.c.bf16 %v3254, %v3254
    %v3274 = vunpack.c.l.b16 %v3174
    %v3275 = vunpack.c.h.b16 %v3174
    %v3276 = vunpack.c.l.b16 %v3175
    %v3277 = vunpack.c.h.b16 %v3175
    %v3278 = vunpack.c.l.b16 %v3176
    %v3279 = vunpack.c.h.b16 %v3176
    %v3280 = vunpack.c.l.b16 %v3177
    %v3281 = vunpack.c.h.b16 %v3177
    %v3282 = vunpack.c.l.b16 %v3178
    %v3283 = vunpack.c.h.b16 %v3178
    %v3284 = vunpack.c.l.b16 %v3179
    %v3285 = vunpack.c.h.b16 %v3179
    %v3286 = vunpack.c.l.b16 %v3180
    %v3287 = vunpack.c.h.b16 %v3180
    %v3288 = vunpack.c.l.b16 %v3181
    %v3289 = vunpack.c.h.b16 %v3181
    %v3290 = vunpack.c.l.b16 %v3182
    %v3291 = vunpack.c.h.b16 %v3182
    %v3292 = vunpack.c.l.b16 %v3183
    %v3293 = vunpack.c.h.b16 %v3183
    %v3294 = vunpack.c.l.b16 %v3184
    %v3295 = vunpack.c.h.b16 %v3184
    %v3296 = vunpack.c.l.b16 %v3185
    %v3297 = vunpack.c.h.b16 %v3185
    %v3298 = vunpack.c.l.b16 %v3186
    %v3299 = vunpack.c.h.b16 %v3186
    %v3300 = vunpack.c.l.b16 %v3187
    %v3301 = vunpack.c.h.b16 %v3187
    %v3302 = vunpack.c.l.b16 %v3188
    %v3303 = vunpack.c.h.b16 %v3188
    %v3304 = vunpack.c.l.b16 %v3189
    %v3305 = vunpack.c.h.b16 %v3189
    %v3306 = vpack.c.b16 %v3276, %v3274
    %v3307 = vpack.c.b16 %v3277, %v3275
    %v3308 = vpack.c.b16 %v3280, %v3278
    %v3309 = vpack.c.b16 %v3281, %v3279
    %v3310 = vpack.c.b16 %v3284, %v3282
    %v3311 = vpack.c.b16 %v3285, %v3283
    %v3312 = vpack.c.b16 %v3288, %v3286
    %v3313 = vpack.c.b16 %v3289, %v3287
    %v3314 = vpack.c.b16 %v3292, %v3290
    %v3315 = vpack.c.b16 %v3293, %v3291
    %v3316 = vpack.c.b16 %v3296, %v3294
    %v3317 = vpack.c.b16 %v3297, %v3295
    %v3318 = vpack.c.b16 %v3300, %v3298
    %v3319 = vpack.c.b16 %v3301, %v3299
    %v3320 = vpack.c.b16 %v3304, %v3302
    %v3321 = vpack.c.b16 %v3305, %v3303
    %3338 = vmatpush.bf16.msra.mxu0 %v3320
    %3339 = vmatpush.bf16.msra.mxu0 %v3318
    %3340 = vmatpush.bf16.msra.mxu0 %v3316
    %3341 = vmatpush.bf16.msra.mxu0 %v3314
    %3342 = vmatpush.bf16.msra.mxu0 %v3312
    %3343 = vmatpush.bf16.msra.mxu0 %v3310
    %3344 = vmatpush.bf16.msra.mxu0 %v3308
    %3345 = vmatpush.bf16.msra.mxu0 %v3306
    %3346 = vmatmul.bf16.gmra.mxu0 %v3257
    %v3347 = vpop.f32.mrf.mxu0
    %v3348 = vadd.f32 0.0, %v3347
    %v3349 = vpop.f32.mrf.mxu0
    %3350 = vdwg.mxu0
    %3351 = vmatpush.bf16.msra.mxu0 %v3321
    %3352 = vmatpush.bf16.msra.mxu0 %v3319
    %3353 = vmatpush.bf16.msra.mxu0 %v3317
    %3354 = vmatpush.bf16.msra.mxu0 %v3315
    %3355 = vmatpush.bf16.msra.mxu0 %v3313
    %3356 = vmatpush.bf16.msra.mxu0 %v3311
    %3357 = vmatpush.bf16.msra.mxu0 %v3309
    %3358 = vmatpush.bf16.msra.mxu0 %v3307
    %3359 = vmatmul.bf16.gmra.mxu0 %v3257
    %v3360 = vpop.f32.mrf.mxu0
    %v3361 = vadd.f32 0.0, %v3360
    %v3362 = vpop.f32.mrf.mxu0
    %3363 = vdwg.mxu0
    %v3365 = vperm.slane %v3207, 0
    %v3366 = vperm.slane %v3207, 1
    %v3369 = vadd.f32 %v3365, %v3348
    %v3370 = vadd.f32 %v3366, %v3361
    %v3371 = vpack.c.bf16 %v3066, %v3066
    %v3372 = vpack.c.bf16 %v3118, %v3118
    %3373 = vmatpush.bf16.xpose.msra.mxu0 0
    %3374 = vmatpush.bf16.xpose.msra.mxu0 0
    %3375 = vmatpush.bf16.xpose.msra.mxu0 0
    %3376 = vmatpush.bf16.xpose.msra.mxu0 0
    %3377 = vmatpush.bf16.xpose.msra.mxu0 0
    %3378 = vmatpush.bf16.xpose.msra.mxu0 0
    %3379 = vmatpush.bf16.xpose.msra.mxu0 0
    %3380 = vmatpush.bf16.xpose.msra.mxu0 %v3372
    %3381 = vmatmul.bf16.gmra.mxu0 %v3371
    %v3382 = vpop.f32.mrf.mxu0
    %v3383 = vadd.f32 0.0, %v3382
    %v3384 = vpop.f32.mrf.mxu0
    %3385 = vdwg.mxu0
    %v3386 = vmul.f32 %v3383, 0.088388346
    %v3387 = vadd.f32 %v3386, %v659
    %v3388 = vsel %vm1518, %v3387, -inf
    %3389 = vmax.xlane.f32.xlu0 %v3388
    %v3390 = vpop.xlane.xlu0 %3389
    %v3391 = vsub.f32 %v3387, %v3390
    %v3392 = vmul.f32 %v3391, 1.442695
    %v3393 = vpow.pop %v3392
    %v3394 = vsel %vm1518, %v3393, 0.0
    %3395 = vadd.xlane.f32.xlu0 %v3394
    %v3396 = vpop.xlane.xlu0 %3395
    %v3397 = vrcp.pop %v3396
    %v3398 = vmul.f32 %v3393, %v3397
    %v3399 = vpack.c.bf16 %v3398, %v3398
    %v3400 = vpack.c.bf16 %v3170, %v3170
    %v3402 = vsel %vm1518, %v3399, 0
    %v3405 = vsel %vm1535, %v3400, 0
    %3407 = vmatpush.bf16.msra.mxu0 0
    %3408 = vmatpush.bf16.msra.mxu0 0
    %3409 = vmatpush.bf16.msra.mxu0 0
    %3410 = vmatpush.bf16.msra.mxu0 0
    %3411 = vmatpush.bf16.msra.mxu0 0
    %3412 = vmatpush.bf16.msra.mxu0 0
    %3413 = vmatpush.bf16.msra.mxu0 0
    %3414 = vmatpush.bf16.msra.mxu0 %v3405
    %3415 = vmatmul.bf16.gmra.mxu0 %v3402
    %v3416 = vpop.f32.mrf.mxu0
    %v3417 = vadd.f32 0.0, %v3416
    %v3418 = vpop.f32.mrf.mxu0
    %3419 = vdwg.mxu0
    %v3420 = vpack.c.bf16 %v3417, %v3417
    %v3437 = vunpack.c.l.b16 %v3190
    %v3438 = vunpack.c.h.b16 %v3190
    %v3439 = vunpack.c.l.b16 %v3191
    %v3440 = vunpack.c.h.b16 %v3191
    %v3441 = vunpack.c.l.b16 %v3192
    %v3442 = vunpack.c.h.b16 %v3192
    %v3443 = vunpack.c.l.b16 %v3193
    %v3444 = vunpack.c.h.b16 %v3193
    %v3445 = vunpack.c.l.b16 %v3194
    %v3446 = vunpack.c.h.b16 %v3194
    %v3447 = vunpack.c.l.b16 %v3195
    %v3448 = vunpack.c.h.b16 %v3195
    %v3449 = vunpack.c.l.b16 %v3196
    %v3450 = vunpack.c.h.b16 %v3196
    %v3451 = vunpack.c.l.b16 %v3197
    %v3452 = vunpack.c.h.b16 %v3197
    %v3453 = vunpack.c.l.b16 %v3198
    %v3454 = vunpack.c.h.b16 %v3198
    %v3455 = vunpack.c.l.b16 %v3199
    %v3456 = vunpack.c.h.b16 %v3199
    %v3457 = vunpack.c.l.b16 %v3200
    %v3458 = vunpack.c.h.b16 %v3200
    %v3459 = vunpack.c.l.b16 %v3201
    %v3460 = vunpack.c.h.b16 %v3201
    %v3461 = vunpack.c.l.b16 %v3202
    %v3462 = vunpack.c.h.b16 %v3202
    %v3463 = vunpack.c.l.b16 %v3203
    %v3464 = vunpack.c.h.b16 %v3203
    %v3465 = vunpack.c.l.b16 %v3204
    %v3466 = vunpack.c.h.b16 %v3204
    %v3467 = vunpack.c.l.b16 %v3205
    %v3468 = vunpack.c.h.b16 %v3205
    %v3469 = vpack.c.b16 %v3439, %v3437
    %v3470 = vpack.c.b16 %v3440, %v3438
    %v3471 = vpack.c.b16 %v3443, %v3441
    %v3472 = vpack.c.b16 %v3444, %v3442
    %v3473 = vpack.c.b16 %v3447, %v3445
    %v3474 = vpack.c.b16 %v3448, %v3446
    %v3475 = vpack.c.b16 %v3451, %v3449
    %v3476 = vpack.c.b16 %v3452, %v3450
    %v3477 = vpack.c.b16 %v3455, %v3453
    %v3478 = vpack.c.b16 %v3456, %v3454
    %v3479 = vpack.c.b16 %v3459, %v3457
    %v3480 = vpack.c.b16 %v3460, %v3458
    %v3481 = vpack.c.b16 %v3463, %v3461
    %v3482 = vpack.c.b16 %v3464, %v3462
    %v3483 = vpack.c.b16 %v3467, %v3465
    %v3484 = vpack.c.b16 %v3468, %v3466
    %3501 = vmatpush.bf16.msra.mxu0 %v3483
    %3502 = vmatpush.bf16.msra.mxu0 %v3481
    %3503 = vmatpush.bf16.msra.mxu0 %v3479
    %3504 = vmatpush.bf16.msra.mxu0 %v3477
    %3505 = vmatpush.bf16.msra.mxu0 %v3475
    %3506 = vmatpush.bf16.msra.mxu0 %v3473
    %3507 = vmatpush.bf16.msra.mxu0 %v3471
    %3508 = vmatpush.bf16.msra.mxu0 %v3469
    %3509 = vmatmul.bf16.gmra.mxu0 %v3420
    %v3510 = vpop.f32.mrf.mxu0
    %v3511 = vadd.f32 0.0, %v3510
    %v3512 = vpop.f32.mrf.mxu0
    %3513 = vdwg.mxu0
    %3514 = vmatpush.bf16.msra.mxu0 %v3484
    %3515 = vmatpush.bf16.msra.mxu0 %v3482
    %3516 = vmatpush.bf16.msra.mxu0 %v3480
    %3517 = vmatpush.bf16.msra.mxu0 %v3478
    %3518 = vmatpush.bf16.msra.mxu0 %v3476
    %3519 = vmatpush.bf16.msra.mxu0 %v3474
    %3520 = vmatpush.bf16.msra.mxu0 %v3472
    %3521 = vmatpush.bf16.msra.mxu0 %v3470
    %3522 = vmatmul.bf16.gmra.mxu0 %v3420
    %v3523 = vpop.f32.mrf.mxu0
    %v3524 = vadd.f32 0.0, %v3523
    %v3525 = vpop.f32.mrf.mxu0
    %3526 = vdwg.mxu0
    %v3527 = vadd.f32 %v3369, %v3511
    %v3528 = vadd.f32 %v3370, %v3524
    %v3529 = vadd.f32 %v2421, %v3527
    %v3530 = vadd.f32 %v2422, %v3528
    %s3531 = scalar_lea.vmem [#allocation18], 1
    %v3532 = vld [vmem:[%s3531] ss:$2 sm:$0x3]
    %s3533 = scalar_lea.vmem [#allocation19], 1
    %v3534 = vld [vmem:[%s3533] ss:$2 sm:$0x3]
    %v3535 = vadd.f32 %v3529, %v3530
    %3536 = vadd.xlane.f32.xlu0 %v3535
    %v3537 = vpop.xlane.xlu0 %3536
    %v3538 = vmul.f32 %v3537, %v1837
    %v3539 = vsub.f32 %v3529, %v3538
    %v3540 = vsub.f32 %v3530, %v3538
    %v3541 = vmul.f32 %v3539, %v3539
    %v3542 = vmul.f32 %v3540, %v3540
    %v3543 = vadd.f32 %v3541, %v3542
    %3544 = vadd.xlane.f32.xlu0 %v3543
    %v3545 = vpop.xlane.xlu0 %3544
    %v3546 = vmul.f32 %v3545, %v1837
    %v3547 = vadd.f32 %v3546, 1e-05
    %v3548 = vrsqrt.pop %v3547
    %v3549 = vmul.f32 %v3548, %v3547
    %v3550 = vmul.f32 %v3549, %v3548
    %v3551 = vmul.f32 0.5, %v3550
    %v3552 = vsub.f32 1.5, %v3551
    %v3553 = vmul.f32 %v3548, %v3552
    %vm3554 = vweird.f32 %v3547
    %vm3555 = vweird.f32 %v3548
    %vm3556 = vmor %vm3554, %vm3555
    %v3557 = vsel %vm3556, %v3548, %v3553
    %v3558 = vmul.f32 %v3539, %v3557
    %v3559 = vmul.f32 %v3540, %v3557
    %v3561 = vperm.slane %v3532, 0
    %v3562 = vperm.slane %v3532, 1
    %v3565 = vmul.f32 %v3558, %v3561
    %v3566 = vmul.f32 %v3559, %v3562
    %v3568 = vperm.slane %v3534, 0
    %v3569 = vperm.slane %v3534, 1
    %v3572 = vadd.f32 %v3565, %v3568
    %v3573 = vadd.f32 %v3566, %v3569
    %v3574 = vpack.c.bf16 %v3572, %v3572
    %v3575 = vpack.c.bf16 %v3573, %v3573
    %s3576 = scalar_lea.vmem [#allocation21], 256
    %v3577 = vld [vmem:[%s3576] sm:$0xff]
    %v3578 = vld [vmem:[%s3576 + $0x8] sm:$0xff]
    %v3579 = vld [vmem:[%s3576 + $0x10] sm:$0xff]
    %v3580 = vld [vmem:[%s3576 + $0x18] sm:$0xff]
    %v3581 = vld [vmem:[%s3576 + $0x20] sm:$0xff]
    %v3582 = vld [vmem:[%s3576 + $0x28] sm:$0xff]
    %v3583 = vld [vmem:[%s3576 + $0x30] sm:$0xff]
    %v3584 = vld [vmem:[%s3576 + $0x38] sm:$0xff]
    %v3585 = vld [vmem:[%s3576 + $0x40] sm:$0xff]
    %v3586 = vld [vmem:[%s3576 + $0x48] sm:$0xff]
    %v3587 = vld [vmem:[%s3576 + $0x50] sm:$0xff]
    %v3588 = vld [vmem:[%s3576 + $0x58] sm:$0xff]
    %v3589 = vld [vmem:[%s3576 + $0x60] sm:$0xff]
    %v3590 = vld [vmem:[%s3576 + $0x68] sm:$0xff]
    %v3591 = vld [vmem:[%s3576 + $0x70] sm:$0xff]
    %v3592 = vld [vmem:[%s3576 + $0x78] sm:$0xff]
    %v3593 = vld [vmem:[%s3576 + $0x80] sm:$0xff]
    %v3594 = vld [vmem:[%s3576 + $0x88] sm:$0xff]
    %v3595 = vld [vmem:[%s3576 + $0x90] sm:$0xff]
    %v3596 = vld [vmem:[%s3576 + $0x98] sm:$0xff]
    %v3597 = vld [vmem:[%s3576 + $0xa0] sm:$0xff]
    %v3598 = vld [vmem:[%s3576 + $0xa8] sm:$0xff]
    %v3599 = vld [vmem:[%s3576 + $0xb0] sm:$0xff]
    %v3600 = vld [vmem:[%s3576 + $0xb8] sm:$0xff]
    %v3601 = vld [vmem:[%s3576 + $0xc0] sm:$0xff]
    %v3602 = vld [vmem:[%s3576 + $0xc8] sm:$0xff]
    %v3603 = vld [vmem:[%s3576 + $0xd0] sm:$0xff]
    %v3604 = vld [vmem:[%s3576 + $0xd8] sm:$0xff]
    %v3605 = vld [vmem:[%s3576 + $0xe0] sm:$0xff]
    %v3606 = vld [vmem:[%s3576 + $0xe8] sm:$0xff]
    %v3607 = vld [vmem:[%s3576 + $0xf0] sm:$0xff]
    %v3608 = vld [vmem:[%s3576 + $0xf8] sm:$0xff]
    %s3609 = scalar_lea.vmem [#allocation22], 1
    %v3610 = vld [vmem:[%s3609] ss:$2 sm:$0x3]
    %v3612 = vperm.slane %v3610, 0
    %v3613 = vperm.slane %v3610, 1
    %v3648 = vunpack.c.l.b16 %v3577
    %v3649 = vunpack.c.h.b16 %v3577
    %v3650 = vunpack.c.l.b16 %v3578
    %v3651 = vunpack.c.h.b16 %v3578
    %v3652 = vunpack.c.l.b16 %v3579
    %v3653 = vunpack.c.h.b16 %v3579
    %v3654 = vunpack.c.l.b16 %v3580
    %v3655 = vunpack.c.h.b16 %v3580
    %v3656 = vunpack.c.l.b16 %v3581
    %v3657 = vunpack.c.h.b16 %v3581
    %v3658 = vunpack.c.l.b16 %v3582
    %v3659 = vunpack.c.h.b16 %v3582
    %v3660 = vunpack.c.l.b16 %v3583
    %v3661 = vunpack.c.h.b16 %v3583
    %v3662 = vunpack.c.l.b16 %v3584
    %v3663 = vunpack.c.h.b16 %v3584
    %v3664 = vunpack.c.l.b16 %v3585
    %v3665 = vunpack.c.h.b16 %v3585
    %v3666 = vunpack.c.l.b16 %v3586
    %v3667 = vunpack.c.h.b16 %v3586
    %v3668 = vunpack.c.l.b16 %v3587
    %v3669 = vunpack.c.h.b16 %v3587
    %v3670 = vunpack.c.l.b16 %v3588
    %v3671 = vunpack.c.h.b16 %v3588
    %v3672 = vunpack.c.l.b16 %v3589
    %v3673 = vunpack.c.h.b16 %v3589
    %v3674 = vunpack.c.l.b16 %v3590
    %v3675 = vunpack.c.h.b16 %v3590
    %v3676 = vunpack.c.l.b16 %v3591
    %v3677 = vunpack.c.h.b16 %v3591
    %v3678 = vunpack.c.l.b16 %v3592
    %v3679 = vunpack.c.h.b16 %v3592
    %v3680 = vunpack.c.l.b16 %v3593
    %v3681 = vunpack.c.h.b16 %v3593
    %v3682 = vunpack.c.l.b16 %v3594
    %v3683 = vunpack.c.h.b16 %v3594
    %v3684 = vunpack.c.l.b16 %v3595
    %v3685 = vunpack.c.h.b16 %v3595
    %v3686 = vunpack.c.l.b16 %v3596
    %v3687 = vunpack.c.h.b16 %v3596
    %v3688 = vunpack.c.l.b16 %v3597
    %v3689 = vunpack.c.h.b16 %v3597
    %v3690 = vunpack.c.l.b16 %v3598
    %v3691 = vunpack.c.h.b16 %v3598
    %v3692 = vunpack.c.l.b16 %v3599
    %v3693 = vunpack.c.h.b16 %v3599
    %v3694 = vunpack.c.l.b16 %v3600
    %v3695 = vunpack.c.h.b16 %v3600
    %v3696 = vunpack.c.l.b16 %v3601
    %v3697 = vunpack.c.h.b16 %v3601
    %v3698 = vunpack.c.l.b16 %v3602
    %v3699 = vunpack.c.h.b16 %v3602
    %v3700 = vunpack.c.l.b16 %v3603
    %v3701 = vunpack.c.h.b16 %v3603
    %v3702 = vunpack.c.l.b16 %v3604
    %v3703 = vunpack.c.h.b16 %v3604
    %v3704 = vunpack.c.l.b16 %v3605
    %v3705 = vunpack.c.h.b16 %v3605
    %v3706 = vunpack.c.l.b16 %v3606
    %v3707 = vunpack.c.h.b16 %v3606
    %v3708 = vunpack.c.l.b16 %v3607
    %v3709 = vunpack.c.h.b16 %v3607
    %v3710 = vunpack.c.l.b16 %v3608
    %v3711 = vunpack.c.h.b16 %v3608
    %v3712 = vpack.c.b16 %v3650, %v3648
    %v3713 = vpack.c.b16 %v3651, %v3649
    %v3714 = vpack.c.b16 %v3654, %v3652
    %v3715 = vpack.c.b16 %v3655, %v3653
    %v3716 = vpack.c.b16 %v3658, %v3656
    %v3717 = vpack.c.b16 %v3659, %v3657
    %v3718 = vpack.c.b16 %v3662, %v3660
    %v3719 = vpack.c.b16 %v3663, %v3661
    %v3720 = vpack.c.b16 %v3666, %v3664
    %v3721 = vpack.c.b16 %v3667, %v3665
    %v3722 = vpack.c.b16 %v3670, %v3668
    %v3723 = vpack.c.b16 %v3671, %v3669
    %v3724 = vpack.c.b16 %v3674, %v3672
    %v3725 = vpack.c.b16 %v3675, %v3673
    %v3726 = vpack.c.b16 %v3678, %v3676
    %v3727 = vpack.c.b16 %v3679, %v3677
    %v3728 = vpack.c.b16 %v3682, %v3680
    %v3729 = vpack.c.b16 %v3683, %v3681
    %v3730 = vpack.c.b16 %v3686, %v3684
    %v3731 = vpack.c.b16 %v3687, %v3685
    %v3732 = vpack.c.b16 %v3690, %v3688
    %v3733 = vpack.c.b16 %v3691, %v3689
    %v3734 = vpack.c.b16 %v3694, %v3692
    %v3735 = vpack.c.b16 %v3695, %v3693
    %v3736 = vpack.c.b16 %v3698, %v3696
    %v3737 = vpack.c.b16 %v3699, %v3697
    %v3738 = vpack.c.b16 %v3702, %v3700
    %v3739 = vpack.c.b16 %v3703, %v3701
    %v3740 = vpack.c.b16 %v3706, %v3704
    %v3741 = vpack.c.b16 %v3707, %v3705
    %v3742 = vpack.c.b16 %v3710, %v3708
    %v3743 = vpack.c.b16 %v3711, %v3709
    %3776 = vmatpush.bf16.msra.mxu0 %v3726
    %3777 = vmatpush.bf16.msra.mxu0 %v3724
    %3778 = vmatpush.bf16.msra.mxu0 %v3722
    %3779 = vmatpush.bf16.msra.mxu0 %v3720
    %3780 = vmatpush.bf16.msra.mxu0 %v3718
    %3781 = vmatpush.bf16.msra.mxu0 %v3716
    %3782 = vmatpush.bf16.msra.mxu0 %v3714
    %3783 = vmatpush.bf16.msra.mxu0 %v3712
    %3784 = vmatmul.bf16.gmra.mxu0 %v3574
    %v3785 = vpop.f32.mrf.mxu0
    %v3786 = vadd.f32 %v3612, %v3785
    %v3787 = vpop.f32.mrf.mxu0
    %3788 = vdwg.mxu0
    %3789 = vmatpush.bf16.msra.mxu0 %v3742
    %3790 = vmatpush.bf16.msra.mxu0 %v3740
    %3791 = vmatpush.bf16.msra.mxu0 %v3738
    %3792 = vmatpush.bf16.msra.mxu0 %v3736
    %3793 = vmatpush.bf16.msra.mxu0 %v3734
    %3794 = vmatpush.bf16.msra.mxu0 %v3732
    %3795 = vmatpush.bf16.msra.mxu0 %v3730
    %3796 = vmatpush.bf16.msra.mxu0 %v3728
    %3797 = vmatmul.bf16.gmra.mxu0 %v3575
    %v3798 = vpop.f32.mrf.mxu0
    %v3799 = vadd.f32 %v3786, %v3798
    %v3800 = vpop.f32.mrf.mxu0
    %3801 = vdwg.mxu0
    %3802 = vmatpush.bf16.msra.mxu0 %v3727
    %3803 = vmatpush.bf16.msra.mxu0 %v3725
    %3804 = vmatpush.bf16.msra.mxu0 %v3723
    %3805 = vmatpush.bf16.msra.mxu0 %v3721
    %3806 = vmatpush.bf16.msra.mxu0 %v3719
    %3807 = vmatpush.bf16.msra.mxu0 %v3717
    %3808 = vmatpush.bf16.msra.mxu0 %v3715
    %3809 = vmatpush.bf16.msra.mxu0 %v3713
    %3810 = vmatmul.bf16.gmra.mxu0 %v3574
    %v3811 = vpop.f32.mrf.mxu0
    %v3812 = vadd.f32 %v3613, %v3811
    %v3813 = vpop.f32.mrf.mxu0
    %3814 = vdwg.mxu0
    %3815 = vmatpush.bf16.msra.mxu0 %v3743
    %3816 = vmatpush.bf16.msra.mxu0 %v3741
    %3817 = vmatpush.bf16.msra.mxu0 %v3739
    %3818 = vmatpush.bf16.msra.mxu0 %v3737
    %3819 = vmatpush.bf16.msra.mxu0 %v3735
    %3820 = vmatpush.bf16.msra.mxu0 %v3733
    %3821 = vmatpush.bf16.msra.mxu0 %v3731
    %3822 = vmatpush.bf16.msra.mxu0 %v3729
    %3823 = vmatmul.bf16.gmra.mxu0 %v3575
    %v3824 = vpop.f32.mrf.mxu0
    %v3825 = vadd.f32 %v3812, %v3824
    %v3826 = vpop.f32.mrf.mxu0
    %3827 = vdwg.mxu0
    %v3828 = vmax.f32 %v3799, 0.0
    %v3829 = vmax.f32 %v3825, 0.0
    %v3830 = vpack.c.bf16 %v3828, %v3828
    %v3831 = vpack.c.bf16 %v3829, %v3829
    %s3832 = scalar_lea.vmem [#allocation24], 256
    %v3833 = vld [vmem:[%s3832] sm:$0xff]
    %v3834 = vld [vmem:[%s3832 + $0x8] sm:$0xff]
    %v3835 = vld [vmem:[%s3832 + $0x10] sm:$0xff]
    %v3836 = vld [vmem:[%s3832 + $0x18] sm:$0xff]
    %v3837 = vld [vmem:[%s3832 + $0x20] sm:$0xff]
    %v3838 = vld [vmem:[%s3832 + $0x28] sm:$0xff]
    %v3839 = vld [vmem:[%s3832 + $0x30] sm:$0xff]
    %v3840 = vld [vmem:[%s3832 + $0x38] sm:$0xff]
    %v3841 = vld [vmem:[%s3832 + $0x40] sm:$0xff]
    %v3842 = vld [vmem:[%s3832 + $0x48] sm:$0xff]
    %v3843 = vld [vmem:[%s3832 + $0x50] sm:$0xff]
    %v3844 = vld [vmem:[%s3832 + $0x58] sm:$0xff]
    %v3845 = vld [vmem:[%s3832 + $0x60] sm:$0xff]
    %v3846 = vld [vmem:[%s3832 + $0x68] sm:$0xff]
    %v3847 = vld [vmem:[%s3832 + $0x70] sm:$0xff]
    %v3848 = vld [vmem:[%s3832 + $0x78] sm:$0xff]
    %v3849 = vld [vmem:[%s3832 + $0x80] sm:$0xff]
    %v3850 = vld [vmem:[%s3832 + $0x88] sm:$0xff]
    %v3851 = vld [vmem:[%s3832 + $0x90] sm:$0xff]
    %v3852 = vld [vmem:[%s3832 + $0x98] sm:$0xff]
    %v3853 = vld [vmem:[%s3832 + $0xa0] sm:$0xff]
    %v3854 = vld [vmem:[%s3832 + $0xa8] sm:$0xff]
    %v3855 = vld [vmem:[%s3832 + $0xb0] sm:$0xff]
    %v3856 = vld [vmem:[%s3832 + $0xb8] sm:$0xff]
    %v3857 = vld [vmem:[%s3832 + $0xc0] sm:$0xff]
    %v3858 = vld [vmem:[%s3832 + $0xc8] sm:$0xff]
    %v3859 = vld [vmem:[%s3832 + $0xd0] sm:$0xff]
    %v3860 = vld [vmem:[%s3832 + $0xd8] sm:$0xff]
    %v3861 = vld [vmem:[%s3832 + $0xe0] sm:$0xff]
    %v3862 = vld [vmem:[%s3832 + $0xe8] sm:$0xff]
    %v3863 = vld [vmem:[%s3832 + $0xf0] sm:$0xff]
    %v3864 = vld [vmem:[%s3832 + $0xf8] sm:$0xff]
    %s3865 = scalar_lea.vmem [#allocation25], 1
    %v3866 = vld [vmem:[%s3865] ss:$2 sm:$0x3]
    %v3868 = vperm.slane %v3866, 0
    %v3869 = vperm.slane %v3866, 1
    %v3904 = vunpack.c.l.b16 %v3833
    %v3905 = vunpack.c.h.b16 %v3833
    %v3906 = vunpack.c.l.b16 %v3834
    %v3907 = vunpack.c.h.b16 %v3834
    %v3908 = vunpack.c.l.b16 %v3835
    %v3909 = vunpack.c.h.b16 %v3835
    %v3910 = vunpack.c.l.b16 %v3836
    %v3911 = vunpack.c.h.b16 %v3836
    %v3912 = vunpack.c.l.b16 %v3837
    %v3913 = vunpack.c.h.b16 %v3837
    %v3914 = vunpack.c.l.b16 %v3838
    %v3915 = vunpack.c.h.b16 %v3838
    %v3916 = vunpack.c.l.b16 %v3839
    %v3917 = vunpack.c.h.b16 %v3839
    %v3918 = vunpack.c.l.b16 %v3840
    %v3919 = vunpack.c.h.b16 %v3840
    %v3920 = vunpack.c.l.b16 %v3841
    %v3921 = vunpack.c.h.b16 %v3841
    %v3922 = vunpack.c.l.b16 %v3842
    %v3923 = vunpack.c.h.b16 %v3842
    %v3924 = vunpack.c.l.b16 %v3843
    %v3925 = vunpack.c.h.b16 %v3843
    %v3926 = vunpack.c.l.b16 %v3844
    %v3927 = vunpack.c.h.b16 %v3844
    %v3928 = vunpack.c.l.b16 %v3845
    %v3929 = vunpack.c.h.b16 %v3845
    %v3930 = vunpack.c.l.b16 %v3846
    %v3931 = vunpack.c.h.b16 %v3846
    %v3932 = vunpack.c.l.b16 %v3847
    %v3933 = vunpack.c.h.b16 %v3847
    %v3934 = vunpack.c.l.b16 %v3848
    %v3935 = vunpack.c.h.b16 %v3848
    %v3936 = vunpack.c.l.b16 %v3849
    %v3937 = vunpack.c.h.b16 %v3849
    %v3938 = vunpack.c.l.b16 %v3850
    %v3939 = vunpack.c.h.b16 %v3850
    %v3940 = vunpack.c.l.b16 %v3851
    %v3941 = vunpack.c.h.b16 %v3851
    %v3942 = vunpack.c.l.b16 %v3852
    %v3943 = vunpack.c.h.b16 %v3852
    %v3944 = vunpack.c.l.b16 %v3853
    %v3945 = vunpack.c.h.b16 %v3853
    %v3946 = vunpack.c.l.b16 %v3854
    %v3947 = vunpack.c.h.b16 %v3854
    %v3948 = vunpack.c.l.b16 %v3855
    %v3949 = vunpack.c.h.b16 %v3855
    %v3950 = vunpack.c.l.b16 %v3856
    %v3951 = vunpack.c.h.b16 %v3856
    %v3952 = vunpack.c.l.b16 %v3857
    %v3953 = vunpack.c.h.b16 %v3857
    %v3954 = vunpack.c.l.b16 %v3858
    %v3955 = vunpack.c.h.b16 %v3858
    %v3956 = vunpack.c.l.b16 %v3859
    %v3957 = vunpack.c.h.b16 %v3859
    %v3958 = vunpack.c.l.b16 %v3860
    %v3959 = vunpack.c.h.b16 %v3860
    %v3960 = vunpack.c.l.b16 %v3861
    %v3961 = vunpack.c.h.b16 %v3861
    %v3962 = vunpack.c.l.b16 %v3862
    %v3963 = vunpack.c.h.b16 %v3862
    %v3964 = vunpack.c.l.b16 %v3863
    %v3965 = vunpack.c.h.b16 %v3863
    %v3966 = vunpack.c.l.b16 %v3864
    %v3967 = vunpack.c.h.b16 %v3864
    %v3968 = vpack.c.b16 %v3906, %v3904
    %v3969 = vpack.c.b16 %v3907, %v3905
    %v3970 = vpack.c.b16 %v3910, %v3908
    %v3971 = vpack.c.b16 %v3911, %v3909
    %v3972 = vpack.c.b16 %v3914, %v3912
    %v3973 = vpack.c.b16 %v3915, %v3913
    %v3974 = vpack.c.b16 %v3918, %v3916
    %v3975 = vpack.c.b16 %v3919, %v3917
    %v3976 = vpack.c.b16 %v3922, %v3920
    %v3977 = vpack.c.b16 %v3923, %v3921
    %v3978 = vpack.c.b16 %v3926, %v3924
    %v3979 = vpack.c.b16 %v3927, %v3925
    %v3980 = vpack.c.b16 %v3930, %v3928
    %v3981 = vpack.c.b16 %v3931, %v3929
    %v3982 = vpack.c.b16 %v3934, %v3932
    %v3983 = vpack.c.b16 %v3935, %v3933
    %v3984 = vpack.c.b16 %v3938, %v3936
    %v3985 = vpack.c.b16 %v3939, %v3937
    %v3986 = vpack.c.b16 %v3942, %v3940
    %v3987 = vpack.c.b16 %v3943, %v3941
    %v3988 = vpack.c.b16 %v3946, %v3944
    %v3989 = vpack.c.b16 %v3947, %v3945
    %v3990 = vpack.c.b16 %v3950, %v3948
    %v3991 = vpack.c.b16 %v3951, %v3949
    %v3992 = vpack.c.b16 %v3954, %v3952
    %v3993 = vpack.c.b16 %v3955, %v3953
    %v3994 = vpack.c.b16 %v3958, %v3956
    %v3995 = vpack.c.b16 %v3959, %v3957
    %v3996 = vpack.c.b16 %v3962, %v3960
    %v3997 = vpack.c.b16 %v3963, %v3961
    %v3998 = vpack.c.b16 %v3966, %v3964
    %v3999 = vpack.c.b16 %v3967, %v3965
    %4032 = vmatpush.bf16.msra.mxu0 %v3982
    %4033 = vmatpush.bf16.msra.mxu0 %v3980
    %4034 = vmatpush.bf16.msra.mxu0 %v3978
    %4035 = vmatpush.bf16.msra.mxu0 %v3976
    %4036 = vmatpush.bf16.msra.mxu0 %v3974
    %4037 = vmatpush.bf16.msra.mxu0 %v3972
    %4038 = vmatpush.bf16.msra.mxu0 %v3970
    %4039 = vmatpush.bf16.msra.mxu0 %v3968
    %4040 = vmatmul.bf16.gmra.mxu0 %v3830
    %v4041 = vpop.f32.mrf.mxu0
    %v4042 = vadd.f32 %v3868, %v4041
    %v4043 = vpop.f32.mrf.mxu0
    %4044 = vdwg.mxu0
    %4045 = vmatpush.bf16.msra.mxu0 %v3998
    %4046 = vmatpush.bf16.msra.mxu0 %v3996
    %4047 = vmatpush.bf16.msra.mxu0 %v3994
    %4048 = vmatpush.bf16.msra.mxu0 %v3992
    %4049 = vmatpush.bf16.msra.mxu0 %v3990
    %4050 = vmatpush.bf16.msra.mxu0 %v3988
    %4051 = vmatpush.bf16.msra.mxu0 %v3986
    %4052 = vmatpush.bf16.msra.mxu0 %v3984
    %4053 = vmatmul.bf16.gmra.mxu0 %v3831
    %v4054 = vpop.f32.mrf.mxu0
    %v4055 = vadd.f32 %v4042, %v4054
    %v4056 = vpop.f32.mrf.mxu0
    %4057 = vdwg.mxu0
    %4058 = vmatpush.bf16.msra.mxu0 %v3983
    %4059 = vmatpush.bf16.msra.mxu0 %v3981
    %4060 = vmatpush.bf16.msra.mxu0 %v3979
    %4061 = vmatpush.bf16.msra.mxu0 %v3977
    %4062 = vmatpush.bf16.msra.mxu0 %v3975
    %4063 = vmatpush.bf16.msra.mxu0 %v3973
    %4064 = vmatpush.bf16.msra.mxu0 %v3971
    %4065 = vmatpush.bf16.msra.mxu0 %v3969
    %4066 = vmatmul.bf16.gmra.mxu0 %v3830
    %v4067 = vpop.f32.mrf.mxu0
    %v4068 = vadd.f32 %v3869, %v4067
    %v4069 = vpop.f32.mrf.mxu0
    %4070 = vdwg.mxu0
    %4071 = vmatpush.bf16.msra.mxu0 %v3999
    %4072 = vmatpush.bf16.msra.mxu0 %v3997
    %4073 = vmatpush.bf16.msra.mxu0 %v3995
    %4074 = vmatpush.bf16.msra.mxu0 %v3993
    %4075 = vmatpush.bf16.msra.mxu0 %v3991
    %4076 = vmatpush.bf16.msra.mxu0 %v3989
    %4077 = vmatpush.bf16.msra.mxu0 %v3987
    %4078 = vmatpush.bf16.msra.mxu0 %v3985
    %4079 = vmatmul.bf16.gmra.mxu0 %v3831
    %v4080 = vpop.f32.mrf.mxu0
    %v4081 = vadd.f32 %v4068, %v4080
    %v4082 = vpop.f32.mrf.mxu0
    %4083 = vdwg.mxu0
    %v4084 = vadd.f32 %v3572, %v4055
    %v4085 = vadd.f32 %v3573, %v4081
    %s4086 = scalar_lea.vmem [#allocation27], 1
    %v4087 = vld [vmem:[%s4086] ss:$2 sm:$0x3]
    %s4088 = scalar_lea.vmem [#allocation28], 1
    %v4089 = vld [vmem:[%s4088] ss:$2 sm:$0x3]
    %v4090 = vadd.f32 %v4084, %v4085
    %4091 = vadd.xlane.f32.xlu0 %v4090
    %v4092 = vpop.xlane.xlu0 %4091
    %v4093 = vmul.f32 %v4092, %v1837
    %v4094 = vsub.f32 %v4084, %v4093
    %v4095 = vsub.f32 %v4085, %v4093
    %v4096 = vmul.f32 %v4094, %v4094
    %v4097 = vmul.f32 %v4095, %v4095
    %v4098 = vadd.f32 %v4096, %v4097
    %4099 = vadd.xlane.f32.xlu0 %v4098
    %v4100 = vpop.xlane.xlu0 %4099
    %v4101 = vmul.f32 %v4100, %v1837
    %v4102 = vadd.f32 %v4101, 1e-05
    %v4103 = vrsqrt.pop %v4102
    %v4104 = vmul.f32 %v4103, %v4102
    %v4105 = vmul.f32 %v4104, %v4103
    %v4106 = vmul.f32 0.5, %v4105
    %v4107 = vsub.f32 1.5, %v4106
    %v4108 = vmul.f32 %v4103, %v4107
    %vm4109 = vweird.f32 %v4102
    %vm4110 = vweird.f32 %v4103
    %vm4111 = vmor %vm4109, %vm4110
    %v4112 = vsel %vm4111, %v4103, %v4108
    %v4113 = vmul.f32 %v4094, %v4112
    %v4114 = vmul.f32 %v4095, %v4112
    %v4116 = vperm.slane %v4087, 0
    %v4117 = vperm.slane %v4087, 1
    %v4120 = vmul.f32 %v4113, %v4116
    %v4121 = vmul.f32 %v4114, %v4117
    %v4123 = vperm.slane %v4089, 0
    %v4124 = vperm.slane %v4089, 1
    %v4127 = vadd.f32 %v4120, %v4123
    %v4128 = vadd.f32 %v4121, %v4124
    %v4129 = vadd.f32 %v704, %v4127
    %v4130 = vadd.f32 %v717, %v4128
    %4131 = vst [vmem:[#allocation54] sm:$0xff] %v4129
    %4132 = vst [vmem:[#allocation54 + $0x8] sm:$0xff] %v4130
    %v4133 = vpack.c.bf16 %v4129, %v4129
    %v4134 = vpack.c.bf16 %v4130, %v4130
    %v4135 = vld [vmem:[#allocation33] sm:$0xff]
    %v4136 = vld [vmem:[#allocation33 + $0x8] sm:$0xff]
    %v4137 = vld [vmem:[#allocation33 + $0x10] sm:$0xff]
    %v4138 = vld [vmem:[#allocation33 + $0x18] sm:$0xff]
    %v4139 = vld [vmem:[#allocation33 + $0x20] sm:$0xff]
    %v4140 = vld [vmem:[#allocation33 + $0x28] sm:$0xff]
    %v4141 = vld [vmem:[#allocation33 + $0x30] sm:$0xff]
    %v4142 = vld [vmem:[#allocation33 + $0x38] sm:$0xff]
    %v4143 = vld [vmem:[#allocation33 + $0x40] sm:$0xff]
    %v4144 = vld [vmem:[#allocation33 + $0x48] sm:$0xff]
    %v4145 = vld [vmem:[#allocation33 + $0x50] sm:$0xff]
    %v4146 = vld [vmem:[#allocation33 + $0x58] sm:$0xff]
    %v4147 = vld [vmem:[#allocation33 + $0x60] sm:$0xff]
    %v4148 = vld [vmem:[#allocation33 + $0x68] sm:$0xff]
    %v4149 = vld [vmem:[#allocation33 + $0x70] sm:$0xff]
    %v4150 = vld [vmem:[#allocation33 + $0x78] sm:$0xff]
    %v4151 = vld [vmem:[#allocation33 + $0x80] sm:$0xff]
    %v4152 = vld [vmem:[#allocation33 + $0x88] sm:$0xff]
    %v4153 = vld [vmem:[#allocation33 + $0x90] sm:$0xff]
    %v4154 = vld [vmem:[#allocation33 + $0x98] sm:$0xff]
    %v4155 = vld [vmem:[#allocation33 + $0xa0] sm:$0xff]
    %v4156 = vld [vmem:[#allocation33 + $0xa8] sm:$0xff]
    %v4157 = vld [vmem:[#allocation33 + $0xb0] sm:$0xff]
    %v4158 = vld [vmem:[#allocation33 + $0xb8] sm:$0xff]
    %v4159 = vld [vmem:[#allocation33 + $0xc0] sm:$0xff]
    %v4160 = vld [vmem:[#allocation33 + $0xc8] sm:$0xff]
    %v4161 = vld [vmem:[#allocation33 + $0xd0] sm:$0xff]
    %v4162 = vld [vmem:[#allocation33 + $0xd8] sm:$0xff]
    %v4163 = vld [vmem:[#allocation33 + $0xe0] sm:$0xff]
    %v4164 = vld [vmem:[#allocation33 + $0xe8] sm:$0xff]
    %v4165 = vld [vmem:[#allocation33 + $0xf0] sm:$0xff]
    %v4166 = vld [vmem:[#allocation33 + $0xf8] sm:$0xff]
    %v4167 = vld [vmem:[#allocation33 + $0x100] sm:$0xff]
    %v4168 = vld [vmem:[#allocation33 + $0x108] sm:$0xff]
    %v4169 = vld [vmem:[#allocation33 + $0x110] sm:$0xff]
    %v4170 = vld [vmem:[#allocation33 + $0x118] sm:$0xff]
    %v4171 = vld [vmem:[#allocation33 + $0x120] sm:$0xff]
    %v4172 = vld [vmem:[#allocation33 + $0x128] sm:$0xff]
    %v4173 = vld [vmem:[#allocation33 + $0x130] sm:$0xff]
    %v4174 = vld [vmem:[#allocation33 + $0x138] sm:$0xff]
    %v4175 = vld [vmem:[#allocation33 + $0x140] sm:$0xff]
    %v4176 = vld [vmem:[#allocation33 + $0x148] sm:$0xff]
    %v4177 = vld [vmem:[#allocation33 + $0x150] sm:$0xff]
    %v4178 = vld [vmem:[#allocation33 + $0x158] sm:$0xff]
    %v4179 = vld [vmem:[#allocation33 + $0x160] sm:$0xff]
    %v4180 = vld [vmem:[#allocation33 + $0x168] sm:$0xff]
    %v4181 = vld [vmem:[#allocation33 + $0x170] sm:$0xff]
    %v4182 = vld [vmem:[#allocation33 + $0x178] sm:$0xff]
    %v4183 = vld [vmem:[#allocation33 + $0x180] sm:$0xff]
    %v4184 = vld [vmem:[#allocation33 + $0x188] sm:$0xff]
    %v4185 = vld [vmem:[#allocation33 + $0x190] sm:$0xff]
    %v4186 = vld [vmem:[#allocation33 + $0x198] sm:$0xff]
    %v4187 = vld [vmem:[#allocation33 + $0x1a0] sm:$0xff]
    %v4188 = vld [vmem:[#allocation33 + $0x1a8] sm:$0xff]
    %v4189 = vld [vmem:[#allocation33 + $0x1b0] sm:$0xff]
    %v4190 = vld [vmem:[#allocation33 + $0x1b8] sm:$0xff]
    %v4191 = vld [vmem:[#allocation33 + $0x1c0] sm:$0xff]
    %v4192 = vld [vmem:[#allocation33 + $0x1c8] sm:$0xff]
    %v4193 = vld [vmem:[#allocation33 + $0x1d0] sm:$0xff]
    %v4194 = vld [vmem:[#allocation33 + $0x1d8] sm:$0xff]
    %v4195 = vld [vmem:[#allocation33 + $0x1e0] sm:$0xff]
    %v4196 = vld [vmem:[#allocation33 + $0x1e8] sm:$0xff]
    %v4197 = vld [vmem:[#allocation33 + $0x1f0] sm:$0xff]
    %v4198 = vld [vmem:[#allocation33 + $0x1f8] sm:$0xff]
    %v4199 = vld [vmem:[#allocation34] sm:$0xff]
    %v4200 = vld [vmem:[#allocation34 + $0x8] sm:$0xff]
    %v4201 = vld [vmem:[#allocation34 + $0x10] sm:$0xff]
    %v4202 = vld [vmem:[#allocation34 + $0x18] sm:$0xff]
    %v4203 = vld [vmem:[#allocation34 + $0x20] sm:$0xff]
    %v4204 = vld [vmem:[#allocation34 + $0x28] sm:$0xff]
    %v4205 = vld [vmem:[#allocation34 + $0x30] sm:$0xff]
    %v4206 = vld [vmem:[#allocation34 + $0x38] sm:$0xff]
    %v4207 = vld [vmem:[#allocation34 + $0x40] sm:$0xff]
    %v4208 = vld [vmem:[#allocation34 + $0x48] sm:$0xff]
    %v4209 = vld [vmem:[#allocation34 + $0x50] sm:$0xff]
    %v4210 = vld [vmem:[#allocation34 + $0x58] sm:$0xff]
    %v4211 = vld [vmem:[#allocation34 + $0x60] sm:$0xff]
    %v4212 = vld [vmem:[#allocation34 + $0x68] sm:$0xff]
    %v4213 = vld [vmem:[#allocation34 + $0x70] sm:$0xff]
    %v4214 = vld [vmem:[#allocation34 + $0x78] sm:$0xff]
    %v4215 = vld [vmem:[#allocation34 + $0x80] sm:$0xff]
    %v4216 = vld [vmem:[#allocation34 + $0x88] sm:$0xff]
    %v4217 = vld [vmem:[#allocation34 + $0x90] sm:$0xff]
    %v4218 = vld [vmem:[#allocation34 + $0x98] sm:$0xff]
    %v4219 = vld [vmem:[#allocation34 + $0xa0] sm:$0xff]
    %v4220 = vld [vmem:[#allocation34 + $0xa8] sm:$0xff]
    %v4221 = vld [vmem:[#allocation34 + $0xb0] sm:$0xff]
    %v4222 = vld [vmem:[#allocation34 + $0xb8] sm:$0xff]
    %v4223 = vld [vmem:[#allocation34 + $0xc0] sm:$0xff]
    %v4224 = vld [vmem:[#allocation34 + $0xc8] sm:$0xff]
    %v4225 = vld [vmem:[#allocation34 + $0xd0] sm:$0xff]
    %v4226 = vld [vmem:[#allocation34 + $0xd8] sm:$0xff]
    %v4227 = vld [vmem:[#allocation34 + $0xe0] sm:$0xff]
    %v4228 = vld [vmem:[#allocation34 + $0xe8] sm:$0xff]
    %v4229 = vld [vmem:[#allocation34 + $0xf0] sm:$0xff]
    %v4230 = vld [vmem:[#allocation34 + $0xf8] sm:$0xff]
    %v4231 = vld [vmem:[#allocation34 + $0x100] sm:$0xff]
    %v4232 = vld [vmem:[#allocation34 + $0x108] sm:$0xff]
    %v4233 = vld [vmem:[#allocation34 + $0x110] sm:$0xff]
    %v4234 = vld [vmem:[#allocation34 + $0x118] sm:$0xff]
    %v4235 = vld [vmem:[#allocation34 + $0x120] sm:$0xff]
    %v4236 = vld [vmem:[#allocation34 + $0x128] sm:$0xff]
    %v4237 = vld [vmem:[#allocation34 + $0x130] sm:$0xff]
    %v4238 = vld [vmem:[#allocation34 + $0x138] sm:$0xff]
    %v4239 = vld [vmem:[#allocation34 + $0x140] sm:$0xff]
    %v4240 = vld [vmem:[#allocation34 + $0x148] sm:$0xff]
    %v4241 = vld [vmem:[#allocation34 + $0x150] sm:$0xff]
    %v4242 = vld [vmem:[#allocation34 + $0x158] sm:$0xff]
    %v4243 = vld [vmem:[#allocation34 + $0x160] sm:$0xff]
    %v4244 = vld [vmem:[#allocation34 + $0x168] sm:$0xff]
    %v4245 = vld [vmem:[#allocation34 + $0x170] sm:$0xff]
    %v4246 = vld [vmem:[#allocation34 + $0x178] sm:$0xff]
    %v4247 = vld [vmem:[#allocation34 + $0x180] sm:$0xff]
    %v4248 = vld [vmem:[#allocation34 + $0x188] sm:$0xff]
    %v4249 = vld [vmem:[#allocation34 + $0x190] sm:$0xff]
    %v4250 = vld [vmem:[#allocation34 + $0x198] sm:$0xff]
    %v4251 = vld [vmem:[#allocation34 + $0x1a0] sm:$0xff]
    %v4252 = vld [vmem:[#allocation34 + $0x1a8] sm:$0xff]
    %v4253 = vld [vmem:[#allocation34 + $0x1b0] sm:$0xff]
    %v4254 = vld [vmem:[#allocation34 + $0x1b8] sm:$0xff]
    %v4255 = vld [vmem:[#allocation34 + $0x1c0] sm:$0xff]
    %v4256 = vld [vmem:[#allocation34 + $0x1c8] sm:$0xff]
    %v4257 = vld [vmem:[#allocation34 + $0x1d0] sm:$0xff]
    %v4258 = vld [vmem:[#allocation34 + $0x1d8] sm:$0xff]
    %v4259 = vld [vmem:[#allocation34 + $0x1e0] sm:$0xff]
    %v4260 = vld [vmem:[#allocation34 + $0x1e8] sm:$0xff]
    %v4261 = vld [vmem:[#allocation34 + $0x1f0] sm:$0xff]
    %v4262 = vld [vmem:[#allocation34 + $0x1f8] sm:$0xff]
    %v4263 = vld [vmem:[%s47] sm:$0xff]
    %v4264 = vld [vmem:[%s47 + $0x8] sm:$0xff]
    %v4265 = vld [vmem:[%s47 + $0x10] sm:$0xff]
    %v4266 = vld [vmem:[%s47 + $0x18] sm:$0xff]
    %v4267 = vld [vmem:[%s47 + $0x20] sm:$0xff]
    %v4268 = vld [vmem:[%s47 + $0x28] sm:$0xff]
    %v4269 = vld [vmem:[%s47 + $0x30] sm:$0xff]
    %v4270 = vld [vmem:[%s47 + $0x38] sm:$0xff]
    %v4271 = vld [vmem:[%s47 + $0x40] sm:$0xff]
    %v4272 = vld [vmem:[%s47 + $0x48] sm:$0xff]
    %v4273 = vld [vmem:[%s47 + $0x50] sm:$0xff]
    %v4274 = vld [vmem:[%s47 + $0x58] sm:$0xff]
    %v4275 = vld [vmem:[%s47 + $0x60] sm:$0xff]
    %v4276 = vld [vmem:[%s47 + $0x68] sm:$0xff]
    %v4277 = vld [vmem:[%s47 + $0x70] sm:$0xff]
    %v4278 = vld [vmem:[%s47 + $0x78] sm:$0xff]
    %v4279 = vld [vmem:[%s47 + $0x80] sm:$0xff]
    %v4280 = vld [vmem:[%s47 + $0x88] sm:$0xff]
    %v4281 = vld [vmem:[%s47 + $0x90] sm:$0xff]
    %v4282 = vld [vmem:[%s47 + $0x98] sm:$0xff]
    %v4283 = vld [vmem:[%s47 + $0xa0] sm:$0xff]
    %v4284 = vld [vmem:[%s47 + $0xa8] sm:$0xff]
    %v4285 = vld [vmem:[%s47 + $0xb0] sm:$0xff]
    %v4286 = vld [vmem:[%s47 + $0xb8] sm:$0xff]
    %v4287 = vld [vmem:[%s47 + $0xc0] sm:$0xff]
    %v4288 = vld [vmem:[%s47 + $0xc8] sm:$0xff]
    %v4289 = vld [vmem:[%s47 + $0xd0] sm:$0xff]
    %v4290 = vld [vmem:[%s47 + $0xd8] sm:$0xff]
    %v4291 = vld [vmem:[%s47 + $0xe0] sm:$0xff]
    %v4292 = vld [vmem:[%s47 + $0xe8] sm:$0xff]
    %v4293 = vld [vmem:[%s47 + $0xf0] sm:$0xff]
    %v4294 = vld [vmem:[%s47 + $0xf8] sm:$0xff]
    %v4295 = vld [vmem:[#allocation39] sm:$0xff]
    %v4296 = vld [vmem:[#allocation39 + $0x8] sm:$0xff]
    %v4297 = vld [vmem:[#allocation39 + $0x10] sm:$0xff]
    %v4298 = vld [vmem:[#allocation39 + $0x18] sm:$0xff]
    %v4299 = vld [vmem:[#allocation39 + $0x20] sm:$0xff]
    %v4300 = vld [vmem:[#allocation39 + $0x28] sm:$0xff]
    %v4301 = vld [vmem:[#allocation39 + $0x30] sm:$0xff]
    %v4302 = vld [vmem:[#allocation39 + $0x38] sm:$0xff]
    %v4303 = vld [vmem:[#allocation39 + $0x40] sm:$0xff]
    %v4304 = vld [vmem:[#allocation39 + $0x48] sm:$0xff]
    %v4305 = vld [vmem:[#allocation39 + $0x50] sm:$0xff]
    %v4306 = vld [vmem:[#allocation39 + $0x58] sm:$0xff]
    %v4307 = vld [vmem:[#allocation39 + $0x60] sm:$0xff]
    %v4308 = vld [vmem:[#allocation39 + $0x68] sm:$0xff]
    %v4309 = vld [vmem:[#allocation39 + $0x70] sm:$0xff]
    %v4310 = vld [vmem:[#allocation39 + $0x78] sm:$0xff]
    %v4311 = vld [vmem:[#allocation39 + $0x80] sm:$0xff]
    %v4312 = vld [vmem:[#allocation39 + $0x88] sm:$0xff]
    %v4313 = vld [vmem:[#allocation39 + $0x90] sm:$0xff]
    %v4314 = vld [vmem:[#allocation39 + $0x98] sm:$0xff]
    %v4315 = vld [vmem:[#allocation39 + $0xa0] sm:$0xff]
    %v4316 = vld [vmem:[#allocation39 + $0xa8] sm:$0xff]
    %v4317 = vld [vmem:[#allocation39 + $0xb0] sm:$0xff]
    %v4318 = vld [vmem:[#allocation39 + $0xb8] sm:$0xff]
    %v4319 = vld [vmem:[#allocation39 + $0xc0] sm:$0xff]
    %v4320 = vld [vmem:[#allocation39 + $0xc8] sm:$0xff]
    %v4321 = vld [vmem:[#allocation39 + $0xd0] sm:$0xff]
    %v4322 = vld [vmem:[#allocation39 + $0xd8] sm:$0xff]
    %v4323 = vld [vmem:[#allocation39 + $0xe0] sm:$0xff]
    %v4324 = vld [vmem:[#allocation39 + $0xe8] sm:$0xff]
    %v4325 = vld [vmem:[#allocation39 + $0xf0] sm:$0xff]
    %v4326 = vld [vmem:[#allocation39 + $0xf8] sm:$0xff]
    %v4327 = vld [vmem:[#allocation42] sm:$0xf]
    %v4328 = vld [vmem:[#allocation42 + $0x4] sm:$0xf]
    %v4329 = vld [vmem:[#allocation42 + $0x8] sm:$0xf]
    %v4330 = vld [vmem:[#allocation42 + $0xc] sm:$0xf]
    %v4331 = vld [vmem:[#allocation42 + $0x10] sm:$0xf]
    %v4332 = vld [vmem:[#allocation42 + $0x14] sm:$0xf]
    %v4333 = vld [vmem:[#allocation42 + $0x18] sm:$0xf]
    %v4334 = vld [vmem:[#allocation42 + $0x1c] sm:$0xf]
    %v4335 = vld [vmem:[#allocation42 + $0x20] sm:$0xf]
    %v4336 = vld [vmem:[#allocation42 + $0x24] sm:$0xf]
    %v4337 = vld [vmem:[#allocation42 + $0x28] sm:$0xf]
    %v4338 = vld [vmem:[#allocation42 + $0x2c] sm:$0xf]
    %v4339 = vld [vmem:[#allocation42 + $0x30] sm:$0xf]
    %v4340 = vld [vmem:[#allocation42 + $0x34] sm:$0xf]
    %v4341 = vld [vmem:[#allocation42 + $0x38] sm:$0xf]
    %v4342 = vld [vmem:[#allocation42 + $0x3c] sm:$0xf]
    %v4343 = vld [vmem:[#allocation42 + $0x40] sm:$0xf]
    %v4344 = vld [vmem:[#allocation42 + $0x44] sm:$0xf]
    %v4345 = vld [vmem:[#allocation42 + $0x48] sm:$0xf]
    %v4346 = vld [vmem:[#allocation42 + $0x4c] sm:$0xf]
    %v4347 = vld [vmem:[#allocation42 + $0x50] sm:$0xf]
    %v4348 = vld [vmem:[#allocation42 + $0x54] sm:$0xf]
    %v4349 = vld [vmem:[#allocation42 + $0x58] sm:$0xf]
    %v4350 = vld [vmem:[#allocation42 + $0x5c] sm:$0xf]
    %v4351 = vld [vmem:[#allocation42 + $0x60] sm:$0xf]
    %v4352 = vld [vmem:[#allocation42 + $0x64] sm:$0xf]
    %v4353 = vld [vmem:[#allocation42 + $0x68] sm:$0xf]
    %v4354 = vld [vmem:[#allocation42 + $0x6c] sm:$0xf]
    %v4355 = vld [vmem:[#allocation42 + $0x70] sm:$0xf]
    %v4356 = vld [vmem:[#allocation42 + $0x74] sm:$0xf]
    %v4357 = vld [vmem:[#allocation42 + $0x78] sm:$0xf]
    %v4358 = vld [vmem:[#allocation42 + $0x7c] sm:$0xf]
    %v4359 = vld [vmem:[#allocation43] sm:$0xf]
    %v4360 = vld [vmem:[#allocation43 + $0x4] sm:$0xf]
    %v4361 = vld [vmem:[#allocation43 + $0x8] sm:$0xf]
    %v4362 = vld [vmem:[#allocation43 + $0xc] sm:$0xf]
    %v4363 = vld [vmem:[#allocation43 + $0x10] sm:$0xf]
    %v4364 = vld [vmem:[#allocation43 + $0x14] sm:$0xf]
    %v4365 = vld [vmem:[#allocation43 + $0x18] sm:$0xf]
    %v4366 = vld [vmem:[#allocation43 + $0x1c] sm:$0xf]
    %v4367 = vld [vmem:[#allocation43 + $0x20] sm:$0xf]
    %v4368 = vld [vmem:[#allocation43 + $0x24] sm:$0xf]
    %v4369 = vld [vmem:[#allocation43 + $0x28] sm:$0xf]
    %v4370 = vld [vmem:[#allocation43 + $0x2c] sm:$0xf]
    %v4371 = vld [vmem:[#allocation43 + $0x30] sm:$0xf]
    %v4372 = vld [vmem:[#allocation43 + $0x34] sm:$0xf]
    %v4373 = vld [vmem:[#allocation43 + $0x38] sm:$0xf]
    %v4374 = vld [vmem:[#allocation43 + $0x3c] sm:$0xf]
    %v4375 = vld [vmem:[#allocation43 + $0x40] sm:$0xf]
    %v4376 = vld [vmem:[#allocation43 + $0x44] sm:$0xf]
    %v4377 = vld [vmem:[#allocation43 + $0x48] sm:$0xf]
    %v4378 = vld [vmem:[#allocation43 + $0x4c] sm:$0xf]
    %v4379 = vld [vmem:[#allocation43 + $0x50] sm:$0xf]
    %v4380 = vld [vmem:[#allocation43 + $0x54] sm:$0xf]
    %v4381 = vld [vmem:[#allocation43 + $0x58] sm:$0xf]
    %v4382 = vld [vmem:[#allocation43 + $0x5c] sm:$0xf]
    %v4383 = vld [vmem:[#allocation43 + $0x60] sm:$0xf]
    %v4384 = vld [vmem:[#allocation43 + $0x64] sm:$0xf]
    %v4385 = vld [vmem:[#allocation43 + $0x68] sm:$0xf]
    %v4386 = vld [vmem:[#allocation43 + $0x6c] sm:$0xf]
    %v4387 = vld [vmem:[#allocation43 + $0x70] sm:$0xf]
    %v4388 = vld [vmem:[#allocation43 + $0x74] sm:$0xf]
    %v4389 = vld [vmem:[#allocation43 + $0x78] sm:$0xf]
    %v4390 = vld [vmem:[#allocation43 + $0x7c] sm:$0xf]
    %v4391 = vld [vmem:[%s63] sm:$0xf]
    %v4392 = vld [vmem:[%s63 + $0x4] sm:$0xf]
    %v4393 = vld [vmem:[%s63 + $0x8] sm:$0xf]
    %v4394 = vld [vmem:[%s63 + $0xc] sm:$0xf]
    %v4395 = vld [vmem:[%s63 + $0x10] sm:$0xf]
    %v4396 = vld [vmem:[%s63 + $0x14] sm:$0xf]
    %v4397 = vld [vmem:[%s63 + $0x18] sm:$0xf]
    %v4398 = vld [vmem:[%s63 + $0x1c] sm:$0xf]
    %v4399 = vld [vmem:[%s63 + $0x20] sm:$0xf]
    %v4400 = vld [vmem:[%s63 + $0x24] sm:$0xf]
    %v4401 = vld [vmem:[%s63 + $0x28] sm:$0xf]
    %v4402 = vld [vmem:[%s63 + $0x2c] sm:$0xf]
    %v4403 = vld [vmem:[%s63 + $0x30] sm:$0xf]
    %v4404 = vld [vmem:[%s63 + $0x34] sm:$0xf]
    %v4405 = vld [vmem:[%s63 + $0x38] sm:$0xf]
    %v4406 = vld [vmem:[%s63 + $0x3c] sm:$0xf]
    %v4407 = vld [vmem:[%s63 + $0x40] sm:$0xf]
    %v4408 = vld [vmem:[%s63 + $0x44] sm:$0xf]
    %v4409 = vld [vmem:[%s63 + $0x48] sm:$0xf]
    %v4410 = vld [vmem:[%s63 + $0x4c] sm:$0xf]
    %v4411 = vld [vmem:[%s63 + $0x50] sm:$0xf]
    %v4412 = vld [vmem:[%s63 + $0x54] sm:$0xf]
    %v4413 = vld [vmem:[%s63 + $0x58] sm:$0xf]
    %v4414 = vld [vmem:[%s63 + $0x5c] sm:$0xf]
    %v4415 = vld [vmem:[%s63 + $0x60] sm:$0xf]
    %v4416 = vld [vmem:[%s63 + $0x64] sm:$0xf]
    %v4417 = vld [vmem:[%s63 + $0x68] sm:$0xf]
    %v4418 = vld [vmem:[%s63 + $0x6c] sm:$0xf]
    %v4419 = vld [vmem:[%s63 + $0x70] sm:$0xf]
    %v4420 = vld [vmem:[%s63 + $0x74] sm:$0xf]
    %v4421 = vld [vmem:[%s63 + $0x78] sm:$0xf]
    %v4422 = vld [vmem:[%s63 + $0x7c] sm:$0xf]
    %v4423 = vld [vmem:[%s65] sm:$0xf]
    %v4424 = vld [vmem:[%s65 + $0x4] sm:$0xf]
    %v4425 = vld [vmem:[%s65 + $0x8] sm:$0xf]
    %v4426 = vld [vmem:[%s65 + $0xc] sm:$0xf]
    %v4427 = vld [vmem:[%s65 + $0x10] sm:$0xf]
    %v4428 = vld [vmem:[%s65 + $0x14] sm:$0xf]
    %v4429 = vld [vmem:[%s65 + $0x18] sm:$0xf]
    %v4430 = vld [vmem:[%s65 + $0x1c] sm:$0xf]
    %v4431 = vld [vmem:[%s65 + $0x20] sm:$0xf]
    %v4432 = vld [vmem:[%s65 + $0x24] sm:$0xf]
    %v4433 = vld [vmem:[%s65 + $0x28] sm:$0xf]
    %v4434 = vld [vmem:[%s65 + $0x2c] sm:$0xf]
    %v4435 = vld [vmem:[%s65 + $0x30] sm:$0xf]
    %v4436 = vld [vmem:[%s65 + $0x34] sm:$0xf]
    %v4437 = vld [vmem:[%s65 + $0x38] sm:$0xf]
    %v4438 = vld [vmem:[%s65 + $0x3c] sm:$0xf]
    %v4439 = vld [vmem:[%s65 + $0x40] sm:$0xf]
    %v4440 = vld [vmem:[%s65 + $0x44] sm:$0xf]
    %v4441 = vld [vmem:[%s65 + $0x48] sm:$0xf]
    %v4442 = vld [vmem:[%s65 + $0x4c] sm:$0xf]
    %v4443 = vld [vmem:[%s65 + $0x50] sm:$0xf]
    %v4444 = vld [vmem:[%s65 + $0x54] sm:$0xf]
    %v4445 = vld [vmem:[%s65 + $0x58] sm:$0xf]
    %v4446 = vld [vmem:[%s65 + $0x5c] sm:$0xf]
    %v4447 = vld [vmem:[%s65 + $0x60] sm:$0xf]
    %v4448 = vld [vmem:[%s65 + $0x64] sm:$0xf]
    %v4449 = vld [vmem:[%s65 + $0x68] sm:$0xf]
    %v4450 = vld [vmem:[%s65 + $0x6c] sm:$0xf]
    %v4451 = vld [vmem:[%s65 + $0x70] sm:$0xf]
    %v4452 = vld [vmem:[%s65 + $0x74] sm:$0xf]
    %v4453 = vld [vmem:[%s65 + $0x78] sm:$0xf]
    %v4454 = vld [vmem:[%s65 + $0x7c] sm:$0xf]
    %v4455 = vld [vmem:[#allocation9] sm:$0xff]
    loop: start=0, step=1, limit=10
    $region298: #{tpu_custom_call.1} parent=1 // loop_pre_header
      _
    $region299: #{tpu_custom_call.1} parent=1 // loop_header
      %s4457 = sphi 0, %s4461
      %p4458 = scmp.ge.s32.totalorder %s4457, 10
      %v4462 = vphi %v4455, %v7324
    $region300: #{tpu_custom_call.1} parent=1 // loop_header_branch
      %4460 = sbr.rel (%p4458) target = $region304
    $region301: #{tpu_custom_call.1} parent=1 // loop_body
      %v4463 = vpack.c.bf16 %v4462, %v4462
      %v4464 = vld [vmem:[#allocation30] sm:$0xff]
      %v4465 = vld [vmem:[#allocation30 + $0x8] sm:$0xff]
      %v4466 = vld [vmem:[#allocation30 + $0x10] sm:$0xff]
      %v4467 = vld [vmem:[#allocation30 + $0x18] sm:$0xff]
      %v4468 = vld [vmem:[#allocation30 + $0x20] sm:$0xff]
      %v4469 = vld [vmem:[#allocation30 + $0x28] sm:$0xff]
      %v4470 = vld [vmem:[#allocation31] sm:$0xf]
      %v4472 = vperm.slane %v4470, 0
      %v4473 = vperm.slane %v4470, 1
      %v4474 = vperm.slane %v4470, 2
      %v4475 = vperm.slane %v4470, 3
      %v4486 = vunpack.c.l.b16 %v4464
      %v4487 = vunpack.c.h.b16 %v4464
      %v4488 = vunpack.c.l.b16 %v4465
      %v4489 = vunpack.c.h.b16 %v4465
      %v4490 = vunpack.c.l.b16 %v4466
      %v4491 = vunpack.c.h.b16 %v4466
      %v4492 = vunpack.c.l.b16 %v4467
      %v4493 = vunpack.c.h.b16 %v4467
      %v4494 = vunpack.c.l.b16 %v4468
      %v4495 = vunpack.c.h.b16 %v4468
      %v4496 = vunpack.c.l.b16 %v4469
      %v4497 = vunpack.c.h.b16 %v4469
      %v4498 = vpack.c.b16 %v4490, %v4486
      %v4499 = vpack.c.b16 %v4491, %v4487
      %v4500 = vpack.c.b16 %v4492, %v4488
      %v4501 = vpack.c.b16 %v4493, %v4489
      %v4502 = vpack.c.b16 %v4494, %v4494
      %v4503 = vpack.c.b16 %v4495, %v4495
      %v4504 = vpack.c.b16 %v4496, %v4496
      %v4505 = vpack.c.b16 %v4497, %v4497
      %vm4510 = vcmask 195584
      %v4512 = vsel %vm4510, %v4463, 0
      %v4515 = vsel %vm1535, %v4502, 0
      %v4518 = vsel %vm1535, %v4503, 0
      %v4521 = vsel %vm1535, %v4504, 0
      %v4524 = vsel %vm1535, %v4505, 0
      %4526 = vmatpush.bf16.msra.mxu0 0
      %4527 = vmatpush.bf16.msra.mxu0 0
      %4528 = vmatpush.bf16.msra.mxu0 0
      %4529 = vmatpush.bf16.msra.mxu0 0
      %4530 = vmatpush.bf16.msra.mxu0 0
      %4531 = vmatpush.bf16.msra.mxu0 0
      %4532 = vmatpush.bf16.msra.mxu0 %v4515
      %4533 = vmatpush.bf16.msra.mxu0 %v4498
      %4534 = vmatmul.bf16.gmra.mxu0 %v4512
      %v4535 = vpop.f32.mrf.mxu0
      %v4536 = vadd.f32 %v4472, %v4535
      %v4537 = vpop.f32.mrf.mxu0
      %4538 = vdwg.mxu0
      %4539 = vmatpush.bf16.msra.mxu0 0
      %4540 = vmatpush.bf16.msra.mxu0 0
      %4541 = vmatpush.bf16.msra.mxu0 0
      %4542 = vmatpush.bf16.msra.mxu0 0
      %4543 = vmatpush.bf16.msra.mxu0 0
      %4544 = vmatpush.bf16.msra.mxu0 0
      %4545 = vmatpush.bf16.msra.mxu0 %v4518
      %4546 = vmatpush.bf16.msra.mxu0 %v4499
      %4547 = vmatmul.bf16.gmra.mxu0 %v4512
      %v4548 = vpop.f32.mrf.mxu0
      %v4549 = vadd.f32 %v4473, %v4548
      %v4550 = vpop.f32.mrf.mxu0
      %4551 = vdwg.mxu0
      %4552 = vmatpush.bf16.msra.mxu0 0
      %4553 = vmatpush.bf16.msra.mxu0 0
      %4554 = vmatpush.bf16.msra.mxu0 0
      %4555 = vmatpush.bf16.msra.mxu0 0
      %4556 = vmatpush.bf16.msra.mxu0 0
      %4557 = vmatpush.bf16.msra.mxu0 0
      %4558 = vmatpush.bf16.msra.mxu0 %v4521
      %4559 = vmatpush.bf16.msra.mxu0 %v4500
      %4560 = vmatmul.bf16.gmra.mxu0 %v4512
      %v4561 = vpop.f32.mrf.mxu0
      %v4562 = vadd.f32 %v4474, %v4561
      %v4563 = vpop.f32.mrf.mxu0
      %4564 = vdwg.mxu0
      %4565 = vmatpush.bf16.msra.mxu0 0
      %4566 = vmatpush.bf16.msra.mxu0 0
      %4567 = vmatpush.bf16.msra.mxu0 0
      %4568 = vmatpush.bf16.msra.mxu0 0
      %4569 = vmatpush.bf16.msra.mxu0 0
      %4570 = vmatpush.bf16.msra.mxu0 0
      %4571 = vmatpush.bf16.msra.mxu0 %v4524
      %4572 = vmatpush.bf16.msra.mxu0 %v4501
      %4573 = vmatmul.bf16.gmra.mxu0 %v4512
      %v4574 = vpop.f32.mrf.mxu0
      %v4575 = vadd.f32 %v4475, %v4574
      %v4576 = vpop.f32.mrf.mxu0
      %4577 = vdwg.mxu0
      %s4578 = sshra.s32 %s4457, 3
      %s4579 = sand.u32 %s4457, 7
      %s4580 = sshra.s32 %s4457, 3
      %s4581 = sand.u32 %s4457, 7
      %s4582 = smul.u32 %s4578, 4
      %s4583 = smul.u32 %s4582, 8
      %s4584 = sadd.s32 %s4583, %s4581
      %s4585 = scalar_lea.vmem %s67, %s4584
      %v4586 = vld [vmem:[%s4585] ss:$8 sm:$0xf]
      %s4587 = scalar_lea.vmem [#allocation48], %s4584
      %v4588 = vld [vmem:[%s4587] ss:$8 sm:$0xf]
      %v4590 = vperm.slane %v4586, 0
      %v4591 = vperm.slane %v4586, 1
      %v4592 = vperm.slane %v4586, 2
      %v4593 = vperm.slane %v4586, 3
      %v4662 = vunpack.c.l.b16 %v4135
      %v4663 = vunpack.c.h.b16 %v4135
      %v4664 = vunpack.c.l.b16 %v4136
      %v4665 = vunpack.c.h.b16 %v4136
      %v4666 = vunpack.c.l.b16 %v4137
      %v4667 = vunpack.c.h.b16 %v4137
      %v4668 = vunpack.c.l.b16 %v4138
      %v4669 = vunpack.c.h.b16 %v4138
      %v4670 = vunpack.c.l.b16 %v4139
      %v4671 = vunpack.c.h.b16 %v4139
      %v4672 = vunpack.c.l.b16 %v4140
      %v4673 = vunpack.c.h.b16 %v4140
      %v4674 = vunpack.c.l.b16 %v4141
      %v4675 = vunpack.c.h.b16 %v4141
      %v4676 = vunpack.c.l.b16 %v4142
      %v4677 = vunpack.c.h.b16 %v4142
      %v4678 = vunpack.c.l.b16 %v4143
      %v4679 = vunpack.c.h.b16 %v4143
      %v4680 = vunpack.c.l.b16 %v4144
      %v4681 = vunpack.c.h.b16 %v4144
      %v4682 = vunpack.c.l.b16 %v4145
      %v4683 = vunpack.c.h.b16 %v4145
      %v4684 = vunpack.c.l.b16 %v4146
      %v4685 = vunpack.c.h.b16 %v4146
      %v4686 = vunpack.c.l.b16 %v4147
      %v4687 = vunpack.c.h.b16 %v4147
      %v4688 = vunpack.c.l.b16 %v4148
      %v4689 = vunpack.c.h.b16 %v4148
      %v4690 = vunpack.c.l.b16 %v4149
      %v4691 = vunpack.c.h.b16 %v4149
      %v4692 = vunpack.c.l.b16 %v4150
      %v4693 = vunpack.c.h.b16 %v4150
      %v4694 = vunpack.c.l.b16 %v4151
      %v4695 = vunpack.c.h.b16 %v4151
      %v4696 = vunpack.c.l.b16 %v4152
      %v4697 = vunpack.c.h.b16 %v4152
      %v4698 = vunpack.c.l.b16 %v4153
      %v4699 = vunpack.c.h.b16 %v4153
      %v4700 = vunpack.c.l.b16 %v4154
      %v4701 = vunpack.c.h.b16 %v4154
      %v4702 = vunpack.c.l.b16 %v4155
      %v4703 = vunpack.c.h.b16 %v4155
      %v4704 = vunpack.c.l.b16 %v4156
      %v4705 = vunpack.c.h.b16 %v4156
      %v4706 = vunpack.c.l.b16 %v4157
      %v4707 = vunpack.c.h.b16 %v4157
      %v4708 = vunpack.c.l.b16 %v4158
      %v4709 = vunpack.c.h.b16 %v4158
      %v4710 = vunpack.c.l.b16 %v4159
      %v4711 = vunpack.c.h.b16 %v4159
      %v4712 = vunpack.c.l.b16 %v4160
      %v4713 = vunpack.c.h.b16 %v4160
      %v4714 = vunpack.c.l.b16 %v4161
      %v4715 = vunpack.c.h.b16 %v4161
      %v4716 = vunpack.c.l.b16 %v4162
      %v4717 = vunpack.c.h.b16 %v4162
      %v4718 = vunpack.c.l.b16 %v4163
      %v4719 = vunpack.c.h.b16 %v4163
      %v4720 = vunpack.c.l.b16 %v4164
      %v4721 = vunpack.c.h.b16 %v4164
      %v4722 = vunpack.c.l.b16 %v4165
      %v4723 = vunpack.c.h.b16 %v4165
      %v4724 = vunpack.c.l.b16 %v4166
      %v4725 = vunpack.c.h.b16 %v4166
      %v4726 = vunpack.c.l.b16 %v4167
      %v4727 = vunpack.c.h.b16 %v4167
      %v4728 = vunpack.c.l.b16 %v4168
      %v4729 = vunpack.c.h.b16 %v4168
      %v4730 = vunpack.c.l.b16 %v4169
      %v4731 = vunpack.c.h.b16 %v4169
      %v4732 = vunpack.c.l.b16 %v4170
      %v4733 = vunpack.c.h.b16 %v4170
      %v4734 = vunpack.c.l.b16 %v4171
      %v4735 = vunpack.c.h.b16 %v4171
      %v4736 = vunpack.c.l.b16 %v4172
      %v4737 = vunpack.c.h.b16 %v4172
      %v4738 = vunpack.c.l.b16 %v4173
      %v4739 = vunpack.c.h.b16 %v4173
      %v4740 = vunpack.c.l.b16 %v4174
      %v4741 = vunpack.c.h.b16 %v4174
      %v4742 = vunpack.c.l.b16 %v4175
      %v4743 = vunpack.c.h.b16 %v4175
      %v4744 = vunpack.c.l.b16 %v4176
      %v4745 = vunpack.c.h.b16 %v4176
      %v4746 = vunpack.c.l.b16 %v4177
      %v4747 = vunpack.c.h.b16 %v4177
      %v4748 = vunpack.c.l.b16 %v4178
      %v4749 = vunpack.c.h.b16 %v4178
      %v4750 = vunpack.c.l.b16 %v4179
      %v4751 = vunpack.c.h.b16 %v4179
      %v4752 = vunpack.c.l.b16 %v4180
      %v4753 = vunpack.c.h.b16 %v4180
      %v4754 = vunpack.c.l.b16 %v4181
      %v4755 = vunpack.c.h.b16 %v4181
      %v4756 = vunpack.c.l.b16 %v4182
      %v4757 = vunpack.c.h.b16 %v4182
      %v4758 = vunpack.c.l.b16 %v4183
      %v4759 = vunpack.c.h.b16 %v4183
      %v4760 = vunpack.c.l.b16 %v4184
      %v4761 = vunpack.c.h.b16 %v4184
      %v4762 = vunpack.c.l.b16 %v4185
      %v4763 = vunpack.c.h.b16 %v4185
      %v4764 = vunpack.c.l.b16 %v4186
      %v4765 = vunpack.c.h.b16 %v4186
      %v4766 = vunpack.c.l.b16 %v4187
      %v4767 = vunpack.c.h.b16 %v4187
      %v4768 = vunpack.c.l.b16 %v4188
      %v4769 = vunpack.c.h.b16 %v4188
      %v4770 = vunpack.c.l.b16 %v4189
      %v4771 = vunpack.c.h.b16 %v4189
      %v4772 = vunpack.c.l.b16 %v4190
      %v4773 = vunpack.c.h.b16 %v4190
      %v4774 = vunpack.c.l.b16 %v4191
      %v4775 = vunpack.c.h.b16 %v4191
      %v4776 = vunpack.c.l.b16 %v4192
      %v4777 = vunpack.c.h.b16 %v4192
      %v4778 = vunpack.c.l.b16 %v4193
      %v4779 = vunpack.c.h.b16 %v4193
      %v4780 = vunpack.c.l.b16 %v4194
      %v4781 = vunpack.c.h.b16 %v4194
      %v4782 = vunpack.c.l.b16 %v4195
      %v4783 = vunpack.c.h.b16 %v4195
      %v4784 = vunpack.c.l.b16 %v4196
      %v4785 = vunpack.c.h.b16 %v4196
      %v4786 = vunpack.c.l.b16 %v4197
      %v4787 = vunpack.c.h.b16 %v4197
      %v4788 = vunpack.c.l.b16 %v4198
      %v4789 = vunpack.c.h.b16 %v4198
      %v4790 = vpack.c.b16 %v4666, %v4662
      %v4791 = vpack.c.b16 %v4667, %v4663
      %v4792 = vpack.c.b16 %v4668, %v4664
      %v4793 = vpack.c.b16 %v4669, %v4665
      %v4794 = vpack.c.b16 %v4674, %v4670
      %v4795 = vpack.c.b16 %v4675, %v4671
      %v4796 = vpack.c.b16 %v4676, %v4672
      %v4797 = vpack.c.b16 %v4677, %v4673
      %v4798 = vpack.c.b16 %v4682, %v4678
      %v4799 = vpack.c.b16 %v4683, %v4679
      %v4800 = vpack.c.b16 %v4684, %v4680
      %v4801 = vpack.c.b16 %v4685, %v4681
      %v4802 = vpack.c.b16 %v4690, %v4686
      %v4803 = vpack.c.b16 %v4691, %v4687
      %v4804 = vpack.c.b16 %v4692, %v4688
      %v4805 = vpack.c.b16 %v4693, %v4689
      %v4806 = vpack.c.b16 %v4698, %v4694
      %v4807 = vpack.c.b16 %v4699, %v4695
      %v4808 = vpack.c.b16 %v4700, %v4696
      %v4809 = vpack.c.b16 %v4701, %v4697
      %v4810 = vpack.c.b16 %v4706, %v4702
      %v4811 = vpack.c.b16 %v4707, %v4703
      %v4812 = vpack.c.b16 %v4708, %v4704
      %v4813 = vpack.c.b16 %v4709, %v4705
      %v4814 = vpack.c.b16 %v4714, %v4710
      %v4815 = vpack.c.b16 %v4715, %v4711
      %v4816 = vpack.c.b16 %v4716, %v4712
      %v4817 = vpack.c.b16 %v4717, %v4713
      %v4818 = vpack.c.b16 %v4722, %v4718
      %v4819 = vpack.c.b16 %v4723, %v4719
      %v4820 = vpack.c.b16 %v4724, %v4720
      %v4821 = vpack.c.b16 %v4725, %v4721
      %v4822 = vpack.c.b16 %v4730, %v4726
      %v4823 = vpack.c.b16 %v4731, %v4727
      %v4824 = vpack.c.b16 %v4732, %v4728
      %v4825 = vpack.c.b16 %v4733, %v4729
      %v4826 = vpack.c.b16 %v4738, %v4734
      %v4827 = vpack.c.b16 %v4739, %v4735
      %v4828 = vpack.c.b16 %v4740, %v4736
      %v4829 = vpack.c.b16 %v4741, %v4737
      %v4830 = vpack.c.b16 %v4746, %v4742
      %v4831 = vpack.c.b16 %v4747, %v4743
      %v4832 = vpack.c.b16 %v4748, %v4744
      %v4833 = vpack.c.b16 %v4749, %v4745
      %v4834 = vpack.c.b16 %v4754, %v4750
      %v4835 = vpack.c.b16 %v4755, %v4751
      %v4836 = vpack.c.b16 %v4756, %v4752
      %v4837 = vpack.c.b16 %v4757, %v4753
      %v4838 = vpack.c.b16 %v4762, %v4758
      %v4839 = vpack.c.b16 %v4763, %v4759
      %v4840 = vpack.c.b16 %v4764, %v4760
      %v4841 = vpack.c.b16 %v4765, %v4761
      %v4842 = vpack.c.b16 %v4770, %v4766
      %v4843 = vpack.c.b16 %v4771, %v4767
      %v4844 = vpack.c.b16 %v4772, %v4768
      %v4845 = vpack.c.b16 %v4773, %v4769
      %v4846 = vpack.c.b16 %v4778, %v4774
      %v4847 = vpack.c.b16 %v4779, %v4775
      %v4848 = vpack.c.b16 %v4780, %v4776
      %v4849 = vpack.c.b16 %v4781, %v4777
      %v4850 = vpack.c.b16 %v4786, %v4782
      %v4851 = vpack.c.b16 %v4787, %v4783
      %v4852 = vpack.c.b16 %v4788, %v4784
      %v4853 = vpack.c.b16 %v4789, %v4785
      %4918 = vmatpush.bf16.msra.mxu0 %v4818
      %4919 = vmatpush.bf16.msra.mxu0 %v4814
      %4920 = vmatpush.bf16.msra.mxu0 %v4810
      %4921 = vmatpush.bf16.msra.mxu0 %v4806
      %4922 = vmatpush.bf16.msra.mxu0 %v4802
      %4923 = vmatpush.bf16.msra.mxu0 %v4798
      %4924 = vmatpush.bf16.msra.mxu0 %v4794
      %4925 = vmatpush.bf16.msra.mxu0 %v4790
      %4926 = vmatmul.bf16.gmra.mxu0 %v4133
      %v4927 = vpop.f32.mrf.mxu0
      %v4928 = vadd.f32 %v4590, %v4927
      %v4929 = vpop.f32.mrf.mxu0
      %4930 = vdwg.mxu0
      %4931 = vmatpush.bf16.msra.mxu0 %v4850
      %4932 = vmatpush.bf16.msra.mxu0 %v4846
      %4933 = vmatpush.bf16.msra.mxu0 %v4842
      %4934 = vmatpush.bf16.msra.mxu0 %v4838
      %4935 = vmatpush.bf16.msra.mxu0 %v4834
      %4936 = vmatpush.bf16.msra.mxu0 %v4830
      %4937 = vmatpush.bf16.msra.mxu0 %v4826
      %4938 = vmatpush.bf16.msra.mxu0 %v4822
      %4939 = vmatmul.bf16.gmra.mxu0 %v4134
      %v4940 = vpop.f32.mrf.mxu0
      %v4941 = vadd.f32 %v4928, %v4940
      %v4942 = vpop.f32.mrf.mxu0
      %4943 = vdwg.mxu0
      %4944 = vmatpush.bf16.msra.mxu0 %v4819
      %4945 = vmatpush.bf16.msra.mxu0 %v4815
      %4946 = vmatpush.bf16.msra.mxu0 %v4811
      %4947 = vmatpush.bf16.msra.mxu0 %v4807
      %4948 = vmatpush.bf16.msra.mxu0 %v4803
      %4949 = vmatpush.bf16.msra.mxu0 %v4799
      %4950 = vmatpush.bf16.msra.mxu0 %v4795
      %4951 = vmatpush.bf16.msra.mxu0 %v4791
      %4952 = vmatmul.bf16.gmra.mxu0 %v4133
      %v4953 = vpop.f32.mrf.mxu0
      %v4954 = vadd.f32 %v4591, %v4953
      %v4955 = vpop.f32.mrf.mxu0
      %4956 = vdwg.mxu0
      %4957 = vmatpush.bf16.msra.mxu0 %v4851
      %4958 = vmatpush.bf16.msra.mxu0 %v4847
      %4959 = vmatpush.bf16.msra.mxu0 %v4843
      %4960 = vmatpush.bf16.msra.mxu0 %v4839
      %4961 = vmatpush.bf16.msra.mxu0 %v4835
      %4962 = vmatpush.bf16.msra.mxu0 %v4831
      %4963 = vmatpush.bf16.msra.mxu0 %v4827
      %4964 = vmatpush.bf16.msra.mxu0 %v4823
      %4965 = vmatmul.bf16.gmra.mxu0 %v4134
      %v4966 = vpop.f32.mrf.mxu0
      %v4967 = vadd.f32 %v4954, %v4966
      %v4968 = vpop.f32.mrf.mxu0
      %4969 = vdwg.mxu0
      %4970 = vmatpush.bf16.msra.mxu0 %v4820
      %4971 = vmatpush.bf16.msra.mxu0 %v4816
      %4972 = vmatpush.bf16.msra.mxu0 %v4812
      %4973 = vmatpush.bf16.msra.mxu0 %v4808
      %4974 = vmatpush.bf16.msra.mxu0 %v4804
      %4975 = vmatpush.bf16.msra.mxu0 %v4800
      %4976 = vmatpush.bf16.msra.mxu0 %v4796
      %4977 = vmatpush.bf16.msra.mxu0 %v4792
      %4978 = vmatmul.bf16.gmra.mxu0 %v4133
      %v4979 = vpop.f32.mrf.mxu0
      %v4980 = vadd.f32 %v4592, %v4979
      %v4981 = vpop.f32.mrf.mxu0
      %4982 = vdwg.mxu0
      %4983 = vmatpush.bf16.msra.mxu0 %v4852
      %4984 = vmatpush.bf16.msra.mxu0 %v4848
      %4985 = vmatpush.bf16.msra.mxu0 %v4844
      %4986 = vmatpush.bf16.msra.mxu0 %v4840
      %4987 = vmatpush.bf16.msra.mxu0 %v4836
      %4988 = vmatpush.bf16.msra.mxu0 %v4832
      %4989 = vmatpush.bf16.msra.mxu0 %v4828
      %4990 = vmatpush.bf16.msra.mxu0 %v4824
      %4991 = vmatmul.bf16.gmra.mxu0 %v4134
      %v4992 = vpop.f32.mrf.mxu0
      %v4993 = vadd.f32 %v4980, %v4992
      %v4994 = vpop.f32.mrf.mxu0
      %4995 = vdwg.mxu0
      %4996 = vmatpush.bf16.msra.mxu0 %v4821
      %4997 = vmatpush.bf16.msra.mxu0 %v4817
      %4998 = vmatpush.bf16.msra.mxu0 %v4813
      %4999 = vmatpush.bf16.msra.mxu0 %v4809
      %5000 = vmatpush.bf16.msra.mxu0 %v4805
      %5001 = vmatpush.bf16.msra.mxu0 %v4801
      %5002 = vmatpush.bf16.msra.mxu0 %v4797
      %5003 = vmatpush.bf16.msra.mxu0 %v4793
      %5004 = vmatmul.bf16.gmra.mxu0 %v4133
      %v5005 = vpop.f32.mrf.mxu0
      %v5006 = vadd.f32 %v4593, %v5005
      %v5007 = vpop.f32.mrf.mxu0
      %5008 = vdwg.mxu0
      %5009 = vmatpush.bf16.msra.mxu0 %v4853
      %5010 = vmatpush.bf16.msra.mxu0 %v4849
      %5011 = vmatpush.bf16.msra.mxu0 %v4845
      %5012 = vmatpush.bf16.msra.mxu0 %v4841
      %5013 = vmatpush.bf16.msra.mxu0 %v4837
      %5014 = vmatpush.bf16.msra.mxu0 %v4833
      %5015 = vmatpush.bf16.msra.mxu0 %v4829
      %5016 = vmatpush.bf16.msra.mxu0 %v4825
      %5017 = vmatmul.bf16.gmra.mxu0 %v4134
      %v5018 = vpop.f32.mrf.mxu0
      %v5019 = vadd.f32 %v5006, %v5018
      %v5020 = vpop.f32.mrf.mxu0
      %5021 = vdwg.mxu0
      %v5022 = vxor.u32 %v4941, 2147483648
      %v5023 = vxor.u32 %v4967, 2147483648
      %v5024 = vxor.u32 %v4993, 2147483648
      %v5025 = vxor.u32 %v5019, 2147483648
      %v5026 = vmul.f32 %v5022, 1.442695
      %v5027 = vpow.pop %v5026
      %v5028 = vmul.f32 %v5023, 1.442695
      %v5029 = vpow.pop %v5028
      %v5030 = vmul.f32 %v5024, 1.442695
      %v5031 = vpow.pop %v5030
      %v5032 = vmul.f32 %v5025, 1.442695
      %v5033 = vpow.pop %v5032
      %v5034 = vadd.f32 %v5027, 1.0
      %v5035 = vadd.f32 %v5029, 1.0
      %v5036 = vadd.f32 %v5031, 1.0
      %v5037 = vadd.f32 %v5033, 1.0
      %v5038 = vrcp.pop %v5034
      %v5039 = vmul.f32 %v5034, %v5038
      %v5040 = vsub.f32 1.0, %v5039
      %v5041 = vmul.f32 %v5038, %v5040
      %v5042 = vadd.f32 %v5038, %v5041
      %vm5043 = vweird.f32 %v5034
      %vm5044 = vweird.f32 %v5038
      %vm5045 = vmor %vm5043, %vm5044
      %v5046 = vsel %vm5045, %v5038, %v5042
      %v5047 = vand.u32 2147483647, %v5034
      %vm5048 = vcmp.eq.f32.partialorder %v5047, 8.507059e+37
      %v5049 = vand.u32 %v5034, 2147483648
      %v5050 = vor.u32 1.1754944e-38, %v5049
      %v5051 = vsel %vm5048, %v5050, %v5046
      %v5052 = vmul.f32 1.0, %v5051
      %v5053 = vrcp.pop %v5035
      %v5054 = vmul.f32 %v5035, %v5053
      %v5055 = vsub.f32 1.0, %v5054
      %v5056 = vmul.f32 %v5053, %v5055
      %v5057 = vadd.f32 %v5053, %v5056
      %vm5058 = vweird.f32 %v5035
      %vm5059 = vweird.f32 %v5053
      %vm5060 = vmor %vm5058, %vm5059
      %v5061 = vsel %vm5060, %v5053, %v5057
      %v5062 = vand.u32 2147483647, %v5035
      %vm5063 = vcmp.eq.f32.partialorder %v5062, 8.507059e+37
      %v5064 = vand.u32 %v5035, 2147483648
      %v5065 = vor.u32 1.1754944e-38, %v5064
      %v5066 = vsel %vm5063, %v5065, %v5061
      %v5067 = vmul.f32 1.0, %v5066
      %v5068 = vrcp.pop %v5036
      %v5069 = vmul.f32 %v5036, %v5068
      %v5070 = vsub.f32 1.0, %v5069
      %v5071 = vmul.f32 %v5068, %v5070
      %v5072 = vadd.f32 %v5068, %v5071
      %vm5073 = vweird.f32 %v5036
      %vm5074 = vweird.f32 %v5068
      %vm5075 = vmor %vm5073, %vm5074
      %v5076 = vsel %vm5075, %v5068, %v5072
      %v5077 = vand.u32 2147483647, %v5036
      %vm5078 = vcmp.eq.f32.partialorder %v5077, 8.507059e+37
      %v5079 = vand.u32 %v5036, 2147483648
      %v5080 = vor.u32 1.1754944e-38, %v5079
      %v5081 = vsel %vm5078, %v5080, %v5076
      %v5082 = vmul.f32 1.0, %v5081
      %v5083 = vrcp.pop %v5037
      %v5084 = vmul.f32 %v5037, %v5083
      %v5085 = vsub.f32 1.0, %v5084
      %v5086 = vmul.f32 %v5083, %v5085
      %v5087 = vadd.f32 %v5083, %v5086
      %vm5088 = vweird.f32 %v5037
      %vm5089 = vweird.f32 %v5083
      %vm5090 = vmor %vm5088, %vm5089
      %v5091 = vsel %vm5090, %v5083, %v5087
      %v5092 = vand.u32 2147483647, %v5037
      %vm5093 = vcmp.eq.f32.partialorder %v5092, 8.507059e+37
      %v5094 = vand.u32 %v5037, 2147483648
      %v5095 = vor.u32 1.1754944e-38, %v5094
      %v5096 = vsel %vm5093, %v5095, %v5091
      %v5097 = vmul.f32 1.0, %v5096
      %v5098 = vmul.f32 %v4536, %v5052
      %v5099 = vmul.f32 %v4549, %v5067
      %v5100 = vmul.f32 %v4562, %v5082
      %v5101 = vmul.f32 %v4575, %v5097
      %v5103 = vperm.slane %v4588, 0
      %v5104 = vperm.slane %v4588, 1
      %v5105 = vperm.slane %v4588, 2
      %v5106 = vperm.slane %v4588, 3
      %v5175 = vunpack.c.l.b16 %v4199
      %v5176 = vunpack.c.h.b16 %v4199
      %v5177 = vunpack.c.l.b16 %v4200
      %v5178 = vunpack.c.h.b16 %v4200
      %v5179 = vunpack.c.l.b16 %v4201
      %v5180 = vunpack.c.h.b16 %v4201
      %v5181 = vunpack.c.l.b16 %v4202
      %v5182 = vunpack.c.h.b16 %v4202
      %v5183 = vunpack.c.l.b16 %v4203
      %v5184 = vunpack.c.h.b16 %v4203
      %v5185 = vunpack.c.l.b16 %v4204
      %v5186 = vunpack.c.h.b16 %v4204
      %v5187 = vunpack.c.l.b16 %v4205
      %v5188 = vunpack.c.h.b16 %v4205
      %v5189 = vunpack.c.l.b16 %v4206
      %v5190 = vunpack.c.h.b16 %v4206
      %v5191 = vunpack.c.l.b16 %v4207
      %v5192 = vunpack.c.h.b16 %v4207
      %v5193 = vunpack.c.l.b16 %v4208
      %v5194 = vunpack.c.h.b16 %v4208
      %v5195 = vunpack.c.l.b16 %v4209
      %v5196 = vunpack.c.h.b16 %v4209
      %v5197 = vunpack.c.l.b16 %v4210
      %v5198 = vunpack.c.h.b16 %v4210
      %v5199 = vunpack.c.l.b16 %v4211
      %v5200 = vunpack.c.h.b16 %v4211
      %v5201 = vunpack.c.l.b16 %v4212
      %v5202 = vunpack.c.h.b16 %v4212
      %v5203 = vunpack.c.l.b16 %v4213
      %v5204 = vunpack.c.h.b16 %v4213
      %v5205 = vunpack.c.l.b16 %v4214
      %v5206 = vunpack.c.h.b16 %v4214
      %v5207 = vunpack.c.l.b16 %v4215
      %v5208 = vunpack.c.h.b16 %v4215
      %v5209 = vunpack.c.l.b16 %v4216
      %v5210 = vunpack.c.h.b16 %v4216
      %v5211 = vunpack.c.l.b16 %v4217
      %v5212 = vunpack.c.h.b16 %v4217
      %v5213 = vunpack.c.l.b16 %v4218
      %v5214 = vunpack.c.h.b16 %v4218
      %v5215 = vunpack.c.l.b16 %v4219
      %v5216 = vunpack.c.h.b16 %v4219
      %v5217 = vunpack.c.l.b16 %v4220
      %v5218 = vunpack.c.h.b16 %v4220
      %v5219 = vunpack.c.l.b16 %v4221
      %v5220 = vunpack.c.h.b16 %v4221
      %v5221 = vunpack.c.l.b16 %v4222
      %v5222 = vunpack.c.h.b16 %v4222
      %v5223 = vunpack.c.l.b16 %v4223
      %v5224 = vunpack.c.h.b16 %v4223
      %v5225 = vunpack.c.l.b16 %v4224
      %v5226 = vunpack.c.h.b16 %v4224
      %v5227 = vunpack.c.l.b16 %v4225
      %v5228 = vunpack.c.h.b16 %v4225
      %v5229 = vunpack.c.l.b16 %v4226
      %v5230 = vunpack.c.h.b16 %v4226
      %v5231 = vunpack.c.l.b16 %v4227
      %v5232 = vunpack.c.h.b16 %v4227
      %v5233 = vunpack.c.l.b16 %v4228
      %v5234 = vunpack.c.h.b16 %v4228
      %v5235 = vunpack.c.l.b16 %v4229
      %v5236 = vunpack.c.h.b16 %v4229
      %v5237 = vunpack.c.l.b16 %v4230
      %v5238 = vunpack.c.h.b16 %v4230
      %v5239 = vunpack.c.l.b16 %v4231
      %v5240 = vunpack.c.h.b16 %v4231
      %v5241 = vunpack.c.l.b16 %v4232
      %v5242 = vunpack.c.h.b16 %v4232
      %v5243 = vunpack.c.l.b16 %v4233
      %v5244 = vunpack.c.h.b16 %v4233
      %v5245 = vunpack.c.l.b16 %v4234
      %v5246 = vunpack.c.h.b16 %v4234
      %v5247 = vunpack.c.l.b16 %v4235
      %v5248 = vunpack.c.h.b16 %v4235
      %v5249 = vunpack.c.l.b16 %v4236
      %v5250 = vunpack.c.h.b16 %v4236
      %v5251 = vunpack.c.l.b16 %v4237
      %v5252 = vunpack.c.h.b16 %v4237
      %v5253 = vunpack.c.l.b16 %v4238
      %v5254 = vunpack.c.h.b16 %v4238
      %v5255 = vunpack.c.l.b16 %v4239
      %v5256 = vunpack.c.h.b16 %v4239
      %v5257 = vunpack.c.l.b16 %v4240
      %v5258 = vunpack.c.h.b16 %v4240
      %v5259 = vunpack.c.l.b16 %v4241
      %v5260 = vunpack.c.h.b16 %v4241
      %v5261 = vunpack.c.l.b16 %v4242
      %v5262 = vunpack.c.h.b16 %v4242
      %v5263 = vunpack.c.l.b16 %v4243
      %v5264 = vunpack.c.h.b16 %v4243
      %v5265 = vunpack.c.l.b16 %v4244
      %v5266 = vunpack.c.h.b16 %v4244
      %v5267 = vunpack.c.l.b16 %v4245
      %v5268 = vunpack.c.h.b16 %v4245
      %v5269 = vunpack.c.l.b16 %v4246
      %v5270 = vunpack.c.h.b16 %v4246
      %v5271 = vunpack.c.l.b16 %v4247
      %v5272 = vunpack.c.h.b16 %v4247
      %v5273 = vunpack.c.l.b16 %v4248
      %v5274 = vunpack.c.h.b16 %v4248
      %v5275 = vunpack.c.l.b16 %v4249
      %v5276 = vunpack.c.h.b16 %v4249
      %v5277 = vunpack.c.l.b16 %v4250
      %v5278 = vunpack.c.h.b16 %v4250
      %v5279 = vunpack.c.l.b16 %v4251
      %v5280 = vunpack.c.h.b16 %v4251
      %v5281 = vunpack.c.l.b16 %v4252
      %v5282 = vunpack.c.h.b16 %v4252
      %v5283 = vunpack.c.l.b16 %v4253
      %v5284 = vunpack.c.h.b16 %v4253
      %v5285 = vunpack.c.l.b16 %v4254
      %v5286 = vunpack.c.h.b16 %v4254
      %v5287 = vunpack.c.l.b16 %v4255
      %v5288 = vunpack.c.h.b16 %v4255
      %v5289 = vunpack.c.l.b16 %v4256
      %v5290 = vunpack.c.h.b16 %v4256
      %v5291 = vunpack.c.l.b16 %v4257
      %v5292 = vunpack.c.h.b16 %v4257
      %v5293 = vunpack.c.l.b16 %v4258
      %v5294 = vunpack.c.h.b16 %v4258
      %v5295 = vunpack.c.l.b16 %v4259
      %v5296 = vunpack.c.h.b16 %v4259
      %v5297 = vunpack.c.l.b16 %v4260
      %v5298 = vunpack.c.h.b16 %v4260
      %v5299 = vunpack.c.l.b16 %v4261
      %v5300 = vunpack.c.h.b16 %v4261
      %v5301 = vunpack.c.l.b16 %v4262
      %v5302 = vunpack.c.h.b16 %v4262
      %v5303 = vpack.c.b16 %v5179, %v5175
      %v5304 = vpack.c.b16 %v5180, %v5176
      %v5305 = vpack.c.b16 %v5181, %v5177
      %v5306 = vpack.c.b16 %v5182, %v5178
      %v5307 = vpack.c.b16 %v5187, %v5183
      %v5308 = vpack.c.b16 %v5188, %v5184
      %v5309 = vpack.c.b16 %v5189, %v5185
      %v5310 = vpack.c.b16 %v5190, %v5186
      %v5311 = vpack.c.b16 %v5195, %v5191
      %v5312 = vpack.c.b16 %v5196, %v5192
      %v5313 = vpack.c.b16 %v5197, %v5193
      %v5314 = vpack.c.b16 %v5198, %v5194
      %v5315 = vpack.c.b16 %v5203, %v5199
      %v5316 = vpack.c.b16 %v5204, %v5200
      %v5317 = vpack.c.b16 %v5205, %v5201
      %v5318 = vpack.c.b16 %v5206, %v5202
      %v5319 = vpack.c.b16 %v5211, %v5207
      %v5320 = vpack.c.b16 %v5212, %v5208
      %v5321 = vpack.c.b16 %v5213, %v5209
      %v5322 = vpack.c.b16 %v5214, %v5210
      %v5323 = vpack.c.b16 %v5219, %v5215
      %v5324 = vpack.c.b16 %v5220, %v5216
      %v5325 = vpack.c.b16 %v5221, %v5217
      %v5326 = vpack.c.b16 %v5222, %v5218
      %v5327 = vpack.c.b16 %v5227, %v5223
      %v5328 = vpack.c.b16 %v5228, %v5224
      %v5329 = vpack.c.b16 %v5229, %v5225
      %v5330 = vpack.c.b16 %v5230, %v5226
      %v5331 = vpack.c.b16 %v5235, %v5231
      %v5332 = vpack.c.b16 %v5236, %v5232
      %v5333 = vpack.c.b16 %v5237, %v5233
      %v5334 = vpack.c.b16 %v5238, %v5234
      %v5335 = vpack.c.b16 %v5243, %v5239
      %v5336 = vpack.c.b16 %v5244, %v5240
      %v5337 = vpack.c.b16 %v5245, %v5241
      %v5338 = vpack.c.b16 %v5246, %v5242
      %v5339 = vpack.c.b16 %v5251, %v5247
      %v5340 = vpack.c.b16 %v5252, %v5248
      %v5341 = vpack.c.b16 %v5253, %v5249
      %v5342 = vpack.c.b16 %v5254, %v5250
      %v5343 = vpack.c.b16 %v5259, %v5255
      %v5344 = vpack.c.b16 %v5260, %v5256
      %v5345 = vpack.c.b16 %v5261, %v5257
      %v5346 = vpack.c.b16 %v5262, %v5258
      %v5347 = vpack.c.b16 %v5267, %v5263
      %v5348 = vpack.c.b16 %v5268, %v5264
      %v5349 = vpack.c.b16 %v5269, %v5265
      %v5350 = vpack.c.b16 %v5270, %v5266
      %v5351 = vpack.c.b16 %v5275, %v5271
      %v5352 = vpack.c.b16 %v5276, %v5272
      %v5353 = vpack.c.b16 %v5277, %v5273
      %v5354 = vpack.c.b16 %v5278, %v5274
      %v5355 = vpack.c.b16 %v5283, %v5279
      %v5356 = vpack.c.b16 %v5284, %v5280
      %v5357 = vpack.c.b16 %v5285, %v5281
      %v5358 = vpack.c.b16 %v5286, %v5282
      %v5359 = vpack.c.b16 %v5291, %v5287
      %v5360 = vpack.c.b16 %v5292, %v5288
      %v5361 = vpack.c.b16 %v5293, %v5289
      %v5362 = vpack.c.b16 %v5294, %v5290
      %v5363 = vpack.c.b16 %v5299, %v5295
      %v5364 = vpack.c.b16 %v5300, %v5296
      %v5365 = vpack.c.b16 %v5301, %v5297
      %v5366 = vpack.c.b16 %v5302, %v5298
      %5431 = vmatpush.bf16.msra.mxu0 %v5331
      %5432 = vmatpush.bf16.msra.mxu0 %v5327
      %5433 = vmatpush.bf16.msra.mxu0 %v5323
      %5434 = vmatpush.bf16.msra.mxu0 %v5319
      %5435 = vmatpush.bf16.msra.mxu0 %v5315
      %5436 = vmatpush.bf16.msra.mxu0 %v5311
      %5437 = vmatpush.bf16.msra.mxu0 %v5307
      %5438 = vmatpush.bf16.msra.mxu0 %v5303
      %5439 = vmatmul.bf16.gmra.mxu0 %v4133
      %v5440 = vpop.f32.mrf.mxu0
      %v5441 = vadd.f32 %v5103, %v5440
      %v5442 = vpop.f32.mrf.mxu0
      %5443 = vdwg.mxu0
      %5444 = vmatpush.bf16.msra.mxu0 %v5363
      %5445 = vmatpush.bf16.msra.mxu0 %v5359
      %5446 = vmatpush.bf16.msra.mxu0 %v5355
      %5447 = vmatpush.bf16.msra.mxu0 %v5351
      %5448 = vmatpush.bf16.msra.mxu0 %v5347
      %5449 = vmatpush.bf16.msra.mxu0 %v5343
      %5450 = vmatpush.bf16.msra.mxu0 %v5339
      %5451 = vmatpush.bf16.msra.mxu0 %v5335
      %5452 = vmatmul.bf16.gmra.mxu0 %v4134
      %v5453 = vpop.f32.mrf.mxu0
      %v5454 = vadd.f32 %v5441, %v5453
      %v5455 = vpop.f32.mrf.mxu0
      %5456 = vdwg.mxu0
      %5457 = vmatpush.bf16.msra.mxu0 %v5332
      %5458 = vmatpush.bf16.msra.mxu0 %v5328
      %5459 = vmatpush.bf16.msra.mxu0 %v5324
      %5460 = vmatpush.bf16.msra.mxu0 %v5320
      %5461 = vmatpush.bf16.msra.mxu0 %v5316
      %5462 = vmatpush.bf16.msra.mxu0 %v5312
      %5463 = vmatpush.bf16.msra.mxu0 %v5308
      %5464 = vmatpush.bf16.msra.mxu0 %v5304
      %5465 = vmatmul.bf16.gmra.mxu0 %v4133
      %v5466 = vpop.f32.mrf.mxu0
      %v5467 = vadd.f32 %v5104, %v5466
      %v5468 = vpop.f32.mrf.mxu0
      %5469 = vdwg.mxu0
      %5470 = vmatpush.bf16.msra.mxu0 %v5364
      %5471 = vmatpush.bf16.msra.mxu0 %v5360
      %5472 = vmatpush.bf16.msra.mxu0 %v5356
      %5473 = vmatpush.bf16.msra.mxu0 %v5352
      %5474 = vmatpush.bf16.msra.mxu0 %v5348
      %5475 = vmatpush.bf16.msra.mxu0 %v5344
      %5476 = vmatpush.bf16.msra.mxu0 %v5340
      %5477 = vmatpush.bf16.msra.mxu0 %v5336
      %5478 = vmatmul.bf16.gmra.mxu0 %v4134
      %v5479 = vpop.f32.mrf.mxu0
      %v5480 = vadd.f32 %v5467, %v5479
      %v5481 = vpop.f32.mrf.mxu0
      %5482 = vdwg.mxu0
      %5483 = vmatpush.bf16.msra.mxu0 %v5333
      %5484 = vmatpush.bf16.msra.mxu0 %v5329
      %5485 = vmatpush.bf16.msra.mxu0 %v5325
      %5486 = vmatpush.bf16.msra.mxu0 %v5321
      %5487 = vmatpush.bf16.msra.mxu0 %v5317
      %5488 = vmatpush.bf16.msra.mxu0 %v5313
      %5489 = vmatpush.bf16.msra.mxu0 %v5309
      %5490 = vmatpush.bf16.msra.mxu0 %v5305
      %5491 = vmatmul.bf16.gmra.mxu0 %v4133
      %v5492 = vpop.f32.mrf.mxu0
      %v5493 = vadd.f32 %v5105, %v5492
      %v5494 = vpop.f32.mrf.mxu0
      %5495 = vdwg.mxu0
      %5496 = vmatpush.bf16.msra.mxu0 %v5365
      %5497 = vmatpush.bf16.msra.mxu0 %v5361
      %5498 = vmatpush.bf16.msra.mxu0 %v5357
      %5499 = vmatpush.bf16.msra.mxu0 %v5353
      %5500 = vmatpush.bf16.msra.mxu0 %v5349
      %5501 = vmatpush.bf16.msra.mxu0 %v5345
      %5502 = vmatpush.bf16.msra.mxu0 %v5341
      %5503 = vmatpush.bf16.msra.mxu0 %v5337
      %5504 = vmatmul.bf16.gmra.mxu0 %v4134
      %v5505 = vpop.f32.mrf.mxu0
      %v5506 = vadd.f32 %v5493, %v5505
      %v5507 = vpop.f32.mrf.mxu0
      %5508 = vdwg.mxu0
      %5509 = vmatpush.bf16.msra.mxu0 %v5334
      %5510 = vmatpush.bf16.msra.mxu0 %v5330
      %5511 = vmatpush.bf16.msra.mxu0 %v5326
      %5512 = vmatpush.bf16.msra.mxu0 %v5322
      %5513 = vmatpush.bf16.msra.mxu0 %v5318
      %5514 = vmatpush.bf16.msra.mxu0 %v5314
      %5515 = vmatpush.bf16.msra.mxu0 %v5310
      %5516 = vmatpush.bf16.msra.mxu0 %v5306
      %5517 = vmatmul.bf16.gmra.mxu0 %v4133
      %v5518 = vpop.f32.mrf.mxu0
      %v5519 = vadd.f32 %v5106, %v5518
      %v5520 = vpop.f32.mrf.mxu0
      %5521 = vdwg.mxu0
      %5522 = vmatpush.bf16.msra.mxu0 %v5366
      %5523 = vmatpush.bf16.msra.mxu0 %v5362
      %5524 = vmatpush.bf16.msra.mxu0 %v5358
      %5525 = vmatpush.bf16.msra.mxu0 %v5354
      %5526 = vmatpush.bf16.msra.mxu0 %v5350
      %5527 = vmatpush.bf16.msra.mxu0 %v5346
      %5528 = vmatpush.bf16.msra.mxu0 %v5342
      %5529 = vmatpush.bf16.msra.mxu0 %v5338
      %5530 = vmatmul.bf16.gmra.mxu0 %v4134
      %v5531 = vpop.f32.mrf.mxu0
      %v5532 = vadd.f32 %v5519, %v5531
      %v5533 = vpop.f32.mrf.mxu0
      %5534 = vdwg.mxu0
      %v5535 = vadd.f32 %v5098, %v5454
      %v5536 = vadd.f32 %v5099, %v5480
      %v5537 = vadd.f32 %v5100, %v5506
      %v5538 = vadd.f32 %v5101, %v5532
      %v5539 = vpack.c.bf16 %v5535, %v5535
      %v5540 = vpack.c.bf16 %v5536, %v5536
      %v5541 = vpack.c.bf16 %v5537, %v5537
      %v5542 = vpack.c.bf16 %v5538, %v5538
      %v5543 = vld [vmem:[#allocation36] sm:$0xff]
      %v5544 = vld [vmem:[#allocation36 + $0x8] sm:$0xff]
      %v5545 = vld [vmem:[#allocation36 + $0x10] sm:$0xff]
      %v5546 = vld [vmem:[#allocation36 + $0x18] sm:$0xff]
      %v5547 = vld [vmem:[#allocation36 + $0x20] sm:$0xff]
      %v5548 = vld [vmem:[#allocation36 + $0x28] sm:$0xff]
      %v5549 = vld [vmem:[#allocation36 + $0x30] sm:$0xff]
      %v5550 = vld [vmem:[#allocation36 + $0x38] sm:$0xff]
      %v5551 = vld [vmem:[#allocation36 + $0x40] sm:$0xff]
      %v5552 = vld [vmem:[#allocation36 + $0x48] sm:$0xff]
      %v5553 = vld [vmem:[#allocation36 + $0x50] sm:$0xff]
      %v5554 = vld [vmem:[#allocation36 + $0x58] sm:$0xff]
      %v5555 = vld [vmem:[#allocation36 + $0x60] sm:$0xff]
      %v5556 = vld [vmem:[#allocation36 + $0x68] sm:$0xff]
      %v5557 = vld [vmem:[#allocation36 + $0x70] sm:$0xff]
      %v5558 = vld [vmem:[#allocation36 + $0x78] sm:$0xff]
      %v5559 = vld [vmem:[#allocation36 + $0x80] sm:$0xff]
      %v5560 = vld [vmem:[#allocation36 + $0x88] sm:$0xff]
      %v5561 = vld [vmem:[#allocation36 + $0x90] sm:$0xff]
      %v5562 = vld [vmem:[#allocation36 + $0x98] sm:$0xff]
      %v5563 = vld [vmem:[#allocation36 + $0xa0] sm:$0xff]
      %v5564 = vld [vmem:[#allocation36 + $0xa8] sm:$0xff]
      %v5565 = vld [vmem:[#allocation36 + $0xb0] sm:$0xff]
      %v5566 = vld [vmem:[#allocation36 + $0xb8] sm:$0xff]
      %v5567 = vld [vmem:[#allocation36 + $0xc0] sm:$0xff]
      %v5568 = vld [vmem:[#allocation36 + $0xc8] sm:$0xff]
      %v5569 = vld [vmem:[#allocation36 + $0xd0] sm:$0xff]
      %v5570 = vld [vmem:[#allocation36 + $0xd8] sm:$0xff]
      %v5571 = vld [vmem:[#allocation36 + $0xe0] sm:$0xff]
      %v5572 = vld [vmem:[#allocation36 + $0xe8] sm:$0xff]
      %v5573 = vld [vmem:[#allocation36 + $0xf0] sm:$0xff]
      %v5574 = vld [vmem:[#allocation36 + $0xf8] sm:$0xff]
      %v5575 = vld [vmem:[#allocation36 + $0x100] sm:$0xff]
      %v5576 = vld [vmem:[#allocation36 + $0x108] sm:$0xff]
      %v5577 = vld [vmem:[#allocation36 + $0x110] sm:$0xff]
      %v5578 = vld [vmem:[#allocation36 + $0x118] sm:$0xff]
      %v5579 = vld [vmem:[#allocation36 + $0x120] sm:$0xff]
      %v5580 = vld [vmem:[#allocation36 + $0x128] sm:$0xff]
      %v5581 = vld [vmem:[#allocation36 + $0x130] sm:$0xff]
      %v5582 = vld [vmem:[#allocation36 + $0x138] sm:$0xff]
      %v5583 = vld [vmem:[#allocation36 + $0x140] sm:$0xff]
      %v5584 = vld [vmem:[#allocation36 + $0x148] sm:$0xff]
      %v5585 = vld [vmem:[#allocation36 + $0x150] sm:$0xff]
      %v5586 = vld [vmem:[#allocation36 + $0x158] sm:$0xff]
      %v5587 = vld [vmem:[#allocation36 + $0x160] sm:$0xff]
      %v5588 = vld [vmem:[#allocation36 + $0x168] sm:$0xff]
      %v5589 = vld [vmem:[#allocation36 + $0x170] sm:$0xff]
      %v5590 = vld [vmem:[#allocation36 + $0x178] sm:$0xff]
      %v5591 = vld [vmem:[#allocation36 + $0x180] sm:$0xff]
      %v5592 = vld [vmem:[#allocation36 + $0x188] sm:$0xff]
      %v5593 = vld [vmem:[#allocation36 + $0x190] sm:$0xff]
      %v5594 = vld [vmem:[#allocation36 + $0x198] sm:$0xff]
      %v5595 = vld [vmem:[#allocation36 + $0x1a0] sm:$0xff]
      %v5596 = vld [vmem:[#allocation36 + $0x1a8] sm:$0xff]
      %v5597 = vld [vmem:[#allocation36 + $0x1b0] sm:$0xff]
      %v5598 = vld [vmem:[#allocation36 + $0x1b8] sm:$0xff]
      %v5599 = vld [vmem:[#allocation36 + $0x1c0] sm:$0xff]
      %v5600 = vld [vmem:[#allocation36 + $0x1c8] sm:$0xff]
      %v5601 = vld [vmem:[#allocation36 + $0x1d0] sm:$0xff]
      %v5602 = vld [vmem:[#allocation36 + $0x1d8] sm:$0xff]
      %v5603 = vld [vmem:[#allocation36 + $0x1e0] sm:$0xff]
      %v5604 = vld [vmem:[#allocation36 + $0x1e8] sm:$0xff]
      %v5605 = vld [vmem:[#allocation36 + $0x1f0] sm:$0xff]
      %v5606 = vld [vmem:[#allocation36 + $0x1f8] sm:$0xff]
      %v5607 = vld [vmem:[#allocation37] sm:$0x3]
      %v5609 = vperm.slane %v5607, 0
      %v5610 = vperm.slane %v5607, 1
      %v5677 = vunpack.c.l.b16 %v5543
      %v5678 = vunpack.c.h.b16 %v5543
      %v5679 = vunpack.c.l.b16 %v5544
      %v5680 = vunpack.c.h.b16 %v5544
      %v5681 = vunpack.c.l.b16 %v5545
      %v5682 = vunpack.c.h.b16 %v5545
      %v5683 = vunpack.c.l.b16 %v5546
      %v5684 = vunpack.c.h.b16 %v5546
      %v5685 = vunpack.c.l.b16 %v5547
      %v5686 = vunpack.c.h.b16 %v5547
      %v5687 = vunpack.c.l.b16 %v5548
      %v5688 = vunpack.c.h.b16 %v5548
      %v5689 = vunpack.c.l.b16 %v5549
      %v5690 = vunpack.c.h.b16 %v5549
      %v5691 = vunpack.c.l.b16 %v5550
      %v5692 = vunpack.c.h.b16 %v5550
      %v5693 = vunpack.c.l.b16 %v5551
      %v5694 = vunpack.c.h.b16 %v5551
      %v5695 = vunpack.c.l.b16 %v5552
      %v5696 = vunpack.c.h.b16 %v5552
      %v5697 = vunpack.c.l.b16 %v5553
      %v5698 = vunpack.c.h.b16 %v5553
      %v5699 = vunpack.c.l.b16 %v5554
      %v5700 = vunpack.c.h.b16 %v5554
      %v5701 = vunpack.c.l.b16 %v5555
      %v5702 = vunpack.c.h.b16 %v5555
      %v5703 = vunpack.c.l.b16 %v5556
      %v5704 = vunpack.c.h.b16 %v5556
      %v5705 = vunpack.c.l.b16 %v5557
      %v5706 = vunpack.c.h.b16 %v5557
      %v5707 = vunpack.c.l.b16 %v5558
      %v5708 = vunpack.c.h.b16 %v5558
      %v5709 = vunpack.c.l.b16 %v5559
      %v5710 = vunpack.c.h.b16 %v5559
      %v5711 = vunpack.c.l.b16 %v5560
      %v5712 = vunpack.c.h.b16 %v5560
      %v5713 = vunpack.c.l.b16 %v5561
      %v5714 = vunpack.c.h.b16 %v5561
      %v5715 = vunpack.c.l.b16 %v5562
      %v5716 = vunpack.c.h.b16 %v5562
      %v5717 = vunpack.c.l.b16 %v5563
      %v5718 = vunpack.c.h.b16 %v5563
      %v5719 = vunpack.c.l.b16 %v5564
      %v5720 = vunpack.c.h.b16 %v5564
      %v5721 = vunpack.c.l.b16 %v5565
      %v5722 = vunpack.c.h.b16 %v5565
      %v5723 = vunpack.c.l.b16 %v5566
      %v5724 = vunpack.c.h.b16 %v5566
      %v5725 = vunpack.c.l.b16 %v5567
      %v5726 = vunpack.c.h.b16 %v5567
      %v5727 = vunpack.c.l.b16 %v5568
      %v5728 = vunpack.c.h.b16 %v5568
      %v5729 = vunpack.c.l.b16 %v5569
      %v5730 = vunpack.c.h.b16 %v5569
      %v5731 = vunpack.c.l.b16 %v5570
      %v5732 = vunpack.c.h.b16 %v5570
      %v5733 = vunpack.c.l.b16 %v5571
      %v5734 = vunpack.c.h.b16 %v5571
      %v5735 = vunpack.c.l.b16 %v5572
      %v5736 = vunpack.c.h.b16 %v5572
      %v5737 = vunpack.c.l.b16 %v5573
      %v5738 = vunpack.c.h.b16 %v5573
      %v5739 = vunpack.c.l.b16 %v5574
      %v5740 = vunpack.c.h.b16 %v5574
      %v5741 = vunpack.c.l.b16 %v5575
      %v5742 = vunpack.c.h.b16 %v5575
      %v5743 = vunpack.c.l.b16 %v5576
      %v5744 = vunpack.c.h.b16 %v5576
      %v5745 = vunpack.c.l.b16 %v5577
      %v5746 = vunpack.c.h.b16 %v5577
      %v5747 = vunpack.c.l.b16 %v5578
      %v5748 = vunpack.c.h.b16 %v5578
      %v5749 = vunpack.c.l.b16 %v5579
      %v5750 = vunpack.c.h.b16 %v5579
      %v5751 = vunpack.c.l.b16 %v5580
      %v5752 = vunpack.c.h.b16 %v5580
      %v5753 = vunpack.c.l.b16 %v5581
      %v5754 = vunpack.c.h.b16 %v5581
      %v5755 = vunpack.c.l.b16 %v5582
      %v5756 = vunpack.c.h.b16 %v5582
      %v5757 = vunpack.c.l.b16 %v5583
      %v5758 = vunpack.c.h.b16 %v5583
      %v5759 = vunpack.c.l.b16 %v5584
      %v5760 = vunpack.c.h.b16 %v5584
      %v5761 = vunpack.c.l.b16 %v5585
      %v5762 = vunpack.c.h.b16 %v5585
      %v5763 = vunpack.c.l.b16 %v5586
      %v5764 = vunpack.c.h.b16 %v5586
      %v5765 = vunpack.c.l.b16 %v5587
      %v5766 = vunpack.c.h.b16 %v5587
      %v5767 = vunpack.c.l.b16 %v5588
      %v5768 = vunpack.c.h.b16 %v5588
      %v5769 = vunpack.c.l.b16 %v5589
      %v5770 = vunpack.c.h.b16 %v5589
      %v5771 = vunpack.c.l.b16 %v5590
      %v5772 = vunpack.c.h.b16 %v5590
      %v5773 = vunpack.c.l.b16 %v5591
      %v5774 = vunpack.c.h.b16 %v5591
      %v5775 = vunpack.c.l.b16 %v5592
      %v5776 = vunpack.c.h.b16 %v5592
      %v5777 = vunpack.c.l.b16 %v5593
      %v5778 = vunpack.c.h.b16 %v5593
      %v5779 = vunpack.c.l.b16 %v5594
      %v5780 = vunpack.c.h.b16 %v5594
      %v5781 = vunpack.c.l.b16 %v5595
      %v5782 = vunpack.c.h.b16 %v5595
      %v5783 = vunpack.c.l.b16 %v5596
      %v5784 = vunpack.c.h.b16 %v5596
      %v5785 = vunpack.c.l.b16 %v5597
      %v5786 = vunpack.c.h.b16 %v5597
      %v5787 = vunpack.c.l.b16 %v5598
      %v5788 = vunpack.c.h.b16 %v5598
      %v5789 = vunpack.c.l.b16 %v5599
      %v5790 = vunpack.c.h.b16 %v5599
      %v5791 = vunpack.c.l.b16 %v5600
      %v5792 = vunpack.c.h.b16 %v5600
      %v5793 = vunpack.c.l.b16 %v5601
      %v5794 = vunpack.c.h.b16 %v5601
      %v5795 = vunpack.c.l.b16 %v5602
      %v5796 = vunpack.c.h.b16 %v5602
      %v5797 = vunpack.c.l.b16 %v5603
      %v5798 = vunpack.c.h.b16 %v5603
      %v5799 = vunpack.c.l.b16 %v5604
      %v5800 = vunpack.c.h.b16 %v5604
      %v5801 = vunpack.c.l.b16 %v5605
      %v5802 = vunpack.c.h.b16 %v5605
      %v5803 = vunpack.c.l.b16 %v5606
      %v5804 = vunpack.c.h.b16 %v5606
      %v5805 = vpack.c.b16 %v5679, %v5677
      %v5806 = vpack.c.b16 %v5680, %v5678
      %v5807 = vpack.c.b16 %v5683, %v5681
      %v5808 = vpack.c.b16 %v5684, %v5682
      %v5809 = vpack.c.b16 %v5687, %v5685
      %v5810 = vpack.c.b16 %v5688, %v5686
      %v5811 = vpack.c.b16 %v5691, %v5689
      %v5812 = vpack.c.b16 %v5692, %v5690
      %v5813 = vpack.c.b16 %v5695, %v5693
      %v5814 = vpack.c.b16 %v5696, %v5694
      %v5815 = vpack.c.b16 %v5699, %v5697
      %v5816 = vpack.c.b16 %v5700, %v5698
      %v5817 = vpack.c.b16 %v5703, %v5701
      %v5818 = vpack.c.b16 %v5704, %v5702
      %v5819 = vpack.c.b16 %v5707, %v5705
      %v5820 = vpack.c.b16 %v5708, %v5706
      %v5821 = vpack.c.b16 %v5711, %v5709
      %v5822 = vpack.c.b16 %v5712, %v5710
      %v5823 = vpack.c.b16 %v5715, %v5713
      %v5824 = vpack.c.b16 %v5716, %v5714
      %v5825 = vpack.c.b16 %v5719, %v5717
      %v5826 = vpack.c.b16 %v5720, %v5718
      %v5827 = vpack.c.b16 %v5723, %v5721
      %v5828 = vpack.c.b16 %v5724, %v5722
      %v5829 = vpack.c.b16 %v5727, %v5725
      %v5830 = vpack.c.b16 %v5728, %v5726
      %v5831 = vpack.c.b16 %v5731, %v5729
      %v5832 = vpack.c.b16 %v5732, %v5730
      %v5833 = vpack.c.b16 %v5735, %v5733
      %v5834 = vpack.c.b16 %v5736, %v5734
      %v5835 = vpack.c.b16 %v5739, %v5737
      %v5836 = vpack.c.b16 %v5740, %v5738
      %v5837 = vpack.c.b16 %v5743, %v5741
      %v5838 = vpack.c.b16 %v5744, %v5742
      %v5839 = vpack.c.b16 %v5747, %v5745
      %v5840 = vpack.c.b16 %v5748, %v5746
      %v5841 = vpack.c.b16 %v5751, %v5749
      %v5842 = vpack.c.b16 %v5752, %v5750
      %v5843 = vpack.c.b16 %v5755, %v5753
      %v5844 = vpack.c.b16 %v5756, %v5754
      %v5845 = vpack.c.b16 %v5759, %v5757
      %v5846 = vpack.c.b16 %v5760, %v5758
      %v5847 = vpack.c.b16 %v5763, %v5761
      %v5848 = vpack.c.b16 %v5764, %v5762
      %v5849 = vpack.c.b16 %v5767, %v5765
      %v5850 = vpack.c.b16 %v5768, %v5766
      %v5851 = vpack.c.b16 %v5771, %v5769
      %v5852 = vpack.c.b16 %v5772, %v5770
      %v5853 = vpack.c.b16 %v5775, %v5773
      %v5854 = vpack.c.b16 %v5776, %v5774
      %v5855 = vpack.c.b16 %v5779, %v5777
      %v5856 = vpack.c.b16 %v5780, %v5778
      %v5857 = vpack.c.b16 %v5783, %v5781
      %v5858 = vpack.c.b16 %v5784, %v5782
      %v5859 = vpack.c.b16 %v5787, %v5785
      %v5860 = vpack.c.b16 %v5788, %v5786
      %v5861 = vpack.c.b16 %v5791, %v5789
      %v5862 = vpack.c.b16 %v5792, %v5790
      %v5863 = vpack.c.b16 %v5795, %v5793
      %v5864 = vpack.c.b16 %v5796, %v5794
      %v5865 = vpack.c.b16 %v5799, %v5797
      %v5866 = vpack.c.b16 %v5800, %v5798
      %v5867 = vpack.c.b16 %v5803, %v5801
      %v5868 = vpack.c.b16 %v5804, %v5802
      %5933 = vmatpush.bf16.msra.mxu0 %v5819
      %5934 = vmatpush.bf16.msra.mxu0 %v5817
      %5935 = vmatpush.bf16.msra.mxu0 %v5815
      %5936 = vmatpush.bf16.msra.mxu0 %v5813
      %5937 = vmatpush.bf16.msra.mxu0 %v5811
      %5938 = vmatpush.bf16.msra.mxu0 %v5809
      %5939 = vmatpush.bf16.msra.mxu0 %v5807
      %5940 = vmatpush.bf16.msra.mxu0 %v5805
      %5941 = vmatmul.bf16.gmra.mxu0 %v5539
      %v5942 = vpop.f32.mrf.mxu0
      %v5943 = vadd.f32 %v5609, %v5942
      %v5944 = vpop.f32.mrf.mxu0
      %5945 = vdwg.mxu0
      %5946 = vmatpush.bf16.msra.mxu0 %v5835
      %5947 = vmatpush.bf16.msra.mxu0 %v5833
      %5948 = vmatpush.bf16.msra.mxu0 %v5831
      %5949 = vmatpush.bf16.msra.mxu0 %v5829
      %5950 = vmatpush.bf16.msra.mxu0 %v5827
      %5951 = vmatpush.bf16.msra.mxu0 %v5825
      %5952 = vmatpush.bf16.msra.mxu0 %v5823
      %5953 = vmatpush.bf16.msra.mxu0 %v5821
      %5954 = vmatmul.bf16.gmra.mxu0 %v5540
      %v5955 = vpop.f32.mrf.mxu0
      %v5956 = vadd.f32 %v5943, %v5955
      %v5957 = vpop.f32.mrf.mxu0
      %5958 = vdwg.mxu0
      %5959 = vmatpush.bf16.msra.mxu0 %v5851
      %5960 = vmatpush.bf16.msra.mxu0 %v5849
      %5961 = vmatpush.bf16.msra.mxu0 %v5847
      %5962 = vmatpush.bf16.msra.mxu0 %v5845
      %5963 = vmatpush.bf16.msra.mxu0 %v5843
      %5964 = vmatpush.bf16.msra.mxu0 %v5841
      %5965 = vmatpush.bf16.msra.mxu0 %v5839
      %5966 = vmatpush.bf16.msra.mxu0 %v5837
      %5967 = vmatmul.bf16.gmra.mxu0 %v5541
      %v5968 = vpop.f32.mrf.mxu0
      %v5969 = vadd.f32 %v5956, %v5968
      %v5970 = vpop.f32.mrf.mxu0
      %5971 = vdwg.mxu0
      %5972 = vmatpush.bf16.msra.mxu0 %v5867
      %5973 = vmatpush.bf16.msra.mxu0 %v5865
      %5974 = vmatpush.bf16.msra.mxu0 %v5863
      %5975 = vmatpush.bf16.msra.mxu0 %v5861
      %5976 = vmatpush.bf16.msra.mxu0 %v5859
      %5977 = vmatpush.bf16.msra.mxu0 %v5857
      %5978 = vmatpush.bf16.msra.mxu0 %v5855
      %5979 = vmatpush.bf16.msra.mxu0 %v5853
      %5980 = vmatmul.bf16.gmra.mxu0 %v5542
      %v5981 = vpop.f32.mrf.mxu0
      %v5982 = vadd.f32 %v5969, %v5981
      %v5983 = vpop.f32.mrf.mxu0
      %5984 = vdwg.mxu0
      %5985 = vmatpush.bf16.msra.mxu0 %v5820
      %5986 = vmatpush.bf16.msra.mxu0 %v5818
      %5987 = vmatpush.bf16.msra.mxu0 %v5816
      %5988 = vmatpush.bf16.msra.mxu0 %v5814
      %5989 = vmatpush.bf16.msra.mxu0 %v5812
      %5990 = vmatpush.bf16.msra.mxu0 %v5810
      %5991 = vmatpush.bf16.msra.mxu0 %v5808
      %5992 = vmatpush.bf16.msra.mxu0 %v5806
      %5993 = vmatmul.bf16.gmra.mxu0 %v5539
      %v5994 = vpop.f32.mrf.mxu0
      %v5995 = vadd.f32 %v5610, %v5994
      %v5996 = vpop.f32.mrf.mxu0
      %5997 = vdwg.mxu0
      %5998 = vmatpush.bf16.msra.mxu0 %v5836
      %5999 = vmatpush.bf16.msra.mxu0 %v5834
      %6000 = vmatpush.bf16.msra.mxu0 %v5832
      %6001 = vmatpush.bf16.msra.mxu0 %v5830
      %6002 = vmatpush.bf16.msra.mxu0 %v5828
      %6003 = vmatpush.bf16.msra.mxu0 %v5826
      %6004 = vmatpush.bf16.msra.mxu0 %v5824
      %6005 = vmatpush.bf16.msra.mxu0 %v5822
      %6006 = vmatmul.bf16.gmra.mxu0 %v5540
      %v6007 = vpop.f32.mrf.mxu0
      %v6008 = vadd.f32 %v5995, %v6007
      %v6009 = vpop.f32.mrf.mxu0
      %6010 = vdwg.mxu0
      %6011 = vmatpush.bf16.msra.mxu0 %v5852
      %6012 = vmatpush.bf16.msra.mxu0 %v5850
      %6013 = vmatpush.bf16.msra.mxu0 %v5848
      %6014 = vmatpush.bf16.msra.mxu0 %v5846
      %6015 = vmatpush.bf16.msra.mxu0 %v5844
      %6016 = vmatpush.bf16.msra.mxu0 %v5842
      %6017 = vmatpush.bf16.msra.mxu0 %v5840
      %6018 = vmatpush.bf16.msra.mxu0 %v5838
      %6019 = vmatmul.bf16.gmra.mxu0 %v5541
      %v6020 = vpop.f32.mrf.mxu0
      %v6021 = vadd.f32 %v6008, %v6020
      %v6022 = vpop.f32.mrf.mxu0
      %6023 = vdwg.mxu0
      %6024 = vmatpush.bf16.msra.mxu0 %v5868
      %6025 = vmatpush.bf16.msra.mxu0 %v5866
      %6026 = vmatpush.bf16.msra.mxu0 %v5864
      %6027 = vmatpush.bf16.msra.mxu0 %v5862
      %6028 = vmatpush.bf16.msra.mxu0 %v5860
      %6029 = vmatpush.bf16.msra.mxu0 %v5858
      %6030 = vmatpush.bf16.msra.mxu0 %v5856
      %6031 = vmatpush.bf16.msra.mxu0 %v5854
      %6032 = vmatmul.bf16.gmra.mxu0 %v5542
      %v6033 = vpop.f32.mrf.mxu0
      %v6034 = vadd.f32 %v6021, %v6033
      %v6035 = vpop.f32.mrf.mxu0
      %6036 = vdwg.mxu0
      %s6037 = smul.u32 %s4578, 2
      %s6038 = smul.u32 %s6037, 8
      %s6039 = sadd.s32 %s6038, %s4581
      %s6040 = scalar_lea.vmem [#allocation46], %s6039
      %v6041 = vld [vmem:[%s6040] ss:$8 sm:$0x3]
      %s6042 = scalar_lea.vmem [#allocation49], %s6039
      %v6043 = vld [vmem:[%s6042] ss:$8 sm:$0x3]
      %v6045 = vperm.slane %v6041, 0
      %v6046 = vperm.slane %v6041, 1
      %v6081 = vunpack.c.l.b16 %v4263
      %v6082 = vunpack.c.h.b16 %v4263
      %v6083 = vunpack.c.l.b16 %v4264
      %v6084 = vunpack.c.h.b16 %v4264
      %v6085 = vunpack.c.l.b16 %v4265
      %v6086 = vunpack.c.h.b16 %v4265
      %v6087 = vunpack.c.l.b16 %v4266
      %v6088 = vunpack.c.h.b16 %v4266
      %v6089 = vunpack.c.l.b16 %v4267
      %v6090 = vunpack.c.h.b16 %v4267
      %v6091 = vunpack.c.l.b16 %v4268
      %v6092 = vunpack.c.h.b16 %v4268
      %v6093 = vunpack.c.l.b16 %v4269
      %v6094 = vunpack.c.h.b16 %v4269
      %v6095 = vunpack.c.l.b16 %v4270
      %v6096 = vunpack.c.h.b16 %v4270
      %v6097 = vunpack.c.l.b16 %v4271
      %v6098 = vunpack.c.h.b16 %v4271
      %v6099 = vunpack.c.l.b16 %v4272
      %v6100 = vunpack.c.h.b16 %v4272
      %v6101 = vunpack.c.l.b16 %v4273
      %v6102 = vunpack.c.h.b16 %v4273
      %v6103 = vunpack.c.l.b16 %v4274
      %v6104 = vunpack.c.h.b16 %v4274
      %v6105 = vunpack.c.l.b16 %v4275
      %v6106 = vunpack.c.h.b16 %v4275
      %v6107 = vunpack.c.l.b16 %v4276
      %v6108 = vunpack.c.h.b16 %v4276
      %v6109 = vunpack.c.l.b16 %v4277
      %v6110 = vunpack.c.h.b16 %v4277
      %v6111 = vunpack.c.l.b16 %v4278
      %v6112 = vunpack.c.h.b16 %v4278
      %v6113 = vunpack.c.l.b16 %v4279
      %v6114 = vunpack.c.h.b16 %v4279
      %v6115 = vunpack.c.l.b16 %v4280
      %v6116 = vunpack.c.h.b16 %v4280
      %v6117 = vunpack.c.l.b16 %v4281
      %v6118 = vunpack.c.h.b16 %v4281
      %v6119 = vunpack.c.l.b16 %v4282
      %v6120 = vunpack.c.h.b16 %v4282
      %v6121 = vunpack.c.l.b16 %v4283
      %v6122 = vunpack.c.h.b16 %v4283
      %v6123 = vunpack.c.l.b16 %v4284
      %v6124 = vunpack.c.h.b16 %v4284
      %v6125 = vunpack.c.l.b16 %v4285
      %v6126 = vunpack.c.h.b16 %v4285
      %v6127 = vunpack.c.l.b16 %v4286
      %v6128 = vunpack.c.h.b16 %v4286
      %v6129 = vunpack.c.l.b16 %v4287
      %v6130 = vunpack.c.h.b16 %v4287
      %v6131 = vunpack.c.l.b16 %v4288
      %v6132 = vunpack.c.h.b16 %v4288
      %v6133 = vunpack.c.l.b16 %v4289
      %v6134 = vunpack.c.h.b16 %v4289
      %v6135 = vunpack.c.l.b16 %v4290
      %v6136 = vunpack.c.h.b16 %v4290
      %v6137 = vunpack.c.l.b16 %v4291
      %v6138 = vunpack.c.h.b16 %v4291
      %v6139 = vunpack.c.l.b16 %v4292
      %v6140 = vunpack.c.h.b16 %v4292
      %v6141 = vunpack.c.l.b16 %v4293
      %v6142 = vunpack.c.h.b16 %v4293
      %v6143 = vunpack.c.l.b16 %v4294
      %v6144 = vunpack.c.h.b16 %v4294
      %v6145 = vpack.c.b16 %v6083, %v6081
      %v6146 = vpack.c.b16 %v6084, %v6082
      %v6147 = vpack.c.b16 %v6087, %v6085
      %v6148 = vpack.c.b16 %v6088, %v6086
      %v6149 = vpack.c.b16 %v6091, %v6089
      %v6150 = vpack.c.b16 %v6092, %v6090
      %v6151 = vpack.c.b16 %v6095, %v6093
      %v6152 = vpack.c.b16 %v6096, %v6094
      %v6153 = vpack.c.b16 %v6099, %v6097
      %v6154 = vpack.c.b16 %v6100, %v6098
      %v6155 = vpack.c.b16 %v6103, %v6101
      %v6156 = vpack.c.b16 %v6104, %v6102
      %v6157 = vpack.c.b16 %v6107, %v6105
      %v6158 = vpack.c.b16 %v6108, %v6106
      %v6159 = vpack.c.b16 %v6111, %v6109
      %v6160 = vpack.c.b16 %v6112, %v6110
      %v6161 = vpack.c.b16 %v6115, %v6113
      %v6162 = vpack.c.b16 %v6116, %v6114
      %v6163 = vpack.c.b16 %v6119, %v6117
      %v6164 = vpack.c.b16 %v6120, %v6118
      %v6165 = vpack.c.b16 %v6123, %v6121
      %v6166 = vpack.c.b16 %v6124, %v6122
      %v6167 = vpack.c.b16 %v6127, %v6125
      %v6168 = vpack.c.b16 %v6128, %v6126
      %v6169 = vpack.c.b16 %v6131, %v6129
      %v6170 = vpack.c.b16 %v6132, %v6130
      %v6171 = vpack.c.b16 %v6135, %v6133
      %v6172 = vpack.c.b16 %v6136, %v6134
      %v6173 = vpack.c.b16 %v6139, %v6137
      %v6174 = vpack.c.b16 %v6140, %v6138
      %v6175 = vpack.c.b16 %v6143, %v6141
      %v6176 = vpack.c.b16 %v6144, %v6142
      %6209 = vmatpush.bf16.msra.mxu0 %v6159
      %6210 = vmatpush.bf16.msra.mxu0 %v6157
      %6211 = vmatpush.bf16.msra.mxu0 %v6155
      %6212 = vmatpush.bf16.msra.mxu0 %v6153
      %6213 = vmatpush.bf16.msra.mxu0 %v6151
      %6214 = vmatpush.bf16.msra.mxu0 %v6149
      %6215 = vmatpush.bf16.msra.mxu0 %v6147
      %6216 = vmatpush.bf16.msra.mxu0 %v6145
      %6217 = vmatmul.bf16.gmra.mxu0 %v4133
      %v6218 = vpop.f32.mrf.mxu0
      %v6219 = vadd.f32 %v6045, %v6218
      %v6220 = vpop.f32.mrf.mxu0
      %6221 = vdwg.mxu0
      %6222 = vmatpush.bf16.msra.mxu0 %v6175
      %6223 = vmatpush.bf16.msra.mxu0 %v6173
      %6224 = vmatpush.bf16.msra.mxu0 %v6171
      %6225 = vmatpush.bf16.msra.mxu0 %v6169
      %6226 = vmatpush.bf16.msra.mxu0 %v6167
      %6227 = vmatpush.bf16.msra.mxu0 %v6165
      %6228 = vmatpush.bf16.msra.mxu0 %v6163
      %6229 = vmatpush.bf16.msra.mxu0 %v6161
      %6230 = vmatmul.bf16.gmra.mxu0 %v4134
      %v6231 = vpop.f32.mrf.mxu0
      %v6232 = vadd.f32 %v6219, %v6231
      %v6233 = vpop.f32.mrf.mxu0
      %6234 = vdwg.mxu0
      %6235 = vmatpush.bf16.msra.mxu0 %v6160
      %6236 = vmatpush.bf16.msra.mxu0 %v6158
      %6237 = vmatpush.bf16.msra.mxu0 %v6156
      %6238 = vmatpush.bf16.msra.mxu0 %v6154
      %6239 = vmatpush.bf16.msra.mxu0 %v6152
      %6240 = vmatpush.bf16.msra.mxu0 %v6150
      %6241 = vmatpush.bf16.msra.mxu0 %v6148
      %6242 = vmatpush.bf16.msra.mxu0 %v6146
      %6243 = vmatmul.bf16.gmra.mxu0 %v4133
      %v6244 = vpop.f32.mrf.mxu0
      %v6245 = vadd.f32 %v6046, %v6244
      %v6246 = vpop.f32.mrf.mxu0
      %6247 = vdwg.mxu0
      %6248 = vmatpush.bf16.msra.mxu0 %v6176
      %6249 = vmatpush.bf16.msra.mxu0 %v6174
      %6250 = vmatpush.bf16.msra.mxu0 %v6172
      %6251 = vmatpush.bf16.msra.mxu0 %v6170
      %6252 = vmatpush.bf16.msra.mxu0 %v6168
      %6253 = vmatpush.bf16.msra.mxu0 %v6166
      %6254 = vmatpush.bf16.msra.mxu0 %v6164
      %6255 = vmatpush.bf16.msra.mxu0 %v6162
      %6256 = vmatmul.bf16.gmra.mxu0 %v4134
      %v6257 = vpop.f32.mrf.mxu0
      %v6258 = vadd.f32 %v6245, %v6257
      %v6259 = vpop.f32.mrf.mxu0
      %6260 = vdwg.mxu0
      %v6261 = vxor.u32 %v6232, 2147483648
      %v6262 = vxor.u32 %v6258, 2147483648
      %v6263 = vmul.f32 %v6261, 1.442695
      %v6264 = vpow.pop %v6263
      %v6265 = vmul.f32 %v6262, 1.442695
      %v6266 = vpow.pop %v6265
      %v6267 = vadd.f32 %v6264, 1.0
      %v6268 = vadd.f32 %v6266, 1.0
      %v6269 = vrcp.pop %v6267
      %v6270 = vmul.f32 %v6267, %v6269
      %v6271 = vsub.f32 1.0, %v6270
      %v6272 = vmul.f32 %v6269, %v6271
      %v6273 = vadd.f32 %v6269, %v6272
      %vm6274 = vweird.f32 %v6267
      %vm6275 = vweird.f32 %v6269
      %vm6276 = vmor %vm6274, %vm6275
      %v6277 = vsel %vm6276, %v6269, %v6273
      %v6278 = vand.u32 2147483647, %v6267
      %vm6279 = vcmp.eq.f32.partialorder %v6278, 8.507059e+37
      %v6280 = vand.u32 %v6267, 2147483648
      %v6281 = vor.u32 1.1754944e-38, %v6280
      %v6282 = vsel %vm6279, %v6281, %v6277
      %v6283 = vmul.f32 1.0, %v6282
      %v6284 = vrcp.pop %v6268
      %v6285 = vmul.f32 %v6268, %v6284
      %v6286 = vsub.f32 1.0, %v6285
      %v6287 = vmul.f32 %v6284, %v6286
      %v6288 = vadd.f32 %v6284, %v6287
      %vm6289 = vweird.f32 %v6268
      %vm6290 = vweird.f32 %v6284
      %vm6291 = vmor %vm6289, %vm6290
      %v6292 = vsel %vm6291, %v6284, %v6288
      %v6293 = vand.u32 2147483647, %v6268
      %vm6294 = vcmp.eq.f32.partialorder %v6293, 8.507059e+37
      %v6295 = vand.u32 %v6268, 2147483648
      %v6296 = vor.u32 1.1754944e-38, %v6295
      %v6297 = vsel %vm6294, %v6296, %v6292
      %v6298 = vmul.f32 1.0, %v6297
      %v6299 = vmul.f32 %v5982, %v6283
      %v6300 = vmul.f32 %v6034, %v6298
      %v6302 = vperm.slane %v6043, 0
      %v6303 = vperm.slane %v6043, 1
      %v6338 = vunpack.c.l.b16 %v4295
      %v6339 = vunpack.c.h.b16 %v4295
      %v6340 = vunpack.c.l.b16 %v4296
      %v6341 = vunpack.c.h.b16 %v4296
      %v6342 = vunpack.c.l.b16 %v4297
      %v6343 = vunpack.c.h.b16 %v4297
      %v6344 = vunpack.c.l.b16 %v4298
      %v6345 = vunpack.c.h.b16 %v4298
      %v6346 = vunpack.c.l.b16 %v4299
      %v6347 = vunpack.c.h.b16 %v4299
      %v6348 = vunpack.c.l.b16 %v4300
      %v6349 = vunpack.c.h.b16 %v4300
      %v6350 = vunpack.c.l.b16 %v4301
      %v6351 = vunpack.c.h.b16 %v4301
      %v6352 = vunpack.c.l.b16 %v4302
      %v6353 = vunpack.c.h.b16 %v4302
      %v6354 = vunpack.c.l.b16 %v4303
      %v6355 = vunpack.c.h.b16 %v4303
      %v6356 = vunpack.c.l.b16 %v4304
      %v6357 = vunpack.c.h.b16 %v4304
      %v6358 = vunpack.c.l.b16 %v4305
      %v6359 = vunpack.c.h.b16 %v4305
      %v6360 = vunpack.c.l.b16 %v4306
      %v6361 = vunpack.c.h.b16 %v4306
      %v6362 = vunpack.c.l.b16 %v4307
      %v6363 = vunpack.c.h.b16 %v4307
      %v6364 = vunpack.c.l.b16 %v4308
      %v6365 = vunpack.c.h.b16 %v4308
      %v6366 = vunpack.c.l.b16 %v4309
      %v6367 = vunpack.c.h.b16 %v4309
      %v6368 = vunpack.c.l.b16 %v4310
      %v6369 = vunpack.c.h.b16 %v4310
      %v6370 = vunpack.c.l.b16 %v4311
      %v6371 = vunpack.c.h.b16 %v4311
      %v6372 = vunpack.c.l.b16 %v4312
      %v6373 = vunpack.c.h.b16 %v4312
      %v6374 = vunpack.c.l.b16 %v4313
      %v6375 = vunpack.c.h.b16 %v4313
      %v6376 = vunpack.c.l.b16 %v4314
      %v6377 = vunpack.c.h.b16 %v4314
      %v6378 = vunpack.c.l.b16 %v4315
      %v6379 = vunpack.c.h.b16 %v4315
      %v6380 = vunpack.c.l.b16 %v4316
      %v6381 = vunpack.c.h.b16 %v4316
      %v6382 = vunpack.c.l.b16 %v4317
      %v6383 = vunpack.c.h.b16 %v4317
      %v6384 = vunpack.c.l.b16 %v4318
      %v6385 = vunpack.c.h.b16 %v4318
      %v6386 = vunpack.c.l.b16 %v4319
      %v6387 = vunpack.c.h.b16 %v4319
      %v6388 = vunpack.c.l.b16 %v4320
      %v6389 = vunpack.c.h.b16 %v4320
      %v6390 = vunpack.c.l.b16 %v4321
      %v6391 = vunpack.c.h.b16 %v4321
      %v6392 = vunpack.c.l.b16 %v4322
      %v6393 = vunpack.c.h.b16 %v4322
      %v6394 = vunpack.c.l.b16 %v4323
      %v6395 = vunpack.c.h.b16 %v4323
      %v6396 = vunpack.c.l.b16 %v4324
      %v6397 = vunpack.c.h.b16 %v4324
      %v6398 = vunpack.c.l.b16 %v4325
      %v6399 = vunpack.c.h.b16 %v4325
      %v6400 = vunpack.c.l.b16 %v4326
      %v6401 = vunpack.c.h.b16 %v4326
      %v6402 = vpack.c.b16 %v6340, %v6338
      %v6403 = vpack.c.b16 %v6341, %v6339
      %v6404 = vpack.c.b16 %v6344, %v6342
      %v6405 = vpack.c.b16 %v6345, %v6343
      %v6406 = vpack.c.b16 %v6348, %v6346
      %v6407 = vpack.c.b16 %v6349, %v6347
      %v6408 = vpack.c.b16 %v6352, %v6350
      %v6409 = vpack.c.b16 %v6353, %v6351
      %v6410 = vpack.c.b16 %v6356, %v6354
      %v6411 = vpack.c.b16 %v6357, %v6355
      %v6412 = vpack.c.b16 %v6360, %v6358
      %v6413 = vpack.c.b16 %v6361, %v6359
      %v6414 = vpack.c.b16 %v6364, %v6362
      %v6415 = vpack.c.b16 %v6365, %v6363
      %v6416 = vpack.c.b16 %v6368, %v6366
      %v6417 = vpack.c.b16 %v6369, %v6367
      %v6418 = vpack.c.b16 %v6372, %v6370
      %v6419 = vpack.c.b16 %v6373, %v6371
      %v6420 = vpack.c.b16 %v6376, %v6374
      %v6421 = vpack.c.b16 %v6377, %v6375
      %v6422 = vpack.c.b16 %v6380, %v6378
      %v6423 = vpack.c.b16 %v6381, %v6379
      %v6424 = vpack.c.b16 %v6384, %v6382
      %v6425 = vpack.c.b16 %v6385, %v6383
      %v6426 = vpack.c.b16 %v6388, %v6386
      %v6427 = vpack.c.b16 %v6389, %v6387
      %v6428 = vpack.c.b16 %v6392, %v6390
      %v6429 = vpack.c.b16 %v6393, %v6391
      %v6430 = vpack.c.b16 %v6396, %v6394
      %v6431 = vpack.c.b16 %v6397, %v6395
      %v6432 = vpack.c.b16 %v6400, %v6398
      %v6433 = vpack.c.b16 %v6401, %v6399
      %6466 = vmatpush.bf16.msra.mxu0 %v6416
      %6467 = vmatpush.bf16.msra.mxu0 %v6414
      %6468 = vmatpush.bf16.msra.mxu0 %v6412
      %6469 = vmatpush.bf16.msra.mxu0 %v6410
      %6470 = vmatpush.bf16.msra.mxu0 %v6408
      %6471 = vmatpush.bf16.msra.mxu0 %v6406
      %6472 = vmatpush.bf16.msra.mxu0 %v6404
      %6473 = vmatpush.bf16.msra.mxu0 %v6402
      %6474 = vmatmul.bf16.gmra.mxu0 %v4133
      %v6475 = vpop.f32.mrf.mxu0
      %v6476 = vadd.f32 %v6302, %v6475
      %v6477 = vpop.f32.mrf.mxu0
      %6478 = vdwg.mxu0
      %6479 = vmatpush.bf16.msra.mxu0 %v6432
      %6480 = vmatpush.bf16.msra.mxu0 %v6430
      %6481 = vmatpush.bf16.msra.mxu0 %v6428
      %6482 = vmatpush.bf16.msra.mxu0 %v6426
      %6483 = vmatpush.bf16.msra.mxu0 %v6424
      %6484 = vmatpush.bf16.msra.mxu0 %v6422
      %6485 = vmatpush.bf16.msra.mxu0 %v6420
      %6486 = vmatpush.bf16.msra.mxu0 %v6418
      %6487 = vmatmul.bf16.gmra.mxu0 %v4134
      %v6488 = vpop.f32.mrf.mxu0
      %v6489 = vadd.f32 %v6476, %v6488
      %v6490 = vpop.f32.mrf.mxu0
      %6491 = vdwg.mxu0
      %6492 = vmatpush.bf16.msra.mxu0 %v6417
      %6493 = vmatpush.bf16.msra.mxu0 %v6415
      %6494 = vmatpush.bf16.msra.mxu0 %v6413
      %6495 = vmatpush.bf16.msra.mxu0 %v6411
      %6496 = vmatpush.bf16.msra.mxu0 %v6409
      %6497 = vmatpush.bf16.msra.mxu0 %v6407
      %6498 = vmatpush.bf16.msra.mxu0 %v6405
      %6499 = vmatpush.bf16.msra.mxu0 %v6403
      %6500 = vmatmul.bf16.gmra.mxu0 %v4133
      %v6501 = vpop.f32.mrf.mxu0
      %v6502 = vadd.f32 %v6303, %v6501
      %v6503 = vpop.f32.mrf.mxu0
      %6504 = vdwg.mxu0
      %6505 = vmatpush.bf16.msra.mxu0 %v6433
      %6506 = vmatpush.bf16.msra.mxu0 %v6431
      %6507 = vmatpush.bf16.msra.mxu0 %v6429
      %6508 = vmatpush.bf16.msra.mxu0 %v6427
      %6509 = vmatpush.bf16.msra.mxu0 %v6425
      %6510 = vmatpush.bf16.msra.mxu0 %v6423
      %6511 = vmatpush.bf16.msra.mxu0 %v6421
      %6512 = vmatpush.bf16.msra.mxu0 %v6419
      %6513 = vmatmul.bf16.gmra.mxu0 %v4134
      %v6514 = vpop.f32.mrf.mxu0
      %v6515 = vadd.f32 %v6502, %v6514
      %v6516 = vpop.f32.mrf.mxu0
      %6517 = vdwg.mxu0
      %v6518 = vadd.f32 %v6299, %v6489
      %v6519 = vadd.f32 %v6300, %v6515
      %v6520 = vpack.c.bf16 %v6518, %v6518
      %v6521 = vpack.c.bf16 %v6519, %v6519
      %v6522 = vld [vmem:[#allocation40] sm:$0xf]
      %v6523 = vld [vmem:[#allocation40 + $0x4] sm:$0xf]
      %v6524 = vld [vmem:[#allocation40 + $0x8] sm:$0xf]
      %v6525 = vld [vmem:[#allocation40 + $0xc] sm:$0xf]
      %v6526 = vld [vmem:[#allocation40 + $0x10] sm:$0xf]
      %v6527 = vld [vmem:[#allocation40 + $0x14] sm:$0xf]
      %v6528 = vld [vmem:[#allocation40 + $0x18] sm:$0xf]
      %v6529 = vld [vmem:[#allocation40 + $0x1c] sm:$0xf]
      %v6530 = vld [vmem:[#allocation40 + $0x20] sm:$0xf]
      %v6531 = vld [vmem:[#allocation40 + $0x24] sm:$0xf]
      %v6532 = vld [vmem:[#allocation40 + $0x28] sm:$0xf]
      %v6533 = vld [vmem:[#allocation40 + $0x2c] sm:$0xf]
      %v6534 = vld [vmem:[#allocation40 + $0x30] sm:$0xf]
      %v6535 = vld [vmem:[#allocation40 + $0x34] sm:$0xf]
      %v6536 = vld [vmem:[#allocation40 + $0x38] sm:$0xf]
      %v6537 = vld [vmem:[#allocation40 + $0x3c] sm:$0xf]
      %v6538 = vld [vmem:[#allocation40 + $0x40] sm:$0xf]
      %v6539 = vld [vmem:[#allocation40 + $0x44] sm:$0xf]
      %v6540 = vld [vmem:[#allocation40 + $0x48] sm:$0xf]
      %v6541 = vld [vmem:[#allocation40 + $0x4c] sm:$0xf]
      %v6542 = vld [vmem:[#allocation40 + $0x50] sm:$0xf]
      %v6543 = vld [vmem:[#allocation40 + $0x54] sm:$0xf]
      %v6544 = vld [vmem:[#allocation40 + $0x58] sm:$0xf]
      %v6545 = vld [vmem:[#allocation40 + $0x5c] sm:$0xf]
      %v6546 = vld [vmem:[#allocation40 + $0x60] sm:$0xf]
      %v6547 = vld [vmem:[#allocation40 + $0x64] sm:$0xf]
      %v6548 = vld [vmem:[#allocation40 + $0x68] sm:$0xf]
      %v6549 = vld [vmem:[#allocation40 + $0x6c] sm:$0xf]
      %v6550 = vld [vmem:[#allocation40 + $0x70] sm:$0xf]
      %v6551 = vld [vmem:[#allocation40 + $0x74] sm:$0xf]
      %v6552 = vld [vmem:[#allocation40 + $0x78] sm:$0xf]
      %v6553 = vld [vmem:[#allocation40 + $0x7c] sm:$0xf]
      %v6554 = vld [vmem:[%s53] sm:$0x1]
      %v6556 = vperm.slane %v6554, 0
      %v6590 = vunpack.c.l.b16 %v6522
      %v6591 = vunpack.c.l.b16 %v6523
      %v6592 = vunpack.c.l.b16 %v6524
      %v6593 = vunpack.c.l.b16 %v6525
      %v6594 = vunpack.c.l.b16 %v6526
      %v6595 = vunpack.c.l.b16 %v6527
      %v6596 = vunpack.c.l.b16 %v6528
      %v6597 = vunpack.c.l.b16 %v6529
      %v6598 = vunpack.c.l.b16 %v6530
      %v6599 = vunpack.c.l.b16 %v6531
      %v6600 = vunpack.c.l.b16 %v6532
      %v6601 = vunpack.c.l.b16 %v6533
      %v6602 = vunpack.c.l.b16 %v6534
      %v6603 = vunpack.c.l.b16 %v6535
      %v6604 = vunpack.c.l.b16 %v6536
      %v6605 = vunpack.c.l.b16 %v6537
      %v6606 = vunpack.c.l.b16 %v6538
      %v6607 = vunpack.c.l.b16 %v6539
      %v6608 = vunpack.c.l.b16 %v6540
      %v6609 = vunpack.c.l.b16 %v6541
      %v6610 = vunpack.c.l.b16 %v6542
      %v6611 = vunpack.c.l.b16 %v6543
      %v6612 = vunpack.c.l.b16 %v6544
      %v6613 = vunpack.c.l.b16 %v6545
      %v6614 = vunpack.c.l.b16 %v6546
      %v6615 = vunpack.c.l.b16 %v6547
      %v6616 = vunpack.c.l.b16 %v6548
      %v6617 = vunpack.c.l.b16 %v6549
      %v6618 = vunpack.c.l.b16 %v6550
      %v6619 = vunpack.c.l.b16 %v6551
      %v6620 = vunpack.c.l.b16 %v6552
      %v6621 = vunpack.c.l.b16 %v6553
      %v6622 = vpack.c.b16 %v6591, %v6590
      %v6623 = vpack.c.b16 %v6593, %v6592
      %v6624 = vpack.c.b16 %v6595, %v6594
      %v6625 = vpack.c.b16 %v6597, %v6596
      %v6626 = vpack.c.b16 %v6599, %v6598
      %v6627 = vpack.c.b16 %v6601, %v6600
      %v6628 = vpack.c.b16 %v6603, %v6602
      %v6629 = vpack.c.b16 %v6605, %v6604
      %v6630 = vpack.c.b16 %v6607, %v6606
      %v6631 = vpack.c.b16 %v6609, %v6608
      %v6632 = vpack.c.b16 %v6611, %v6610
      %v6633 = vpack.c.b16 %v6613, %v6612
      %v6634 = vpack.c.b16 %v6615, %v6614
      %v6635 = vpack.c.b16 %v6617, %v6616
      %v6636 = vpack.c.b16 %v6619, %v6618
      %v6637 = vpack.c.b16 %v6621, %v6620
      %6654 = vmatpush.bf16.msra.mxu0 %v6629
      %6655 = vmatpush.bf16.msra.mxu0 %v6628
      %6656 = vmatpush.bf16.msra.mxu0 %v6627
      %6657 = vmatpush.bf16.msra.mxu0 %v6626
      %6658 = vmatpush.bf16.msra.mxu0 %v6625
      %6659 = vmatpush.bf16.msra.mxu0 %v6624
      %6660 = vmatpush.bf16.msra.mxu0 %v6623
      %6661 = vmatpush.bf16.msra.mxu0 %v6622
      %6662 = vmatmul.bf16.gmra.mxu0 %v6520
      %v6663 = vpop.f32.mrf.mxu0
      %v6664 = vadd.f32 %v6556, %v6663
      %v6665 = vpop.f32.mrf.mxu0
      %6666 = vdwg.mxu0
      %6667 = vmatpush.bf16.msra.mxu0 %v6637
      %6668 = vmatpush.bf16.msra.mxu0 %v6636
      %6669 = vmatpush.bf16.msra.mxu0 %v6635
      %6670 = vmatpush.bf16.msra.mxu0 %v6634
      %6671 = vmatpush.bf16.msra.mxu0 %v6633
      %6672 = vmatpush.bf16.msra.mxu0 %v6632
      %6673 = vmatpush.bf16.msra.mxu0 %v6631
      %6674 = vmatpush.bf16.msra.mxu0 %v6630
      %6675 = vmatmul.bf16.gmra.mxu0 %v6521
      %v6676 = vpop.f32.mrf.mxu0
      %v6677 = vadd.f32 %v6664, %v6676
      %v6678 = vpop.f32.mrf.mxu0
      %6679 = vdwg.mxu0
      %s6680 = scalar_lea.vmem %s71, %s4457
      %v6681 = vld [vmem:[%s6680] sm:$0x1]
      %s6682 = scalar_lea.vmem [#allocation51], %s4457
      %v6683 = vld [vmem:[%s6682] sm:$0x1]
      %v6684 = vperm.slane %v6681, 0
      %v6717 = vunpack.c.l.b16 %v4327
      %v6718 = vunpack.c.l.b16 %v4328
      %v6719 = vunpack.c.l.b16 %v4329
      %v6720 = vunpack.c.l.b16 %v4330
      %v6721 = vunpack.c.l.b16 %v4331
      %v6722 = vunpack.c.l.b16 %v4332
      %v6723 = vunpack.c.l.b16 %v4333
      %v6724 = vunpack.c.l.b16 %v4334
      %v6725 = vunpack.c.l.b16 %v4335
      %v6726 = vunpack.c.l.b16 %v4336
      %v6727 = vunpack.c.l.b16 %v4337
      %v6728 = vunpack.c.l.b16 %v4338
      %v6729 = vunpack.c.l.b16 %v4339
      %v6730 = vunpack.c.l.b16 %v4340
      %v6731 = vunpack.c.l.b16 %v4341
      %v6732 = vunpack.c.l.b16 %v4342
      %v6733 = vunpack.c.l.b16 %v4343
      %v6734 = vunpack.c.l.b16 %v4344
      %v6735 = vunpack.c.l.b16 %v4345
      %v6736 = vunpack.c.l.b16 %v4346
      %v6737 = vunpack.c.l.b16 %v4347
      %v6738 = vunpack.c.l.b16 %v4348
      %v6739 = vunpack.c.l.b16 %v4349
      %v6740 = vunpack.c.l.b16 %v4350
      %v6741 = vunpack.c.l.b16 %v4351
      %v6742 = vunpack.c.l.b16 %v4352
      %v6743 = vunpack.c.l.b16 %v4353
      %v6744 = vunpack.c.l.b16 %v4354
      %v6745 = vunpack.c.l.b16 %v4355
      %v6746 = vunpack.c.l.b16 %v4356
      %v6747 = vunpack.c.l.b16 %v4357
      %v6748 = vunpack.c.l.b16 %v4358
      %v6749 = vpack.c.b16 %v6718, %v6717
      %v6750 = vpack.c.b16 %v6720, %v6719
      %v6751 = vpack.c.b16 %v6722, %v6721
      %v6752 = vpack.c.b16 %v6724, %v6723
      %v6753 = vpack.c.b16 %v6726, %v6725
      %v6754 = vpack.c.b16 %v6728, %v6727
      %v6755 = vpack.c.b16 %v6730, %v6729
      %v6756 = vpack.c.b16 %v6732, %v6731
      %v6757 = vpack.c.b16 %v6734, %v6733
      %v6758 = vpack.c.b16 %v6736, %v6735
      %v6759 = vpack.c.b16 %v6738, %v6737
      %v6760 = vpack.c.b16 %v6740, %v6739
      %v6761 = vpack.c.b16 %v6742, %v6741
      %v6762 = vpack.c.b16 %v6744, %v6743
      %v6763 = vpack.c.b16 %v6746, %v6745
      %v6764 = vpack.c.b16 %v6748, %v6747
      %6781 = vmatpush.bf16.msra.mxu0 %v6756
      %6782 = vmatpush.bf16.msra.mxu0 %v6755
      %6783 = vmatpush.bf16.msra.mxu0 %v6754
      %6784 = vmatpush.bf16.msra.mxu0 %v6753
      %6785 = vmatpush.bf16.msra.mxu0 %v6752
      %6786 = vmatpush.bf16.msra.mxu0 %v6751
      %6787 = vmatpush.bf16.msra.mxu0 %v6750
      %6788 = vmatpush.bf16.msra.mxu0 %v6749
      %6789 = vmatmul.bf16.gmra.mxu0 %v4133
      %v6790 = vpop.f32.mrf.mxu0
      %v6791 = vadd.f32 %v6684, %v6790
      %v6792 = vpop.f32.mrf.mxu0
      %6793 = vdwg.mxu0
      %6794 = vmatpush.bf16.msra.mxu0 %v6764
      %6795 = vmatpush.bf16.msra.mxu0 %v6763
      %6796 = vmatpush.bf16.msra.mxu0 %v6762
      %6797 = vmatpush.bf16.msra.mxu0 %v6761
      %6798 = vmatpush.bf16.msra.mxu0 %v6760
      %6799 = vmatpush.bf16.msra.mxu0 %v6759
      %6800 = vmatpush.bf16.msra.mxu0 %v6758
      %6801 = vmatpush.bf16.msra.mxu0 %v6757
      %6802 = vmatmul.bf16.gmra.mxu0 %v4134
      %v6803 = vpop.f32.mrf.mxu0
      %v6804 = vadd.f32 %v6791, %v6803
      %v6805 = vpop.f32.mrf.mxu0
      %6806 = vdwg.mxu0
      %v6807 = vxor.u32 %v6804, 2147483648
      %v6808 = vmul.f32 %v6807, 1.442695
      %v6809 = vpow.pop %v6808
      %v6810 = vadd.f32 %v6809, 1.0
      %v6811 = vrcp.pop %v6810
      %v6812 = vmul.f32 %v6810, %v6811
      %v6813 = vsub.f32 1.0, %v6812
      %v6814 = vmul.f32 %v6811, %v6813
      %v6815 = vadd.f32 %v6811, %v6814
      %vm6816 = vweird.f32 %v6810
      %vm6817 = vweird.f32 %v6811
      %vm6818 = vmor %vm6816, %vm6817
      %v6819 = vsel %vm6818, %v6811, %v6815
      %v6820 = vand.u32 2147483647, %v6810
      %vm6821 = vcmp.eq.f32.partialorder %v6820, 8.507059e+37
      %v6822 = vand.u32 %v6810, 2147483648
      %v6823 = vor.u32 1.1754944e-38, %v6822
      %v6824 = vsel %vm6821, %v6823, %v6819
      %v6825 = vmul.f32 1.0, %v6824
      %v6826 = vmul.f32 %v6677, %v6825
      %v6827 = vperm.slane %v6683, 0
      %v6860 = vunpack.c.l.b16 %v4359
      %v6861 = vunpack.c.l.b16 %v4360
      %v6862 = vunpack.c.l.b16 %v4361
      %v6863 = vunpack.c.l.b16 %v4362
      %v6864 = vunpack.c.l.b16 %v4363
      %v6865 = vunpack.c.l.b16 %v4364
      %v6866 = vunpack.c.l.b16 %v4365
      %v6867 = vunpack.c.l.b16 %v4366
      %v6868 = vunpack.c.l.b16 %v4367
      %v6869 = vunpack.c.l.b16 %v4368
      %v6870 = vunpack.c.l.b16 %v4369
      %v6871 = vunpack.c.l.b16 %v4370
      %v6872 = vunpack.c.l.b16 %v4371
      %v6873 = vunpack.c.l.b16 %v4372
      %v6874 = vunpack.c.l.b16 %v4373
      %v6875 = vunpack.c.l.b16 %v4374
      %v6876 = vunpack.c.l.b16 %v4375
      %v6877 = vunpack.c.l.b16 %v4376
      %v6878 = vunpack.c.l.b16 %v4377
      %v6879 = vunpack.c.l.b16 %v4378
      %v6880 = vunpack.c.l.b16 %v4379
      %v6881 = vunpack.c.l.b16 %v4380
      %v6882 = vunpack.c.l.b16 %v4381
      %v6883 = vunpack.c.l.b16 %v4382
      %v6884 = vunpack.c.l.b16 %v4383
      %v6885 = vunpack.c.l.b16 %v4384
      %v6886 = vunpack.c.l.b16 %v4385
      %v6887 = vunpack.c.l.b16 %v4386
      %v6888 = vunpack.c.l.b16 %v4387
      %v6889 = vunpack.c.l.b16 %v4388
      %v6890 = vunpack.c.l.b16 %v4389
      %v6891 = vunpack.c.l.b16 %v4390
      %v6892 = vpack.c.b16 %v6861, %v6860
      %v6893 = vpack.c.b16 %v6863, %v6862
      %v6894 = vpack.c.b16 %v6865, %v6864
      %v6895 = vpack.c.b16 %v6867, %v6866
      %v6896 = vpack.c.b16 %v6869, %v6868
      %v6897 = vpack.c.b16 %v6871, %v6870
      %v6898 = vpack.c.b16 %v6873, %v6872
      %v6899 = vpack.c.b16 %v6875, %v6874
      %v6900 = vpack.c.b16 %v6877, %v6876
      %v6901 = vpack.c.b16 %v6879, %v6878
      %v6902 = vpack.c.b16 %v6881, %v6880
      %v6903 = vpack.c.b16 %v6883, %v6882
      %v6904 = vpack.c.b16 %v6885, %v6884
      %v6905 = vpack.c.b16 %v6887, %v6886
      %v6906 = vpack.c.b16 %v6889, %v6888
      %v6907 = vpack.c.b16 %v6891, %v6890
      %6924 = vmatpush.bf16.msra.mxu0 %v6899
      %6925 = vmatpush.bf16.msra.mxu0 %v6898
      %6926 = vmatpush.bf16.msra.mxu0 %v6897
      %6927 = vmatpush.bf16.msra.mxu0 %v6896
      %6928 = vmatpush.bf16.msra.mxu0 %v6895
      %6929 = vmatpush.bf16.msra.mxu0 %v6894
      %6930 = vmatpush.bf16.msra.mxu0 %v6893
      %6931 = vmatpush.bf16.msra.mxu0 %v6892
      %6932 = vmatmul.bf16.gmra.mxu0 %v4133
      %v6933 = vpop.f32.mrf.mxu0
      %v6934 = vadd.f32 %v6827, %v6933
      %v6935 = vpop.f32.mrf.mxu0
      %6936 = vdwg.mxu0
      %6937 = vmatpush.bf16.msra.mxu0 %v6907
      %6938 = vmatpush.bf16.msra.mxu0 %v6906
      %6939 = vmatpush.bf16.msra.mxu0 %v6905
      %6940 = vmatpush.bf16.msra.mxu0 %v6904
      %6941 = vmatpush.bf16.msra.mxu0 %v6903
      %6942 = vmatpush.bf16.msra.mxu0 %v6902
      %6943 = vmatpush.bf16.msra.mxu0 %v6901
      %6944 = vmatpush.bf16.msra.mxu0 %v6900
      %6945 = vmatmul.bf16.gmra.mxu0 %v4134
      %v6946 = vpop.f32.mrf.mxu0
      %v6947 = vadd.f32 %v6934, %v6946
      %v6948 = vpop.f32.mrf.mxu0
      %6949 = vdwg.mxu0
      %v6950 = vadd.f32 %v6826, %v6947
      %v6951 = vpack.c.bf16 %v6950, %v6950
      %v6952 = vld [vmem:[%s59] sm:$0xf]
      %v6953 = vld [vmem:[%s59 + $0x4] sm:$0xf]
      %v6954 = vld [vmem:[%s59 + $0x8] sm:$0xf]
      %v6955 = vld [vmem:[%s59 + $0xc] sm:$0xf]
      %v6956 = vld [vmem:[%s59 + $0x10] sm:$0xf]
      %v6957 = vld [vmem:[%s59 + $0x14] sm:$0xf]
      %v6958 = vld [vmem:[%s59 + $0x18] sm:$0xf]
      %v6959 = vld [vmem:[%s59 + $0x1c] sm:$0xf]
      %v6960 = vld [vmem:[%s59 + $0x20] sm:$0xf]
      %v6961 = vld [vmem:[%s59 + $0x24] sm:$0xf]
      %v6962 = vld [vmem:[%s59 + $0x28] sm:$0xf]
      %v6963 = vld [vmem:[%s59 + $0x2c] sm:$0xf]
      %v6964 = vld [vmem:[%s59 + $0x30] sm:$0xf]
      %v6965 = vld [vmem:[%s59 + $0x34] sm:$0xf]
      %v6966 = vld [vmem:[%s59 + $0x38] sm:$0xf]
      %v6967 = vld [vmem:[%s59 + $0x3c] sm:$0xf]
      %v6968 = vld [vmem:[#allocation45] sm:$0x1]
      %v6970 = vperm.slane %v6968, 0
      %v6988 = vunpack.c.l.b16 %v6952
      %v6989 = vunpack.c.l.b16 %v6953
      %v6990 = vunpack.c.l.b16 %v6954
      %v6991 = vunpack.c.l.b16 %v6955
      %v6992 = vunpack.c.l.b16 %v6956
      %v6993 = vunpack.c.l.b16 %v6957
      %v6994 = vunpack.c.l.b16 %v6958
      %v6995 = vunpack.c.l.b16 %v6959
      %v6996 = vunpack.c.l.b16 %v6960
      %v6997 = vunpack.c.l.b16 %v6961
      %v6998 = vunpack.c.l.b16 %v6962
      %v6999 = vunpack.c.l.b16 %v6963
      %v7000 = vunpack.c.l.b16 %v6964
      %v7001 = vunpack.c.l.b16 %v6965
      %v7002 = vunpack.c.l.b16 %v6966
      %v7003 = vunpack.c.l.b16 %v6967
      %v7004 = vpack.c.b16 %v6989, %v6988
      %v7005 = vpack.c.b16 %v6991, %v6990
      %v7006 = vpack.c.b16 %v6993, %v6992
      %v7007 = vpack.c.b16 %v6995, %v6994
      %v7008 = vpack.c.b16 %v6997, %v6996
      %v7009 = vpack.c.b16 %v6999, %v6998
      %v7010 = vpack.c.b16 %v7001, %v7000
      %v7011 = vpack.c.b16 %v7003, %v7002
      %7020 = vmatpush.bf16.msra.mxu0 %v7011
      %7021 = vmatpush.bf16.msra.mxu0 %v7010
      %7022 = vmatpush.bf16.msra.mxu0 %v7009
      %7023 = vmatpush.bf16.msra.mxu0 %v7008
      %7024 = vmatpush.bf16.msra.mxu0 %v7007
      %7025 = vmatpush.bf16.msra.mxu0 %v7006
      %7026 = vmatpush.bf16.msra.mxu0 %v7005
      %7027 = vmatpush.bf16.msra.mxu0 %v7004
      %7028 = vmatmul.bf16.gmra.mxu0 %v6951
      %v7029 = vpop.f32.mrf.mxu0
      %v7030 = vadd.f32 %v6970, %v7029
      %v7031 = vpop.f32.mrf.mxu0
      %7032 = vdwg.mxu0
      %s7033 = scalar_lea.vmem %s73, %s4457
      %v7034 = vld [vmem:[%s7033] sm:$0x1]
      %s7035 = scalar_lea.vmem [#allocation52], %s4457
      %v7036 = vld [vmem:[%s7035] sm:$0x1]
      %v7037 = vperm.slane %v7034, 0
      %v7070 = vunpack.c.l.b16 %v4391
      %v7071 = vunpack.c.l.b16 %v4392
      %v7072 = vunpack.c.l.b16 %v4393
      %v7073 = vunpack.c.l.b16 %v4394
      %v7074 = vunpack.c.l.b16 %v4395
      %v7075 = vunpack.c.l.b16 %v4396
      %v7076 = vunpack.c.l.b16 %v4397
      %v7077 = vunpack.c.l.b16 %v4398
      %v7078 = vunpack.c.l.b16 %v4399
      %v7079 = vunpack.c.l.b16 %v4400
      %v7080 = vunpack.c.l.b16 %v4401
      %v7081 = vunpack.c.l.b16 %v4402
      %v7082 = vunpack.c.l.b16 %v4403
      %v7083 = vunpack.c.l.b16 %v4404
      %v7084 = vunpack.c.l.b16 %v4405
      %v7085 = vunpack.c.l.b16 %v4406
      %v7086 = vunpack.c.l.b16 %v4407
      %v7087 = vunpack.c.l.b16 %v4408
      %v7088 = vunpack.c.l.b16 %v4409
      %v7089 = vunpack.c.l.b16 %v4410
      %v7090 = vunpack.c.l.b16 %v4411
      %v7091 = vunpack.c.l.b16 %v4412
      %v7092 = vunpack.c.l.b16 %v4413
      %v7093 = vunpack.c.l.b16 %v4414
      %v7094 = vunpack.c.l.b16 %v4415
      %v7095 = vunpack.c.l.b16 %v4416
      %v7096 = vunpack.c.l.b16 %v4417
      %v7097 = vunpack.c.l.b16 %v4418
      %v7098 = vunpack.c.l.b16 %v4419
      %v7099 = vunpack.c.l.b16 %v4420
      %v7100 = vunpack.c.l.b16 %v4421
      %v7101 = vunpack.c.l.b16 %v4422
      %v7102 = vpack.c.b16 %v7071, %v7070
      %v7103 = vpack.c.b16 %v7073, %v7072
      %v7104 = vpack.c.b16 %v7075, %v7074
      %v7105 = vpack.c.b16 %v7077, %v7076
      %v7106 = vpack.c.b16 %v7079, %v7078
      %v7107 = vpack.c.b16 %v7081, %v7080
      %v7108 = vpack.c.b16 %v7083, %v7082
      %v7109 = vpack.c.b16 %v7085, %v7084
      %v7110 = vpack.c.b16 %v7087, %v7086
      %v7111 = vpack.c.b16 %v7089, %v7088
      %v7112 = vpack.c.b16 %v7091, %v7090
      %v7113 = vpack.c.b16 %v7093, %v7092
      %v7114 = vpack.c.b16 %v7095, %v7094
      %v7115 = vpack.c.b16 %v7097, %v7096
      %v7116 = vpack.c.b16 %v7099, %v7098
      %v7117 = vpack.c.b16 %v7101, %v7100
      %7134 = vmatpush.bf16.msra.mxu0 %v7109
      %7135 = vmatpush.bf16.msra.mxu0 %v7108
      %7136 = vmatpush.bf16.msra.mxu0 %v7107
      %7137 = vmatpush.bf16.msra.mxu0 %v7106
      %7138 = vmatpush.bf16.msra.mxu0 %v7105
      %7139 = vmatpush.bf16.msra.mxu0 %v7104
      %7140 = vmatpush.bf16.msra.mxu0 %v7103
      %7141 = vmatpush.bf16.msra.mxu0 %v7102
      %7142 = vmatmul.bf16.gmra.mxu0 %v4133
      %v7143 = vpop.f32.mrf.mxu0
      %v7144 = vadd.f32 %v7037, %v7143
      %v7145 = vpop.f32.mrf.mxu0
      %7146 = vdwg.mxu0
      %7147 = vmatpush.bf16.msra.mxu0 %v7117
      %7148 = vmatpush.bf16.msra.mxu0 %v7116
      %7149 = vmatpush.bf16.msra.mxu0 %v7115
      %7150 = vmatpush.bf16.msra.mxu0 %v7114
      %7151 = vmatpush.bf16.msra.mxu0 %v7113
      %7152 = vmatpush.bf16.msra.mxu0 %v7112
      %7153 = vmatpush.bf16.msra.mxu0 %v7111
      %7154 = vmatpush.bf16.msra.mxu0 %v7110
      %7155 = vmatmul.bf16.gmra.mxu0 %v4134
      %v7156 = vpop.f32.mrf.mxu0
      %v7157 = vadd.f32 %v7144, %v7156
      %v7158 = vpop.f32.mrf.mxu0
      %7159 = vdwg.mxu0
      %v7160 = vxor.u32 %v7157, 2147483648
      %v7161 = vmul.f32 %v7160, 1.442695
      %v7162 = vpow.pop %v7161
      %v7163 = vadd.f32 %v7162, 1.0
      %v7164 = vrcp.pop %v7163
      %v7165 = vmul.f32 %v7163, %v7164
      %v7166 = vsub.f32 1.0, %v7165
      %v7167 = vmul.f32 %v7164, %v7166
      %v7168 = vadd.f32 %v7164, %v7167
      %vm7169 = vweird.f32 %v7163
      %vm7170 = vweird.f32 %v7164
      %vm7171 = vmor %vm7169, %vm7170
      %v7172 = vsel %vm7171, %v7164, %v7168
      %v7173 = vand.u32 2147483647, %v7163
      %vm7174 = vcmp.eq.f32.partialorder %v7173, 8.507059e+37
      %v7175 = vand.u32 %v7163, 2147483648
      %v7176 = vor.u32 1.1754944e-38, %v7175
      %v7177 = vsel %vm7174, %v7176, %v7172
      %v7178 = vmul.f32 1.0, %v7177
      %v7179 = vmul.f32 %v7030, %v7178
      %v7180 = vperm.slane %v7036, 0
      %v7213 = vunpack.c.l.b16 %v4423
      %v7214 = vunpack.c.l.b16 %v4424
      %v7215 = vunpack.c.l.b16 %v4425
      %v7216 = vunpack.c.l.b16 %v4426
      %v7217 = vunpack.c.l.b16 %v4427
      %v7218 = vunpack.c.l.b16 %v4428
      %v7219 = vunpack.c.l.b16 %v4429
      %v7220 = vunpack.c.l.b16 %v4430
      %v7221 = vunpack.c.l.b16 %v4431
      %v7222 = vunpack.c.l.b16 %v4432
      %v7223 = vunpack.c.l.b16 %v4433
      %v7224 = vunpack.c.l.b16 %v4434
      %v7225 = vunpack.c.l.b16 %v4435
      %v7226 = vunpack.c.l.b16 %v4436
      %v7227 = vunpack.c.l.b16 %v4437
      %v7228 = vunpack.c.l.b16 %v4438
      %v7229 = vunpack.c.l.b16 %v4439
      %v7230 = vunpack.c.l.b16 %v4440
      %v7231 = vunpack.c.l.b16 %v4441
      %v7232 = vunpack.c.l.b16 %v4442
      %v7233 = vunpack.c.l.b16 %v4443
      %v7234 = vunpack.c.l.b16 %v4444
      %v7235 = vunpack.c.l.b16 %v4445
      %v7236 = vunpack.c.l.b16 %v4446
      %v7237 = vunpack.c.l.b16 %v4447
      %v7238 = vunpack.c.l.b16 %v4448
      %v7239 = vunpack.c.l.b16 %v4449
      %v7240 = vunpack.c.l.b16 %v4450
      %v7241 = vunpack.c.l.b16 %v4451
      %v7242 = vunpack.c.l.b16 %v4452
      %v7243 = vunpack.c.l.b16 %v4453
      %v7244 = vunpack.c.l.b16 %v4454
      %v7245 = vpack.c.b16 %v7214, %v7213
      %v7246 = vpack.c.b16 %v7216, %v7215
      %v7247 = vpack.c.b16 %v7218, %v7217
      %v7248 = vpack.c.b16 %v7220, %v7219
      %v7249 = vpack.c.b16 %v7222, %v7221
      %v7250 = vpack.c.b16 %v7224, %v7223
      %v7251 = vpack.c.b16 %v7226, %v7225
      %v7252 = vpack.c.b16 %v7228, %v7227
      %v7253 = vpack.c.b16 %v7230, %v7229
      %v7254 = vpack.c.b16 %v7232, %v7231
      %v7255 = vpack.c.b16 %v7234, %v7233
      %v7256 = vpack.c.b16 %v7236, %v7235
      %v7257 = vpack.c.b16 %v7238, %v7237
      %v7258 = vpack.c.b16 %v7240, %v7239
      %v7259 = vpack.c.b16 %v7242, %v7241
      %v7260 = vpack.c.b16 %v7244, %v7243
      %7277 = vmatpush.bf16.msra.mxu0 %v7252
      %7278 = vmatpush.bf16.msra.mxu0 %v7251
      %7279 = vmatpush.bf16.msra.mxu0 %v7250
      %7280 = vmatpush.bf16.msra.mxu0 %v7249
      %7281 = vmatpush.bf16.msra.mxu0 %v7248
      %7282 = vmatpush.bf16.msra.mxu0 %v7247
      %7283 = vmatpush.bf16.msra.mxu0 %v7246
      %7284 = vmatpush.bf16.msra.mxu0 %v7245
      %7285 = vmatmul.bf16.gmra.mxu0 %v4133
      %v7286 = vpop.f32.mrf.mxu0
      %v7287 = vadd.f32 %v7180, %v7286
      %v7288 = vpop.f32.mrf.mxu0
      %7289 = vdwg.mxu0
      %7290 = vmatpush.bf16.msra.mxu0 %v7260
      %7291 = vmatpush.bf16.msra.mxu0 %v7259
      %7292 = vmatpush.bf16.msra.mxu0 %v7258
      %7293 = vmatpush.bf16.msra.mxu0 %v7257
      %7294 = vmatpush.bf16.msra.mxu0 %v7256
      %7295 = vmatpush.bf16.msra.mxu0 %v7255
      %7296 = vmatpush.bf16.msra.mxu0 %v7254
      %7297 = vmatpush.bf16.msra.mxu0 %v7253
      %7298 = vmatmul.bf16.gmra.mxu0 %v4134
      %v7299 = vpop.f32.mrf.mxu0
      %v7300 = vadd.f32 %v7287, %v7299
      %v7301 = vpop.f32.mrf.mxu0
      %7302 = vdwg.mxu0
      %v7303 = vadd.f32 %v7179, %v7300
      %s7304 = sld [smem:[#allocation2 + %s4457]]
      %s7305 = sshra.s32 %s4457, 7
      %s7306 = sand.u32 %s4457, 127
      %s7307 = sadd.s32 %s7305, 1
      %s7308 = smul.u32 %s7307, 128
      %s7309 = sshra.s32 %s4457, 7
      %s7310 = sand.u32 %s4457, 127
      %s7311 = sadd.s32 %s7308, %s7310
      %s7312 = sld [smem:[#allocation2 + %s7311]]
      %s7313 = sadd.s32 %s7305, 2
      %s7314 = smul.u32 %s7313, 128
      %s7315 = sadd.s32 %s7314, %s7310
      %s7316 = sld [smem:[#allocation2 + %s7315]]
      %v7317 = vstv %s7304
      %v7318 = vmul.f32 %v7317, %v7303
      %v7319 = vsub.f32 %v4462, %v7318
      %v7320 = vstv %s7312
      %v7321 = vmul.f32 %v7319, %v7320
      %v7322 = vstv %s7316
      %v7323 = vmul.f32 %v7322, %v4455
      %v7324 = vadd.f32 %v7321, %v7323
    $region302: #{tpu_custom_call.1} parent=1 // loop_footer
      %s4461 = sadd.s32 1, %s4457
    $region303: #{tpu_custom_call.1} parent=1 // loop_footer_branch
      %4456 = sbr.rel target = $region299
    $region304: #{tpu_custom_call.1} parent=1 // loop_exit
      _
    %vm7325 = vcmask 195584
    %7326 = vst.msk [vmem:[#allocation55] sm:$0xff] %vm7325, %v4462
    // Predicated region
    $region305: #{tpu_custom_call.1} parent=1 // pred_check
      _
    $region306: #{tpu_custom_call.1} parent=1 // pred_check_branch
      %7328 = sbr.rel (0) target = $region308
    $region307: #{tpu_custom_call.1} parent=1 // pred_region
      %7330 = vsyncadd [#allocation4], 0
      %s7332 = sshll.u32 [#allocation54], 4
      %s7333 = int_to_ptr.vmem [resolvable:$true] %s7332
      %s7334 = sshll.u32 %s83, 4
      %s7335 = int_to_ptr.hbm [resolvable:$true] %s7334
      %7337 = dma.vmem_to_hbm [thread:$0]  %s7333, 256, %s7335, [#allocation4]
    $region308: #{tpu_custom_call.1} parent=1 // pred_fallthru
      _
    // Predicated region
    $region309: #{tpu_custom_call.1} parent=1 // pred_check
      _
    $region310: #{tpu_custom_call.1} parent=1 // pred_check_branch
      %7339 = sbr.rel (0) target = $region312
    $region311: #{tpu_custom_call.1} parent=1 // pred_region
      %7341 = vsyncadd [#allocation56], 0
      %s7343 = sshll.u32 [#allocation55], 4
      %s7344 = int_to_ptr.vmem [resolvable:$true] %s7343
      %s7345 = sshll.u32 %s85, 4
      %s7346 = int_to_ptr.hbm [resolvable:$true] %s7345
      %7348 = dma.vmem_to_hbm [thread:$0]  %s7344, 128, %s7346, [#allocation56]
    $region312: #{tpu_custom_call.1} parent=1 // pred_fallthru
      _
    // Predicated region
    $region313: #{tpu_custom_call.1} parent=1 // pred_check
      _
    $region314: #{tpu_custom_call.1} parent=1 // pred_check_branch
      %7350 = sbr.rel (0) target = $region316
    $region315: #{tpu_custom_call.1} parent=1 // pred_region
      %7352 = dma.done [#allocation4], 256
    $region316: #{tpu_custom_call.1} parent=1 // pred_fallthru
      _
    // Predicated region
    $region317: #{tpu_custom_call.1} parent=1 // pred_check
      _
    $region318: #{tpu_custom_call.1} parent=1 // pred_check_branch
      %7354 = sbr.rel (0) target = $region320
    $region319: #{tpu_custom_call.1} parent=1 // pred_region
      %7356 = dma.done [#allocation56], 128
    $region320: #{tpu_custom_call.1} parent=1 // pred_fallthru
      _
    %7357 = vsyncpa [#allocation3], 1
    %7358 = vsyncpa [#allocation8], 1
    %7359 = vsyncpa [#allocation11], 1
    %7360 = vsyncpa [#allocation14], 1
    %7361 = vsyncpa [#allocation17], 1
    %7362 = vsyncpa [#allocation20], 1
    %7363 = vsyncpa [#allocation23], 1
    %7364 = vsyncpa [#allocation26], 1
    %7365 = vsyncpa [#allocation29], 1
    %7366 = vsyncpa [#allocation32], 1
    %7367 = vsyncpa [#allocation35], 1
    %7368 = vsyncpa [#allocation38], 1
    %7369 = vsyncpa [#allocation41], 1
    %7370 = vsyncpa [#allocation44], 1
    %7371 = vsyncpa [#allocation47], 1
    %7372 = vsyncpa [#allocation50], 1
    %7373 = vsyncpa [#allocation53], 1
    %7374 = vsyncpa [#allocation4], 1
    %7375 = vsyncpa [#allocation56], 1
    %7376 = vsyncpa [#allocation5], 1

</llo_original>
